<compile_context>
chip_gen: v7x
topology: tpu7x:2x2x1
jax: 0.10.0
libtpu: 0.0.40
codegen_flags: <defaults>
</compile_context>

<pallas_src>
import numpy as np
import jax
import jax.numpy as jnp
from jax.experimental import pallas as pl
from jax.experimental.pallas import tpu as pltpu

VMEM_SPEC = pl.BlockSpec(memory_space=pltpu.MemorySpace.VMEM)


# ---------------- Pooling matrix (module-level constant, built once with numpy) --------

def _build_pool_matrix():
    # (16, 196): row p = weights of the 5x5/stride-3 average-pool window producing output
    # position p (h-major) from the row-major flattened 14x14 input.
    P = np.zeros((4, 14), np.float32)
    for i in range(4):
        P[i, 3 * i:3 * i + 5] = 1.0 / 5.0
    return np.kron(P, P).astype(np.float32)


_POOL_MT = _build_pool_matrix()           # numpy constant; becomes an XLA constant under jit


# ---------------- Fused Pallas kernel ----------------

def _aux_fused_kernel(x_ref,      # (N, 196, Cin) f32  NHWC-flattened input
                      mt_ref,     # (16, 196)     f32  pooling matrix
                      cw_ref,     # (Cin, 128)    f32  1x1 conv weight, pre-transposed
                      cs_ref,     # (1, 128)      f32  folded BN scale
                      csh_ref,    # (1, 128)      f32  folded conv-bias + BN shift
                      w1_ref,     # (2048, 1024)  bf16 fc1 weight, permuted to (p,c) row order
                      b1_ref,     # (1, 1024)     f32
                      w2_ref,     # (1024, C)     f32  fc2 weight, pre-transposed
                      b2_ref,     # (1, C)        f32
                      o_ref):     # (N, C)        f32
    f32 = jnp.float32
    N = x_ref.shape[0]
    HW = mt_ref.shape[0]                      # 16 pooled spatial positions

    mt = mt_ref[...]
    cw = cw_ref[...]
    cs = cs_ref[...]
    csh = csh_ref[...]
    b1 = b1_ref[...]
    w2 = w2_ref[...]
    b2 = b2_ref[...]

    # --- per-sample: avg-pool (as matmul) + 1x1 conv + folded BN + ReLU, kept in registers ---
    ys = []
    for n in range(N):                        # static unroll (N is tiny and known at trace time)
        xn = x_ref[n]                                              # (196, Cin)
        pooled = jnp.dot(mt, xn, preferred_element_type=f32)       # (16, Cin)
        y = jnp.dot(pooled, cw, preferred_element_type=f32)        # (16, 128)  spatial x out_ch
        ys.append(jnp.maximum(y * cs + csh, 0.0))

    # --- fc1: stream the 2048x1024 bf16 weight in 16 per-spatial chunks of 128 rows.
    #     fc1_w was permuted at pack time so chunk p corresponds to spatial position p,
    #     which makes the NCHW flatten exact without any in-kernel reshape/relayout. ---
    hs = [jnp.zeros((1, b1.shape[1]), f32) for _ in range(N)]
    for p in range(HW):
        w1p = w1_ref[pl.ds(p * 128, 128), :]                       # (128, 1024) bf16
        for n in range(N):
            row = ys[n][p:p + 1, :].astype(w1p.dtype)              # (1, 128) bf16
            hs[n] = hs[n] + jnp.dot(row, w1p, preferred_element_type=f32)

    # --- ReLU, dropout (identity in eval), fc2, write out ---
    for n in range(N):
        hn = jnp.maximum(hs[n] + b1, 0.0)                          # (1, 1024)
        on = jnp.dot(hn, w2, preferred_element_type=f32) + b2      # (1, C)
        o_ref[pl.ds(n, 1), :] = on


# ---------------- Forward pass wrapper ----------------

@jax.jit
def inception_aux_forward(x, packed):
    N, Cin, H, W = x.shape
    assert (H, W) == (14, 14), "aux head assumes 14x14 input (pool -> 4x4, fc1 in=2048)"
    num_classes = packed["b2"].shape[1]
    f32 = jnp.float32

    # NCHW -> (N, H*W, Cin): lets pool and 1x1 conv run as plain row-major matmuls in-kernel.
    x_nhwc = x.astype(f32).transpose(0, 2, 3, 1).reshape(N, H * W, Cin)
    mt = jnp.asarray(_POOL_MT)                                     # (16, 196) constant

    return pl.pallas_call(
        _aux_fused_kernel,
        out_shape=jax.ShapeDtypeStruct((N, num_classes), f32),
        in_specs=[VMEM_SPEC] * 9,
        out_specs=VMEM_SPEC,
        compiler_params=pltpu.CompilerParams(vmem_limit_bytes=32 << 20),
    )(x_nhwc, mt,
      packed["conv_wT"], packed["cscale"], packed["cshift"],
      packed["w1"], packed["b1"], packed["w2T"], packed["b2"])


# ---------------- One-time parameter packing (layouts the kernel wants) ----------------

def pack_params(params):
    eps = 1e-5
    f32 = jnp.float32
    s = params["bn_gamma"] / jnp.sqrt(params["bn_var"] + eps)
    cscale = s.reshape(1, 128).astype(f32)
    # BN(conv + bias) = conv*scale + (bias*scale + beta - mean*scale)
    cshift = (params["conv_b"] * s + params["bn_beta"]
              - params["bn_mean"] * s).reshape(1, 128).astype(f32)

    # Fold the NCHW flatten permutation into fc1_w:
    #   kernel flatten order  = (spatial p, channel c) -> row p*128 + c
    #   PyTorch flatten order = (channel c, spatial p) -> col c*16 + p
    w1 = params["fc1_w"].reshape(1024, 128, 16).transpose(2, 1, 0).reshape(2048, 1024)

    num_classes = params["fc2_w"].shape[0]
    return {
        "conv_wT": params["conv_w"].T.astype(f32),                 # (Cin, 128)
        "cscale": cscale,                                          # (1, 128)
        "cshift": cshift,                                          # (1, 128)
        "w1": w1.astype(jnp.bfloat16),                             # (2048, 1024) bf16
        "b1": params["fc1_b"].reshape(1, -1).astype(f32),          # (1, 1024)
        "w2T": params["fc2_w"].T.astype(f32),                      # (1024, C)
        "b2": params["fc2_b"].reshape(1, num_classes).astype(f32), # (1, C)
    }


# ---------------- Deterministic parameter init (PyTorch-style shapes) ----------------

def init_params(key, in_channels, num_classes):
    ks = jax.random.split(key, 8)

    def u(k, shape, fan_in):
        bound = (1.0 / fan_in) ** 0.5
        return jax.random.uniform(k, shape, jnp.float32, -bound, bound)

    return {
        "conv_w": u(ks[0], (128, in_channels), in_channels),   # (out_ch, in_ch) 1x1 kernel
        "conv_b": u(ks[1], (128,), in_channels),
        "bn_gamma": jnp.ones((128,), jnp.float32),
        "bn_beta": jnp.zeros((128,), jnp.float32),
        "bn_mean": 0.1 * jax.random.normal(ks[2], (128,), jnp.float32),
        "bn_var": jnp.abs(jax.random.normal(ks[3], (128,), jnp.float32)) + 0.5,
        "fc1_w": u(ks[4], (1024, 2048), 2048),
        "fc1_b": u(ks[5], (1024,), 2048),
        "fc2_w": u(ks[6], (num_classes, 1024), 1024),
        "fc2_b": u(ks[7], (num_classes,), 1024),
    }


# ---------------- Pure-JAX f32 reference for verification ----------------

def reference(x, params):
    N = x.shape[0]
    pooled = jax.lax.reduce_window(x, 0.0, jax.lax.add,
                                   (1, 1, 5, 5), (1, 1, 3, 3), "VALID") / 25.0
    y = jnp.einsum("nchw,oc->nohw", pooled, params["conv_w"]) \
        + params["conv_b"][None, :, None, None]
    eps = 1e-5
    scale = params["bn_gamma"] / jnp.sqrt(params["bn_var"] + eps)
    shift = params["bn_beta"] - params["bn_mean"] * scale
    y = jnp.maximum(y * scale[None, :, None, None] + shift[None, :, None, None], 0.0)
    flat = y.reshape(N, -1)
    h = jnp.maximum(flat @ params["fc1_w"].T + params["fc1_b"], 0.0)
    return h @ params["fc2_w"].T + params["fc2_b"]


if __name__ == "__main__":
    key = jax.random.PRNGKey(0)
    kx, kp = jax.random.split(key)
    N, Cin, num_classes = 2, 8, 10
    x = jax.random.normal(kx, (N, Cin, 14, 14), jnp.float32)
    params = init_params(kp, Cin, num_classes)
    packed = pack_params(params)

    out = jax.block_until_ready(inception_aux_forward(x, packed))
    ref = reference(x, params)

    assert out.shape == (N, num_classes)
    # fc1_w is intentionally bf16 in the kernel path -> slightly looser tolerance vs f32 ref.
    assert bool(jnp.allclose(out, ref, atol=5e-3, rtol=5e-3)), "mismatch vs reference"
    print("KERNEL_OK")
</pallas_src>

<mosaic_0001>
module attributes {stable_mosaic.version = 11 : i64} {
  func.func @_aux_fused_kernel(%arg0: memref<2x196x8xf32, #tpu.memory_space<vmem>>, %arg1: memref<16x196xf32, #tpu.memory_space<vmem>>, %arg2: memref<8x128xf32, #tpu.memory_space<vmem>>, %arg3: memref<1x128xf32, #tpu.memory_space<vmem>>, %arg4: memref<1x128xf32, #tpu.memory_space<vmem>>, %arg5: memref<2048x1024xbf16, #tpu.memory_space<vmem>>, %arg6: memref<1x1024xf32, #tpu.memory_space<vmem>>, %arg7: memref<1024x10xf32, #tpu.memory_space<vmem>>, %arg8: memref<1x10xf32, #tpu.memory_space<vmem>>, %arg9: memref<2x10xf32, #tpu.memory_space<vmem>>) attributes {dimension_semantics = [], scalar_prefetch = 0 : i64, scratch_operands = 0 : i64, tpu.core_type = #tpu.core_type<tc>} {
    %c0 = arith.constant 0 : index
    %c0_0 = arith.constant 0 : index
    %0 = vector.load %arg1[%c0, %c0_0] : memref<16x196xf32, #tpu.memory_space<vmem>>, vector<16x196xf32>
    %c0_1 = arith.constant 0 : index
    %c0_2 = arith.constant 0 : index
    %1 = vector.load %arg2[%c0_1, %c0_2] : memref<8x128xf32, #tpu.memory_space<vmem>>, vector<8x128xf32>
    %c0_3 = arith.constant 0 : index
    %c0_4 = arith.constant 0 : index
    %2 = vector.load %arg3[%c0_3, %c0_4] : memref<1x128xf32, #tpu.memory_space<vmem>>, vector<1x128xf32>
    %c0_5 = arith.constant 0 : index
    %c0_6 = arith.constant 0 : index
    %3 = vector.load %arg4[%c0_5, %c0_6] : memref<1x128xf32, #tpu.memory_space<vmem>>, vector<1x128xf32>
    %c0_7 = arith.constant 0 : index
    %c0_8 = arith.constant 0 : index
    %4 = vector.load %arg6[%c0_7, %c0_8] : memref<1x1024xf32, #tpu.memory_space<vmem>>, vector<1x1024xf32>
    %c0_9 = arith.constant 0 : index
    %c0_10 = arith.constant 0 : index
    %5 = vector.load %arg7[%c0_9, %c0_10] : memref<1024x10xf32, #tpu.memory_space<vmem>>, vector<1024x10xf32>
    %c0_11 = arith.constant 0 : index
    %c0_12 = arith.constant 0 : index
    %6 = vector.load %arg8[%c0_11, %c0_12] : memref<1x10xf32, #tpu.memory_space<vmem>>, vector<1x10xf32>
    %c0_13 = arith.constant 0 : index
    %c0_14 = arith.constant 0 : index
    %c0_15 = arith.constant 0 : index
    %7 = vector.load %arg0[%c0_13, %c0_14, %c0_15] : memref<2x196x8xf32, #tpu.memory_space<vmem>>, vector<1x196x8xf32>
    %8 = vector.shape_cast %7 : vector<1x196x8xf32> to vector<196x8xf32>
    %cst = arith.constant dense<0.000000e+00> : vector<16x8xf32>
    %9 = tpu.matmul %0, %8, %cst {dimension_numbers = #tpu.dot_dimension_numbers<[1], [0], [0], [1], [0, 0, 1, 1], [], []>} : vector<16x196xf32>, vector<196x8xf32>, vector<16x8xf32> -> vector<16x8xf32>
    %cst_16 = arith.constant dense<0.000000e+00> : vector<16x128xf32>
    %10 = tpu.matmul %9, %1, %cst_16 {dimension_numbers = #tpu.dot_dimension_numbers<[1], [0], [0], [1], [0, 0, 1, 1], [], []>} : vector<16x8xf32>, vector<8x128xf32>, vector<16x128xf32> -> vector<16x128xf32>
    %11 = vector.broadcast %2 : vector<1x128xf32> to vector<16x128xf32>
    %12 = arith.mulf %10, %11 : vector<16x128xf32>
    %13 = vector.broadcast %3 : vector<1x128xf32> to vector<16x128xf32>
    %14 = arith.addf %12, %13 : vector<16x128xf32>
    %cst_17 = arith.constant 0.000000e+00 : f32
    %15 = vector.broadcast %cst_17 : f32 to vector<16x128xf32>
    %16 = arith.maximumf %14, %15 : vector<16x128xf32>
    %c1 = arith.constant 1 : index
    %c0_18 = arith.constant 0 : index
    %c0_19 = arith.constant 0 : index
    %17 = vector.load %arg0[%c1, %c0_18, %c0_19] : memref<2x196x8xf32, #tpu.memory_space<vmem>>, vector<1x196x8xf32>
    %18 = vector.shape_cast %17 : vector<1x196x8xf32> to vector<196x8xf32>
    %cst_20 = arith.constant dense<0.000000e+00> : vector<16x8xf32>
    %19 = tpu.matmul %0, %18, %cst_20 {dimension_numbers = #tpu.dot_dimension_numbers<[1], [0], [0], [1], [0, 0, 1, 1], [], []>} : vector<16x196xf32>, vector<196x8xf32>, vector<16x8xf32> -> vector<16x8xf32>
    %cst_21 = arith.constant dense<0.000000e+00> : vector<16x128xf32>
    %20 = tpu.matmul %19, %1, %cst_21 {dimension_numbers = #tpu.dot_dimension_numbers<[1], [0], [0], [1], [0, 0, 1, 1], [], []>} : vector<16x8xf32>, vector<8x128xf32>, vector<16x128xf32> -> vector<16x128xf32>
    %21 = vector.broadcast %2 : vector<1x128xf32> to vector<16x128xf32>
    %22 = arith.mulf %20, %21 : vector<16x128xf32>
    %23 = vector.broadcast %3 : vector<1x128xf32> to vector<16x128xf32>
    %24 = arith.addf %22, %23 : vector<16x128xf32>
    %cst_22 = arith.constant 0.000000e+00 : f32
    %25 = vector.broadcast %cst_22 : f32 to vector<16x128xf32>
    %26 = arith.maximumf %24, %25 : vector<16x128xf32>
    %cst_23 = arith.constant 0.000000e+00 : f32
    %27 = vector.broadcast %cst_23 : f32 to vector<1x1024xf32>
    %cst_24 = arith.constant 0.000000e+00 : f32
    %28 = vector.broadcast %cst_24 : f32 to vector<1x1024xf32>
    %c0_25 = arith.constant 0 : index
    %c0_26 = arith.constant 0 : index
    %29 = vector.load %arg5[%c0_25, %c0_26] : memref<2048x1024xbf16, #tpu.memory_space<vmem>>, vector<128x1024xbf16>
    %30 = vector.extract_strided_slice %16 {offsets = [0, 0], sizes = [1, 128], strides = [1, 1]} : vector<16x128xf32> to vector<1x128xf32>
    %31 = arith.truncf %30 : vector<1x128xf32> to vector<1x128xbf16>
    %cst_27 = arith.constant dense<0.000000e+00> : vector<1x1024xf32>
    %32 = tpu.matmul %31, %29, %cst_27 {dimension_numbers = #tpu.dot_dimension_numbers<[1], [0], [0], [1], [0, 0, 1, 1], [], []>} : vector<1x128xbf16>, vector<128x1024xbf16>, vector<1x1024xf32> -> vector<1x1024xf32>
    %33 = arith.addf %27, %32 : vector<1x1024xf32>
    %34 = vector.extract_strided_slice %26 {offsets = [0, 0], sizes = [1, 128], strides = [1, 1]} : vector<16x128xf32> to vector<1x128xf32>
    %35 = arith.truncf %34 : vector<1x128xf32> to vector<1x128xbf16>
    %cst_28 = arith.constant dense<0.000000e+00> : vector<1x1024xf32>
    %36 = tpu.matmul %35, %29, %cst_28 {dimension_numbers = #tpu.dot_dimension_numbers<[1], [0], [0], [1], [0, 0, 1, 1], [], []>} : vector<1x128xbf16>, vector<128x1024xbf16>, vector<1x1024xf32> -> vector<1x1024xf32>
    %37 = arith.addf %28, %36 : vector<1x1024xf32>
    %c128 = arith.constant 128 : index
    %c0_29 = arith.constant 0 : index
    %38 = vector.load %arg5[%c128, %c0_29] : memref<2048x1024xbf16, #tpu.memory_space<vmem>>, vector<128x1024xbf16>
    %39 = vector.extract_strided_slice %16 {offsets = [1, 0], sizes = [1, 128], strides = [1, 1]} : vector<16x128xf32> to vector<1x128xf32>
    %40 = arith.truncf %39 : vector<1x128xf32> to vector<1x128xbf16>
    %cst_30 = arith.constant dense<0.000000e+00> : vector<1x1024xf32>
    %41 = tpu.matmul %40, %38, %cst_30 {dimension_numbers = #tpu.dot_dimension_numbers<[1], [0], [0], [1], [0, 0, 1, 1], [], []>} : vector<1x128xbf16>, vector<128x1024xbf16>, vector<1x1024xf32> -> vector<1x1024xf32>
    %42 = arith.addf %33, %41 : vector<1x1024xf32>
    %43 = vector.extract_strided_slice %26 {offsets = [1, 0], sizes = [1, 128], strides = [1, 1]} : vector<16x128xf32> to vector<1x128xf32>
    %44 = arith.truncf %43 : vector<1x128xf32> to vector<1x128xbf16>
    %cst_31 = arith.constant dense<0.000000e+00> : vector<1x1024xf32>
    %45 = tpu.matmul %44, %38, %cst_31 {dimension_numbers = #tpu.dot_dimension_numbers<[1], [0], [0], [1], [0, 0, 1, 1], [], []>} : vector<1x128xbf16>, vector<128x1024xbf16>, vector<1x1024xf32> -> vector<1x1024xf32>
    %46 = arith.addf %37, %45 : vector<1x1024xf32>
    %c256 = arith.constant 256 : index
    %c0_32 = arith.constant 0 : index
    %47 = vector.load %arg5[%c256, %c0_32] : memref<2048x1024xbf16, #tpu.memory_space<vmem>>, vector<128x1024xbf16>
    %48 = vector.extract_strided_slice %16 {offsets = [2, 0], sizes = [1, 128], strides = [1, 1]} : vector<16x128xf32> to vector<1x128xf32>
    %49 = arith.truncf %48 : vector<1x128xf32> to vector<1x128xbf16>
    %cst_33 = arith.constant dense<0.000000e+00> : vector<1x1024xf32>
    %50 = tpu.matmul %49, %47, %cst_33 {dimension_numbers = #tpu.dot_dimension_numbers<[1], [0], [0], [1], [0, 0, 1, 1], [], []>} : vector<1x128xbf16>, vector<128x1024xbf16>, vector<1x1024xf32> -> vector<1x1024xf32>
    %51 = arith.addf %42, %50 : vector<1x1024xf32>
    %52 = vector.extract_strided_slice %26 {offsets = [2, 0], sizes = [1, 128], strides = [1, 1]} : vector<16x128xf32> to vector<1x128xf32>
    %53 = arith.truncf %52 : vector<1x128xf32> to vector<1x128xbf16>
    %cst_34 = arith.constant dense<0.000000e+00> : vector<1x1024xf32>
    %54 = tpu.matmul %53, %47, %cst_34 {dimension_numbers = #tpu.dot_dimension_numbers<[1], [0], [0], [1], [0, 0, 1, 1], [], []>} : vector<1x128xbf16>, vector<128x1024xbf16>, vector<1x1024xf32> -> vector<1x1024xf32>
    %55 = arith.addf %46, %54 : vector<1x1024xf32>
    %c384 = arith.constant 384 : index
    %c0_35 = arith.constant 0 : index
    %56 = vector.load %arg5[%c384, %c0_35] : memref<2048x1024xbf16, #tpu.memory_space<vmem>>, vector<128x1024xbf16>
    %57 = vector.extract_strided_slice %16 {offsets = [3, 0], sizes = [1, 128], strides = [1, 1]} : vector<16x128xf32> to vector<1x128xf32>
    %58 = arith.truncf %57 : vector<1x128xf32> to vector<1x128xbf16>
    %cst_36 = arith.constant dense<0.000000e+00> : vector<1x1024xf32>
    %59 = tpu.matmul %58, %56, %cst_36 {dimension_numbers = #tpu.dot_dimension_numbers<[1], [0], [0], [1], [0, 0, 1, 1], [], []>} : vector<1x128xbf16>, vector<128x1024xbf16>, vector<1x1024xf32> -> vector<1x1024xf32>
    %60 = arith.addf %51, %59 : vector<1x1024xf32>
    %61 = vector.extract_strided_slice %26 {offsets = [3, 0], sizes = [1, 128], strides = [1, 1]} : vector<16x128xf32> to vector<1x128xf32>
    %62 = arith.truncf %61 : vector<1x128xf32> to vector<1x128xbf16>
    %cst_37 = arith.constant dense<0.000000e+00> : vector<1x1024xf32>
    %63 = tpu.matmul %62, %56, %cst_37 {dimension_numbers = #tpu.dot_dimension_numbers<[1], [0], [0], [1], [0, 0, 1, 1], [], []>} : vector<1x128xbf16>, vector<128x1024xbf16>, vector<1x1024xf32> -> vector<1x1024xf32>
    %64 = arith.addf %55, %63 : vector<1x1024xf32>
    %c512 = arith.constant 512 : index
    %c0_38 = arith.constant 0 : index
    %65 = vector.load %arg5[%c512, %c0_38] : memref<2048x1024xbf16, #tpu.memory_space<vmem>>, vector<128x1024xbf16>
    %66 = vector.extract_strided_slice %16 {offsets = [4, 0], sizes = [1, 128], strides = [1, 1]} : vector<16x128xf32> to vector<1x128xf32>
    %67 = arith.truncf %66 : vector<1x128xf32> to vector<1x128xbf16>
    %cst_39 = arith.constant dense<0.000000e+00> : vector<1x1024xf32>
    %68 = tpu.matmul %67, %65, %cst_39 {dimension_numbers = #tpu.dot_dimension_numbers<[1], [0], [0], [1], [0, 0, 1, 1], [], []>} : vector<1x128xbf16>, vector<128x1024xbf16>, vector<1x1024xf32> -> vector<1x1024xf32>
    %69 = arith.addf %60, %68 : vector<1x1024xf32>
    %70 = vector.extract_strided_slice %26 {offsets = [4, 0], sizes = [1, 128], strides = [1, 1]} : vector<16x128xf32> to vector<1x128xf32>
    %71 = arith.truncf %70 : vector<1x128xf32> to vector<1x128xbf16>
    %cst_40 = arith.constant dense<0.000000e+00> : vector<1x1024xf32>
    %72 = tpu.matmul %71, %65, %cst_40 {dimension_numbers = #tpu.dot_dimension_numbers<[1], [0], [0], [1], [0, 0, 1, 1], [], []>} : vector<1x128xbf16>, vector<128x1024xbf16>, vector<1x1024xf32> -> vector<1x1024xf32>
    %73 = arith.addf %64, %72 : vector<1x1024xf32>
    %c640 = arith.constant 640 : index
    %c0_41 = arith.constant 0 : index
    %74 = vector.load %arg5[%c640, %c0_41] : memref<2048x1024xbf16, #tpu.memory_space<vmem>>, vector<128x1024xbf16>
    %75 = vector.extract_strided_slice %16 {offsets = [5, 0], sizes = [1, 128], strides = [1, 1]} : vector<16x128xf32> to vector<1x128xf32>
    %76 = arith.truncf %75 : vector<1x128xf32> to vector<1x128xbf16>
    %cst_42 = arith.constant dense<0.000000e+00> : vector<1x1024xf32>
    %77 = tpu.matmul %76, %74, %cst_42 {dimension_numbers = #tpu.dot_dimension_numbers<[1], [0], [0], [1], [0, 0, 1, 1], [], []>} : vector<1x128xbf16>, vector<128x1024xbf16>, vector<1x1024xf32> -> vector<1x1024xf32>
    %78 = arith.addf %69, %77 : vector<1x1024xf32>
    %79 = vector.extract_strided_slice %26 {offsets = [5, 0], sizes = [1, 128], strides = [1, 1]} : vector<16x128xf32> to vector<1x128xf32>
    %80 = arith.truncf %79 : vector<1x128xf32> to vector<1x128xbf16>
    %cst_43 = arith.constant dense<0.000000e+00> : vector<1x1024xf32>
    %81 = tpu.matmul %80, %74, %cst_43 {dimension_numbers = #tpu.dot_dimension_numbers<[1], [0], [0], [1], [0, 0, 1, 1], [], []>} : vector<1x128xbf16>, vector<128x1024xbf16>, vector<1x1024xf32> -> vector<1x1024xf32>
    %82 = arith.addf %73, %81 : vector<1x1024xf32>
    %c768 = arith.constant 768 : index
    %c0_44 = arith.constant 0 : index
    %83 = vector.load %arg5[%c768, %c0_44] : memref<2048x1024xbf16, #tpu.memory_space<vmem>>, vector<128x1024xbf16>
    %84 = vector.extract_strided_slice %16 {offsets = [6, 0], sizes = [1, 128], strides = [1, 1]} : vector<16x128xf32> to vector<1x128xf32>
    %85 = arith.truncf %84 : vector<1x128xf32> to vector<1x128xbf16>
    %cst_45 = arith.constant dense<0.000000e+00> : vector<1x1024xf32>
    %86 = tpu.matmul %85, %83, %cst_45 {dimension_numbers = #tpu.dot_dimension_numbers<[1], [0], [0], [1], [0, 0, 1, 1], [], []>} : vector<1x128xbf16>, vector<128x1024xbf16>, vector<1x1024xf32> -> vector<1x1024xf32>
    %87 = arith.addf %78, %86 : vector<1x1024xf32>
    %88 = vector.extract_strided_slice %26 {offsets = [6, 0], sizes = [1, 128], strides = [1, 1]} : vector<16x128xf32> to vector<1x128xf32>
    %89 = arith.truncf %88 : vector<1x128xf32> to vector<1x128xbf16>
    %cst_46 = arith.constant dense<0.000000e+00> : vector<1x1024xf32>
    %90 = tpu.matmul %89, %83, %cst_46 {dimension_numbers = #tpu.dot_dimension_numbers<[1], [0], [0], [1], [0, 0, 1, 1], [], []>} : vector<1x128xbf16>, vector<128x1024xbf16>, vector<1x1024xf32> -> vector<1x1024xf32>
    %91 = arith.addf %82, %90 : vector<1x1024xf32>
    %c896 = arith.constant 896 : index
    %c0_47 = arith.constant 0 : index
    %92 = vector.load %arg5[%c896, %c0_47] : memref<2048x1024xbf16, #tpu.memory_space<vmem>>, vector<128x1024xbf16>
    %93 = vector.extract_strided_slice %16 {offsets = [7, 0], sizes = [1, 128], strides = [1, 1]} : vector<16x128xf32> to vector<1x128xf32>
    %94 = arith.truncf %93 : vector<1x128xf32> to vector<1x128xbf16>
    %cst_48 = arith.constant dense<0.000000e+00> : vector<1x1024xf32>
    %95 = tpu.matmul %94, %92, %cst_48 {dimension_numbers = #tpu.dot_dimension_numbers<[1], [0], [0], [1], [0, 0, 1, 1], [], []>} : vector<1x128xbf16>, vector<128x1024xbf16>, vector<1x1024xf32> -> vector<1x1024xf32>
    %96 = arith.addf %87, %95 : vector<1x1024xf32>
    %97 = vector.extract_strided_slice %26 {offsets = [7, 0], sizes = [1, 128], strides = [1, 1]} : vector<16x128xf32> to vector<1x128xf32>
    %98 = arith.truncf %97 : vector<1x128xf32> to vector<1x128xbf16>
    %cst_49 = arith.constant dense<0.000000e+00> : vector<1x1024xf32>
    %99 = tpu.matmul %98, %92, %cst_49 {dimension_numbers = #tpu.dot_dimension_numbers<[1], [0], [0], [1], [0, 0, 1, 1], [], []>} : vector<1x128xbf16>, vector<128x1024xbf16>, vector<1x1024xf32> -> vector<1x1024xf32>
    %100 = arith.addf %91, %99 : vector<1x1024xf32>
    %c1024 = arith.constant 1024 : index
    %c0_50 = arith.constant 0 : index
    %101 = vector.load %arg5[%c1024, %c0_50] : memref<2048x1024xbf16, #tpu.memory_space<vmem>>, vector<128x1024xbf16>
    %102 = vector.extract_strided_slice %16 {offsets = [8, 0], sizes = [1, 128], strides = [1, 1]} : vector<16x128xf32> to vector<1x128xf32>
    %103 = arith.truncf %102 : vector<1x128xf32> to vector<1x128xbf16>
    %cst_51 = arith.constant dense<0.000000e+00> : vector<1x1024xf32>
    %104 = tpu.matmul %103, %101, %cst_51 {dimension_numbers = #tpu.dot_dimension_numbers<[1], [0], [0], [1], [0, 0, 1, 1], [], []>} : vector<1x128xbf16>, vector<128x1024xbf16>, vector<1x1024xf32> -> vector<1x1024xf32>
    %105 = arith.addf %96, %104 : vector<1x1024xf32>
    %106 = vector.extract_strided_slice %26 {offsets = [8, 0], sizes = [1, 128], strides = [1, 1]} : vector<16x128xf32> to vector<1x128xf32>
    %107 = arith.truncf %106 : vector<1x128xf32> to vector<1x128xbf16>
    %cst_52 = arith.constant dense<0.000000e+00> : vector<1x1024xf32>
    %108 = tpu.matmul %107, %101, %cst_52 {dimension_numbers = #tpu.dot_dimension_numbers<[1], [0], [0], [1], [0, 0, 1, 1], [], []>} : vector<1x128xbf16>, vector<128x1024xbf16>, vector<1x1024xf32> -> vector<1x1024xf32>
    %109 = arith.addf %100, %108 : vector<1x1024xf32>
    %c1152 = arith.constant 1152 : index
    %c0_53 = arith.constant 0 : index
    %110 = vector.load %arg5[%c1152, %c0_53] : memref<2048x1024xbf16, #tpu.memory_space<vmem>>, vector<128x1024xbf16>
    %111 = vector.extract_strided_slice %16 {offsets = [9, 0], sizes = [1, 128], strides = [1, 1]} : vector<16x128xf32> to vector<1x128xf32>
    %112 = arith.truncf %111 : vector<1x128xf32> to vector<1x128xbf16>
    %cst_54 = arith.constant dense<0.000000e+00> : vector<1x1024xf32>
    %113 = tpu.matmul %112, %110, %cst_54 {dimension_numbers = #tpu.dot_dimension_numbers<[1], [0], [0], [1], [0, 0, 1, 1], [], []>} : vector<1x128xbf16>, vector<128x1024xbf16>, vector<1x1024xf32> -> vector<1x1024xf32>
    %114 = arith.addf %105, %113 : vector<1x1024xf32>
    %115 = vector.extract_strided_slice %26 {offsets = [9, 0], sizes = [1, 128], strides = [1, 1]} : vector<16x128xf32> to vector<1x128xf32>
    %116 = arith.truncf %115 : vector<1x128xf32> to vector<1x128xbf16>
    %cst_55 = arith.constant dense<0.000000e+00> : vector<1x1024xf32>
    %117 = tpu.matmul %116, %110, %cst_55 {dimension_numbers = #tpu.dot_dimension_numbers<[1], [0], [0], [1], [0, 0, 1, 1], [], []>} : vector<1x128xbf16>, vector<128x1024xbf16>, vector<1x1024xf32> -> vector<1x1024xf32>
    %118 = arith.addf %109, %117 : vector<1x1024xf32>
    %c1280 = arith.constant 1280 : index
    %c0_56 = arith.constant 0 : index
    %119 = vector.load %arg5[%c1280, %c0_56] : memref<2048x1024xbf16, #tpu.memory_space<vmem>>, vector<128x1024xbf16>
    %120 = vector.extract_strided_slice %16 {offsets = [10, 0], sizes = [1, 128], strides = [1, 1]} : vector<16x128xf32> to vector<1x128xf32>
    %121 = arith.truncf %120 : vector<1x128xf32> to vector<1x128xbf16>
    %cst_57 = arith.constant dense<0.000000e+00> : vector<1x1024xf32>
    %122 = tpu.matmul %121, %119, %cst_57 {dimension_numbers = #tpu.dot_dimension_numbers<[1], [0], [0], [1], [0, 0, 1, 1], [], []>} : vector<1x128xbf16>, vector<128x1024xbf16>, vector<1x1024xf32> -> vector<1x1024xf32>
    %123 = arith.addf %114, %122 : vector<1x1024xf32>
    %124 = vector.extract_strided_slice %26 {offsets = [10, 0], sizes = [1, 128], strides = [1, 1]} : vector<16x128xf32> to vector<1x128xf32>
    %125 = arith.truncf %124 : vector<1x128xf32> to vector<1x128xbf16>
    %cst_58 = arith.constant dense<0.000000e+00> : vector<1x1024xf32>
    %126 = tpu.matmul %125, %119, %cst_58 {dimension_numbers = #tpu.dot_dimension_numbers<[1], [0], [0], [1], [0, 0, 1, 1], [], []>} : vector<1x128xbf16>, vector<128x1024xbf16>, vector<1x1024xf32> -> vector<1x1024xf32>
    %127 = arith.addf %118, %126 : vector<1x1024xf32>
    %c1408 = arith.constant 1408 : index
    %c0_59 = arith.constant 0 : index
    %128 = vector.load %arg5[%c1408, %c0_59] : memref<2048x1024xbf16, #tpu.memory_space<vmem>>, vector<128x1024xbf16>
    %129 = vector.extract_strided_slice %16 {offsets = [11, 0], sizes = [1, 128], strides = [1, 1]} : vector<16x128xf32> to vector<1x128xf32>
    %130 = arith.truncf %129 : vector<1x128xf32> to vector<1x128xbf16>
    %cst_60 = arith.constant dense<0.000000e+00> : vector<1x1024xf32>
    %131 = tpu.matmul %130, %128, %cst_60 {dimension_numbers = #tpu.dot_dimension_numbers<[1], [0], [0], [1], [0, 0, 1, 1], [], []>} : vector<1x128xbf16>, vector<128x1024xbf16>, vector<1x1024xf32> -> vector<1x1024xf32>
    %132 = arith.addf %123, %131 : vector<1x1024xf32>
    %133 = vector.extract_strided_slice %26 {offsets = [11, 0], sizes = [1, 128], strides = [1, 1]} : vector<16x128xf32> to vector<1x128xf32>
    %134 = arith.truncf %133 : vector<1x128xf32> to vector<1x128xbf16>
    %cst_61 = arith.constant dense<0.000000e+00> : vector<1x1024xf32>
    %135 = tpu.matmul %134, %128, %cst_61 {dimension_numbers = #tpu.dot_dimension_numbers<[1], [0], [0], [1], [0, 0, 1, 1], [], []>} : vector<1x128xbf16>, vector<128x1024xbf16>, vector<1x1024xf32> -> vector<1x1024xf32>
    %136 = arith.addf %127, %135 : vector<1x1024xf32>
    %c1536 = arith.constant 1536 : index
    %c0_62 = arith.constant 0 : index
    %137 = vector.load %arg5[%c1536, %c0_62] : memref<2048x1024xbf16, #tpu.memory_space<vmem>>, vector<128x1024xbf16>
    %138 = vector.extract_strided_slice %16 {offsets = [12, 0], sizes = [1, 128], strides = [1, 1]} : vector<16x128xf32> to vector<1x128xf32>
    %139 = arith.truncf %138 : vector<1x128xf32> to vector<1x128xbf16>
    %cst_63 = arith.constant dense<0.000000e+00> : vector<1x1024xf32>
    %140 = tpu.matmul %139, %137, %cst_63 {dimension_numbers = #tpu.dot_dimension_numbers<[1], [0], [0], [1], [0, 0, 1, 1], [], []>} : vector<1x128xbf16>, vector<128x1024xbf16>, vector<1x1024xf32> -> vector<1x1024xf32>
    %141 = arith.addf %132, %140 : vector<1x1024xf32>
    %142 = vector.extract_strided_slice %26 {offsets = [12, 0], sizes = [1, 128], strides = [1, 1]} : vector<16x128xf32> to vector<1x128xf32>
    %143 = arith.truncf %142 : vector<1x128xf32> to vector<1x128xbf16>
    %cst_64 = arith.constant dense<0.000000e+00> : vector<1x1024xf32>
    %144 = tpu.matmul %143, %137, %cst_64 {dimension_numbers = #tpu.dot_dimension_numbers<[1], [0], [0], [1], [0, 0, 1, 1], [], []>} : vector<1x128xbf16>, vector<128x1024xbf16>, vector<1x1024xf32> -> vector<1x1024xf32>
    %145 = arith.addf %136, %144 : vector<1x1024xf32>
    %c1664 = arith.constant 1664 : index
    %c0_65 = arith.constant 0 : index
    %146 = vector.load %arg5[%c1664, %c0_65] : memref<2048x1024xbf16, #tpu.memory_space<vmem>>, vector<128x1024xbf16>
    %147 = vector.extract_strided_slice %16 {offsets = [13, 0], sizes = [1, 128], strides = [1, 1]} : vector<16x128xf32> to vector<1x128xf32>
    %148 = arith.truncf %147 : vector<1x128xf32> to vector<1x128xbf16>
    %cst_66 = arith.constant dense<0.000000e+00> : vector<1x1024xf32>
    %149 = tpu.matmul %148, %146, %cst_66 {dimension_numbers = #tpu.dot_dimension_numbers<[1], [0], [0], [1], [0, 0, 1, 1], [], []>} : vector<1x128xbf16>, vector<128x1024xbf16>, vector<1x1024xf32> -> vector<1x1024xf32>
    %150 = arith.addf %141, %149 : vector<1x1024xf32>
    %151 = vector.extract_strided_slice %26 {offsets = [13, 0], sizes = [1, 128], strides = [1, 1]} : vector<16x128xf32> to vector<1x128xf32>
    %152 = arith.truncf %151 : vector<1x128xf32> to vector<1x128xbf16>
    %cst_67 = arith.constant dense<0.000000e+00> : vector<1x1024xf32>
    %153 = tpu.matmul %152, %146, %cst_67 {dimension_numbers = #tpu.dot_dimension_numbers<[1], [0], [0], [1], [0, 0, 1, 1], [], []>} : vector<1x128xbf16>, vector<128x1024xbf16>, vector<1x1024xf32> -> vector<1x1024xf32>
    %154 = arith.addf %145, %153 : vector<1x1024xf32>
    %c1792 = arith.constant 1792 : index
    %c0_68 = arith.constant 0 : index
    %155 = vector.load %arg5[%c1792, %c0_68] : memref<2048x1024xbf16, #tpu.memory_space<vmem>>, vector<128x1024xbf16>
    %156 = vector.extract_strided_slice %16 {offsets = [14, 0], sizes = [1, 128], strides = [1, 1]} : vector<16x128xf32> to vector<1x128xf32>
    %157 = arith.truncf %156 : vector<1x128xf32> to vector<1x128xbf16>
    %cst_69 = arith.constant dense<0.000000e+00> : vector<1x1024xf32>
    %158 = tpu.matmul %157, %155, %cst_69 {dimension_numbers = #tpu.dot_dimension_numbers<[1], [0], [0], [1], [0, 0, 1, 1], [], []>} : vector<1x128xbf16>, vector<128x1024xbf16>, vector<1x1024xf32> -> vector<1x1024xf32>
    %159 = arith.addf %150, %158 : vector<1x1024xf32>
    %160 = vector.extract_strided_slice %26 {offsets = [14, 0], sizes = [1, 128], strides = [1, 1]} : vector<16x128xf32> to vector<1x128xf32>
    %161 = arith.truncf %160 : vector<1x128xf32> to vector<1x128xbf16>
    %cst_70 = arith.constant dense<0.000000e+00> : vector<1x1024xf32>
    %162 = tpu.matmul %161, %155, %cst_70 {dimension_numbers = #tpu.dot_dimension_numbers<[1], [0], [0], [1], [0, 0, 1, 1], [], []>} : vector<1x128xbf16>, vector<128x1024xbf16>, vector<1x1024xf32> -> vector<1x1024xf32>
    %163 = arith.addf %154, %162 : vector<1x1024xf32>
    %c1920 = arith.constant 1920 : index
    %c0_71 = arith.constant 0 : index
    %164 = vector.load %arg5[%c1920, %c0_71] : memref<2048x1024xbf16, #tpu.memory_space<vmem>>, vector<128x1024xbf16>
    %165 = vector.extract_strided_slice %16 {offsets = [15, 0], sizes = [1, 128], strides = [1, 1]} : vector<16x128xf32> to vector<1x128xf32>
    %166 = arith.truncf %165 : vector<1x128xf32> to vector<1x128xbf16>
    %cst_72 = arith.constant dense<0.000000e+00> : vector<1x1024xf32>
    %167 = tpu.matmul %166, %164, %cst_72 {dimension_numbers = #tpu.dot_dimension_numbers<[1], [0], [0], [1], [0, 0, 1, 1], [], []>} : vector<1x128xbf16>, vector<128x1024xbf16>, vector<1x1024xf32> -> vector<1x1024xf32>
    %168 = arith.addf %159, %167 : vector<1x1024xf32>
    %169 = vector.extract_strided_slice %26 {offsets = [15, 0], sizes = [1, 128], strides = [1, 1]} : vector<16x128xf32> to vector<1x128xf32>
    %170 = arith.truncf %169 : vector<1x128xf32> to vector<1x128xbf16>
    %cst_73 = arith.constant dense<0.000000e+00> : vector<1x1024xf32>
    %171 = tpu.matmul %170, %164, %cst_73 {dimension_numbers = #tpu.dot_dimension_numbers<[1], [0], [0], [1], [0, 0, 1, 1], [], []>} : vector<1x128xbf16>, vector<128x1024xbf16>, vector<1x1024xf32> -> vector<1x1024xf32>
    %172 = arith.addf %163, %171 : vector<1x1024xf32>
    %173 = arith.addf %168, %4 : vector<1x1024xf32>
    %cst_74 = arith.constant 0.000000e+00 : f32
    %174 = vector.broadcast %cst_74 : f32 to vector<1x1024xf32>
    %175 = arith.maximumf %173, %174 : vector<1x1024xf32>
    %cst_75 = arith.constant dense<0.000000e+00> : vector<1x10xf32>
    %176 = tpu.matmul %175, %5, %cst_75 {dimension_numbers = #tpu.dot_dimension_numbers<[1], [0], [0], [1], [0, 0, 1, 1], [], []>} : vector<1x1024xf32>, vector<1024x10xf32>, vector<1x10xf32> -> vector<1x10xf32>
    %177 = arith.addf %176, %6 : vector<1x10xf32>
    %c0_76 = arith.constant 0 : index
    %c0_77 = arith.constant 0 : index
    %178 = vector.load %arg9[%c0_76, %c0_77] : memref<2x10xf32, #tpu.memory_space<vmem>>, vector<1x10xf32>
    tpu.vector_store %arg9[%c0_76, %c0_77], %177 {strides = array<i32>} : memref<2x10xf32, #tpu.memory_space<vmem>>, vector<1x10xf32>,
    %179 = arith.addf %172, %4 : vector<1x1024xf32>
    %cst_78 = arith.constant 0.000000e+00 : f32
    %180 = vector.broadcast %cst_78 : f32 to vector<1x1024xf32>
    %181 = arith.maximumf %179, %180 : vector<1x1024xf32>
    %cst_79 = arith.constant dense<0.000000e+00> : vector<1x10xf32>
    %182 = tpu.matmul %181, %5, %cst_79 {dimension_numbers = #tpu.dot_dimension_numbers<[1], [0], [0], [1], [0, 0, 1, 1], [], []>} : vector<1x1024xf32>, vector<1024x10xf32>, vector<1x10xf32> -> vector<1x10xf32>
    %183 = arith.addf %182, %6 : vector<1x10xf32>
    %c1_80 = arith.constant 1 : index
    %c0_81 = arith.constant 0 : index
    %184 = vector.load %arg9[%c1_80, %c0_81] : memref<2x10xf32, #tpu.memory_space<vmem>>, vector<1x10xf32>
    tpu.vector_store %arg9[%c1_80, %c0_81], %183 {strides = array<i32>} : memref<2x10xf32, #tpu.memory_space<vmem>>, vector<1x10xf32>,
    return
  }
}

</mosaic_0001>

<llo_original>
// kernel: inception_aux_forward.1
$region0: #{inception_aux_forward.1}
  #allocation0 [shape = 'u32[]', space=smem, size = 0x4, offset = 0x4, fixed_abs, tag = 'smem constant byte address 0x4 - core index']
  #allocation1 [shape = 'u32[144,128]{1,0:T(1,128)}', space=vmem, size = 0x12000, scoped, tag = 'internal scratch']
  %s0 = inlined_call_operand.vmem [shape: f32[2,196,8], index: 0, kind: input, shape index: {}]
  %s1 = inlined_call_operand.hbm [shape: f32[16,196], index: 1, kind: input, shape index: {}]
  %s2 = inlined_call_operand.hbm [shape: f32[8,128], index: 2, kind: input, shape index: {}]
  %s3 = inlined_call_operand.hbm [shape: f32[1,128], index: 3, kind: input, shape index: {}]
  %s4 = inlined_call_operand.hbm [shape: f32[1,128], index: 4, kind: input, shape index: {}]
  %s5 = inlined_call_operand.hbm [shape: bf16[2048,1024], index: 5, kind: input, shape index: {}]
  %s6 = inlined_call_operand.hbm [shape: f32[1,1024], index: 6, kind: input, shape index: {}]
  %s7 = inlined_call_operand.vmem [shape: f32[1024,10], index: 7, kind: input, shape index: {}]
  %s8 = inlined_call_operand.hbm [shape: f32[1,10], index: 8, kind: input, shape index: {}]
  %s9 = inlined_call_operand.hbm [shape: f32[2,10], index: 9, kind: output, shape index: {}]
  %s10 = sld [smem:[#allocation0]]
  $region74: #{inception_aux_forward.1} parent=0
    _
  %s12 = ssub.s32 1, %s10
  %s13 = scalar_select 0, %s12, %s10
  $region1: #{inception_aux_forward.1} parent=0
    #allocation2 [shape = 'u8[16384]{0}', space=vmem, size = 0x4000, scoped, tag = 'input window, operand 1, single buffered']
    #allocation3 [shape = 's32[1]{0}', space=sflag, size = 0x4, scoped, tag = 'scoped memory for inception_aux_forward.1']
    #allocation4 [shape = 's32[1]{0}', space=sflag, size = 0x4, scoped, tag = 'scoped memory for inception_aux_forward.1']
    #allocation5 [shape = 'u8[4096]{0}', space=vmem, size = 0x1000, scoped, tag = 'input window, operand 2, single buffered']
    #allocation6 [shape = 's32[1]{0}', space=sflag, size = 0x4, scoped, tag = 'scoped memory for inception_aux_forward.1']
    #allocation7 [shape = 'u8[512]{0}', space=vmem, size = 0x400, scoped, tag = 'input window, operand 3, single buffered']
    #allocation8 [shape = 'u8[512]{0}', space=vmem, size = 0x400, scoped, tag = 'input window, operand 4, single buffered']
    #allocation9 [shape = 's32[1]{0}', space=sflag, size = 0x4, scoped, tag = 'scoped memory for inception_aux_forward.1']
    #allocation10 [shape = 'u8[4194304]{0}', space=vmem, size = 0x400000, scoped, tag = 'input window, operand 5, single buffered']
    #allocation11 [shape = 'u8[4096]{0}', space=vmem, size = 0x1000, scoped, tag = 'input window, operand 6, single buffered']
    #allocation12 [shape = 's32[1]{0}', space=sflag, size = 0x4, scoped, tag = 'scoped memory for inception_aux_forward.1']
    #allocation13 [shape = 'u8[512]{0}', space=vmem, size = 0x400, scoped, tag = 'input window, operand 8, single buffered']
    #allocation14 [shape = 'u8[1024]{0}', space=vmem, size = 0x400, scoped, tag = 'output window, operand 0, single buffered']
    %14 = vsyncpa [#allocation3], 0
    %15 = vsyncpa [#allocation6], 0
    %16 = vsyncpa [#allocation9], 0
    %17 = vsyncpa [#allocation12], 0
    %18 = vsyncpa [#allocation4], 0
    // Predicated region
    $region2: #{inception_aux_forward.1} parent=1 // pred_check
      _
    $region3: #{inception_aux_forward.1} parent=1 // pred_check_branch
      %20 = sbr.rel (0) target = $region5
    $region4: #{inception_aux_forward.1} parent=1 // pred_region
      _
    $region5: #{inception_aux_forward.1} parent=1 // pred_fallthru
      _
    // Predicated region
    $region6: #{inception_aux_forward.1} parent=1 // pred_check
      _
    $region7: #{inception_aux_forward.1} parent=1 // pred_check_branch
      %22 = sbr.rel (0) target = $region9
    $region8: #{inception_aux_forward.1} parent=1 // pred_region
      %s24 = ssub.s32 512, 512
      %25 = vsyncadd [#allocation3], %s24
      %s26 = sshll.u32 [#allocation2], 4
      %s27 = int_to_ptr.vmem [resolvable:$true] %s26
      %32 = dma.hbm_to_vmem [thread:$0]  %s1, 512, %s27, [#allocation3], 256, 256, 16
    $region9: #{inception_aux_forward.1} parent=1 // pred_fallthru
      _
    // Predicated region
    $region10: #{inception_aux_forward.1} parent=1 // pred_check
      _
    $region11: #{inception_aux_forward.1} parent=1 // pred_check_branch
      %34 = sbr.rel (0) target = $region13
    $region12: #{inception_aux_forward.1} parent=1 // pred_region
      %s36 = ssub.s32 128, 128
      %37 = vsyncadd [#allocation6], %s36
      %s39 = sshll.u32 [#allocation5], 4
      %s40 = int_to_ptr.vmem [resolvable:$true] %s39
      %42 = dma.hbm_to_vmem [thread:$0]  %s2, 128, %s40, [#allocation6]
    $region13: #{inception_aux_forward.1} parent=1 // pred_fallthru
      _
    // Predicated region
    $region14: #{inception_aux_forward.1} parent=1 // pred_check
      _
    $region15: #{inception_aux_forward.1} parent=1 // pred_check_branch
      %44 = sbr.rel (0) target = $region17
    $region16: #{inception_aux_forward.1} parent=1 // pred_region
      %s46 = ssub.s32 16, 16
      %47 = vsyncadd [#allocation6], %s46
      %s49 = sshll.u32 [#allocation7], 4
      %s50 = int_to_ptr.vmem [resolvable:$true] %s49
      %52 = dma.hbm_to_vmem [thread:$0]  %s3, 16, %s50, [#allocation6]
    $region17: #{inception_aux_forward.1} parent=1 // pred_fallthru
      _
    // Predicated region
    $region18: #{inception_aux_forward.1} parent=1 // pred_check
      _
    $region19: #{inception_aux_forward.1} parent=1 // pred_check_branch
      %54 = sbr.rel (0) target = $region21
    $region20: #{inception_aux_forward.1} parent=1 // pred_region
      %s56 = ssub.s32 16, 16
      %57 = vsyncadd [#allocation9], %s56
      %s59 = sshll.u32 [#allocation8], 4
      %s60 = int_to_ptr.vmem [resolvable:$true] %s59
      %62 = dma.hbm_to_vmem [thread:$0]  %s4, 16, %s60, [#allocation9]
    $region21: #{inception_aux_forward.1} parent=1 // pred_fallthru
      _
    // Predicated region
    $region22: #{inception_aux_forward.1} parent=1 // pred_check
      _
    $region23: #{inception_aux_forward.1} parent=1 // pred_check_branch
      %64 = sbr.rel (0) target = $region25
    $region24: #{inception_aux_forward.1} parent=1 // pred_region
      %s66 = ssub.s32 131072, 131072
      %67 = vsyncadd [#allocation9], %s66
      %s68 = sshll.u32 [#allocation10], 4
      %s69 = int_to_ptr.vmem [resolvable:$true] %s68
      %74 = dma.hbm_to_vmem [thread:$0]  %s5, 131072, %s69, [#allocation9], 512, 512, 32
    $region25: #{inception_aux_forward.1} parent=1 // pred_fallthru
      _
    // Predicated region
    $region26: #{inception_aux_forward.1} parent=1 // pred_check
      _
    $region27: #{inception_aux_forward.1} parent=1 // pred_check_branch
      %76 = sbr.rel (0) target = $region29
    $region28: #{inception_aux_forward.1} parent=1 // pred_region
      %s78 = ssub.s32 128, 128
      %79 = vsyncadd [#allocation12], %s78
      %s81 = sshll.u32 [#allocation11], 4
      %s82 = int_to_ptr.vmem [resolvable:$true] %s81
      %84 = dma.hbm_to_vmem [thread:$0]  %s6, 128, %s82, [#allocation12]
    $region29: #{inception_aux_forward.1} parent=1 // pred_fallthru
      _
    // Predicated region
    $region30: #{inception_aux_forward.1} parent=1 // pred_check
      _
    $region31: #{inception_aux_forward.1} parent=1 // pred_check_branch
      %86 = sbr.rel (0) target = $region33
    $region32: #{inception_aux_forward.1} parent=1 // pred_region
      _
    $region33: #{inception_aux_forward.1} parent=1 // pred_fallthru
      _
    // Predicated region
    $region34: #{inception_aux_forward.1} parent=1 // pred_check
      _
    $region35: #{inception_aux_forward.1} parent=1 // pred_check_branch
      %88 = sbr.rel (0) target = $region37
    $region36: #{inception_aux_forward.1} parent=1 // pred_region
      %s90 = ssub.s32 16, 16
      %91 = vsyncadd [#allocation12], %s90
      %s93 = sshll.u32 [#allocation13], 4
      %s94 = int_to_ptr.vmem [resolvable:$true] %s93
      %96 = dma.hbm_to_vmem [thread:$0]  %s8, 16, %s94, [#allocation12]
    $region37: #{inception_aux_forward.1} parent=1 // pred_fallthru
      _
    // Predicated region
    $region38: #{inception_aux_forward.1} parent=1 // pred_check
      _
    $region39: #{inception_aux_forward.1} parent=1 // pred_check_branch
      %98 = sbr.rel (0) target = $region41
    $region40: #{inception_aux_forward.1} parent=1 // pred_region
      %99 = dma.done [#allocation3], 512
    $region41: #{inception_aux_forward.1} parent=1 // pred_fallthru
      _
    // Predicated region
    $region42: #{inception_aux_forward.1} parent=1 // pred_check
      _
    $region43: #{inception_aux_forward.1} parent=1 // pred_check_branch
      %101 = sbr.rel (0) target = $region45
    $region44: #{inception_aux_forward.1} parent=1 // pred_region
      %102 = dma.done [#allocation6], 128
    $region45: #{inception_aux_forward.1} parent=1 // pred_fallthru
      _
    // Predicated region
    $region46: #{inception_aux_forward.1} parent=1 // pred_check
      _
    $region47: #{inception_aux_forward.1} parent=1 // pred_check_branch
      %104 = sbr.rel (0) target = $region49
    $region48: #{inception_aux_forward.1} parent=1 // pred_region
      %105 = dma.done [#allocation6], 16
    $region49: #{inception_aux_forward.1} parent=1 // pred_fallthru
      _
    // Predicated region
    $region50: #{inception_aux_forward.1} parent=1 // pred_check
      _
    $region51: #{inception_aux_forward.1} parent=1 // pred_check_branch
      %107 = sbr.rel (0) target = $region53
    $region52: #{inception_aux_forward.1} parent=1 // pred_region
      %108 = dma.done [#allocation9], 16
    $region53: #{inception_aux_forward.1} parent=1 // pred_fallthru
      _
    // Predicated region
    $region54: #{inception_aux_forward.1} parent=1 // pred_check
      _
    $region55: #{inception_aux_forward.1} parent=1 // pred_check_branch
      %110 = sbr.rel (0) target = $region57
    $region56: #{inception_aux_forward.1} parent=1 // pred_region
      %111 = dma.done [#allocation9], 131072
    $region57: #{inception_aux_forward.1} parent=1 // pred_fallthru
      _
    // Predicated region
    $region58: #{inception_aux_forward.1} parent=1 // pred_check
      _
    $region59: #{inception_aux_forward.1} parent=1 // pred_check_branch
      %113 = sbr.rel (0) target = $region61
    $region60: #{inception_aux_forward.1} parent=1 // pred_region
      %114 = dma.done [#allocation12], 128
    $region61: #{inception_aux_forward.1} parent=1 // pred_fallthru
      _
    // Predicated region
    $region62: #{inception_aux_forward.1} parent=1 // pred_check
      _
    $region63: #{inception_aux_forward.1} parent=1 // pred_check_branch
      %116 = sbr.rel (0) target = $region65
    $region64: #{inception_aux_forward.1} parent=1 // pred_region
      %117 = dma.done [#allocation12], 16
    $region65: #{inception_aux_forward.1} parent=1 // pred_fallthru
      _
    %v119 = vld [vmem:[#allocation2] sm:$0xff]
    %v120 = vld [vmem:[#allocation2 + $0x8] sm:$0xff]
    %v121 = vld [vmem:[#allocation2 + $0x10] sm:$0xff]
    %v122 = vld [vmem:[#allocation2 + $0x18] sm:$0xff]
    %v123 = vld [vmem:[#allocation5] sm:$0xff]
    %v124 = vld [vmem:[#allocation7] sm:$0x1]
    %v125 = vld [vmem:[#allocation8] sm:$0x1]
    %v126 = vld [vmem:[#allocation11] sm:$0xff]
    %v127 = vld [vmem:[%s7] sm:$0xff]
    %v128 = vld [vmem:[%s7 + $0x8] sm:$0xff]
    %v129 = vld [vmem:[%s7 + $0x10] sm:$0xff]
    %v130 = vld [vmem:[%s7 + $0x18] sm:$0xff]
    %v131 = vld [vmem:[%s7 + $0x20] sm:$0xff]
    %v132 = vld [vmem:[%s7 + $0x28] sm:$0xff]
    %v133 = vld [vmem:[%s7 + $0x30] sm:$0xff]
    %v134 = vld [vmem:[%s7 + $0x38] sm:$0xff]
    %v135 = vld [vmem:[%s7 + $0x40] sm:$0xff]
    %v136 = vld [vmem:[%s7 + $0x48] sm:$0xff]
    %v137 = vld [vmem:[%s7 + $0x50] sm:$0xff]
    %v138 = vld [vmem:[%s7 + $0x58] sm:$0xff]
    %v139 = vld [vmem:[%s7 + $0x60] sm:$0xff]
    %v140 = vld [vmem:[%s7 + $0x68] sm:$0xff]
    %v141 = vld [vmem:[%s7 + $0x70] sm:$0xff]
    %v142 = vld [vmem:[%s7 + $0x78] sm:$0xff]
    %v143 = vld [vmem:[%s7 + $0x80] sm:$0xff]
    %v144 = vld [vmem:[%s7 + $0x88] sm:$0xff]
    %v145 = vld [vmem:[%s7 + $0x90] sm:$0xff]
    %v146 = vld [vmem:[%s7 + $0x98] sm:$0xff]
    %v147 = vld [vmem:[%s7 + $0xa0] sm:$0xff]
    %v148 = vld [vmem:[%s7 + $0xa8] sm:$0xff]
    %v149 = vld [vmem:[%s7 + $0xb0] sm:$0xff]
    %v150 = vld [vmem:[%s7 + $0xb8] sm:$0xff]
    %v151 = vld [vmem:[%s7 + $0xc0] sm:$0xff]
    %v152 = vld [vmem:[%s7 + $0xc8] sm:$0xff]
    %v153 = vld [vmem:[%s7 + $0xd0] sm:$0xff]
    %v154 = vld [vmem:[%s7 + $0xd8] sm:$0xff]
    %v155 = vld [vmem:[%s7 + $0xe0] sm:$0xff]
    %v156 = vld [vmem:[%s7 + $0xe8] sm:$0xff]
    %v157 = vld [vmem:[%s7 + $0xf0] sm:$0xff]
    %v158 = vld [vmem:[%s7 + $0xf8] sm:$0xff]
    %v159 = vld [vmem:[%s7 + $0x100] sm:$0xff]
    %v160 = vld [vmem:[%s7 + $0x108] sm:$0xff]
    %v161 = vld [vmem:[%s7 + $0x110] sm:$0xff]
    %v162 = vld [vmem:[%s7 + $0x118] sm:$0xff]
    %v163 = vld [vmem:[%s7 + $0x120] sm:$0xff]
    %v164 = vld [vmem:[%s7 + $0x128] sm:$0xff]
    %v165 = vld [vmem:[%s7 + $0x130] sm:$0xff]
    %v166 = vld [vmem:[%s7 + $0x138] sm:$0xff]
    %v167 = vld [vmem:[%s7 + $0x140] sm:$0xff]
    %v168 = vld [vmem:[%s7 + $0x148] sm:$0xff]
    %v169 = vld [vmem:[%s7 + $0x150] sm:$0xff]
    %v170 = vld [vmem:[%s7 + $0x158] sm:$0xff]
    %v171 = vld [vmem:[%s7 + $0x160] sm:$0xff]
    %v172 = vld [vmem:[%s7 + $0x168] sm:$0xff]
    %v173 = vld [vmem:[%s7 + $0x170] sm:$0xff]
    %v174 = vld [vmem:[%s7 + $0x178] sm:$0xff]
    %v175 = vld [vmem:[%s7 + $0x180] sm:$0xff]
    %v176 = vld [vmem:[%s7 + $0x188] sm:$0xff]
    %v177 = vld [vmem:[%s7 + $0x190] sm:$0xff]
    %v178 = vld [vmem:[%s7 + $0x198] sm:$0xff]
    %v179 = vld [vmem:[%s7 + $0x1a0] sm:$0xff]
    %v180 = vld [vmem:[%s7 + $0x1a8] sm:$0xff]
    %v181 = vld [vmem:[%s7 + $0x1b0] sm:$0xff]
    %v182 = vld [vmem:[%s7 + $0x1b8] sm:$0xff]
    %v183 = vld [vmem:[%s7 + $0x1c0] sm:$0xff]
    %v184 = vld [vmem:[%s7 + $0x1c8] sm:$0xff]
    %v185 = vld [vmem:[%s7 + $0x1d0] sm:$0xff]
    %v186 = vld [vmem:[%s7 + $0x1d8] sm:$0xff]
    %v187 = vld [vmem:[%s7 + $0x1e0] sm:$0xff]
    %v188 = vld [vmem:[%s7 + $0x1e8] sm:$0xff]
    %v189 = vld [vmem:[%s7 + $0x1f0] sm:$0xff]
    %v190 = vld [vmem:[%s7 + $0x1f8] sm:$0xff]
    %v191 = vld [vmem:[%s7 + $0x200] sm:$0xff]
    %v192 = vld [vmem:[%s7 + $0x208] sm:$0xff]
    %v193 = vld [vmem:[%s7 + $0x210] sm:$0xff]
    %v194 = vld [vmem:[%s7 + $0x218] sm:$0xff]
    %v195 = vld [vmem:[%s7 + $0x220] sm:$0xff]
    %v196 = vld [vmem:[%s7 + $0x228] sm:$0xff]
    %v197 = vld [vmem:[%s7 + $0x230] sm:$0xff]
    %v198 = vld [vmem:[%s7 + $0x238] sm:$0xff]
    %v199 = vld [vmem:[%s7 + $0x240] sm:$0xff]
    %v200 = vld [vmem:[%s7 + $0x248] sm:$0xff]
    %v201 = vld [vmem:[%s7 + $0x250] sm:$0xff]
    %v202 = vld [vmem:[%s7 + $0x258] sm:$0xff]
    %v203 = vld [vmem:[%s7 + $0x260] sm:$0xff]
    %v204 = vld [vmem:[%s7 + $0x268] sm:$0xff]
    %v205 = vld [vmem:[%s7 + $0x270] sm:$0xff]
    %v206 = vld [vmem:[%s7 + $0x278] sm:$0xff]
    %v207 = vld [vmem:[%s7 + $0x280] sm:$0xff]
    %v208 = vld [vmem:[%s7 + $0x288] sm:$0xff]
    %v209 = vld [vmem:[%s7 + $0x290] sm:$0xff]
    %v210 = vld [vmem:[%s7 + $0x298] sm:$0xff]
    %v211 = vld [vmem:[%s7 + $0x2a0] sm:$0xff]
    %v212 = vld [vmem:[%s7 + $0x2a8] sm:$0xff]
    %v213 = vld [vmem:[%s7 + $0x2b0] sm:$0xff]
    %v214 = vld [vmem:[%s7 + $0x2b8] sm:$0xff]
    %v215 = vld [vmem:[%s7 + $0x2c0] sm:$0xff]
    %v216 = vld [vmem:[%s7 + $0x2c8] sm:$0xff]
    %v217 = vld [vmem:[%s7 + $0x2d0] sm:$0xff]
    %v218 = vld [vmem:[%s7 + $0x2d8] sm:$0xff]
    %v219 = vld [vmem:[%s7 + $0x2e0] sm:$0xff]
    %v220 = vld [vmem:[%s7 + $0x2e8] sm:$0xff]
    %v221 = vld [vmem:[%s7 + $0x2f0] sm:$0xff]
    %v222 = vld [vmem:[%s7 + $0x2f8] sm:$0xff]
    %v223 = vld [vmem:[%s7 + $0x300] sm:$0xff]
    %v224 = vld [vmem:[%s7 + $0x308] sm:$0xff]
    %v225 = vld [vmem:[%s7 + $0x310] sm:$0xff]
    %v226 = vld [vmem:[%s7 + $0x318] sm:$0xff]
    %v227 = vld [vmem:[%s7 + $0x320] sm:$0xff]
    %v228 = vld [vmem:[%s7 + $0x328] sm:$0xff]
    %v229 = vld [vmem:[%s7 + $0x330] sm:$0xff]
    %v230 = vld [vmem:[%s7 + $0x338] sm:$0xff]
    %v231 = vld [vmem:[%s7 + $0x340] sm:$0xff]
    %v232 = vld [vmem:[%s7 + $0x348] sm:$0xff]
    %v233 = vld [vmem:[%s7 + $0x350] sm:$0xff]
    %v234 = vld [vmem:[%s7 + $0x358] sm:$0xff]
    %v235 = vld [vmem:[%s7 + $0x360] sm:$0xff]
    %v236 = vld [vmem:[%s7 + $0x368] sm:$0xff]
    %v237 = vld [vmem:[%s7 + $0x370] sm:$0xff]
    %v238 = vld [vmem:[%s7 + $0x378] sm:$0xff]
    %v239 = vld [vmem:[%s7 + $0x380] sm:$0xff]
    %v240 = vld [vmem:[%s7 + $0x388] sm:$0xff]
    %v241 = vld [vmem:[%s7 + $0x390] sm:$0xff]
    %v242 = vld [vmem:[%s7 + $0x398] sm:$0xff]
    %v243 = vld [vmem:[%s7 + $0x3a0] sm:$0xff]
    %v244 = vld [vmem:[%s7 + $0x3a8] sm:$0xff]
    %v245 = vld [vmem:[%s7 + $0x3b0] sm:$0xff]
    %v246 = vld [vmem:[%s7 + $0x3b8] sm:$0xff]
    %v247 = vld [vmem:[%s7 + $0x3c0] sm:$0xff]
    %v248 = vld [vmem:[%s7 + $0x3c8] sm:$0xff]
    %v249 = vld [vmem:[%s7 + $0x3d0] sm:$0xff]
    %v250 = vld [vmem:[%s7 + $0x3d8] sm:$0xff]
    %v251 = vld [vmem:[%s7 + $0x3e0] sm:$0xff]
    %v252 = vld [vmem:[%s7 + $0x3e8] sm:$0xff]
    %v253 = vld [vmem:[%s7 + $0x3f0] sm:$0xff]
    %v254 = vld [vmem:[%s7 + $0x3f8] sm:$0xff]
    %v255 = vld [vmem:[#allocation13] sm:$0x1]
    %v256 = vld [vmem:[%s0] sm:$0xff]
    %v257 = vld [vmem:[%s0 + $0x8] sm:$0xff]
    %v258 = vld [vmem:[%s0 + $0x10] sm:$0xff]
    %v259 = vld [vmem:[%s0 + $0x18] sm:$0xff]
    %v260 = vld [vmem:[%s0 + $0x20] sm:$0xff]
    %v261 = vld [vmem:[%s0 + $0x28] sm:$0xff]
    %v262 = vld [vmem:[%s0 + $0x30] sm:$0xff]
    %v263 = vld [vmem:[%s0 + $0x38] sm:$0xff]
    %v264 = vld [vmem:[%s0 + $0x40] sm:$0xff]
    %v265 = vld [vmem:[%s0 + $0x48] sm:$0xff]
    %v266 = vld [vmem:[%s0 + $0x50] sm:$0xff]
    %v267 = vld [vmem:[%s0 + $0x58] sm:$0xff]
    %v268 = vld [vmem:[%s0 + $0x60] sm:$0xff]
    %v269 = vld [vmem:[%s0 + $0x68] sm:$0xff]
    %v270 = vld [vmem:[%s0 + $0x70] sm:$0xff]
    %v271 = vld [vmem:[%s0 + $0x78] sm:$0xff]
    %v272 = vld [vmem:[%s0 + $0x80] sm:$0xff]
    %v273 = vld [vmem:[%s0 + $0x88] sm:$0xff]
    %v274 = vld [vmem:[%s0 + $0x90] sm:$0xff]
    %v275 = vld [vmem:[%s0 + $0x98] sm:$0xff]
    %v276 = vld [vmem:[%s0 + $0xa0] sm:$0xff]
    %v277 = vld [vmem:[%s0 + $0xa8] sm:$0xff]
    %v278 = vld [vmem:[%s0 + $0xb0] sm:$0xff]
    %v279 = vld [vmem:[%s0 + $0xb8] sm:$0xff]
    %v280 = vld [vmem:[%s0 + $0xc0] sm:$0xf]
    %vm281 = vcmask 556032
    %v283 = vsel %vm281, %v120, 0
    %v286 = vsel %vm281, %v122, 0
    %vm288 = vcmask 1043456
    %v290 = vsel %vm288, %v280, 0
    %292 = vmatprep.subr.mxu0 0.0
    %293 = vmatpush1.msra.mxu0 %v256
    %294 = vmatprep.subr.mxu0 0.0
    %295 = vmatpush1.msra.mxu0 %v257
    %296 = vmatprep.subr.mxu0 0.0
    %297 = vmatpush1.msra.mxu0 %v258
    %298 = vmatprep.subr.mxu0 0.0
    %299 = vmatpush1.msra.mxu0 %v259
    %300 = vmatprep.subr.mxu0 0.0
    %301 = vmatpush1.msra.mxu0 %v260
    %302 = vmatprep.subr.mxu0 0.0
    %303 = vmatpush1.msra.mxu0 %v261
    %304 = vmatprep.subr.mxu0 0.0
    %305 = vmatpush1.msra.mxu0 %v262
    %306 = vmatprep.subr.mxu0 0.0
    %307 = vmatpush1.msra.mxu0 %v263
    %308 = vmatprep.subr.mxu0 0.0
    %309 = vmatpush1.msra.mxu0 %v264
    %310 = vmatprep.subr.mxu0 0.0
    %311 = vmatpush1.msra.mxu0 %v265
    %312 = vmatprep.subr.mxu0 0.0
    %313 = vmatpush1.msra.mxu0 %v266
    %314 = vmatprep.subr.mxu0 0.0
    %315 = vmatpush1.msra.mxu0 %v267
    %316 = vmatprep.subr.mxu0 0.0
    %317 = vmatpush1.msra.mxu0 %v268
    %318 = vmatprep.subr.mxu0 0.0
    %319 = vmatpush1.msra.mxu0 %v269
    %320 = vmatprep.subr.mxu0 0.0
    %321 = vmatpush1.msra.mxu0 %v270
    %322 = vmatprep.subr.mxu0 0.0
    %323 = vmatpush1.msra.mxu0 %v271
    %324 = vmatprep.subr.mxu0 0.0
    %325 = vmatpush1.msra.mxu0 %v272
    %326 = vmatprep.subr.mxu0 0.0
    %327 = vmatpush1.msra.mxu0 %v273
    %328 = vmatprep.subr.mxu0 0.0
    %329 = vmatpush1.msra.mxu0 %v274
    %330 = vmatprep.subr.mxu0 0.0
    %331 = vmatpush1.msra.mxu0 %v275
    %332 = vmatprep.subr.mxu0 0.0
    %333 = vmatpush1.msra.mxu0 %v276
    %334 = vmatprep.subr.mxu0 0.0
    %335 = vmatpush1.msra.mxu0 %v277
    %336 = vmatprep.subr.mxu0 0.0
    %337 = vmatpush1.msra.mxu0 %v278
    %338 = vmatprep.subr.mxu0 0.0
    %339 = vmatpush1.msra.mxu0 %v279
    %340 = vmatprep.subr.mxu0 0.0
    %341 = vmatpush1.msra.mxu0 %v290
    %342 = vmatprep.subr.mxu0 0.0
    %343 = vmatpush1.msra.mxu0 0.0
    %344 = vmatprep.subr.mxu0 0.0
    %345 = vmatpush1.msra.mxu0 0.0
    %346 = vmatprep.subr.mxu0 0.0
    %347 = vmatpush1.msra.mxu0 0.0
    %348 = vmatprep.subr.mxu0 0.0
    %349 = vmatpush1.msra.mxu0 0.0
    %350 = vmatprep.subr.mxu0 0.0
    %351 = vmatpush1.msra.mxu0 0.0
    %352 = vmatprep.subr.mxu0 0.0
    %353 = vmatpush1.msra.mxu0 0.0
    %354 = vmatprep.subr.mxu0 0.0
    %355 = vmatpush1.msra.mxu0 0.0
    %356 = vmatprep.mubr.f32.mxu0 %v283
    %357 = vmatmul.mubr.f32.gmra.mrb[0].mxu0 %v119
    %v358 = vpop.f32.mrb[0].mxu0
    %v359 = vadd.f32 0.0, %v358
    %v360 = vpop.f32.mrb[0].mxu0
    %361 = vmatprep.mubr.f32.mxu0 %v286
    %362 = vmatmul.mubr.f32.gmra.mrb[0].mxu0 %v121
    %v363 = vpop.f32.mrb[0].mxu0
    %v364 = vadd.f32 0.0, %v363
    %v365 = vpop.f32.mrb[0].mxu0
    %366 = vdwg.mxu0
    %vm367 = vcmask 64512
    %v369 = vsel %vm367, %v359, 0
    %v372 = vsel %vm367, %v364, 0
    %374 = vmatprep.subr.mxu0 0.0
    %375 = vmatpush1.msra.mxu0 %v123
    %376 = vmatprep.subr.mxu0 0.0
    %377 = vmatpush1.msra.mxu0 0.0
    %378 = vmatprep.subr.mxu0 0.0
    %379 = vmatpush1.msra.mxu0 0.0
    %380 = vmatprep.subr.mxu0 0.0
    %381 = vmatpush1.msra.mxu0 0.0
    %382 = vmatprep.subr.mxu0 0.0
    %383 = vmatpush1.msra.mxu0 0.0
    %384 = vmatprep.subr.mxu0 0.0
    %385 = vmatpush1.msra.mxu0 0.0
    %386 = vmatprep.subr.mxu0 0.0
    %387 = vmatpush1.msra.mxu0 0.0
    %388 = vmatprep.subr.mxu0 0.0
    %389 = vmatpush1.msra.mxu0 0.0
    %390 = vmatprep.subr.mxu0 0.0
    %391 = vmatpush1.msra.mxu0 0.0
    %392 = vmatprep.subr.mxu0 0.0
    %393 = vmatpush1.msra.mxu0 0.0
    %394 = vmatprep.subr.mxu0 0.0
    %395 = vmatpush1.msra.mxu0 0.0
    %396 = vmatprep.subr.mxu0 0.0
    %397 = vmatpush1.msra.mxu0 0.0
    %398 = vmatprep.subr.mxu0 0.0
    %399 = vmatpush1.msra.mxu0 0.0
    %400 = vmatprep.subr.mxu0 0.0
    %401 = vmatpush1.msra.mxu0 0.0
    %402 = vmatprep.subr.mxu0 0.0
    %403 = vmatpush1.msra.mxu0 0.0
    %404 = vmatprep.subr.mxu0 0.0
    %405 = vmatpush1.msra.mxu0 0.0
    %406 = vmatprep.subr.mxu0 0.0
    %407 = vmatpush1.msra.mxu0 0.0
    %408 = vmatprep.subr.mxu0 0.0
    %409 = vmatpush1.msra.mxu0 0.0
    %410 = vmatprep.subr.mxu0 0.0
    %411 = vmatpush1.msra.mxu0 0.0
    %412 = vmatprep.subr.mxu0 0.0
    %413 = vmatpush1.msra.mxu0 0.0
    %414 = vmatprep.subr.mxu0 0.0
    %415 = vmatpush1.msra.mxu0 0.0
    %416 = vmatprep.subr.mxu0 0.0
    %417 = vmatpush1.msra.mxu0 0.0
    %418 = vmatprep.subr.mxu0 0.0
    %419 = vmatpush1.msra.mxu0 0.0
    %420 = vmatprep.subr.mxu0 0.0
    %421 = vmatpush1.msra.mxu0 0.0
    %422 = vmatprep.subr.mxu0 0.0
    %423 = vmatpush1.msra.mxu0 0.0
    %424 = vmatprep.subr.mxu0 0.0
    %425 = vmatpush1.msra.mxu0 0.0
    %426 = vmatprep.subr.mxu0 0.0
    %427 = vmatpush1.msra.mxu0 0.0
    %428 = vmatprep.subr.mxu0 0.0
    %429 = vmatpush1.msra.mxu0 0.0
    %430 = vmatprep.subr.mxu0 0.0
    %431 = vmatpush1.msra.mxu0 0.0
    %432 = vmatprep.subr.mxu0 0.0
    %433 = vmatpush1.msra.mxu0 0.0
    %434 = vmatprep.subr.mxu0 0.0
    %435 = vmatpush1.msra.mxu0 0.0
    %436 = vmatprep.subr.mxu0 0.0
    %437 = vmatpush1.msra.mxu0 0.0
    %438 = vmatprep.mubr.f32.mxu0 0.0
    %439 = vmatmul.mubr.f32.gmra.mrb[0].mxu0 %v369
    %v440 = vpop.f32.mrb[0].mxu0
    %v441 = vadd.f32 0.0, %v440
    %v442 = vpop.f32.mrb[0].mxu0
    %443 = vmatprep.mubr.f32.mxu0 0.0
    %444 = vmatmul.mubr.f32.gmra.mrb[0].mxu0 %v372
    %v445 = vpop.f32.mrb[0].mxu0
    %v446 = vadd.f32 0.0, %v445
    %v447 = vpop.f32.mrb[0].mxu0
    %448 = vdwg.mxu0
    %v450 = vlaneseq
    %v451 = vshrl.u32 %v450, 7
    %v452 = vsub.s32 0, %v451
    %v453 = vrot.slane %v124, %v452
    %v455 = vmul.f32 %v441, %v453
    %v456 = vmul.f32 %v446, %v453
    %v458 = vlaneseq
    %v459 = vshrl.u32 %v458, 7
    %v460 = vsub.s32 0, %v459
    %v461 = vrot.slane %v125, %v460
    %v463 = vadd.f32 %v455, %v461
    %v464 = vadd.f32 %v456, %v461
    %v465 = vmax.f32 %v463, 0.0
    %v466 = vmax.f32 %v464, 0.0
    %s467 = scalar_lea.vmem %s0, 200
    %v468 = vld [vmem:[%s467] sm:$0xff]
    %v469 = vld [vmem:[%s467 + $0x8] sm:$0xff]
    %v470 = vld [vmem:[%s467 + $0x10] sm:$0xff]
    %v471 = vld [vmem:[%s467 + $0x18] sm:$0xff]
    %v472 = vld [vmem:[%s467 + $0x20] sm:$0xff]
    %v473 = vld [vmem:[%s467 + $0x28] sm:$0xff]
    %v474 = vld [vmem:[%s467 + $0x30] sm:$0xff]
    %v475 = vld [vmem:[%s467 + $0x38] sm:$0xff]
    %v476 = vld [vmem:[%s467 + $0x40] sm:$0xff]
    %v477 = vld [vmem:[%s467 + $0x48] sm:$0xff]
    %v478 = vld [vmem:[%s467 + $0x50] sm:$0xff]
    %v479 = vld [vmem:[%s467 + $0x58] sm:$0xff]
    %v480 = vld [vmem:[%s467 + $0x60] sm:$0xff]
    %v481 = vld [vmem:[%s467 + $0x68] sm:$0xff]
    %v482 = vld [vmem:[%s467 + $0x70] sm:$0xff]
    %v483 = vld [vmem:[%s467 + $0x78] sm:$0xff]
    %v484 = vld [vmem:[%s467 + $0x80] sm:$0xff]
    %v485 = vld [vmem:[%s467 + $0x88] sm:$0xff]
    %v486 = vld [vmem:[%s467 + $0x90] sm:$0xff]
    %v487 = vld [vmem:[%s467 + $0x98] sm:$0xff]
    %v488 = vld [vmem:[%s467 + $0xa0] sm:$0xff]
    %v489 = vld [vmem:[%s467 + $0xa8] sm:$0xff]
    %v490 = vld [vmem:[%s467 + $0xb0] sm:$0xff]
    %v491 = vld [vmem:[%s467 + $0xb8] sm:$0xff]
    %v492 = vld [vmem:[%s467 + $0xc0] sm:$0xf]
    %v494 = vsel %vm288, %v492, 0
    %496 = vmatprep.subr.mxu0 0.0
    %497 = vmatpush1.msra.mxu0 %v468
    %498 = vmatprep.subr.mxu0 0.0
    %499 = vmatpush1.msra.mxu0 %v469
    %500 = vmatprep.subr.mxu0 0.0
    %501 = vmatpush1.msra.mxu0 %v470
    %502 = vmatprep.subr.mxu0 0.0
    %503 = vmatpush1.msra.mxu0 %v471
    %504 = vmatprep.subr.mxu0 0.0
    %505 = vmatpush1.msra.mxu0 %v472
    %506 = vmatprep.subr.mxu0 0.0
    %507 = vmatpush1.msra.mxu0 %v473
    %508 = vmatprep.subr.mxu0 0.0
    %509 = vmatpush1.msra.mxu0 %v474
    %510 = vmatprep.subr.mxu0 0.0
    %511 = vmatpush1.msra.mxu0 %v475
    %512 = vmatprep.subr.mxu0 0.0
    %513 = vmatpush1.msra.mxu0 %v476
    %514 = vmatprep.subr.mxu0 0.0
    %515 = vmatpush1.msra.mxu0 %v477
    %516 = vmatprep.subr.mxu0 0.0
    %517 = vmatpush1.msra.mxu0 %v478
    %518 = vmatprep.subr.mxu0 0.0
    %519 = vmatpush1.msra.mxu0 %v479
    %520 = vmatprep.subr.mxu0 0.0
    %521 = vmatpush1.msra.mxu0 %v480
    %522 = vmatprep.subr.mxu0 0.0
    %523 = vmatpush1.msra.mxu0 %v481
    %524 = vmatprep.subr.mxu0 0.0
    %525 = vmatpush1.msra.mxu0 %v482
    %526 = vmatprep.subr.mxu0 0.0
    %527 = vmatpush1.msra.mxu0 %v483
    %528 = vmatprep.subr.mxu0 0.0
    %529 = vmatpush1.msra.mxu0 %v484
    %530 = vmatprep.subr.mxu0 0.0
    %531 = vmatpush1.msra.mxu0 %v485
    %532 = vmatprep.subr.mxu0 0.0
    %533 = vmatpush1.msra.mxu0 %v486
    %534 = vmatprep.subr.mxu0 0.0
    %535 = vmatpush1.msra.mxu0 %v487
    %536 = vmatprep.subr.mxu0 0.0
    %537 = vmatpush1.msra.mxu0 %v488
    %538 = vmatprep.subr.mxu0 0.0
    %539 = vmatpush1.msra.mxu0 %v489
    %540 = vmatprep.subr.mxu0 0.0
    %541 = vmatpush1.msra.mxu0 %v490
    %542 = vmatprep.subr.mxu0 0.0
    %543 = vmatpush1.msra.mxu0 %v491
    %544 = vmatprep.subr.mxu0 0.0
    %545 = vmatpush1.msra.mxu0 %v494
    %546 = vmatprep.subr.mxu0 0.0
    %547 = vmatpush1.msra.mxu0 0.0
    %548 = vmatprep.subr.mxu0 0.0
    %549 = vmatpush1.msra.mxu0 0.0
    %550 = vmatprep.subr.mxu0 0.0
    %551 = vmatpush1.msra.mxu0 0.0
    %552 = vmatprep.subr.mxu0 0.0
    %553 = vmatpush1.msra.mxu0 0.0
    %554 = vmatprep.subr.mxu0 0.0
    %555 = vmatpush1.msra.mxu0 0.0
    %556 = vmatprep.subr.mxu0 0.0
    %557 = vmatpush1.msra.mxu0 0.0
    %558 = vmatprep.subr.mxu0 0.0
    %559 = vmatpush1.msra.mxu0 0.0
    %560 = vmatprep.mubr.f32.mxu0 %v283
    %561 = vmatmul.mubr.f32.gmra.mrb[0].mxu0 %v119
    %v562 = vpop.f32.mrb[0].mxu0
    %v563 = vadd.f32 0.0, %v562
    %v564 = vpop.f32.mrb[0].mxu0
    %565 = vmatprep.mubr.f32.mxu0 %v286
    %566 = vmatmul.mubr.f32.gmra.mrb[0].mxu0 %v121
    %v567 = vpop.f32.mrb[0].mxu0
    %v568 = vadd.f32 0.0, %v567
    %v569 = vpop.f32.mrb[0].mxu0
    %570 = vdwg.mxu0
    %v572 = vsel %vm367, %v563, 0
    %v575 = vsel %vm367, %v568, 0
    %577 = vmatprep.subr.mxu0 0.0
    %578 = vmatpush1.msra.mxu0 %v123
    %579 = vmatprep.subr.mxu0 0.0
    %580 = vmatpush1.msra.mxu0 0.0
    %581 = vmatprep.subr.mxu0 0.0
    %582 = vmatpush1.msra.mxu0 0.0
    %583 = vmatprep.subr.mxu0 0.0
    %584 = vmatpush1.msra.mxu0 0.0
    %585 = vmatprep.subr.mxu0 0.0
    %586 = vmatpush1.msra.mxu0 0.0
    %587 = vmatprep.subr.mxu0 0.0
    %588 = vmatpush1.msra.mxu0 0.0
    %589 = vmatprep.subr.mxu0 0.0
    %590 = vmatpush1.msra.mxu0 0.0
    %591 = vmatprep.subr.mxu0 0.0
    %592 = vmatpush1.msra.mxu0 0.0
    %593 = vmatprep.subr.mxu0 0.0
    %594 = vmatpush1.msra.mxu0 0.0
    %595 = vmatprep.subr.mxu0 0.0
    %596 = vmatpush1.msra.mxu0 0.0
    %597 = vmatprep.subr.mxu0 0.0
    %598 = vmatpush1.msra.mxu0 0.0
    %599 = vmatprep.subr.mxu0 0.0
    %600 = vmatpush1.msra.mxu0 0.0
    %601 = vmatprep.subr.mxu0 0.0
    %602 = vmatpush1.msra.mxu0 0.0
    %603 = vmatprep.subr.mxu0 0.0
    %604 = vmatpush1.msra.mxu0 0.0
    %605 = vmatprep.subr.mxu0 0.0
    %606 = vmatpush1.msra.mxu0 0.0
    %607 = vmatprep.subr.mxu0 0.0
    %608 = vmatpush1.msra.mxu0 0.0
    %609 = vmatprep.subr.mxu0 0.0
    %610 = vmatpush1.msra.mxu0 0.0
    %611 = vmatprep.subr.mxu0 0.0
    %612 = vmatpush1.msra.mxu0 0.0
    %613 = vmatprep.subr.mxu0 0.0
    %614 = vmatpush1.msra.mxu0 0.0
    %615 = vmatprep.subr.mxu0 0.0
    %616 = vmatpush1.msra.mxu0 0.0
    %617 = vmatprep.subr.mxu0 0.0
    %618 = vmatpush1.msra.mxu0 0.0
    %619 = vmatprep.subr.mxu0 0.0
    %620 = vmatpush1.msra.mxu0 0.0
    %621 = vmatprep.subr.mxu0 0.0
    %622 = vmatpush1.msra.mxu0 0.0
    %623 = vmatprep.subr.mxu0 0.0
    %624 = vmatpush1.msra.mxu0 0.0
    %625 = vmatprep.subr.mxu0 0.0
    %626 = vmatpush1.msra.mxu0 0.0
    %627 = vmatprep.subr.mxu0 0.0
    %628 = vmatpush1.msra.mxu0 0.0
    %629 = vmatprep.subr.mxu0 0.0
    %630 = vmatpush1.msra.mxu0 0.0
    %631 = vmatprep.subr.mxu0 0.0
    %632 = vmatpush1.msra.mxu0 0.0
    %633 = vmatprep.subr.mxu0 0.0
    %634 = vmatpush1.msra.mxu0 0.0
    %635 = vmatprep.subr.mxu0 0.0
    %636 = vmatpush1.msra.mxu0 0.0
    %637 = vmatprep.subr.mxu0 0.0
    %638 = vmatpush1.msra.mxu0 0.0
    %639 = vmatprep.subr.mxu0 0.0
    %640 = vmatpush1.msra.mxu0 0.0
    %641 = vmatprep.mubr.f32.mxu0 0.0
    %642 = vmatmul.mubr.f32.gmra.mrb[0].mxu0 %v572
    %v643 = vpop.f32.mrb[0].mxu0
    %v644 = vadd.f32 0.0, %v643
    %v645 = vpop.f32.mrb[0].mxu0
    %646 = vmatprep.mubr.f32.mxu0 0.0
    %647 = vmatmul.mubr.f32.gmra.mrb[0].mxu0 %v575
    %v648 = vpop.f32.mrb[0].mxu0
    %v649 = vadd.f32 0.0, %v648
    %v650 = vpop.f32.mrb[0].mxu0
    %651 = vdwg.mxu0
    %v652 = vmul.f32 %v644, %v453
    %v653 = vmul.f32 %v649, %v453
    %v654 = vadd.f32 %v652, %v461
    %v655 = vadd.f32 %v653, %v461
    %v656 = vmax.f32 %v654, 0.0
    %v657 = vmax.f32 %v655, 0.0
    %v658 = vld [vmem:[#allocation10] sm:$0xff]
    %v659 = vld [vmem:[#allocation10 + $0x8] sm:$0xff]
    %v660 = vld [vmem:[#allocation10 + $0x10] sm:$0xff]
    %v661 = vld [vmem:[#allocation10 + $0x18] sm:$0xff]
    %v662 = vld [vmem:[#allocation10 + $0x20] sm:$0xff]
    %v663 = vld [vmem:[#allocation10 + $0x28] sm:$0xff]
    %v664 = vld [vmem:[#allocation10 + $0x30] sm:$0xff]
    %v665 = vld [vmem:[#allocation10 + $0x38] sm:$0xff]
    %v666 = vld [vmem:[#allocation10 + $0x40] sm:$0xff]
    %v667 = vld [vmem:[#allocation10 + $0x48] sm:$0xff]
    %v668 = vld [vmem:[#allocation10 + $0x50] sm:$0xff]
    %v669 = vld [vmem:[#allocation10 + $0x58] sm:$0xff]
    %v670 = vld [vmem:[#allocation10 + $0x60] sm:$0xff]
    %v671 = vld [vmem:[#allocation10 + $0x68] sm:$0xff]
    %v672 = vld [vmem:[#allocation10 + $0x70] sm:$0xff]
    %v673 = vld [vmem:[#allocation10 + $0x78] sm:$0xff]
    %v674 = vld [vmem:[#allocation10 + $0x80] sm:$0xff]
    %v675 = vld [vmem:[#allocation10 + $0x88] sm:$0xff]
    %v676 = vld [vmem:[#allocation10 + $0x90] sm:$0xff]
    %v677 = vld [vmem:[#allocation10 + $0x98] sm:$0xff]
    %v678 = vld [vmem:[#allocation10 + $0xa0] sm:$0xff]
    %v679 = vld [vmem:[#allocation10 + $0xa8] sm:$0xff]
    %v680 = vld [vmem:[#allocation10 + $0xb0] sm:$0xff]
    %v681 = vld [vmem:[#allocation10 + $0xb8] sm:$0xff]
    %v682 = vld [vmem:[#allocation10 + $0xc0] sm:$0xff]
    %v683 = vld [vmem:[#allocation10 + $0xc8] sm:$0xff]
    %v684 = vld [vmem:[#allocation10 + $0xd0] sm:$0xff]
    %v685 = vld [vmem:[#allocation10 + $0xd8] sm:$0xff]
    %v686 = vld [vmem:[#allocation10 + $0xe0] sm:$0xff]
    %v687 = vld [vmem:[#allocation10 + $0xe8] sm:$0xff]
    %v688 = vld [vmem:[#allocation10 + $0xf0] sm:$0xff]
    %v689 = vld [vmem:[#allocation10 + $0xf8] sm:$0xff]
    %v690 = vld [vmem:[#allocation10 + $0x100] sm:$0xff]
    %v691 = vld [vmem:[#allocation10 + $0x108] sm:$0xff]
    %v692 = vld [vmem:[#allocation10 + $0x110] sm:$0xff]
    %v693 = vld [vmem:[#allocation10 + $0x118] sm:$0xff]
    %v694 = vld [vmem:[#allocation10 + $0x120] sm:$0xff]
    %v695 = vld [vmem:[#allocation10 + $0x128] sm:$0xff]
    %v696 = vld [vmem:[#allocation10 + $0x130] sm:$0xff]
    %v697 = vld [vmem:[#allocation10 + $0x138] sm:$0xff]
    %v698 = vld [vmem:[#allocation10 + $0x140] sm:$0xff]
    %v699 = vld [vmem:[#allocation10 + $0x148] sm:$0xff]
    %v700 = vld [vmem:[#allocation10 + $0x150] sm:$0xff]
    %v701 = vld [vmem:[#allocation10 + $0x158] sm:$0xff]
    %v702 = vld [vmem:[#allocation10 + $0x160] sm:$0xff]
    %v703 = vld [vmem:[#allocation10 + $0x168] sm:$0xff]
    %v704 = vld [vmem:[#allocation10 + $0x170] sm:$0xff]
    %v705 = vld [vmem:[#allocation10 + $0x178] sm:$0xff]
    %v706 = vld [vmem:[#allocation10 + $0x180] sm:$0xff]
    %v707 = vld [vmem:[#allocation10 + $0x188] sm:$0xff]
    %v708 = vld [vmem:[#allocation10 + $0x190] sm:$0xff]
    %v709 = vld [vmem:[#allocation10 + $0x198] sm:$0xff]
    %v710 = vld [vmem:[#allocation10 + $0x1a0] sm:$0xff]
    %v711 = vld [vmem:[#allocation10 + $0x1a8] sm:$0xff]
    %v712 = vld [vmem:[#allocation10 + $0x1b0] sm:$0xff]
    %v713 = vld [vmem:[#allocation10 + $0x1b8] sm:$0xff]
    %v714 = vld [vmem:[#allocation10 + $0x1c0] sm:$0xff]
    %v715 = vld [vmem:[#allocation10 + $0x1c8] sm:$0xff]
    %v716 = vld [vmem:[#allocation10 + $0x1d0] sm:$0xff]
    %v717 = vld [vmem:[#allocation10 + $0x1d8] sm:$0xff]
    %v718 = vld [vmem:[#allocation10 + $0x1e0] sm:$0xff]
    %v719 = vld [vmem:[#allocation10 + $0x1e8] sm:$0xff]
    %v720 = vld [vmem:[#allocation10 + $0x1f0] sm:$0xff]
    %v721 = vld [vmem:[#allocation10 + $0x1f8] sm:$0xff]
    %v722 = vpack.c.bf16 %v465, %v465
    %v723 = vpack.c.bf16 %v656, %v656
    %v724 = vld [vmem:[#allocation10 + $0x200] sm:$0xff]
    %v725 = vld [vmem:[#allocation10 + $0x208] sm:$0xff]
    %v726 = vld [vmem:[#allocation10 + $0x210] sm:$0xff]
    %v727 = vld [vmem:[#allocation10 + $0x218] sm:$0xff]
    %v728 = vld [vmem:[#allocation10 + $0x220] sm:$0xff]
    %v729 = vld [vmem:[#allocation10 + $0x228] sm:$0xff]
    %v730 = vld [vmem:[#allocation10 + $0x230] sm:$0xff]
    %v731 = vld [vmem:[#allocation10 + $0x238] sm:$0xff]
    %v732 = vld [vmem:[#allocation10 + $0x240] sm:$0xff]
    %v733 = vld [vmem:[#allocation10 + $0x248] sm:$0xff]
    %v734 = vld [vmem:[#allocation10 + $0x250] sm:$0xff]
    %v735 = vld [vmem:[#allocation10 + $0x258] sm:$0xff]
    %v736 = vld [vmem:[#allocation10 + $0x260] sm:$0xff]
    %v737 = vld [vmem:[#allocation10 + $0x268] sm:$0xff]
    %v738 = vld [vmem:[#allocation10 + $0x270] sm:$0xff]
    %v739 = vld [vmem:[#allocation10 + $0x278] sm:$0xff]
    %v740 = vld [vmem:[#allocation10 + $0x280] sm:$0xff]
    %v741 = vld [vmem:[#allocation10 + $0x288] sm:$0xff]
    %v742 = vld [vmem:[#allocation10 + $0x290] sm:$0xff]
    %v743 = vld [vmem:[#allocation10 + $0x298] sm:$0xff]
    %v744 = vld [vmem:[#allocation10 + $0x2a0] sm:$0xff]
    %v745 = vld [vmem:[#allocation10 + $0x2a8] sm:$0xff]
    %v746 = vld [vmem:[#allocation10 + $0x2b0] sm:$0xff]
    %v747 = vld [vmem:[#allocation10 + $0x2b8] sm:$0xff]
    %v748 = vld [vmem:[#allocation10 + $0x2c0] sm:$0xff]
    %v749 = vld [vmem:[#allocation10 + $0x2c8] sm:$0xff]
    %v750 = vld [vmem:[#allocation10 + $0x2d0] sm:$0xff]
    %v751 = vld [vmem:[#allocation10 + $0x2d8] sm:$0xff]
    %v752 = vld [vmem:[#allocation10 + $0x2e0] sm:$0xff]
    %v753 = vld [vmem:[#allocation10 + $0x2e8] sm:$0xff]
    %v754 = vld [vmem:[#allocation10 + $0x2f0] sm:$0xff]
    %v755 = vld [vmem:[#allocation10 + $0x2f8] sm:$0xff]
    %v756 = vld [vmem:[#allocation10 + $0x300] sm:$0xff]
    %v757 = vld [vmem:[#allocation10 + $0x308] sm:$0xff]
    %v758 = vld [vmem:[#allocation10 + $0x310] sm:$0xff]
    %v759 = vld [vmem:[#allocation10 + $0x318] sm:$0xff]
    %v760 = vld [vmem:[#allocation10 + $0x320] sm:$0xff]
    %v761 = vld [vmem:[#allocation10 + $0x328] sm:$0xff]
    %v762 = vld [vmem:[#allocation10 + $0x330] sm:$0xff]
    %v763 = vld [vmem:[#allocation10 + $0x338] sm:$0xff]
    %v764 = vld [vmem:[#allocation10 + $0x340] sm:$0xff]
    %v765 = vld [vmem:[#allocation10 + $0x348] sm:$0xff]
    %v766 = vld [vmem:[#allocation10 + $0x350] sm:$0xff]
    %v767 = vld [vmem:[#allocation10 + $0x358] sm:$0xff]
    %v768 = vld [vmem:[#allocation10 + $0x360] sm:$0xff]
    %v769 = vld [vmem:[#allocation10 + $0x368] sm:$0xff]
    %v770 = vld [vmem:[#allocation10 + $0x370] sm:$0xff]
    %v771 = vld [vmem:[#allocation10 + $0x378] sm:$0xff]
    %v772 = vld [vmem:[#allocation10 + $0x380] sm:$0xff]
    %v773 = vld [vmem:[#allocation10 + $0x388] sm:$0xff]
    %v774 = vld [vmem:[#allocation10 + $0x390] sm:$0xff]
    %v775 = vld [vmem:[#allocation10 + $0x398] sm:$0xff]
    %v776 = vld [vmem:[#allocation10 + $0x3a0] sm:$0xff]
    %v777 = vld [vmem:[#allocation10 + $0x3a8] sm:$0xff]
    %v778 = vld [vmem:[#allocation10 + $0x3b0] sm:$0xff]
    %v779 = vld [vmem:[#allocation10 + $0x3b8] sm:$0xff]
    %v780 = vld [vmem:[#allocation10 + $0x3c0] sm:$0xff]
    %v781 = vld [vmem:[#allocation10 + $0x3c8] sm:$0xff]
    %v782 = vld [vmem:[#allocation10 + $0x3d0] sm:$0xff]
    %v783 = vld [vmem:[#allocation10 + $0x3d8] sm:$0xff]
    %v784 = vld [vmem:[#allocation10 + $0x3e0] sm:$0xff]
    %v785 = vld [vmem:[#allocation10 + $0x3e8] sm:$0xff]
    %v786 = vld [vmem:[#allocation10 + $0x3f0] sm:$0xff]
    %v787 = vld [vmem:[#allocation10 + $0x3f8] sm:$0xff]
    %v789 = vshrl.u32 %v722, 16
    %v856 = vunpack.c.l.b16 %v724
    %v857 = vunpack.c.h.b16 %v724
    %v858 = vunpack.c.l.b16 %v725
    %v859 = vunpack.c.h.b16 %v725
    %v860 = vunpack.c.l.b16 %v726
    %v861 = vunpack.c.h.b16 %v726
    %v862 = vunpack.c.l.b16 %v727
    %v863 = vunpack.c.h.b16 %v727
    %v864 = vunpack.c.l.b16 %v728
    %v865 = vunpack.c.h.b16 %v728
    %v866 = vunpack.c.l.b16 %v729
    %v867 = vunpack.c.h.b16 %v729
    %v868 = vunpack.c.l.b16 %v730
    %v869 = vunpack.c.h.b16 %v730
    %v870 = vunpack.c.l.b16 %v731
    %v871 = vunpack.c.h.b16 %v731
    %v872 = vunpack.c.l.b16 %v732
    %v873 = vunpack.c.h.b16 %v732
    %v874 = vunpack.c.l.b16 %v733
    %v875 = vunpack.c.h.b16 %v733
    %v876 = vunpack.c.l.b16 %v734
    %v877 = vunpack.c.h.b16 %v734
    %v878 = vunpack.c.l.b16 %v735
    %v879 = vunpack.c.h.b16 %v735
    %v880 = vunpack.c.l.b16 %v736
    %v881 = vunpack.c.h.b16 %v736
    %v882 = vunpack.c.l.b16 %v737
    %v883 = vunpack.c.h.b16 %v737
    %v884 = vunpack.c.l.b16 %v738
    %v885 = vunpack.c.h.b16 %v738
    %v886 = vunpack.c.l.b16 %v739
    %v887 = vunpack.c.h.b16 %v739
    %v888 = vunpack.c.l.b16 %v740
    %v889 = vunpack.c.h.b16 %v740
    %v890 = vunpack.c.l.b16 %v741
    %v891 = vunpack.c.h.b16 %v741
    %v892 = vunpack.c.l.b16 %v742
    %v893 = vunpack.c.h.b16 %v742
    %v894 = vunpack.c.l.b16 %v743
    %v895 = vunpack.c.h.b16 %v743
    %v896 = vunpack.c.l.b16 %v744
    %v897 = vunpack.c.h.b16 %v744
    %v898 = vunpack.c.l.b16 %v745
    %v899 = vunpack.c.h.b16 %v745
    %v900 = vunpack.c.l.b16 %v746
    %v901 = vunpack.c.h.b16 %v746
    %v902 = vunpack.c.l.b16 %v747
    %v903 = vunpack.c.h.b16 %v747
    %v904 = vunpack.c.l.b16 %v748
    %v905 = vunpack.c.h.b16 %v748
    %v906 = vunpack.c.l.b16 %v749
    %v907 = vunpack.c.h.b16 %v749
    %v908 = vunpack.c.l.b16 %v750
    %v909 = vunpack.c.h.b16 %v750
    %v910 = vunpack.c.l.b16 %v751
    %v911 = vunpack.c.h.b16 %v751
    %v912 = vunpack.c.l.b16 %v752
    %v913 = vunpack.c.h.b16 %v752
    %v914 = vunpack.c.l.b16 %v753
    %v915 = vunpack.c.h.b16 %v753
    %v916 = vunpack.c.l.b16 %v754
    %v917 = vunpack.c.h.b16 %v754
    %v918 = vunpack.c.l.b16 %v755
    %v919 = vunpack.c.h.b16 %v755
    %v920 = vunpack.c.l.b16 %v756
    %v921 = vunpack.c.h.b16 %v756
    %v922 = vunpack.c.l.b16 %v757
    %v923 = vunpack.c.h.b16 %v757
    %v924 = vunpack.c.l.b16 %v758
    %v925 = vunpack.c.h.b16 %v758
    %v926 = vunpack.c.l.b16 %v759
    %v927 = vunpack.c.h.b16 %v759
    %v928 = vunpack.c.l.b16 %v760
    %v929 = vunpack.c.h.b16 %v760
    %v930 = vunpack.c.l.b16 %v761
    %v931 = vunpack.c.h.b16 %v761
    %v932 = vunpack.c.l.b16 %v762
    %v933 = vunpack.c.h.b16 %v762
    %v934 = vunpack.c.l.b16 %v763
    %v935 = vunpack.c.h.b16 %v763
    %v936 = vunpack.c.l.b16 %v764
    %v937 = vunpack.c.h.b16 %v764
    %v938 = vunpack.c.l.b16 %v765
    %v939 = vunpack.c.h.b16 %v765
    %v940 = vunpack.c.l.b16 %v766
    %v941 = vunpack.c.h.b16 %v766
    %v942 = vunpack.c.l.b16 %v767
    %v943 = vunpack.c.h.b16 %v767
    %v944 = vunpack.c.l.b16 %v768
    %v945 = vunpack.c.h.b16 %v768
    %v946 = vunpack.c.l.b16 %v769
    %v947 = vunpack.c.h.b16 %v769
    %v948 = vunpack.c.l.b16 %v770
    %v949 = vunpack.c.h.b16 %v770
    %v950 = vunpack.c.l.b16 %v771
    %v951 = vunpack.c.h.b16 %v771
    %v952 = vunpack.c.l.b16 %v772
    %v953 = vunpack.c.h.b16 %v772
    %v954 = vunpack.c.l.b16 %v773
    %v955 = vunpack.c.h.b16 %v773
    %v956 = vunpack.c.l.b16 %v774
    %v957 = vunpack.c.h.b16 %v774
    %v958 = vunpack.c.l.b16 %v775
    %v959 = vunpack.c.h.b16 %v775
    %v960 = vunpack.c.l.b16 %v776
    %v961 = vunpack.c.h.b16 %v776
    %v962 = vunpack.c.l.b16 %v777
    %v963 = vunpack.c.h.b16 %v777
    %v964 = vunpack.c.l.b16 %v778
    %v965 = vunpack.c.h.b16 %v778
    %v966 = vunpack.c.l.b16 %v779
    %v967 = vunpack.c.h.b16 %v779
    %v968 = vunpack.c.l.b16 %v780
    %v969 = vunpack.c.h.b16 %v780
    %v970 = vunpack.c.l.b16 %v781
    %v971 = vunpack.c.h.b16 %v781
    %v972 = vunpack.c.l.b16 %v782
    %v973 = vunpack.c.h.b16 %v782
    %v974 = vunpack.c.l.b16 %v783
    %v975 = vunpack.c.h.b16 %v783
    %v976 = vunpack.c.l.b16 %v784
    %v977 = vunpack.c.h.b16 %v784
    %v978 = vunpack.c.l.b16 %v785
    %v979 = vunpack.c.h.b16 %v785
    %v980 = vunpack.c.l.b16 %v786
    %v981 = vunpack.c.h.b16 %v786
    %v982 = vunpack.c.l.b16 %v787
    %v983 = vunpack.c.h.b16 %v787
    %v984 = vpack.c.b16 %v864, %v856
    %v985 = vpack.c.b16 %v865, %v857
    %v986 = vpack.c.b16 %v866, %v858
    %v987 = vpack.c.b16 %v867, %v859
    %v988 = vpack.c.b16 %v868, %v860
    %v989 = vpack.c.b16 %v869, %v861
    %v990 = vpack.c.b16 %v870, %v862
    %v991 = vpack.c.b16 %v871, %v863
    %v992 = vpack.c.b16 %v880, %v872
    %v993 = vpack.c.b16 %v881, %v873
    %v994 = vpack.c.b16 %v882, %v874
    %v995 = vpack.c.b16 %v883, %v875
    %v996 = vpack.c.b16 %v884, %v876
    %v997 = vpack.c.b16 %v885, %v877
    %v998 = vpack.c.b16 %v886, %v878
    %v999 = vpack.c.b16 %v887, %v879
    %v1000 = vpack.c.b16 %v896, %v888
    %v1001 = vpack.c.b16 %v897, %v889
    %v1002 = vpack.c.b16 %v898, %v890
    %v1003 = vpack.c.b16 %v899, %v891
    %v1004 = vpack.c.b16 %v900, %v892
    %v1005 = vpack.c.b16 %v901, %v893
    %v1006 = vpack.c.b16 %v902, %v894
    %v1007 = vpack.c.b16 %v903, %v895
    %v1008 = vpack.c.b16 %v912, %v904
    %v1009 = vpack.c.b16 %v913, %v905
    %v1010 = vpack.c.b16 %v914, %v906
    %v1011 = vpack.c.b16 %v915, %v907
    %v1012 = vpack.c.b16 %v916, %v908
    %v1013 = vpack.c.b16 %v917, %v909
    %v1014 = vpack.c.b16 %v918, %v910
    %v1015 = vpack.c.b16 %v919, %v911
    %v1016 = vpack.c.b16 %v928, %v920
    %v1017 = vpack.c.b16 %v929, %v921
    %v1018 = vpack.c.b16 %v930, %v922
    %v1019 = vpack.c.b16 %v931, %v923
    %v1020 = vpack.c.b16 %v932, %v924
    %v1021 = vpack.c.b16 %v933, %v925
    %v1022 = vpack.c.b16 %v934, %v926
    %v1023 = vpack.c.b16 %v935, %v927
    %v1024 = vpack.c.b16 %v944, %v936
    %v1025 = vpack.c.b16 %v945, %v937
    %v1026 = vpack.c.b16 %v946, %v938
    %v1027 = vpack.c.b16 %v947, %v939
    %v1028 = vpack.c.b16 %v948, %v940
    %v1029 = vpack.c.b16 %v949, %v941
    %v1030 = vpack.c.b16 %v950, %v942
    %v1031 = vpack.c.b16 %v951, %v943
    %v1032 = vpack.c.b16 %v960, %v952
    %v1033 = vpack.c.b16 %v961, %v953
    %v1034 = vpack.c.b16 %v962, %v954
    %v1035 = vpack.c.b16 %v963, %v955
    %v1036 = vpack.c.b16 %v964, %v956
    %v1037 = vpack.c.b16 %v965, %v957
    %v1038 = vpack.c.b16 %v966, %v958
    %v1039 = vpack.c.b16 %v967, %v959
    %v1040 = vpack.c.b16 %v976, %v968
    %v1041 = vpack.c.b16 %v977, %v969
    %v1042 = vpack.c.b16 %v978, %v970
    %v1043 = vpack.c.b16 %v979, %v971
    %v1044 = vpack.c.b16 %v980, %v972
    %v1045 = vpack.c.b16 %v981, %v973
    %v1046 = vpack.c.b16 %v982, %v974
    %v1047 = vpack.c.b16 %v983, %v975
    %1112 = vmatprep.subr.bf16.mxu0 %v985
    %1113 = vmatpush1.bf16.msra.mxu0 %v984
    %1114 = vmatprep.subr.bf16.mxu0 %v993
    %1115 = vmatpush1.bf16.msra.mxu0 %v992
    %1116 = vmatprep.subr.bf16.mxu0 %v1001
    %1117 = vmatpush1.bf16.msra.mxu0 %v1000
    %1118 = vmatprep.subr.bf16.mxu0 %v1009
    %1119 = vmatpush1.bf16.msra.mxu0 %v1008
    %1120 = vmatprep.subr.bf16.mxu0 %v1017
    %1121 = vmatpush1.bf16.msra.mxu0 %v1016
    %1122 = vmatprep.subr.bf16.mxu0 %v1025
    %1123 = vmatpush1.bf16.msra.mxu0 %v1024
    %1124 = vmatprep.subr.bf16.mxu0 %v1033
    %1125 = vmatpush1.bf16.msra.mxu0 %v1032
    %1126 = vmatprep.subr.bf16.mxu0 %v1041
    %1127 = vmatpush1.bf16.msra.mxu0 %v1040
    %1128 = vmatprep.subr.bf16.mxu0 0
    %1129 = vmatpush1.bf16.msra.mxu0 0
    %1130 = vmatprep.subr.bf16.mxu0 0
    %1131 = vmatpush1.bf16.msra.mxu0 0
    %1132 = vmatprep.subr.bf16.mxu0 0
    %1133 = vmatpush1.bf16.msra.mxu0 0
    %1134 = vmatprep.subr.bf16.mxu0 0
    %1135 = vmatpush1.bf16.msra.mxu0 0
    %1136 = vmatprep.subr.bf16.mxu0 0
    %1137 = vmatpush1.bf16.msra.mxu0 0
    %1138 = vmatprep.subr.bf16.mxu0 0
    %1139 = vmatpush1.bf16.msra.mxu0 0
    %1140 = vmatprep.subr.bf16.mxu0 0
    %1141 = vmatpush1.bf16.msra.mxu0 0
    %1142 = vmatprep.subr.bf16.mxu0 0
    %1143 = vmatpush1.bf16.msra.mxu0 0
    %1144 = vmatprep.mubr.bf16.mxu0 0
    %1145 = vmatmul.mubr.bf16.gmra.mrb[0].mxu0 %v789
    %v1146 = vpop.f32.mrb[0].mxu0
    %v1147 = vadd.f32 0.0, %v1146
    %v1148 = vpop.f32.mrb[0].mxu0
    %v1149 = vadd.f32 0.0, %v1148
    %v1150 = vpop.f32.mrb[0].mxu0
    %v1151 = vpop.f32.mrb[0].mxu0
    %1152 = vdwg.mxu0
    %1153 = vmatprep.subr.bf16.mxu0 %v987
    %1154 = vmatpush1.bf16.msra.mxu0 %v986
    %1155 = vmatprep.subr.bf16.mxu0 %v995
    %1156 = vmatpush1.bf16.msra.mxu0 %v994
    %1157 = vmatprep.subr.bf16.mxu0 %v1003
    %1158 = vmatpush1.bf16.msra.mxu0 %v1002
    %1159 = vmatprep.subr.bf16.mxu0 %v1011
    %1160 = vmatpush1.bf16.msra.mxu0 %v1010
    %1161 = vmatprep.subr.bf16.mxu0 %v1019
    %1162 = vmatpush1.bf16.msra.mxu0 %v1018
    %1163 = vmatprep.subr.bf16.mxu0 %v1027
    %1164 = vmatpush1.bf16.msra.mxu0 %v1026
    %1165 = vmatprep.subr.bf16.mxu0 %v1035
    %1166 = vmatpush1.bf16.msra.mxu0 %v1034
    %1167 = vmatprep.subr.bf16.mxu0 %v1043
    %1168 = vmatpush1.bf16.msra.mxu0 %v1042
    %1169 = vmatprep.subr.bf16.mxu0 0
    %1170 = vmatpush1.bf16.msra.mxu0 0
    %1171 = vmatprep.subr.bf16.mxu0 0
    %1172 = vmatpush1.bf16.msra.mxu0 0
    %1173 = vmatprep.subr.bf16.mxu0 0
    %1174 = vmatpush1.bf16.msra.mxu0 0
    %1175 = vmatprep.subr.bf16.mxu0 0
    %1176 = vmatpush1.bf16.msra.mxu0 0
    %1177 = vmatprep.subr.bf16.mxu0 0
    %1178 = vmatpush1.bf16.msra.mxu0 0
    %1179 = vmatprep.subr.bf16.mxu0 0
    %1180 = vmatpush1.bf16.msra.mxu0 0
    %1181 = vmatprep.subr.bf16.mxu0 0
    %1182 = vmatpush1.bf16.msra.mxu0 0
    %1183 = vmatprep.subr.bf16.mxu0 0
    %1184 = vmatpush1.bf16.msra.mxu0 0
    %1185 = vmatprep.mubr.bf16.mxu0 0
    %1186 = vmatmul.mubr.bf16.gmra.mrb[0].mxu0 %v789
    %v1187 = vpop.f32.mrb[0].mxu0
    %v1188 = vadd.f32 0.0, %v1187
    %v1189 = vpop.f32.mrb[0].mxu0
    %v1190 = vadd.f32 0.0, %v1189
    %v1191 = vpop.f32.mrb[0].mxu0
    %v1192 = vpop.f32.mrb[0].mxu0
    %1193 = vdwg.mxu0
    %1194 = vmatprep.subr.bf16.mxu0 %v989
    %1195 = vmatpush1.bf16.msra.mxu0 %v988
    %1196 = vmatprep.subr.bf16.mxu0 %v997
    %1197 = vmatpush1.bf16.msra.mxu0 %v996
    %1198 = vmatprep.subr.bf16.mxu0 %v1005
    %1199 = vmatpush1.bf16.msra.mxu0 %v1004
    %1200 = vmatprep.subr.bf16.mxu0 %v1013
    %1201 = vmatpush1.bf16.msra.mxu0 %v1012
    %1202 = vmatprep.subr.bf16.mxu0 %v1021
    %1203 = vmatpush1.bf16.msra.mxu0 %v1020
    %1204 = vmatprep.subr.bf16.mxu0 %v1029
    %1205 = vmatpush1.bf16.msra.mxu0 %v1028
    %1206 = vmatprep.subr.bf16.mxu0 %v1037
    %1207 = vmatpush1.bf16.msra.mxu0 %v1036
    %1208 = vmatprep.subr.bf16.mxu0 %v1045
    %1209 = vmatpush1.bf16.msra.mxu0 %v1044
    %1210 = vmatprep.subr.bf16.mxu0 0
    %1211 = vmatpush1.bf16.msra.mxu0 0
    %1212 = vmatprep.subr.bf16.mxu0 0
    %1213 = vmatpush1.bf16.msra.mxu0 0
    %1214 = vmatprep.subr.bf16.mxu0 0
    %1215 = vmatpush1.bf16.msra.mxu0 0
    %1216 = vmatprep.subr.bf16.mxu0 0
    %1217 = vmatpush1.bf16.msra.mxu0 0
    %1218 = vmatprep.subr.bf16.mxu0 0
    %1219 = vmatpush1.bf16.msra.mxu0 0
    %1220 = vmatprep.subr.bf16.mxu0 0
    %1221 = vmatpush1.bf16.msra.mxu0 0
    %1222 = vmatprep.subr.bf16.mxu0 0
    %1223 = vmatpush1.bf16.msra.mxu0 0
    %1224 = vmatprep.subr.bf16.mxu0 0
    %1225 = vmatpush1.bf16.msra.mxu0 0
    %1226 = vmatprep.mubr.bf16.mxu0 0
    %1227 = vmatmul.mubr.bf16.gmra.mrb[0].mxu0 %v789
    %v1228 = vpop.f32.mrb[0].mxu0
    %v1229 = vadd.f32 0.0, %v1228
    %v1230 = vpop.f32.mrb[0].mxu0
    %v1231 = vadd.f32 0.0, %v1230
    %v1232 = vpop.f32.mrb[0].mxu0
    %v1233 = vpop.f32.mrb[0].mxu0
    %1234 = vdwg.mxu0
    %1235 = vmatprep.subr.bf16.mxu0 %v991
    %1236 = vmatpush1.bf16.msra.mxu0 %v990
    %1237 = vmatprep.subr.bf16.mxu0 %v999
    %1238 = vmatpush1.bf16.msra.mxu0 %v998
    %1239 = vmatprep.subr.bf16.mxu0 %v1007
    %1240 = vmatpush1.bf16.msra.mxu0 %v1006
    %1241 = vmatprep.subr.bf16.mxu0 %v1015
    %1242 = vmatpush1.bf16.msra.mxu0 %v1014
    %1243 = vmatprep.subr.bf16.mxu0 %v1023
    %1244 = vmatpush1.bf16.msra.mxu0 %v1022
    %1245 = vmatprep.subr.bf16.mxu0 %v1031
    %1246 = vmatpush1.bf16.msra.mxu0 %v1030
    %1247 = vmatprep.subr.bf16.mxu0 %v1039
    %1248 = vmatpush1.bf16.msra.mxu0 %v1038
    %1249 = vmatprep.subr.bf16.mxu0 %v1047
    %1250 = vmatpush1.bf16.msra.mxu0 %v1046
    %1251 = vmatprep.subr.bf16.mxu0 0
    %1252 = vmatpush1.bf16.msra.mxu0 0
    %1253 = vmatprep.subr.bf16.mxu0 0
    %1254 = vmatpush1.bf16.msra.mxu0 0
    %1255 = vmatprep.subr.bf16.mxu0 0
    %1256 = vmatpush1.bf16.msra.mxu0 0
    %1257 = vmatprep.subr.bf16.mxu0 0
    %1258 = vmatpush1.bf16.msra.mxu0 0
    %1259 = vmatprep.subr.bf16.mxu0 0
    %1260 = vmatpush1.bf16.msra.mxu0 0
    %1261 = vmatprep.subr.bf16.mxu0 0
    %1262 = vmatpush1.bf16.msra.mxu0 0
    %1263 = vmatprep.subr.bf16.mxu0 0
    %1264 = vmatpush1.bf16.msra.mxu0 0
    %1265 = vmatprep.subr.bf16.mxu0 0
    %1266 = vmatpush1.bf16.msra.mxu0 0
    %1267 = vmatprep.mubr.bf16.mxu0 0
    %1268 = vmatmul.mubr.bf16.gmra.mrb[0].mxu0 %v789
    %v1269 = vpop.f32.mrb[0].mxu0
    %v1270 = vadd.f32 0.0, %v1269
    %v1271 = vpop.f32.mrb[0].mxu0
    %v1272 = vadd.f32 0.0, %v1271
    %v1273 = vpop.f32.mrb[0].mxu0
    %v1274 = vpop.f32.mrb[0].mxu0
    %1275 = vdwg.mxu0
    %v1340 = vunpack.c.l.b16 %v658
    %v1341 = vunpack.c.h.b16 %v658
    %v1342 = vunpack.c.l.b16 %v659
    %v1343 = vunpack.c.h.b16 %v659
    %v1344 = vunpack.c.l.b16 %v660
    %v1345 = vunpack.c.h.b16 %v660
    %v1346 = vunpack.c.l.b16 %v661
    %v1347 = vunpack.c.h.b16 %v661
    %v1348 = vunpack.c.l.b16 %v662
    %v1349 = vunpack.c.h.b16 %v662
    %v1350 = vunpack.c.l.b16 %v663
    %v1351 = vunpack.c.h.b16 %v663
    %v1352 = vunpack.c.l.b16 %v664
    %v1353 = vunpack.c.h.b16 %v664
    %v1354 = vunpack.c.l.b16 %v665
    %v1355 = vunpack.c.h.b16 %v665
    %v1356 = vunpack.c.l.b16 %v666
    %v1357 = vunpack.c.h.b16 %v666
    %v1358 = vunpack.c.l.b16 %v667
    %v1359 = vunpack.c.h.b16 %v667
    %v1360 = vunpack.c.l.b16 %v668
    %v1361 = vunpack.c.h.b16 %v668
    %v1362 = vunpack.c.l.b16 %v669
    %v1363 = vunpack.c.h.b16 %v669
    %v1364 = vunpack.c.l.b16 %v670
    %v1365 = vunpack.c.h.b16 %v670
    %v1366 = vunpack.c.l.b16 %v671
    %v1367 = vunpack.c.h.b16 %v671
    %v1368 = vunpack.c.l.b16 %v672
    %v1369 = vunpack.c.h.b16 %v672
    %v1370 = vunpack.c.l.b16 %v673
    %v1371 = vunpack.c.h.b16 %v673
    %v1372 = vunpack.c.l.b16 %v674
    %v1373 = vunpack.c.h.b16 %v674
    %v1374 = vunpack.c.l.b16 %v675
    %v1375 = vunpack.c.h.b16 %v675
    %v1376 = vunpack.c.l.b16 %v676
    %v1377 = vunpack.c.h.b16 %v676
    %v1378 = vunpack.c.l.b16 %v677
    %v1379 = vunpack.c.h.b16 %v677
    %v1380 = vunpack.c.l.b16 %v678
    %v1381 = vunpack.c.h.b16 %v678
    %v1382 = vunpack.c.l.b16 %v679
    %v1383 = vunpack.c.h.b16 %v679
    %v1384 = vunpack.c.l.b16 %v680
    %v1385 = vunpack.c.h.b16 %v680
    %v1386 = vunpack.c.l.b16 %v681
    %v1387 = vunpack.c.h.b16 %v681
    %v1388 = vunpack.c.l.b16 %v682
    %v1389 = vunpack.c.h.b16 %v682
    %v1390 = vunpack.c.l.b16 %v683
    %v1391 = vunpack.c.h.b16 %v683
    %v1392 = vunpack.c.l.b16 %v684
    %v1393 = vunpack.c.h.b16 %v684
    %v1394 = vunpack.c.l.b16 %v685
    %v1395 = vunpack.c.h.b16 %v685
    %v1396 = vunpack.c.l.b16 %v686
    %v1397 = vunpack.c.h.b16 %v686
    %v1398 = vunpack.c.l.b16 %v687
    %v1399 = vunpack.c.h.b16 %v687
    %v1400 = vunpack.c.l.b16 %v688
    %v1401 = vunpack.c.h.b16 %v688
    %v1402 = vunpack.c.l.b16 %v689
    %v1403 = vunpack.c.h.b16 %v689
    %v1404 = vunpack.c.l.b16 %v690
    %v1405 = vunpack.c.h.b16 %v690
    %v1406 = vunpack.c.l.b16 %v691
    %v1407 = vunpack.c.h.b16 %v691
    %v1408 = vunpack.c.l.b16 %v692
    %v1409 = vunpack.c.h.b16 %v692
    %v1410 = vunpack.c.l.b16 %v693
    %v1411 = vunpack.c.h.b16 %v693
    %v1412 = vunpack.c.l.b16 %v694
    %v1413 = vunpack.c.h.b16 %v694
    %v1414 = vunpack.c.l.b16 %v695
    %v1415 = vunpack.c.h.b16 %v695
    %v1416 = vunpack.c.l.b16 %v696
    %v1417 = vunpack.c.h.b16 %v696
    %v1418 = vunpack.c.l.b16 %v697
    %v1419 = vunpack.c.h.b16 %v697
    %v1420 = vunpack.c.l.b16 %v698
    %v1421 = vunpack.c.h.b16 %v698
    %v1422 = vunpack.c.l.b16 %v699
    %v1423 = vunpack.c.h.b16 %v699
    %v1424 = vunpack.c.l.b16 %v700
    %v1425 = vunpack.c.h.b16 %v700
    %v1426 = vunpack.c.l.b16 %v701
    %v1427 = vunpack.c.h.b16 %v701
    %v1428 = vunpack.c.l.b16 %v702
    %v1429 = vunpack.c.h.b16 %v702
    %v1430 = vunpack.c.l.b16 %v703
    %v1431 = vunpack.c.h.b16 %v703
    %v1432 = vunpack.c.l.b16 %v704
    %v1433 = vunpack.c.h.b16 %v704
    %v1434 = vunpack.c.l.b16 %v705
    %v1435 = vunpack.c.h.b16 %v705
    %v1436 = vunpack.c.l.b16 %v706
    %v1437 = vunpack.c.h.b16 %v706
    %v1438 = vunpack.c.l.b16 %v707
    %v1439 = vunpack.c.h.b16 %v707
    %v1440 = vunpack.c.l.b16 %v708
    %v1441 = vunpack.c.h.b16 %v708
    %v1442 = vunpack.c.l.b16 %v709
    %v1443 = vunpack.c.h.b16 %v709
    %v1444 = vunpack.c.l.b16 %v710
    %v1445 = vunpack.c.h.b16 %v710
    %v1446 = vunpack.c.l.b16 %v711
    %v1447 = vunpack.c.h.b16 %v711
    %v1448 = vunpack.c.l.b16 %v712
    %v1449 = vunpack.c.h.b16 %v712
    %v1450 = vunpack.c.l.b16 %v713
    %v1451 = vunpack.c.h.b16 %v713
    %v1452 = vunpack.c.l.b16 %v714
    %v1453 = vunpack.c.h.b16 %v714
    %v1454 = vunpack.c.l.b16 %v715
    %v1455 = vunpack.c.h.b16 %v715
    %v1456 = vunpack.c.l.b16 %v716
    %v1457 = vunpack.c.h.b16 %v716
    %v1458 = vunpack.c.l.b16 %v717
    %v1459 = vunpack.c.h.b16 %v717
    %v1460 = vunpack.c.l.b16 %v718
    %v1461 = vunpack.c.h.b16 %v718
    %v1462 = vunpack.c.l.b16 %v719
    %v1463 = vunpack.c.h.b16 %v719
    %v1464 = vunpack.c.l.b16 %v720
    %v1465 = vunpack.c.h.b16 %v720
    %v1466 = vunpack.c.l.b16 %v721
    %v1467 = vunpack.c.h.b16 %v721
    %v1468 = vpack.c.b16 %v1348, %v1340
    %v1469 = vpack.c.b16 %v1349, %v1341
    %v1470 = vpack.c.b16 %v1350, %v1342
    %v1471 = vpack.c.b16 %v1351, %v1343
    %v1472 = vpack.c.b16 %v1352, %v1344
    %v1473 = vpack.c.b16 %v1353, %v1345
    %v1474 = vpack.c.b16 %v1354, %v1346
    %v1475 = vpack.c.b16 %v1355, %v1347
    %v1476 = vpack.c.b16 %v1364, %v1356
    %v1477 = vpack.c.b16 %v1365, %v1357
    %v1478 = vpack.c.b16 %v1366, %v1358
    %v1479 = vpack.c.b16 %v1367, %v1359
    %v1480 = vpack.c.b16 %v1368, %v1360
    %v1481 = vpack.c.b16 %v1369, %v1361
    %v1482 = vpack.c.b16 %v1370, %v1362
    %v1483 = vpack.c.b16 %v1371, %v1363
    %v1484 = vpack.c.b16 %v1380, %v1372
    %v1485 = vpack.c.b16 %v1381, %v1373
    %v1486 = vpack.c.b16 %v1382, %v1374
    %v1487 = vpack.c.b16 %v1383, %v1375
    %v1488 = vpack.c.b16 %v1384, %v1376
    %v1489 = vpack.c.b16 %v1385, %v1377
    %v1490 = vpack.c.b16 %v1386, %v1378
    %v1491 = vpack.c.b16 %v1387, %v1379
    %v1492 = vpack.c.b16 %v1396, %v1388
    %v1493 = vpack.c.b16 %v1397, %v1389
    %v1494 = vpack.c.b16 %v1398, %v1390
    %v1495 = vpack.c.b16 %v1399, %v1391
    %v1496 = vpack.c.b16 %v1400, %v1392
    %v1497 = vpack.c.b16 %v1401, %v1393
    %v1498 = vpack.c.b16 %v1402, %v1394
    %v1499 = vpack.c.b16 %v1403, %v1395
    %v1500 = vpack.c.b16 %v1412, %v1404
    %v1501 = vpack.c.b16 %v1413, %v1405
    %v1502 = vpack.c.b16 %v1414, %v1406
    %v1503 = vpack.c.b16 %v1415, %v1407
    %v1504 = vpack.c.b16 %v1416, %v1408
    %v1505 = vpack.c.b16 %v1417, %v1409
    %v1506 = vpack.c.b16 %v1418, %v1410
    %v1507 = vpack.c.b16 %v1419, %v1411
    %v1508 = vpack.c.b16 %v1428, %v1420
    %v1509 = vpack.c.b16 %v1429, %v1421
    %v1510 = vpack.c.b16 %v1430, %v1422
    %v1511 = vpack.c.b16 %v1431, %v1423
    %v1512 = vpack.c.b16 %v1432, %v1424
    %v1513 = vpack.c.b16 %v1433, %v1425
    %v1514 = vpack.c.b16 %v1434, %v1426
    %v1515 = vpack.c.b16 %v1435, %v1427
    %v1516 = vpack.c.b16 %v1444, %v1436
    %v1517 = vpack.c.b16 %v1445, %v1437
    %v1518 = vpack.c.b16 %v1446, %v1438
    %v1519 = vpack.c.b16 %v1447, %v1439
    %v1520 = vpack.c.b16 %v1448, %v1440
    %v1521 = vpack.c.b16 %v1449, %v1441
    %v1522 = vpack.c.b16 %v1450, %v1442
    %v1523 = vpack.c.b16 %v1451, %v1443
    %v1524 = vpack.c.b16 %v1460, %v1452
    %v1525 = vpack.c.b16 %v1461, %v1453
    %v1526 = vpack.c.b16 %v1462, %v1454
    %v1527 = vpack.c.b16 %v1463, %v1455
    %v1528 = vpack.c.b16 %v1464, %v1456
    %v1529 = vpack.c.b16 %v1465, %v1457
    %v1530 = vpack.c.b16 %v1466, %v1458
    %v1531 = vpack.c.b16 %v1467, %v1459
    %1596 = vmatprep.subr.bf16.mxu0 %v1469
    %1597 = vmatpush1.bf16.msra.mxu0 %v1468
    %1598 = vmatprep.subr.bf16.mxu0 %v1477
    %1599 = vmatpush1.bf16.msra.mxu0 %v1476
    %1600 = vmatprep.subr.bf16.mxu0 %v1485
    %1601 = vmatpush1.bf16.msra.mxu0 %v1484
    %1602 = vmatprep.subr.bf16.mxu0 %v1493
    %1603 = vmatpush1.bf16.msra.mxu0 %v1492
    %1604 = vmatprep.subr.bf16.mxu0 %v1501
    %1605 = vmatpush1.bf16.msra.mxu0 %v1500
    %1606 = vmatprep.subr.bf16.mxu0 %v1509
    %1607 = vmatpush1.bf16.msra.mxu0 %v1508
    %1608 = vmatprep.subr.bf16.mxu0 %v1517
    %1609 = vmatpush1.bf16.msra.mxu0 %v1516
    %1610 = vmatprep.subr.bf16.mxu0 %v1525
    %1611 = vmatpush1.bf16.msra.mxu0 %v1524
    %1612 = vmatprep.subr.bf16.mxu0 0
    %1613 = vmatpush1.bf16.msra.mxu0 0
    %1614 = vmatprep.subr.bf16.mxu0 0
    %1615 = vmatpush1.bf16.msra.mxu0 0
    %1616 = vmatprep.subr.bf16.mxu0 0
    %1617 = vmatpush1.bf16.msra.mxu0 0
    %1618 = vmatprep.subr.bf16.mxu0 0
    %1619 = vmatpush1.bf16.msra.mxu0 0
    %1620 = vmatprep.subr.bf16.mxu0 0
    %1621 = vmatpush1.bf16.msra.mxu0 0
    %1622 = vmatprep.subr.bf16.mxu0 0
    %1623 = vmatpush1.bf16.msra.mxu0 0
    %1624 = vmatprep.subr.bf16.mxu0 0
    %1625 = vmatpush1.bf16.msra.mxu0 0
    %1626 = vmatprep.subr.bf16.mxu0 0
    %1627 = vmatpush1.bf16.msra.mxu0 0
    %1628 = vmatprep.mubr.bf16.mxu0 0
    %1629 = vmatmul.mubr.bf16.gmra.mrb[0].mxu0 %v722
    %v1630 = vpop.f32.mrb[0].mxu0
    %v1631 = vadd.f32 %v1147, %v1630
    %v1632 = vpop.f32.mrb[0].mxu0
    %v1633 = vadd.f32 %v1149, %v1632
    %v1634 = vpop.f32.mrb[0].mxu0
    %v1635 = vpop.f32.mrb[0].mxu0
    %1636 = vdwg.mxu0
    %1637 = vmatprep.subr.bf16.mxu0 %v1471
    %1638 = vmatpush1.bf16.msra.mxu0 %v1470
    %1639 = vmatprep.subr.bf16.mxu0 %v1479
    %1640 = vmatpush1.bf16.msra.mxu0 %v1478
    %1641 = vmatprep.subr.bf16.mxu0 %v1487
    %1642 = vmatpush1.bf16.msra.mxu0 %v1486
    %1643 = vmatprep.subr.bf16.mxu0 %v1495
    %1644 = vmatpush1.bf16.msra.mxu0 %v1494
    %1645 = vmatprep.subr.bf16.mxu0 %v1503
    %1646 = vmatpush1.bf16.msra.mxu0 %v1502
    %1647 = vmatprep.subr.bf16.mxu0 %v1511
    %1648 = vmatpush1.bf16.msra.mxu0 %v1510
    %1649 = vmatprep.subr.bf16.mxu0 %v1519
    %1650 = vmatpush1.bf16.msra.mxu0 %v1518
    %1651 = vmatprep.subr.bf16.mxu0 %v1527
    %1652 = vmatpush1.bf16.msra.mxu0 %v1526
    %1653 = vmatprep.subr.bf16.mxu0 0
    %1654 = vmatpush1.bf16.msra.mxu0 0
    %1655 = vmatprep.subr.bf16.mxu0 0
    %1656 = vmatpush1.bf16.msra.mxu0 0
    %1657 = vmatprep.subr.bf16.mxu0 0
    %1658 = vmatpush1.bf16.msra.mxu0 0
    %1659 = vmatprep.subr.bf16.mxu0 0
    %1660 = vmatpush1.bf16.msra.mxu0 0
    %1661 = vmatprep.subr.bf16.mxu0 0
    %1662 = vmatpush1.bf16.msra.mxu0 0
    %1663 = vmatprep.subr.bf16.mxu0 0
    %1664 = vmatpush1.bf16.msra.mxu0 0
    %1665 = vmatprep.subr.bf16.mxu0 0
    %1666 = vmatpush1.bf16.msra.mxu0 0
    %1667 = vmatprep.subr.bf16.mxu0 0
    %1668 = vmatpush1.bf16.msra.mxu0 0
    %1669 = vmatprep.mubr.bf16.mxu0 0
    %1670 = vmatmul.mubr.bf16.gmra.mrb[0].mxu0 %v722
    %v1671 = vpop.f32.mrb[0].mxu0
    %v1672 = vadd.f32 %v1188, %v1671
    %v1673 = vpop.f32.mrb[0].mxu0
    %v1674 = vadd.f32 %v1190, %v1673
    %v1675 = vpop.f32.mrb[0].mxu0
    %v1676 = vpop.f32.mrb[0].mxu0
    %1677 = vdwg.mxu0
    %1678 = vmatprep.subr.bf16.mxu0 %v1473
    %1679 = vmatpush1.bf16.msra.mxu0 %v1472
    %1680 = vmatprep.subr.bf16.mxu0 %v1481
    %1681 = vmatpush1.bf16.msra.mxu0 %v1480
    %1682 = vmatprep.subr.bf16.mxu0 %v1489
    %1683 = vmatpush1.bf16.msra.mxu0 %v1488
    %1684 = vmatprep.subr.bf16.mxu0 %v1497
    %1685 = vmatpush1.bf16.msra.mxu0 %v1496
    %1686 = vmatprep.subr.bf16.mxu0 %v1505
    %1687 = vmatpush1.bf16.msra.mxu0 %v1504
    %1688 = vmatprep.subr.bf16.mxu0 %v1513
    %1689 = vmatpush1.bf16.msra.mxu0 %v1512
    %1690 = vmatprep.subr.bf16.mxu0 %v1521
    %1691 = vmatpush1.bf16.msra.mxu0 %v1520
    %1692 = vmatprep.subr.bf16.mxu0 %v1529
    %1693 = vmatpush1.bf16.msra.mxu0 %v1528
    %1694 = vmatprep.subr.bf16.mxu0 0
    %1695 = vmatpush1.bf16.msra.mxu0 0
    %1696 = vmatprep.subr.bf16.mxu0 0
    %1697 = vmatpush1.bf16.msra.mxu0 0
    %1698 = vmatprep.subr.bf16.mxu0 0
    %1699 = vmatpush1.bf16.msra.mxu0 0
    %1700 = vmatprep.subr.bf16.mxu0 0
    %1701 = vmatpush1.bf16.msra.mxu0 0
    %1702 = vmatprep.subr.bf16.mxu0 0
    %1703 = vmatpush1.bf16.msra.mxu0 0
    %1704 = vmatprep.subr.bf16.mxu0 0
    %1705 = vmatpush1.bf16.msra.mxu0 0
    %1706 = vmatprep.subr.bf16.mxu0 0
    %1707 = vmatpush1.bf16.msra.mxu0 0
    %1708 = vmatprep.subr.bf16.mxu0 0
    %1709 = vmatpush1.bf16.msra.mxu0 0
    %1710 = vmatprep.mubr.bf16.mxu0 0
    %1711 = vmatmul.mubr.bf16.gmra.mrb[0].mxu0 %v722
    %v1712 = vpop.f32.mrb[0].mxu0
    %v1713 = vadd.f32 %v1229, %v1712
    %v1714 = vpop.f32.mrb[0].mxu0
    %v1715 = vadd.f32 %v1231, %v1714
    %v1716 = vpop.f32.mrb[0].mxu0
    %v1717 = vpop.f32.mrb[0].mxu0
    %1718 = vdwg.mxu0
    %1719 = vmatprep.subr.bf16.mxu0 %v1475
    %1720 = vmatpush1.bf16.msra.mxu0 %v1474
    %1721 = vmatprep.subr.bf16.mxu0 %v1483
    %1722 = vmatpush1.bf16.msra.mxu0 %v1482
    %1723 = vmatprep.subr.bf16.mxu0 %v1491
    %1724 = vmatpush1.bf16.msra.mxu0 %v1490
    %1725 = vmatprep.subr.bf16.mxu0 %v1499
    %1726 = vmatpush1.bf16.msra.mxu0 %v1498
    %1727 = vmatprep.subr.bf16.mxu0 %v1507
    %1728 = vmatpush1.bf16.msra.mxu0 %v1506
    %1729 = vmatprep.subr.bf16.mxu0 %v1515
    %1730 = vmatpush1.bf16.msra.mxu0 %v1514
    %1731 = vmatprep.subr.bf16.mxu0 %v1523
    %1732 = vmatpush1.bf16.msra.mxu0 %v1522
    %1733 = vmatprep.subr.bf16.mxu0 %v1531
    %1734 = vmatpush1.bf16.msra.mxu0 %v1530
    %1735 = vmatprep.subr.bf16.mxu0 0
    %1736 = vmatpush1.bf16.msra.mxu0 0
    %1737 = vmatprep.subr.bf16.mxu0 0
    %1738 = vmatpush1.bf16.msra.mxu0 0
    %1739 = vmatprep.subr.bf16.mxu0 0
    %1740 = vmatpush1.bf16.msra.mxu0 0
    %1741 = vmatprep.subr.bf16.mxu0 0
    %1742 = vmatpush1.bf16.msra.mxu0 0
    %1743 = vmatprep.subr.bf16.mxu0 0
    %1744 = vmatpush1.bf16.msra.mxu0 0
    %1745 = vmatprep.subr.bf16.mxu0 0
    %1746 = vmatpush1.bf16.msra.mxu0 0
    %1747 = vmatprep.subr.bf16.mxu0 0
    %1748 = vmatpush1.bf16.msra.mxu0 0
    %1749 = vmatprep.subr.bf16.mxu0 0
    %1750 = vmatpush1.bf16.msra.mxu0 0
    %1751 = vmatprep.mubr.bf16.mxu0 0
    %1752 = vmatmul.mubr.bf16.gmra.mrb[0].mxu0 %v722
    %v1753 = vpop.f32.mrb[0].mxu0
    %v1754 = vadd.f32 %v1270, %v1753
    %v1755 = vpop.f32.mrb[0].mxu0
    %v1756 = vadd.f32 %v1272, %v1755
    %v1757 = vpop.f32.mrb[0].mxu0
    %v1758 = vpop.f32.mrb[0].mxu0
    %1759 = vdwg.mxu0
    %v1761 = vshrl.u32 %v723, 16
    %1764 = vmatprep.subr.bf16.mxu0 %v985
    %1765 = vmatpush1.bf16.msra.mxu0 %v984
    %1766 = vmatprep.subr.bf16.mxu0 %v993
    %1767 = vmatpush1.bf16.msra.mxu0 %v992
    %1768 = vmatprep.subr.bf16.mxu0 %v1001
    %1769 = vmatpush1.bf16.msra.mxu0 %v1000
    %1770 = vmatprep.subr.bf16.mxu0 %v1009
    %1771 = vmatpush1.bf16.msra.mxu0 %v1008
    %1772 = vmatprep.subr.bf16.mxu0 %v1017
    %1773 = vmatpush1.bf16.msra.mxu0 %v1016
    %1774 = vmatprep.subr.bf16.mxu0 %v1025
    %1775 = vmatpush1.bf16.msra.mxu0 %v1024
    %1776 = vmatprep.subr.bf16.mxu0 %v1033
    %1777 = vmatpush1.bf16.msra.mxu0 %v1032
    %1778 = vmatprep.subr.bf16.mxu0 %v1041
    %1779 = vmatpush1.bf16.msra.mxu0 %v1040
    %1780 = vmatprep.subr.bf16.mxu0 0
    %1781 = vmatpush1.bf16.msra.mxu0 0
    %1782 = vmatprep.subr.bf16.mxu0 0
    %1783 = vmatpush1.bf16.msra.mxu0 0
    %1784 = vmatprep.subr.bf16.mxu0 0
    %1785 = vmatpush1.bf16.msra.mxu0 0
    %1786 = vmatprep.subr.bf16.mxu0 0
    %1787 = vmatpush1.bf16.msra.mxu0 0
    %1788 = vmatprep.subr.bf16.mxu0 0
    %1789 = vmatpush1.bf16.msra.mxu0 0
    %1790 = vmatprep.subr.bf16.mxu0 0
    %1791 = vmatpush1.bf16.msra.mxu0 0
    %1792 = vmatprep.subr.bf16.mxu0 0
    %1793 = vmatpush1.bf16.msra.mxu0 0
    %1794 = vmatprep.subr.bf16.mxu0 0
    %1795 = vmatpush1.bf16.msra.mxu0 0
    %1796 = vmatprep.mubr.bf16.mxu0 0
    %1797 = vmatmul.mubr.bf16.gmra.mrb[0].mxu0 %v1761
    %v1798 = vpop.f32.mrb[0].mxu0
    %v1799 = vadd.f32 0.0, %v1798
    %v1800 = vpop.f32.mrb[0].mxu0
    %v1801 = vadd.f32 0.0, %v1800
    %v1802 = vpop.f32.mrb[0].mxu0
    %v1803 = vpop.f32.mrb[0].mxu0
    %1804 = vdwg.mxu0
    %1805 = vmatprep.subr.bf16.mxu0 %v987
    %1806 = vmatpush1.bf16.msra.mxu0 %v986
    %1807 = vmatprep.subr.bf16.mxu0 %v995
    %1808 = vmatpush1.bf16.msra.mxu0 %v994
    %1809 = vmatprep.subr.bf16.mxu0 %v1003
    %1810 = vmatpush1.bf16.msra.mxu0 %v1002
    %1811 = vmatprep.subr.bf16.mxu0 %v1011
    %1812 = vmatpush1.bf16.msra.mxu0 %v1010
    %1813 = vmatprep.subr.bf16.mxu0 %v1019
    %1814 = vmatpush1.bf16.msra.mxu0 %v1018
    %1815 = vmatprep.subr.bf16.mxu0 %v1027
    %1816 = vmatpush1.bf16.msra.mxu0 %v1026
    %1817 = vmatprep.subr.bf16.mxu0 %v1035
    %1818 = vmatpush1.bf16.msra.mxu0 %v1034
    %1819 = vmatprep.subr.bf16.mxu0 %v1043
    %1820 = vmatpush1.bf16.msra.mxu0 %v1042
    %1821 = vmatprep.subr.bf16.mxu0 0
    %1822 = vmatpush1.bf16.msra.mxu0 0
    %1823 = vmatprep.subr.bf16.mxu0 0
    %1824 = vmatpush1.bf16.msra.mxu0 0
    %1825 = vmatprep.subr.bf16.mxu0 0
    %1826 = vmatpush1.bf16.msra.mxu0 0
    %1827 = vmatprep.subr.bf16.mxu0 0
    %1828 = vmatpush1.bf16.msra.mxu0 0
    %1829 = vmatprep.subr.bf16.mxu0 0
    %1830 = vmatpush1.bf16.msra.mxu0 0
    %1831 = vmatprep.subr.bf16.mxu0 0
    %1832 = vmatpush1.bf16.msra.mxu0 0
    %1833 = vmatprep.subr.bf16.mxu0 0
    %1834 = vmatpush1.bf16.msra.mxu0 0
    %1835 = vmatprep.subr.bf16.mxu0 0
    %1836 = vmatpush1.bf16.msra.mxu0 0
    %1837 = vmatprep.mubr.bf16.mxu0 0
    %1838 = vmatmul.mubr.bf16.gmra.mrb[0].mxu0 %v1761
    %v1839 = vpop.f32.mrb[0].mxu0
    %v1840 = vadd.f32 0.0, %v1839
    %v1841 = vpop.f32.mrb[0].mxu0
    %v1842 = vadd.f32 0.0, %v1841
    %v1843 = vpop.f32.mrb[0].mxu0
    %v1844 = vpop.f32.mrb[0].mxu0
    %1845 = vdwg.mxu0
    %1846 = vmatprep.subr.bf16.mxu0 %v989
    %1847 = vmatpush1.bf16.msra.mxu0 %v988
    %1848 = vmatprep.subr.bf16.mxu0 %v997
    %1849 = vmatpush1.bf16.msra.mxu0 %v996
    %1850 = vmatprep.subr.bf16.mxu0 %v1005
    %1851 = vmatpush1.bf16.msra.mxu0 %v1004
    %1852 = vmatprep.subr.bf16.mxu0 %v1013
    %1853 = vmatpush1.bf16.msra.mxu0 %v1012
    %1854 = vmatprep.subr.bf16.mxu0 %v1021
    %1855 = vmatpush1.bf16.msra.mxu0 %v1020
    %1856 = vmatprep.subr.bf16.mxu0 %v1029
    %1857 = vmatpush1.bf16.msra.mxu0 %v1028
    %1858 = vmatprep.subr.bf16.mxu0 %v1037
    %1859 = vmatpush1.bf16.msra.mxu0 %v1036
    %1860 = vmatprep.subr.bf16.mxu0 %v1045
    %1861 = vmatpush1.bf16.msra.mxu0 %v1044
    %1862 = vmatprep.subr.bf16.mxu0 0
    %1863 = vmatpush1.bf16.msra.mxu0 0
    %1864 = vmatprep.subr.bf16.mxu0 0
    %1865 = vmatpush1.bf16.msra.mxu0 0
    %1866 = vmatprep.subr.bf16.mxu0 0
    %1867 = vmatpush1.bf16.msra.mxu0 0
    %1868 = vmatprep.subr.bf16.mxu0 0
    %1869 = vmatpush1.bf16.msra.mxu0 0
    %1870 = vmatprep.subr.bf16.mxu0 0
    %1871 = vmatpush1.bf16.msra.mxu0 0
    %1872 = vmatprep.subr.bf16.mxu0 0
    %1873 = vmatpush1.bf16.msra.mxu0 0
    %1874 = vmatprep.subr.bf16.mxu0 0
    %1875 = vmatpush1.bf16.msra.mxu0 0
    %1876 = vmatprep.subr.bf16.mxu0 0
    %1877 = vmatpush1.bf16.msra.mxu0 0
    %1878 = vmatprep.mubr.bf16.mxu0 0
    %1879 = vmatmul.mubr.bf16.gmra.mrb[0].mxu0 %v1761
    %v1880 = vpop.f32.mrb[0].mxu0
    %v1881 = vadd.f32 0.0, %v1880
    %v1882 = vpop.f32.mrb[0].mxu0
    %v1883 = vadd.f32 0.0, %v1882
    %v1884 = vpop.f32.mrb[0].mxu0
    %v1885 = vpop.f32.mrb[0].mxu0
    %1886 = vdwg.mxu0
    %1887 = vmatprep.subr.bf16.mxu0 %v991
    %1888 = vmatpush1.bf16.msra.mxu0 %v990
    %1889 = vmatprep.subr.bf16.mxu0 %v999
    %1890 = vmatpush1.bf16.msra.mxu0 %v998
    %1891 = vmatprep.subr.bf16.mxu0 %v1007
    %1892 = vmatpush1.bf16.msra.mxu0 %v1006
    %1893 = vmatprep.subr.bf16.mxu0 %v1015
    %1894 = vmatpush1.bf16.msra.mxu0 %v1014
    %1895 = vmatprep.subr.bf16.mxu0 %v1023
    %1896 = vmatpush1.bf16.msra.mxu0 %v1022
    %1897 = vmatprep.subr.bf16.mxu0 %v1031
    %1898 = vmatpush1.bf16.msra.mxu0 %v1030
    %1899 = vmatprep.subr.bf16.mxu0 %v1039
    %1900 = vmatpush1.bf16.msra.mxu0 %v1038
    %1901 = vmatprep.subr.bf16.mxu0 %v1047
    %1902 = vmatpush1.bf16.msra.mxu0 %v1046
    %1903 = vmatprep.subr.bf16.mxu0 0
    %1904 = vmatpush1.bf16.msra.mxu0 0
    %1905 = vmatprep.subr.bf16.mxu0 0
    %1906 = vmatpush1.bf16.msra.mxu0 0
    %1907 = vmatprep.subr.bf16.mxu0 0
    %1908 = vmatpush1.bf16.msra.mxu0 0
    %1909 = vmatprep.subr.bf16.mxu0 0
    %1910 = vmatpush1.bf16.msra.mxu0 0
    %1911 = vmatprep.subr.bf16.mxu0 0
    %1912 = vmatpush1.bf16.msra.mxu0 0
    %1913 = vmatprep.subr.bf16.mxu0 0
    %1914 = vmatpush1.bf16.msra.mxu0 0
    %1915 = vmatprep.subr.bf16.mxu0 0
    %1916 = vmatpush1.bf16.msra.mxu0 0
    %1917 = vmatprep.subr.bf16.mxu0 0
    %1918 = vmatpush1.bf16.msra.mxu0 0
    %1919 = vmatprep.mubr.bf16.mxu0 0
    %1920 = vmatmul.mubr.bf16.gmra.mrb[0].mxu0 %v1761
    %v1921 = vpop.f32.mrb[0].mxu0
    %v1922 = vadd.f32 0.0, %v1921
    %v1923 = vpop.f32.mrb[0].mxu0
    %v1924 = vadd.f32 0.0, %v1923
    %v1925 = vpop.f32.mrb[0].mxu0
    %v1926 = vpop.f32.mrb[0].mxu0
    %1927 = vdwg.mxu0
    %1928 = vmatprep.subr.bf16.mxu0 %v1469
    %1929 = vmatpush1.bf16.msra.mxu0 %v1468
    %1930 = vmatprep.subr.bf16.mxu0 %v1477
    %1931 = vmatpush1.bf16.msra.mxu0 %v1476
    %1932 = vmatprep.subr.bf16.mxu0 %v1485
    %1933 = vmatpush1.bf16.msra.mxu0 %v1484
    %1934 = vmatprep.subr.bf16.mxu0 %v1493
    %1935 = vmatpush1.bf16.msra.mxu0 %v1492
    %1936 = vmatprep.subr.bf16.mxu0 %v1501
    %1937 = vmatpush1.bf16.msra.mxu0 %v1500
    %1938 = vmatprep.subr.bf16.mxu0 %v1509
    %1939 = vmatpush1.bf16.msra.mxu0 %v1508
    %1940 = vmatprep.subr.bf16.mxu0 %v1517
    %1941 = vmatpush1.bf16.msra.mxu0 %v1516
    %1942 = vmatprep.subr.bf16.mxu0 %v1525
    %1943 = vmatpush1.bf16.msra.mxu0 %v1524
    %1944 = vmatprep.subr.bf16.mxu0 0
    %1945 = vmatpush1.bf16.msra.mxu0 0
    %1946 = vmatprep.subr.bf16.mxu0 0
    %1947 = vmatpush1.bf16.msra.mxu0 0
    %1948 = vmatprep.subr.bf16.mxu0 0
    %1949 = vmatpush1.bf16.msra.mxu0 0
    %1950 = vmatprep.subr.bf16.mxu0 0
    %1951 = vmatpush1.bf16.msra.mxu0 0
    %1952 = vmatprep.subr.bf16.mxu0 0
    %1953 = vmatpush1.bf16.msra.mxu0 0
    %1954 = vmatprep.subr.bf16.mxu0 0
    %1955 = vmatpush1.bf16.msra.mxu0 0
    %1956 = vmatprep.subr.bf16.mxu0 0
    %1957 = vmatpush1.bf16.msra.mxu0 0
    %1958 = vmatprep.subr.bf16.mxu0 0
    %1959 = vmatpush1.bf16.msra.mxu0 0
    %1960 = vmatprep.mubr.bf16.mxu0 0
    %1961 = vmatmul.mubr.bf16.gmra.mrb[0].mxu0 %v723
    %v1962 = vpop.f32.mrb[0].mxu0
    %v1963 = vadd.f32 %v1799, %v1962
    %v1964 = vpop.f32.mrb[0].mxu0
    %v1965 = vadd.f32 %v1801, %v1964
    %v1966 = vpop.f32.mrb[0].mxu0
    %v1967 = vpop.f32.mrb[0].mxu0
    %1968 = vdwg.mxu0
    %1969 = vmatprep.subr.bf16.mxu0 %v1471
    %1970 = vmatpush1.bf16.msra.mxu0 %v1470
    %1971 = vmatprep.subr.bf16.mxu0 %v1479
    %1972 = vmatpush1.bf16.msra.mxu0 %v1478
    %1973 = vmatprep.subr.bf16.mxu0 %v1487
    %1974 = vmatpush1.bf16.msra.mxu0 %v1486
    %1975 = vmatprep.subr.bf16.mxu0 %v1495
    %1976 = vmatpush1.bf16.msra.mxu0 %v1494
    %1977 = vmatprep.subr.bf16.mxu0 %v1503
    %1978 = vmatpush1.bf16.msra.mxu0 %v1502
    %1979 = vmatprep.subr.bf16.mxu0 %v1511
    %1980 = vmatpush1.bf16.msra.mxu0 %v1510
    %1981 = vmatprep.subr.bf16.mxu0 %v1519
    %1982 = vmatpush1.bf16.msra.mxu0 %v1518
    %1983 = vmatprep.subr.bf16.mxu0 %v1527
    %1984 = vmatpush1.bf16.msra.mxu0 %v1526
    %1985 = vmatprep.subr.bf16.mxu0 0
    %1986 = vmatpush1.bf16.msra.mxu0 0
    %1987 = vmatprep.subr.bf16.mxu0 0
    %1988 = vmatpush1.bf16.msra.mxu0 0
    %1989 = vmatprep.subr.bf16.mxu0 0
    %1990 = vmatpush1.bf16.msra.mxu0 0
    %1991 = vmatprep.subr.bf16.mxu0 0
    %1992 = vmatpush1.bf16.msra.mxu0 0
    %1993 = vmatprep.subr.bf16.mxu0 0
    %1994 = vmatpush1.bf16.msra.mxu0 0
    %1995 = vmatprep.subr.bf16.mxu0 0
    %1996 = vmatpush1.bf16.msra.mxu0 0
    %1997 = vmatprep.subr.bf16.mxu0 0
    %1998 = vmatpush1.bf16.msra.mxu0 0
    %1999 = vmatprep.subr.bf16.mxu0 0
    %2000 = vmatpush1.bf16.msra.mxu0 0
    %2001 = vmatprep.mubr.bf16.mxu0 0
    %2002 = vmatmul.mubr.bf16.gmra.mrb[0].mxu0 %v723
    %v2003 = vpop.f32.mrb[0].mxu0
    %v2004 = vadd.f32 %v1840, %v2003
    %v2005 = vpop.f32.mrb[0].mxu0
    %v2006 = vadd.f32 %v1842, %v2005
    %v2007 = vpop.f32.mrb[0].mxu0
    %v2008 = vpop.f32.mrb[0].mxu0
    %2009 = vdwg.mxu0
    %2010 = vmatprep.subr.bf16.mxu0 %v1473
    %2011 = vmatpush1.bf16.msra.mxu0 %v1472
    %2012 = vmatprep.subr.bf16.mxu0 %v1481
    %2013 = vmatpush1.bf16.msra.mxu0 %v1480
    %2014 = vmatprep.subr.bf16.mxu0 %v1489
    %2015 = vmatpush1.bf16.msra.mxu0 %v1488
    %2016 = vmatprep.subr.bf16.mxu0 %v1497
    %2017 = vmatpush1.bf16.msra.mxu0 %v1496
    %2018 = vmatprep.subr.bf16.mxu0 %v1505
    %2019 = vmatpush1.bf16.msra.mxu0 %v1504
    %2020 = vmatprep.subr.bf16.mxu0 %v1513
    %2021 = vmatpush1.bf16.msra.mxu0 %v1512
    %2022 = vmatprep.subr.bf16.mxu0 %v1521
    %2023 = vmatpush1.bf16.msra.mxu0 %v1520
    %2024 = vmatprep.subr.bf16.mxu0 %v1529
    %2025 = vmatpush1.bf16.msra.mxu0 %v1528
    %2026 = vmatprep.subr.bf16.mxu0 0
    %2027 = vmatpush1.bf16.msra.mxu0 0
    %2028 = vmatprep.subr.bf16.mxu0 0
    %2029 = vmatpush1.bf16.msra.mxu0 0
    %2030 = vmatprep.subr.bf16.mxu0 0
    %2031 = vmatpush1.bf16.msra.mxu0 0
    %2032 = vmatprep.subr.bf16.mxu0 0
    %2033 = vmatpush1.bf16.msra.mxu0 0
    %2034 = vmatprep.subr.bf16.mxu0 0
    %2035 = vmatpush1.bf16.msra.mxu0 0
    %2036 = vmatprep.subr.bf16.mxu0 0
    %2037 = vmatpush1.bf16.msra.mxu0 0
    %2038 = vmatprep.subr.bf16.mxu0 0
    %2039 = vmatpush1.bf16.msra.mxu0 0
    %2040 = vmatprep.subr.bf16.mxu0 0
    %2041 = vmatpush1.bf16.msra.mxu0 0
    %2042 = vmatprep.mubr.bf16.mxu0 0
    %2043 = vmatmul.mubr.bf16.gmra.mrb[0].mxu0 %v723
    %v2044 = vpop.f32.mrb[0].mxu0
    %v2045 = vadd.f32 %v1881, %v2044
    %v2046 = vpop.f32.mrb[0].mxu0
    %v2047 = vadd.f32 %v1883, %v2046
    %v2048 = vpop.f32.mrb[0].mxu0
    %v2049 = vpop.f32.mrb[0].mxu0
    %2050 = vdwg.mxu0
    %2051 = vmatprep.subr.bf16.mxu0 %v1475
    %2052 = vmatpush1.bf16.msra.mxu0 %v1474
    %2053 = vmatprep.subr.bf16.mxu0 %v1483
    %2054 = vmatpush1.bf16.msra.mxu0 %v1482
    %2055 = vmatprep.subr.bf16.mxu0 %v1491
    %2056 = vmatpush1.bf16.msra.mxu0 %v1490
    %2057 = vmatprep.subr.bf16.mxu0 %v1499
    %2058 = vmatpush1.bf16.msra.mxu0 %v1498
    %2059 = vmatprep.subr.bf16.mxu0 %v1507
    %2060 = vmatpush1.bf16.msra.mxu0 %v1506
    %2061 = vmatprep.subr.bf16.mxu0 %v1515
    %2062 = vmatpush1.bf16.msra.mxu0 %v1514
    %2063 = vmatprep.subr.bf16.mxu0 %v1523
    %2064 = vmatpush1.bf16.msra.mxu0 %v1522
    %2065 = vmatprep.subr.bf16.mxu0 %v1531
    %2066 = vmatpush1.bf16.msra.mxu0 %v1530
    %2067 = vmatprep.subr.bf16.mxu0 0
    %2068 = vmatpush1.bf16.msra.mxu0 0
    %2069 = vmatprep.subr.bf16.mxu0 0
    %2070 = vmatpush1.bf16.msra.mxu0 0
    %2071 = vmatprep.subr.bf16.mxu0 0
    %2072 = vmatpush1.bf16.msra.mxu0 0
    %2073 = vmatprep.subr.bf16.mxu0 0
    %2074 = vmatpush1.bf16.msra.mxu0 0
    %2075 = vmatprep.subr.bf16.mxu0 0
    %2076 = vmatpush1.bf16.msra.mxu0 0
    %2077 = vmatprep.subr.bf16.mxu0 0
    %2078 = vmatpush1.bf16.msra.mxu0 0
    %2079 = vmatprep.subr.bf16.mxu0 0
    %2080 = vmatpush1.bf16.msra.mxu0 0
    %2081 = vmatprep.subr.bf16.mxu0 0
    %2082 = vmatpush1.bf16.msra.mxu0 0
    %2083 = vmatprep.mubr.bf16.mxu0 0
    %2084 = vmatmul.mubr.bf16.gmra.mrb[0].mxu0 %v723
    %v2085 = vpop.f32.mrb[0].mxu0
    %v2086 = vadd.f32 %v1922, %v2085
    %v2087 = vpop.f32.mrb[0].mxu0
    %v2088 = vadd.f32 %v1924, %v2087
    %v2089 = vpop.f32.mrb[0].mxu0
    %v2090 = vpop.f32.mrb[0].mxu0
    %2091 = vdwg.mxu0
    %v2092 = vld [vmem:[#allocation10 + $0x400] sm:$0xff]
    %v2093 = vld [vmem:[#allocation10 + $0x408] sm:$0xff]
    %v2094 = vld [vmem:[#allocation10 + $0x410] sm:$0xff]
    %v2095 = vld [vmem:[#allocation10 + $0x418] sm:$0xff]
    %v2096 = vld [vmem:[#allocation10 + $0x420] sm:$0xff]
    %v2097 = vld [vmem:[#allocation10 + $0x428] sm:$0xff]
    %v2098 = vld [vmem:[#allocation10 + $0x430] sm:$0xff]
    %v2099 = vld [vmem:[#allocation10 + $0x438] sm:$0xff]
    %v2100 = vld [vmem:[#allocation10 + $0x440] sm:$0xff]
    %v2101 = vld [vmem:[#allocation10 + $0x448] sm:$0xff]
    %v2102 = vld [vmem:[#allocation10 + $0x450] sm:$0xff]
    %v2103 = vld [vmem:[#allocation10 + $0x458] sm:$0xff]
    %v2104 = vld [vmem:[#allocation10 + $0x460] sm:$0xff]
    %v2105 = vld [vmem:[#allocation10 + $0x468] sm:$0xff]
    %v2106 = vld [vmem:[#allocation10 + $0x470] sm:$0xff]
    %v2107 = vld [vmem:[#allocation10 + $0x478] sm:$0xff]
    %v2108 = vld [vmem:[#allocation10 + $0x480] sm:$0xff]
    %v2109 = vld [vmem:[#allocation10 + $0x488] sm:$0xff]
    %v2110 = vld [vmem:[#allocation10 + $0x490] sm:$0xff]
    %v2111 = vld [vmem:[#allocation10 + $0x498] sm:$0xff]
    %v2112 = vld [vmem:[#allocation10 + $0x4a0] sm:$0xff]
    %v2113 = vld [vmem:[#allocation10 + $0x4a8] sm:$0xff]
    %v2114 = vld [vmem:[#allocation10 + $0x4b0] sm:$0xff]
    %v2115 = vld [vmem:[#allocation10 + $0x4b8] sm:$0xff]
    %v2116 = vld [vmem:[#allocation10 + $0x4c0] sm:$0xff]
    %v2117 = vld [vmem:[#allocation10 + $0x4c8] sm:$0xff]
    %v2118 = vld [vmem:[#allocation10 + $0x4d0] sm:$0xff]
    %v2119 = vld [vmem:[#allocation10 + $0x4d8] sm:$0xff]
    %v2120 = vld [vmem:[#allocation10 + $0x4e0] sm:$0xff]
    %v2121 = vld [vmem:[#allocation10 + $0x4e8] sm:$0xff]
    %v2122 = vld [vmem:[#allocation10 + $0x4f0] sm:$0xff]
    %v2123 = vld [vmem:[#allocation10 + $0x4f8] sm:$0xff]
    %v2124 = vld [vmem:[#allocation10 + $0x500] sm:$0xff]
    %v2125 = vld [vmem:[#allocation10 + $0x508] sm:$0xff]
    %v2126 = vld [vmem:[#allocation10 + $0x510] sm:$0xff]
    %v2127 = vld [vmem:[#allocation10 + $0x518] sm:$0xff]
    %v2128 = vld [vmem:[#allocation10 + $0x520] sm:$0xff]
    %v2129 = vld [vmem:[#allocation10 + $0x528] sm:$0xff]
    %v2130 = vld [vmem:[#allocation10 + $0x530] sm:$0xff]
    %v2131 = vld [vmem:[#allocation10 + $0x538] sm:$0xff]
    %v2132 = vld [vmem:[#allocation10 + $0x540] sm:$0xff]
    %v2133 = vld [vmem:[#allocation10 + $0x548] sm:$0xff]
    %v2134 = vld [vmem:[#allocation10 + $0x550] sm:$0xff]
    %v2135 = vld [vmem:[#allocation10 + $0x558] sm:$0xff]
    %v2136 = vld [vmem:[#allocation10 + $0x560] sm:$0xff]
    %v2137 = vld [vmem:[#allocation10 + $0x568] sm:$0xff]
    %v2138 = vld [vmem:[#allocation10 + $0x570] sm:$0xff]
    %v2139 = vld [vmem:[#allocation10 + $0x578] sm:$0xff]
    %v2140 = vld [vmem:[#allocation10 + $0x580] sm:$0xff]
    %v2141 = vld [vmem:[#allocation10 + $0x588] sm:$0xff]
    %v2142 = vld [vmem:[#allocation10 + $0x590] sm:$0xff]
    %v2143 = vld [vmem:[#allocation10 + $0x598] sm:$0xff]
    %v2144 = vld [vmem:[#allocation10 + $0x5a0] sm:$0xff]
    %v2145 = vld [vmem:[#allocation10 + $0x5a8] sm:$0xff]
    %v2146 = vld [vmem:[#allocation10 + $0x5b0] sm:$0xff]
    %v2147 = vld [vmem:[#allocation10 + $0x5b8] sm:$0xff]
    %v2148 = vld [vmem:[#allocation10 + $0x5c0] sm:$0xff]
    %v2149 = vld [vmem:[#allocation10 + $0x5c8] sm:$0xff]
    %v2150 = vld [vmem:[#allocation10 + $0x5d0] sm:$0xff]
    %v2151 = vld [vmem:[#allocation10 + $0x5d8] sm:$0xff]
    %v2152 = vld [vmem:[#allocation10 + $0x5e0] sm:$0xff]
    %v2153 = vld [vmem:[#allocation10 + $0x5e8] sm:$0xff]
    %v2154 = vld [vmem:[#allocation10 + $0x5f0] sm:$0xff]
    %v2155 = vld [vmem:[#allocation10 + $0x5f8] sm:$0xff]
    %v2157 = vrot.slane %v722, 1
    %v2223 = vunpack.c.l.b16 %v2092
    %v2224 = vunpack.c.h.b16 %v2092
    %v2225 = vunpack.c.l.b16 %v2093
    %v2226 = vunpack.c.h.b16 %v2093
    %v2227 = vunpack.c.l.b16 %v2094
    %v2228 = vunpack.c.h.b16 %v2094
    %v2229 = vunpack.c.l.b16 %v2095
    %v2230 = vunpack.c.h.b16 %v2095
    %v2231 = vunpack.c.l.b16 %v2096
    %v2232 = vunpack.c.h.b16 %v2096
    %v2233 = vunpack.c.l.b16 %v2097
    %v2234 = vunpack.c.h.b16 %v2097
    %v2235 = vunpack.c.l.b16 %v2098
    %v2236 = vunpack.c.h.b16 %v2098
    %v2237 = vunpack.c.l.b16 %v2099
    %v2238 = vunpack.c.h.b16 %v2099
    %v2239 = vunpack.c.l.b16 %v2100
    %v2240 = vunpack.c.h.b16 %v2100
    %v2241 = vunpack.c.l.b16 %v2101
    %v2242 = vunpack.c.h.b16 %v2101
    %v2243 = vunpack.c.l.b16 %v2102
    %v2244 = vunpack.c.h.b16 %v2102
    %v2245 = vunpack.c.l.b16 %v2103
    %v2246 = vunpack.c.h.b16 %v2103
    %v2247 = vunpack.c.l.b16 %v2104
    %v2248 = vunpack.c.h.b16 %v2104
    %v2249 = vunpack.c.l.b16 %v2105
    %v2250 = vunpack.c.h.b16 %v2105
    %v2251 = vunpack.c.l.b16 %v2106
    %v2252 = vunpack.c.h.b16 %v2106
    %v2253 = vunpack.c.l.b16 %v2107
    %v2254 = vunpack.c.h.b16 %v2107
    %v2255 = vunpack.c.l.b16 %v2108
    %v2256 = vunpack.c.h.b16 %v2108
    %v2257 = vunpack.c.l.b16 %v2109
    %v2258 = vunpack.c.h.b16 %v2109
    %v2259 = vunpack.c.l.b16 %v2110
    %v2260 = vunpack.c.h.b16 %v2110
    %v2261 = vunpack.c.l.b16 %v2111
    %v2262 = vunpack.c.h.b16 %v2111
    %v2263 = vunpack.c.l.b16 %v2112
    %v2264 = vunpack.c.h.b16 %v2112
    %v2265 = vunpack.c.l.b16 %v2113
    %v2266 = vunpack.c.h.b16 %v2113
    %v2267 = vunpack.c.l.b16 %v2114
    %v2268 = vunpack.c.h.b16 %v2114
    %v2269 = vunpack.c.l.b16 %v2115
    %v2270 = vunpack.c.h.b16 %v2115
    %v2271 = vunpack.c.l.b16 %v2116
    %v2272 = vunpack.c.h.b16 %v2116
    %v2273 = vunpack.c.l.b16 %v2117
    %v2274 = vunpack.c.h.b16 %v2117
    %v2275 = vunpack.c.l.b16 %v2118
    %v2276 = vunpack.c.h.b16 %v2118
    %v2277 = vunpack.c.l.b16 %v2119
    %v2278 = vunpack.c.h.b16 %v2119
    %v2279 = vunpack.c.l.b16 %v2120
    %v2280 = vunpack.c.h.b16 %v2120
    %v2281 = vunpack.c.l.b16 %v2121
    %v2282 = vunpack.c.h.b16 %v2121
    %v2283 = vunpack.c.l.b16 %v2122
    %v2284 = vunpack.c.h.b16 %v2122
    %v2285 = vunpack.c.l.b16 %v2123
    %v2286 = vunpack.c.h.b16 %v2123
    %v2287 = vunpack.c.l.b16 %v2124
    %v2288 = vunpack.c.h.b16 %v2124
    %v2289 = vunpack.c.l.b16 %v2125
    %v2290 = vunpack.c.h.b16 %v2125
    %v2291 = vunpack.c.l.b16 %v2126
    %v2292 = vunpack.c.h.b16 %v2126
    %v2293 = vunpack.c.l.b16 %v2127
    %v2294 = vunpack.c.h.b16 %v2127
    %v2295 = vunpack.c.l.b16 %v2128
    %v2296 = vunpack.c.h.b16 %v2128
    %v2297 = vunpack.c.l.b16 %v2129
    %v2298 = vunpack.c.h.b16 %v2129
    %v2299 = vunpack.c.l.b16 %v2130
    %v2300 = vunpack.c.h.b16 %v2130
    %v2301 = vunpack.c.l.b16 %v2131
    %v2302 = vunpack.c.h.b16 %v2131
    %v2303 = vunpack.c.l.b16 %v2132
    %v2304 = vunpack.c.h.b16 %v2132
    %v2305 = vunpack.c.l.b16 %v2133
    %v2306 = vunpack.c.h.b16 %v2133
    %v2307 = vunpack.c.l.b16 %v2134
    %v2308 = vunpack.c.h.b16 %v2134
    %v2309 = vunpack.c.l.b16 %v2135
    %v2310 = vunpack.c.h.b16 %v2135
    %v2311 = vunpack.c.l.b16 %v2136
    %v2312 = vunpack.c.h.b16 %v2136
    %v2313 = vunpack.c.l.b16 %v2137
    %v2314 = vunpack.c.h.b16 %v2137
    %v2315 = vunpack.c.l.b16 %v2138
    %v2316 = vunpack.c.h.b16 %v2138
    %v2317 = vunpack.c.l.b16 %v2139
    %v2318 = vunpack.c.h.b16 %v2139
    %v2319 = vunpack.c.l.b16 %v2140
    %v2320 = vunpack.c.h.b16 %v2140
    %v2321 = vunpack.c.l.b16 %v2141
    %v2322 = vunpack.c.h.b16 %v2141
    %v2323 = vunpack.c.l.b16 %v2142
    %v2324 = vunpack.c.h.b16 %v2142
    %v2325 = vunpack.c.l.b16 %v2143
    %v2326 = vunpack.c.h.b16 %v2143
    %v2327 = vunpack.c.l.b16 %v2144
    %v2328 = vunpack.c.h.b16 %v2144
    %v2329 = vunpack.c.l.b16 %v2145
    %v2330 = vunpack.c.h.b16 %v2145
    %v2331 = vunpack.c.l.b16 %v2146
    %v2332 = vunpack.c.h.b16 %v2146
    %v2333 = vunpack.c.l.b16 %v2147
    %v2334 = vunpack.c.h.b16 %v2147
    %v2335 = vunpack.c.l.b16 %v2148
    %v2336 = vunpack.c.h.b16 %v2148
    %v2337 = vunpack.c.l.b16 %v2149
    %v2338 = vunpack.c.h.b16 %v2149
    %v2339 = vunpack.c.l.b16 %v2150
    %v2340 = vunpack.c.h.b16 %v2150
    %v2341 = vunpack.c.l.b16 %v2151
    %v2342 = vunpack.c.h.b16 %v2151
    %v2343 = vunpack.c.l.b16 %v2152
    %v2344 = vunpack.c.h.b16 %v2152
    %v2345 = vunpack.c.l.b16 %v2153
    %v2346 = vunpack.c.h.b16 %v2153
    %v2347 = vunpack.c.l.b16 %v2154
    %v2348 = vunpack.c.h.b16 %v2154
    %v2349 = vunpack.c.l.b16 %v2155
    %v2350 = vunpack.c.h.b16 %v2155
    %v2351 = vpack.c.b16 %v2231, %v2223
    %v2352 = vpack.c.b16 %v2232, %v2224
    %v2353 = vpack.c.b16 %v2233, %v2225
    %v2354 = vpack.c.b16 %v2234, %v2226
    %v2355 = vpack.c.b16 %v2235, %v2227
    %v2356 = vpack.c.b16 %v2236, %v2228
    %v2357 = vpack.c.b16 %v2237, %v2229
    %v2358 = vpack.c.b16 %v2238, %v2230
    %v2359 = vpack.c.b16 %v2247, %v2239
    %v2360 = vpack.c.b16 %v2248, %v2240
    %v2361 = vpack.c.b16 %v2249, %v2241
    %v2362 = vpack.c.b16 %v2250, %v2242
    %v2363 = vpack.c.b16 %v2251, %v2243
    %v2364 = vpack.c.b16 %v2252, %v2244
    %v2365 = vpack.c.b16 %v2253, %v2245
    %v2366 = vpack.c.b16 %v2254, %v2246
    %v2367 = vpack.c.b16 %v2263, %v2255
    %v2368 = vpack.c.b16 %v2264, %v2256
    %v2369 = vpack.c.b16 %v2265, %v2257
    %v2370 = vpack.c.b16 %v2266, %v2258
    %v2371 = vpack.c.b16 %v2267, %v2259
    %v2372 = vpack.c.b16 %v2268, %v2260
    %v2373 = vpack.c.b16 %v2269, %v2261
    %v2374 = vpack.c.b16 %v2270, %v2262
    %v2375 = vpack.c.b16 %v2279, %v2271
    %v2376 = vpack.c.b16 %v2280, %v2272
    %v2377 = vpack.c.b16 %v2281, %v2273
    %v2378 = vpack.c.b16 %v2282, %v2274
    %v2379 = vpack.c.b16 %v2283, %v2275
    %v2380 = vpack.c.b16 %v2284, %v2276
    %v2381 = vpack.c.b16 %v2285, %v2277
    %v2382 = vpack.c.b16 %v2286, %v2278
    %v2383 = vpack.c.b16 %v2295, %v2287
    %v2384 = vpack.c.b16 %v2296, %v2288
    %v2385 = vpack.c.b16 %v2297, %v2289
    %v2386 = vpack.c.b16 %v2298, %v2290
    %v2387 = vpack.c.b16 %v2299, %v2291
    %v2388 = vpack.c.b16 %v2300, %v2292
    %v2389 = vpack.c.b16 %v2301, %v2293
    %v2390 = vpack.c.b16 %v2302, %v2294
    %v2391 = vpack.c.b16 %v2311, %v2303
    %v2392 = vpack.c.b16 %v2312, %v2304
    %v2393 = vpack.c.b16 %v2313, %v2305
    %v2394 = vpack.c.b16 %v2314, %v2306
    %v2395 = vpack.c.b16 %v2315, %v2307
    %v2396 = vpack.c.b16 %v2316, %v2308
    %v2397 = vpack.c.b16 %v2317, %v2309
    %v2398 = vpack.c.b16 %v2318, %v2310
    %v2399 = vpack.c.b16 %v2327, %v2319
    %v2400 = vpack.c.b16 %v2328, %v2320
    %v2401 = vpack.c.b16 %v2329, %v2321
    %v2402 = vpack.c.b16 %v2330, %v2322
    %v2403 = vpack.c.b16 %v2331, %v2323
    %v2404 = vpack.c.b16 %v2332, %v2324
    %v2405 = vpack.c.b16 %v2333, %v2325
    %v2406 = vpack.c.b16 %v2334, %v2326
    %v2407 = vpack.c.b16 %v2343, %v2335
    %v2408 = vpack.c.b16 %v2344, %v2336
    %v2409 = vpack.c.b16 %v2345, %v2337
    %v2410 = vpack.c.b16 %v2346, %v2338
    %v2411 = vpack.c.b16 %v2347, %v2339
    %v2412 = vpack.c.b16 %v2348, %v2340
    %v2413 = vpack.c.b16 %v2349, %v2341
    %v2414 = vpack.c.b16 %v2350, %v2342
    %2479 = vmatprep.subr.bf16.mxu0 %v2352
    %2480 = vmatpush1.bf16.msra.mxu0 %v2351
    %2481 = vmatprep.subr.bf16.mxu0 %v2360
    %2482 = vmatpush1.bf16.msra.mxu0 %v2359
    %2483 = vmatprep.subr.bf16.mxu0 %v2368
    %2484 = vmatpush1.bf16.msra.mxu0 %v2367
    %2485 = vmatprep.subr.bf16.mxu0 %v2376
    %2486 = vmatpush1.bf16.msra.mxu0 %v2375
    %2487 = vmatprep.subr.bf16.mxu0 %v2384
    %2488 = vmatpush1.bf16.msra.mxu0 %v2383
    %2489 = vmatprep.subr.bf16.mxu0 %v2392
    %2490 = vmatpush1.bf16.msra.mxu0 %v2391
    %2491 = vmatprep.subr.bf16.mxu0 %v2400
    %2492 = vmatpush1.bf16.msra.mxu0 %v2399
    %2493 = vmatprep.subr.bf16.mxu0 %v2408
    %2494 = vmatpush1.bf16.msra.mxu0 %v2407
    %2495 = vmatprep.subr.bf16.mxu0 0
    %2496 = vmatpush1.bf16.msra.mxu0 0
    %2497 = vmatprep.subr.bf16.mxu0 0
    %2498 = vmatpush1.bf16.msra.mxu0 0
    %2499 = vmatprep.subr.bf16.mxu0 0
    %2500 = vmatpush1.bf16.msra.mxu0 0
    %2501 = vmatprep.subr.bf16.mxu0 0
    %2502 = vmatpush1.bf16.msra.mxu0 0
    %2503 = vmatprep.subr.bf16.mxu0 0
    %2504 = vmatpush1.bf16.msra.mxu0 0
    %2505 = vmatprep.subr.bf16.mxu0 0
    %2506 = vmatpush1.bf16.msra.mxu0 0
    %2507 = vmatprep.subr.bf16.mxu0 0
    %2508 = vmatpush1.bf16.msra.mxu0 0
    %2509 = vmatprep.subr.bf16.mxu0 0
    %2510 = vmatpush1.bf16.msra.mxu0 0
    %2511 = vmatprep.mubr.bf16.mxu0 0
    %2512 = vmatmul.mubr.bf16.gmra.mrb[0].mxu0 %v2157
    %v2513 = vpop.f32.mrb[0].mxu0
    %v2514 = vadd.f32 0.0, %v2513
    %v2515 = vpop.f32.mrb[0].mxu0
    %v2516 = vadd.f32 0.0, %v2515
    %v2517 = vpop.f32.mrb[0].mxu0
    %v2518 = vpop.f32.mrb[0].mxu0
    %2519 = vdwg.mxu0
    %2520 = vmatprep.subr.bf16.mxu0 %v2354
    %2521 = vmatpush1.bf16.msra.mxu0 %v2353
    %2522 = vmatprep.subr.bf16.mxu0 %v2362
    %2523 = vmatpush1.bf16.msra.mxu0 %v2361
    %2524 = vmatprep.subr.bf16.mxu0 %v2370
    %2525 = vmatpush1.bf16.msra.mxu0 %v2369
    %2526 = vmatprep.subr.bf16.mxu0 %v2378
    %2527 = vmatpush1.bf16.msra.mxu0 %v2377
    %2528 = vmatprep.subr.bf16.mxu0 %v2386
    %2529 = vmatpush1.bf16.msra.mxu0 %v2385
    %2530 = vmatprep.subr.bf16.mxu0 %v2394
    %2531 = vmatpush1.bf16.msra.mxu0 %v2393
    %2532 = vmatprep.subr.bf16.mxu0 %v2402
    %2533 = vmatpush1.bf16.msra.mxu0 %v2401
    %2534 = vmatprep.subr.bf16.mxu0 %v2410
    %2535 = vmatpush1.bf16.msra.mxu0 %v2409
    %2536 = vmatprep.subr.bf16.mxu0 0
    %2537 = vmatpush1.bf16.msra.mxu0 0
    %2538 = vmatprep.subr.bf16.mxu0 0
    %2539 = vmatpush1.bf16.msra.mxu0 0
    %2540 = vmatprep.subr.bf16.mxu0 0
    %2541 = vmatpush1.bf16.msra.mxu0 0
    %2542 = vmatprep.subr.bf16.mxu0 0
    %2543 = vmatpush1.bf16.msra.mxu0 0
    %2544 = vmatprep.subr.bf16.mxu0 0
    %2545 = vmatpush1.bf16.msra.mxu0 0
    %2546 = vmatprep.subr.bf16.mxu0 0
    %2547 = vmatpush1.bf16.msra.mxu0 0
    %2548 = vmatprep.subr.bf16.mxu0 0
    %2549 = vmatpush1.bf16.msra.mxu0 0
    %2550 = vmatprep.subr.bf16.mxu0 0
    %2551 = vmatpush1.bf16.msra.mxu0 0
    %2552 = vmatprep.mubr.bf16.mxu0 0
    %2553 = vmatmul.mubr.bf16.gmra.mrb[0].mxu0 %v2157
    %v2554 = vpop.f32.mrb[0].mxu0
    %v2555 = vadd.f32 0.0, %v2554
    %v2556 = vpop.f32.mrb[0].mxu0
    %v2557 = vadd.f32 0.0, %v2556
    %v2558 = vpop.f32.mrb[0].mxu0
    %v2559 = vpop.f32.mrb[0].mxu0
    %2560 = vdwg.mxu0
    %2561 = vmatprep.subr.bf16.mxu0 %v2356
    %2562 = vmatpush1.bf16.msra.mxu0 %v2355
    %2563 = vmatprep.subr.bf16.mxu0 %v2364
    %2564 = vmatpush1.bf16.msra.mxu0 %v2363
    %2565 = vmatprep.subr.bf16.mxu0 %v2372
    %2566 = vmatpush1.bf16.msra.mxu0 %v2371
    %2567 = vmatprep.subr.bf16.mxu0 %v2380
    %2568 = vmatpush1.bf16.msra.mxu0 %v2379
    %2569 = vmatprep.subr.bf16.mxu0 %v2388
    %2570 = vmatpush1.bf16.msra.mxu0 %v2387
    %2571 = vmatprep.subr.bf16.mxu0 %v2396
    %2572 = vmatpush1.bf16.msra.mxu0 %v2395
    %2573 = vmatprep.subr.bf16.mxu0 %v2404
    %2574 = vmatpush1.bf16.msra.mxu0 %v2403
    %2575 = vmatprep.subr.bf16.mxu0 %v2412
    %2576 = vmatpush1.bf16.msra.mxu0 %v2411
    %2577 = vmatprep.subr.bf16.mxu0 0
    %2578 = vmatpush1.bf16.msra.mxu0 0
    %2579 = vmatprep.subr.bf16.mxu0 0
    %2580 = vmatpush1.bf16.msra.mxu0 0
    %2581 = vmatprep.subr.bf16.mxu0 0
    %2582 = vmatpush1.bf16.msra.mxu0 0
    %2583 = vmatprep.subr.bf16.mxu0 0
    %2584 = vmatpush1.bf16.msra.mxu0 0
    %2585 = vmatprep.subr.bf16.mxu0 0
    %2586 = vmatpush1.bf16.msra.mxu0 0
    %2587 = vmatprep.subr.bf16.mxu0 0
    %2588 = vmatpush1.bf16.msra.mxu0 0
    %2589 = vmatprep.subr.bf16.mxu0 0
    %2590 = vmatpush1.bf16.msra.mxu0 0
    %2591 = vmatprep.subr.bf16.mxu0 0
    %2592 = vmatpush1.bf16.msra.mxu0 0
    %2593 = vmatprep.mubr.bf16.mxu0 0
    %2594 = vmatmul.mubr.bf16.gmra.mrb[0].mxu0 %v2157
    %v2595 = vpop.f32.mrb[0].mxu0
    %v2596 = vadd.f32 0.0, %v2595
    %v2597 = vpop.f32.mrb[0].mxu0
    %v2598 = vadd.f32 0.0, %v2597
    %v2599 = vpop.f32.mrb[0].mxu0
    %v2600 = vpop.f32.mrb[0].mxu0
    %2601 = vdwg.mxu0
    %2602 = vmatprep.subr.bf16.mxu0 %v2358
    %2603 = vmatpush1.bf16.msra.mxu0 %v2357
    %2604 = vmatprep.subr.bf16.mxu0 %v2366
    %2605 = vmatpush1.bf16.msra.mxu0 %v2365
    %2606 = vmatprep.subr.bf16.mxu0 %v2374
    %2607 = vmatpush1.bf16.msra.mxu0 %v2373
    %2608 = vmatprep.subr.bf16.mxu0 %v2382
    %2609 = vmatpush1.bf16.msra.mxu0 %v2381
    %2610 = vmatprep.subr.bf16.mxu0 %v2390
    %2611 = vmatpush1.bf16.msra.mxu0 %v2389
    %2612 = vmatprep.subr.bf16.mxu0 %v2398
    %2613 = vmatpush1.bf16.msra.mxu0 %v2397
    %2614 = vmatprep.subr.bf16.mxu0 %v2406
    %2615 = vmatpush1.bf16.msra.mxu0 %v2405
    %2616 = vmatprep.subr.bf16.mxu0 %v2414
    %2617 = vmatpush1.bf16.msra.mxu0 %v2413
    %2618 = vmatprep.subr.bf16.mxu0 0
    %2619 = vmatpush1.bf16.msra.mxu0 0
    %2620 = vmatprep.subr.bf16.mxu0 0
    %2621 = vmatpush1.bf16.msra.mxu0 0
    %2622 = vmatprep.subr.bf16.mxu0 0
    %2623 = vmatpush1.bf16.msra.mxu0 0
    %2624 = vmatprep.subr.bf16.mxu0 0
    %2625 = vmatpush1.bf16.msra.mxu0 0
    %2626 = vmatprep.subr.bf16.mxu0 0
    %2627 = vmatpush1.bf16.msra.mxu0 0
    %2628 = vmatprep.subr.bf16.mxu0 0
    %2629 = vmatpush1.bf16.msra.mxu0 0
    %2630 = vmatprep.subr.bf16.mxu0 0
    %2631 = vmatpush1.bf16.msra.mxu0 0
    %2632 = vmatprep.subr.bf16.mxu0 0
    %2633 = vmatpush1.bf16.msra.mxu0 0
    %2634 = vmatprep.mubr.bf16.mxu0 0
    %2635 = vmatmul.mubr.bf16.gmra.mrb[0].mxu0 %v2157
    %v2636 = vpop.f32.mrb[0].mxu0
    %v2637 = vadd.f32 0.0, %v2636
    %v2638 = vpop.f32.mrb[0].mxu0
    %v2639 = vadd.f32 0.0, %v2638
    %v2640 = vpop.f32.mrb[0].mxu0
    %v2641 = vpop.f32.mrb[0].mxu0
    %2642 = vdwg.mxu0
    %v2643 = vadd.f32 %v1631, %v2514
    %v2644 = vadd.f32 %v1633, %v2516
    %v2645 = vadd.f32 %v1672, %v2555
    %v2646 = vadd.f32 %v1674, %v2557
    %v2647 = vadd.f32 %v1713, %v2596
    %v2648 = vadd.f32 %v1715, %v2598
    %v2649 = vadd.f32 %v1754, %v2637
    %v2650 = vadd.f32 %v1756, %v2639
    %v2652 = vrot.slane %v723, 1
    %2654 = vmatprep.subr.bf16.mxu0 %v2352
    %2655 = vmatpush1.bf16.msra.mxu0 %v2351
    %2656 = vmatprep.subr.bf16.mxu0 %v2360
    %2657 = vmatpush1.bf16.msra.mxu0 %v2359
    %2658 = vmatprep.subr.bf16.mxu0 %v2368
    %2659 = vmatpush1.bf16.msra.mxu0 %v2367
    %2660 = vmatprep.subr.bf16.mxu0 %v2376
    %2661 = vmatpush1.bf16.msra.mxu0 %v2375
    %2662 = vmatprep.subr.bf16.mxu0 %v2384
    %2663 = vmatpush1.bf16.msra.mxu0 %v2383
    %2664 = vmatprep.subr.bf16.mxu0 %v2392
    %2665 = vmatpush1.bf16.msra.mxu0 %v2391
    %2666 = vmatprep.subr.bf16.mxu0 %v2400
    %2667 = vmatpush1.bf16.msra.mxu0 %v2399
    %2668 = vmatprep.subr.bf16.mxu0 %v2408
    %2669 = vmatpush1.bf16.msra.mxu0 %v2407
    %2670 = vmatprep.subr.bf16.mxu0 0
    %2671 = vmatpush1.bf16.msra.mxu0 0
    %2672 = vmatprep.subr.bf16.mxu0 0
    %2673 = vmatpush1.bf16.msra.mxu0 0
    %2674 = vmatprep.subr.bf16.mxu0 0
    %2675 = vmatpush1.bf16.msra.mxu0 0
    %2676 = vmatprep.subr.bf16.mxu0 0
    %2677 = vmatpush1.bf16.msra.mxu0 0
    %2678 = vmatprep.subr.bf16.mxu0 0
    %2679 = vmatpush1.bf16.msra.mxu0 0
    %2680 = vmatprep.subr.bf16.mxu0 0
    %2681 = vmatpush1.bf16.msra.mxu0 0
    %2682 = vmatprep.subr.bf16.mxu0 0
    %2683 = vmatpush1.bf16.msra.mxu0 0
    %2684 = vmatprep.subr.bf16.mxu0 0
    %2685 = vmatpush1.bf16.msra.mxu0 0
    %2686 = vmatprep.mubr.bf16.mxu0 0
    %2687 = vmatmul.mubr.bf16.gmra.mrb[0].mxu0 %v2652
    %v2688 = vpop.f32.mrb[0].mxu0
    %v2689 = vadd.f32 0.0, %v2688
    %v2690 = vpop.f32.mrb[0].mxu0
    %v2691 = vadd.f32 0.0, %v2690
    %v2692 = vpop.f32.mrb[0].mxu0
    %v2693 = vpop.f32.mrb[0].mxu0
    %2694 = vdwg.mxu0
    %2695 = vmatprep.subr.bf16.mxu0 %v2354
    %2696 = vmatpush1.bf16.msra.mxu0 %v2353
    %2697 = vmatprep.subr.bf16.mxu0 %v2362
    %2698 = vmatpush1.bf16.msra.mxu0 %v2361
    %2699 = vmatprep.subr.bf16.mxu0 %v2370
    %2700 = vmatpush1.bf16.msra.mxu0 %v2369
    %2701 = vmatprep.subr.bf16.mxu0 %v2378
    %2702 = vmatpush1.bf16.msra.mxu0 %v2377
    %2703 = vmatprep.subr.bf16.mxu0 %v2386
    %2704 = vmatpush1.bf16.msra.mxu0 %v2385
    %2705 = vmatprep.subr.bf16.mxu0 %v2394
    %2706 = vmatpush1.bf16.msra.mxu0 %v2393
    %2707 = vmatprep.subr.bf16.mxu0 %v2402
    %2708 = vmatpush1.bf16.msra.mxu0 %v2401
    %2709 = vmatprep.subr.bf16.mxu0 %v2410
    %2710 = vmatpush1.bf16.msra.mxu0 %v2409
    %2711 = vmatprep.subr.bf16.mxu0 0
    %2712 = vmatpush1.bf16.msra.mxu0 0
    %2713 = vmatprep.subr.bf16.mxu0 0
    %2714 = vmatpush1.bf16.msra.mxu0 0
    %2715 = vmatprep.subr.bf16.mxu0 0
    %2716 = vmatpush1.bf16.msra.mxu0 0
    %2717 = vmatprep.subr.bf16.mxu0 0
    %2718 = vmatpush1.bf16.msra.mxu0 0
    %2719 = vmatprep.subr.bf16.mxu0 0
    %2720 = vmatpush1.bf16.msra.mxu0 0
    %2721 = vmatprep.subr.bf16.mxu0 0
    %2722 = vmatpush1.bf16.msra.mxu0 0
    %2723 = vmatprep.subr.bf16.mxu0 0
    %2724 = vmatpush1.bf16.msra.mxu0 0
    %2725 = vmatprep.subr.bf16.mxu0 0
    %2726 = vmatpush1.bf16.msra.mxu0 0
    %2727 = vmatprep.mubr.bf16.mxu0 0
    %2728 = vmatmul.mubr.bf16.gmra.mrb[0].mxu0 %v2652
    %v2729 = vpop.f32.mrb[0].mxu0
    %v2730 = vadd.f32 0.0, %v2729
    %v2731 = vpop.f32.mrb[0].mxu0
    %v2732 = vadd.f32 0.0, %v2731
    %v2733 = vpop.f32.mrb[0].mxu0
    %v2734 = vpop.f32.mrb[0].mxu0
    %2735 = vdwg.mxu0
    %2736 = vmatprep.subr.bf16.mxu0 %v2356
    %2737 = vmatpush1.bf16.msra.mxu0 %v2355
    %2738 = vmatprep.subr.bf16.mxu0 %v2364
    %2739 = vmatpush1.bf16.msra.mxu0 %v2363
    %2740 = vmatprep.subr.bf16.mxu0 %v2372
    %2741 = vmatpush1.bf16.msra.mxu0 %v2371
    %2742 = vmatprep.subr.bf16.mxu0 %v2380
    %2743 = vmatpush1.bf16.msra.mxu0 %v2379
    %2744 = vmatprep.subr.bf16.mxu0 %v2388
    %2745 = vmatpush1.bf16.msra.mxu0 %v2387
    %2746 = vmatprep.subr.bf16.mxu0 %v2396
    %2747 = vmatpush1.bf16.msra.mxu0 %v2395
    %2748 = vmatprep.subr.bf16.mxu0 %v2404
    %2749 = vmatpush1.bf16.msra.mxu0 %v2403
    %2750 = vmatprep.subr.bf16.mxu0 %v2412
    %2751 = vmatpush1.bf16.msra.mxu0 %v2411
    %2752 = vmatprep.subr.bf16.mxu0 0
    %2753 = vmatpush1.bf16.msra.mxu0 0
    %2754 = vmatprep.subr.bf16.mxu0 0
    %2755 = vmatpush1.bf16.msra.mxu0 0
    %2756 = vmatprep.subr.bf16.mxu0 0
    %2757 = vmatpush1.bf16.msra.mxu0 0
    %2758 = vmatprep.subr.bf16.mxu0 0
    %2759 = vmatpush1.bf16.msra.mxu0 0
    %2760 = vmatprep.subr.bf16.mxu0 0
    %2761 = vmatpush1.bf16.msra.mxu0 0
    %2762 = vmatprep.subr.bf16.mxu0 0
    %2763 = vmatpush1.bf16.msra.mxu0 0
    %2764 = vmatprep.subr.bf16.mxu0 0
    %2765 = vmatpush1.bf16.msra.mxu0 0
    %2766 = vmatprep.subr.bf16.mxu0 0
    %2767 = vmatpush1.bf16.msra.mxu0 0
    %2768 = vmatprep.mubr.bf16.mxu0 0
    %2769 = vmatmul.mubr.bf16.gmra.mrb[0].mxu0 %v2652
    %v2770 = vpop.f32.mrb[0].mxu0
    %v2771 = vadd.f32 0.0, %v2770
    %v2772 = vpop.f32.mrb[0].mxu0
    %v2773 = vadd.f32 0.0, %v2772
    %v2774 = vpop.f32.mrb[0].mxu0
    %v2775 = vpop.f32.mrb[0].mxu0
    %2776 = vdwg.mxu0
    %2777 = vmatprep.subr.bf16.mxu0 %v2358
    %2778 = vmatpush1.bf16.msra.mxu0 %v2357
    %2779 = vmatprep.subr.bf16.mxu0 %v2366
    %2780 = vmatpush1.bf16.msra.mxu0 %v2365
    %2781 = vmatprep.subr.bf16.mxu0 %v2374
    %2782 = vmatpush1.bf16.msra.mxu0 %v2373
    %2783 = vmatprep.subr.bf16.mxu0 %v2382
    %2784 = vmatpush1.bf16.msra.mxu0 %v2381
    %2785 = vmatprep.subr.bf16.mxu0 %v2390
    %2786 = vmatpush1.bf16.msra.mxu0 %v2389
    %2787 = vmatprep.subr.bf16.mxu0 %v2398
    %2788 = vmatpush1.bf16.msra.mxu0 %v2397
    %2789 = vmatprep.subr.bf16.mxu0 %v2406
    %2790 = vmatpush1.bf16.msra.mxu0 %v2405
    %2791 = vmatprep.subr.bf16.mxu0 %v2414
    %2792 = vmatpush1.bf16.msra.mxu0 %v2413
    %2793 = vmatprep.subr.bf16.mxu0 0
    %2794 = vmatpush1.bf16.msra.mxu0 0
    %2795 = vmatprep.subr.bf16.mxu0 0
    %2796 = vmatpush1.bf16.msra.mxu0 0
    %2797 = vmatprep.subr.bf16.mxu0 0
    %2798 = vmatpush1.bf16.msra.mxu0 0
    %2799 = vmatprep.subr.bf16.mxu0 0
    %2800 = vmatpush1.bf16.msra.mxu0 0
    %2801 = vmatprep.subr.bf16.mxu0 0
    %2802 = vmatpush1.bf16.msra.mxu0 0
    %2803 = vmatprep.subr.bf16.mxu0 0
    %2804 = vmatpush1.bf16.msra.mxu0 0
    %2805 = vmatprep.subr.bf16.mxu0 0
    %2806 = vmatpush1.bf16.msra.mxu0 0
    %2807 = vmatprep.subr.bf16.mxu0 0
    %2808 = vmatpush1.bf16.msra.mxu0 0
    %2809 = vmatprep.mubr.bf16.mxu0 0
    %2810 = vmatmul.mubr.bf16.gmra.mrb[0].mxu0 %v2652
    %v2811 = vpop.f32.mrb[0].mxu0
    %v2812 = vadd.f32 0.0, %v2811
    %v2813 = vpop.f32.mrb[0].mxu0
    %v2814 = vadd.f32 0.0, %v2813
    %v2815 = vpop.f32.mrb[0].mxu0
    %v2816 = vpop.f32.mrb[0].mxu0
    %2817 = vdwg.mxu0
    %v2818 = vadd.f32 %v1963, %v2689
    %v2819 = vadd.f32 %v1965, %v2691
    %v2820 = vadd.f32 %v2004, %v2730
    %v2821 = vadd.f32 %v2006, %v2732
    %v2822 = vadd.f32 %v2045, %v2771
    %v2823 = vadd.f32 %v2047, %v2773
    %v2824 = vadd.f32 %v2086, %v2812
    %v2825 = vadd.f32 %v2088, %v2814
    %v2826 = vld [vmem:[#allocation10 + $0x600] sm:$0xff]
    %v2827 = vld [vmem:[#allocation10 + $0x608] sm:$0xff]
    %v2828 = vld [vmem:[#allocation10 + $0x610] sm:$0xff]
    %v2829 = vld [vmem:[#allocation10 + $0x618] sm:$0xff]
    %v2830 = vld [vmem:[#allocation10 + $0x620] sm:$0xff]
    %v2831 = vld [vmem:[#allocation10 + $0x628] sm:$0xff]
    %v2832 = vld [vmem:[#allocation10 + $0x630] sm:$0xff]
    %v2833 = vld [vmem:[#allocation10 + $0x638] sm:$0xff]
    %v2834 = vld [vmem:[#allocation10 + $0x640] sm:$0xff]
    %v2835 = vld [vmem:[#allocation10 + $0x648] sm:$0xff]
    %v2836 = vld [vmem:[#allocation10 + $0x650] sm:$0xff]
    %v2837 = vld [vmem:[#allocation10 + $0x658] sm:$0xff]
    %v2838 = vld [vmem:[#allocation10 + $0x660] sm:$0xff]
    %v2839 = vld [vmem:[#allocation10 + $0x668] sm:$0xff]
    %v2840 = vld [vmem:[#allocation10 + $0x670] sm:$0xff]
    %v2841 = vld [vmem:[#allocation10 + $0x678] sm:$0xff]
    %v2842 = vld [vmem:[#allocation10 + $0x680] sm:$0xff]
    %v2843 = vld [vmem:[#allocation10 + $0x688] sm:$0xff]
    %v2844 = vld [vmem:[#allocation10 + $0x690] sm:$0xff]
    %v2845 = vld [vmem:[#allocation10 + $0x698] sm:$0xff]
    %v2846 = vld [vmem:[#allocation10 + $0x6a0] sm:$0xff]
    %v2847 = vld [vmem:[#allocation10 + $0x6a8] sm:$0xff]
    %v2848 = vld [vmem:[#allocation10 + $0x6b0] sm:$0xff]
    %v2849 = vld [vmem:[#allocation10 + $0x6b8] sm:$0xff]
    %v2850 = vld [vmem:[#allocation10 + $0x6c0] sm:$0xff]
    %v2851 = vld [vmem:[#allocation10 + $0x6c8] sm:$0xff]
    %v2852 = vld [vmem:[#allocation10 + $0x6d0] sm:$0xff]
    %v2853 = vld [vmem:[#allocation10 + $0x6d8] sm:$0xff]
    %v2854 = vld [vmem:[#allocation10 + $0x6e0] sm:$0xff]
    %v2855 = vld [vmem:[#allocation10 + $0x6e8] sm:$0xff]
    %v2856 = vld [vmem:[#allocation10 + $0x6f0] sm:$0xff]
    %v2857 = vld [vmem:[#allocation10 + $0x6f8] sm:$0xff]
    %v2858 = vld [vmem:[#allocation10 + $0x700] sm:$0xff]
    %v2859 = vld [vmem:[#allocation10 + $0x708] sm:$0xff]
    %v2860 = vld [vmem:[#allocation10 + $0x710] sm:$0xff]
    %v2861 = vld [vmem:[#allocation10 + $0x718] sm:$0xff]
    %v2862 = vld [vmem:[#allocation10 + $0x720] sm:$0xff]
    %v2863 = vld [vmem:[#allocation10 + $0x728] sm:$0xff]
    %v2864 = vld [vmem:[#allocation10 + $0x730] sm:$0xff]
    %v2865 = vld [vmem:[#allocation10 + $0x738] sm:$0xff]
    %v2866 = vld [vmem:[#allocation10 + $0x740] sm:$0xff]
    %v2867 = vld [vmem:[#allocation10 + $0x748] sm:$0xff]
    %v2868 = vld [vmem:[#allocation10 + $0x750] sm:$0xff]
    %v2869 = vld [vmem:[#allocation10 + $0x758] sm:$0xff]
    %v2870 = vld [vmem:[#allocation10 + $0x760] sm:$0xff]
    %v2871 = vld [vmem:[#allocation10 + $0x768] sm:$0xff]
    %v2872 = vld [vmem:[#allocation10 + $0x770] sm:$0xff]
    %v2873 = vld [vmem:[#allocation10 + $0x778] sm:$0xff]
    %v2874 = vld [vmem:[#allocation10 + $0x780] sm:$0xff]
    %v2875 = vld [vmem:[#allocation10 + $0x788] sm:$0xff]
    %v2876 = vld [vmem:[#allocation10 + $0x790] sm:$0xff]
    %v2877 = vld [vmem:[#allocation10 + $0x798] sm:$0xff]
    %v2878 = vld [vmem:[#allocation10 + $0x7a0] sm:$0xff]
    %v2879 = vld [vmem:[#allocation10 + $0x7a8] sm:$0xff]
    %v2880 = vld [vmem:[#allocation10 + $0x7b0] sm:$0xff]
    %v2881 = vld [vmem:[#allocation10 + $0x7b8] sm:$0xff]
    %v2882 = vld [vmem:[#allocation10 + $0x7c0] sm:$0xff]
    %v2883 = vld [vmem:[#allocation10 + $0x7c8] sm:$0xff]
    %v2884 = vld [vmem:[#allocation10 + $0x7d0] sm:$0xff]
    %v2885 = vld [vmem:[#allocation10 + $0x7d8] sm:$0xff]
    %v2886 = vld [vmem:[#allocation10 + $0x7e0] sm:$0xff]
    %v2887 = vld [vmem:[#allocation10 + $0x7e8] sm:$0xff]
    %v2888 = vld [vmem:[#allocation10 + $0x7f0] sm:$0xff]
    %v2889 = vld [vmem:[#allocation10 + $0x7f8] sm:$0xff]
    %v2890 = vrot.slane %v789, 1
    %v2956 = vunpack.c.l.b16 %v2826
    %v2957 = vunpack.c.h.b16 %v2826
    %v2958 = vunpack.c.l.b16 %v2827
    %v2959 = vunpack.c.h.b16 %v2827
    %v2960 = vunpack.c.l.b16 %v2828
    %v2961 = vunpack.c.h.b16 %v2828
    %v2962 = vunpack.c.l.b16 %v2829
    %v2963 = vunpack.c.h.b16 %v2829
    %v2964 = vunpack.c.l.b16 %v2830
    %v2965 = vunpack.c.h.b16 %v2830
    %v2966 = vunpack.c.l.b16 %v2831
    %v2967 = vunpack.c.h.b16 %v2831
    %v2968 = vunpack.c.l.b16 %v2832
    %v2969 = vunpack.c.h.b16 %v2832
    %v2970 = vunpack.c.l.b16 %v2833
    %v2971 = vunpack.c.h.b16 %v2833
    %v2972 = vunpack.c.l.b16 %v2834
    %v2973 = vunpack.c.h.b16 %v2834
    %v2974 = vunpack.c.l.b16 %v2835
    %v2975 = vunpack.c.h.b16 %v2835
    %v2976 = vunpack.c.l.b16 %v2836
    %v2977 = vunpack.c.h.b16 %v2836
    %v2978 = vunpack.c.l.b16 %v2837
    %v2979 = vunpack.c.h.b16 %v2837
    %v2980 = vunpack.c.l.b16 %v2838
    %v2981 = vunpack.c.h.b16 %v2838
    %v2982 = vunpack.c.l.b16 %v2839
    %v2983 = vunpack.c.h.b16 %v2839
    %v2984 = vunpack.c.l.b16 %v2840
    %v2985 = vunpack.c.h.b16 %v2840
    %v2986 = vunpack.c.l.b16 %v2841
    %v2987 = vunpack.c.h.b16 %v2841
    %v2988 = vunpack.c.l.b16 %v2842
    %v2989 = vunpack.c.h.b16 %v2842
    %v2990 = vunpack.c.l.b16 %v2843
    %v2991 = vunpack.c.h.b16 %v2843
    %v2992 = vunpack.c.l.b16 %v2844
    %v2993 = vunpack.c.h.b16 %v2844
    %v2994 = vunpack.c.l.b16 %v2845
    %v2995 = vunpack.c.h.b16 %v2845
    %v2996 = vunpack.c.l.b16 %v2846
    %v2997 = vunpack.c.h.b16 %v2846
    %v2998 = vunpack.c.l.b16 %v2847
    %v2999 = vunpack.c.h.b16 %v2847
    %v3000 = vunpack.c.l.b16 %v2848
    %v3001 = vunpack.c.h.b16 %v2848
    %v3002 = vunpack.c.l.b16 %v2849
    %v3003 = vunpack.c.h.b16 %v2849
    %v3004 = vunpack.c.l.b16 %v2850
    %v3005 = vunpack.c.h.b16 %v2850
    %v3006 = vunpack.c.l.b16 %v2851
    %v3007 = vunpack.c.h.b16 %v2851
    %v3008 = vunpack.c.l.b16 %v2852
    %v3009 = vunpack.c.h.b16 %v2852
    %v3010 = vunpack.c.l.b16 %v2853
    %v3011 = vunpack.c.h.b16 %v2853
    %v3012 = vunpack.c.l.b16 %v2854
    %v3013 = vunpack.c.h.b16 %v2854
    %v3014 = vunpack.c.l.b16 %v2855
    %v3015 = vunpack.c.h.b16 %v2855
    %v3016 = vunpack.c.l.b16 %v2856
    %v3017 = vunpack.c.h.b16 %v2856
    %v3018 = vunpack.c.l.b16 %v2857
    %v3019 = vunpack.c.h.b16 %v2857
    %v3020 = vunpack.c.l.b16 %v2858
    %v3021 = vunpack.c.h.b16 %v2858
    %v3022 = vunpack.c.l.b16 %v2859
    %v3023 = vunpack.c.h.b16 %v2859
    %v3024 = vunpack.c.l.b16 %v2860
    %v3025 = vunpack.c.h.b16 %v2860
    %v3026 = vunpack.c.l.b16 %v2861
    %v3027 = vunpack.c.h.b16 %v2861
    %v3028 = vunpack.c.l.b16 %v2862
    %v3029 = vunpack.c.h.b16 %v2862
    %v3030 = vunpack.c.l.b16 %v2863
    %v3031 = vunpack.c.h.b16 %v2863
    %v3032 = vunpack.c.l.b16 %v2864
    %v3033 = vunpack.c.h.b16 %v2864
    %v3034 = vunpack.c.l.b16 %v2865
    %v3035 = vunpack.c.h.b16 %v2865
    %v3036 = vunpack.c.l.b16 %v2866
    %v3037 = vunpack.c.h.b16 %v2866
    %v3038 = vunpack.c.l.b16 %v2867
    %v3039 = vunpack.c.h.b16 %v2867
    %v3040 = vunpack.c.l.b16 %v2868
    %v3041 = vunpack.c.h.b16 %v2868
    %v3042 = vunpack.c.l.b16 %v2869
    %v3043 = vunpack.c.h.b16 %v2869
    %v3044 = vunpack.c.l.b16 %v2870
    %v3045 = vunpack.c.h.b16 %v2870
    %v3046 = vunpack.c.l.b16 %v2871
    %v3047 = vunpack.c.h.b16 %v2871
    %v3048 = vunpack.c.l.b16 %v2872
    %v3049 = vunpack.c.h.b16 %v2872
    %v3050 = vunpack.c.l.b16 %v2873
    %v3051 = vunpack.c.h.b16 %v2873
    %v3052 = vunpack.c.l.b16 %v2874
    %v3053 = vunpack.c.h.b16 %v2874
    %v3054 = vunpack.c.l.b16 %v2875
    %v3055 = vunpack.c.h.b16 %v2875
    %v3056 = vunpack.c.l.b16 %v2876
    %v3057 = vunpack.c.h.b16 %v2876
    %v3058 = vunpack.c.l.b16 %v2877
    %v3059 = vunpack.c.h.b16 %v2877
    %v3060 = vunpack.c.l.b16 %v2878
    %v3061 = vunpack.c.h.b16 %v2878
    %v3062 = vunpack.c.l.b16 %v2879
    %v3063 = vunpack.c.h.b16 %v2879
    %v3064 = vunpack.c.l.b16 %v2880
    %v3065 = vunpack.c.h.b16 %v2880
    %v3066 = vunpack.c.l.b16 %v2881
    %v3067 = vunpack.c.h.b16 %v2881
    %v3068 = vunpack.c.l.b16 %v2882
    %v3069 = vunpack.c.h.b16 %v2882
    %v3070 = vunpack.c.l.b16 %v2883
    %v3071 = vunpack.c.h.b16 %v2883
    %v3072 = vunpack.c.l.b16 %v2884
    %v3073 = vunpack.c.h.b16 %v2884
    %v3074 = vunpack.c.l.b16 %v2885
    %v3075 = vunpack.c.h.b16 %v2885
    %v3076 = vunpack.c.l.b16 %v2886
    %v3077 = vunpack.c.h.b16 %v2886
    %v3078 = vunpack.c.l.b16 %v2887
    %v3079 = vunpack.c.h.b16 %v2887
    %v3080 = vunpack.c.l.b16 %v2888
    %v3081 = vunpack.c.h.b16 %v2888
    %v3082 = vunpack.c.l.b16 %v2889
    %v3083 = vunpack.c.h.b16 %v2889
    %v3084 = vpack.c.b16 %v2964, %v2956
    %v3085 = vpack.c.b16 %v2965, %v2957
    %v3086 = vpack.c.b16 %v2966, %v2958
    %v3087 = vpack.c.b16 %v2967, %v2959
    %v3088 = vpack.c.b16 %v2968, %v2960
    %v3089 = vpack.c.b16 %v2969, %v2961
    %v3090 = vpack.c.b16 %v2970, %v2962
    %v3091 = vpack.c.b16 %v2971, %v2963
    %v3092 = vpack.c.b16 %v2980, %v2972
    %v3093 = vpack.c.b16 %v2981, %v2973
    %v3094 = vpack.c.b16 %v2982, %v2974
    %v3095 = vpack.c.b16 %v2983, %v2975
    %v3096 = vpack.c.b16 %v2984, %v2976
    %v3097 = vpack.c.b16 %v2985, %v2977
    %v3098 = vpack.c.b16 %v2986, %v2978
    %v3099 = vpack.c.b16 %v2987, %v2979
    %v3100 = vpack.c.b16 %v2996, %v2988
    %v3101 = vpack.c.b16 %v2997, %v2989
    %v3102 = vpack.c.b16 %v2998, %v2990
    %v3103 = vpack.c.b16 %v2999, %v2991
    %v3104 = vpack.c.b16 %v3000, %v2992
    %v3105 = vpack.c.b16 %v3001, %v2993
    %v3106 = vpack.c.b16 %v3002, %v2994
    %v3107 = vpack.c.b16 %v3003, %v2995
    %v3108 = vpack.c.b16 %v3012, %v3004
    %v3109 = vpack.c.b16 %v3013, %v3005
    %v3110 = vpack.c.b16 %v3014, %v3006
    %v3111 = vpack.c.b16 %v3015, %v3007
    %v3112 = vpack.c.b16 %v3016, %v3008
    %v3113 = vpack.c.b16 %v3017, %v3009
    %v3114 = vpack.c.b16 %v3018, %v3010
    %v3115 = vpack.c.b16 %v3019, %v3011
    %v3116 = vpack.c.b16 %v3028, %v3020
    %v3117 = vpack.c.b16 %v3029, %v3021
    %v3118 = vpack.c.b16 %v3030, %v3022
    %v3119 = vpack.c.b16 %v3031, %v3023
    %v3120 = vpack.c.b16 %v3032, %v3024
    %v3121 = vpack.c.b16 %v3033, %v3025
    %v3122 = vpack.c.b16 %v3034, %v3026
    %v3123 = vpack.c.b16 %v3035, %v3027
    %v3124 = vpack.c.b16 %v3044, %v3036
    %v3125 = vpack.c.b16 %v3045, %v3037
    %v3126 = vpack.c.b16 %v3046, %v3038
    %v3127 = vpack.c.b16 %v3047, %v3039
    %v3128 = vpack.c.b16 %v3048, %v3040
    %v3129 = vpack.c.b16 %v3049, %v3041
    %v3130 = vpack.c.b16 %v3050, %v3042
    %v3131 = vpack.c.b16 %v3051, %v3043
    %v3132 = vpack.c.b16 %v3060, %v3052
    %v3133 = vpack.c.b16 %v3061, %v3053
    %v3134 = vpack.c.b16 %v3062, %v3054
    %v3135 = vpack.c.b16 %v3063, %v3055
    %v3136 = vpack.c.b16 %v3064, %v3056
    %v3137 = vpack.c.b16 %v3065, %v3057
    %v3138 = vpack.c.b16 %v3066, %v3058
    %v3139 = vpack.c.b16 %v3067, %v3059
    %v3140 = vpack.c.b16 %v3076, %v3068
    %v3141 = vpack.c.b16 %v3077, %v3069
    %v3142 = vpack.c.b16 %v3078, %v3070
    %v3143 = vpack.c.b16 %v3079, %v3071
    %v3144 = vpack.c.b16 %v3080, %v3072
    %v3145 = vpack.c.b16 %v3081, %v3073
    %v3146 = vpack.c.b16 %v3082, %v3074
    %v3147 = vpack.c.b16 %v3083, %v3075
    %3212 = vmatprep.subr.bf16.mxu0 %v3085
    %3213 = vmatpush1.bf16.msra.mxu0 %v3084
    %3214 = vmatprep.subr.bf16.mxu0 %v3093
    %3215 = vmatpush1.bf16.msra.mxu0 %v3092
    %3216 = vmatprep.subr.bf16.mxu0 %v3101
    %3217 = vmatpush1.bf16.msra.mxu0 %v3100
    %3218 = vmatprep.subr.bf16.mxu0 %v3109
    %3219 = vmatpush1.bf16.msra.mxu0 %v3108
    %3220 = vmatprep.subr.bf16.mxu0 %v3117
    %3221 = vmatpush1.bf16.msra.mxu0 %v3116
    %3222 = vmatprep.subr.bf16.mxu0 %v3125
    %3223 = vmatpush1.bf16.msra.mxu0 %v3124
    %3224 = vmatprep.subr.bf16.mxu0 %v3133
    %3225 = vmatpush1.bf16.msra.mxu0 %v3132
    %3226 = vmatprep.subr.bf16.mxu0 %v3141
    %3227 = vmatpush1.bf16.msra.mxu0 %v3140
    %3228 = vmatprep.subr.bf16.mxu0 0
    %3229 = vmatpush1.bf16.msra.mxu0 0
    %3230 = vmatprep.subr.bf16.mxu0 0
    %3231 = vmatpush1.bf16.msra.mxu0 0
    %3232 = vmatprep.subr.bf16.mxu0 0
    %3233 = vmatpush1.bf16.msra.mxu0 0
    %3234 = vmatprep.subr.bf16.mxu0 0
    %3235 = vmatpush1.bf16.msra.mxu0 0
    %3236 = vmatprep.subr.bf16.mxu0 0
    %3237 = vmatpush1.bf16.msra.mxu0 0
    %3238 = vmatprep.subr.bf16.mxu0 0
    %3239 = vmatpush1.bf16.msra.mxu0 0
    %3240 = vmatprep.subr.bf16.mxu0 0
    %3241 = vmatpush1.bf16.msra.mxu0 0
    %3242 = vmatprep.subr.bf16.mxu0 0
    %3243 = vmatpush1.bf16.msra.mxu0 0
    %3244 = vmatprep.mubr.bf16.mxu0 0
    %3245 = vmatmul.mubr.bf16.gmra.mrb[0].mxu0 %v2890
    %v3246 = vpop.f32.mrb[0].mxu0
    %v3247 = vadd.f32 0.0, %v3246
    %v3248 = vpop.f32.mrb[0].mxu0
    %v3249 = vadd.f32 0.0, %v3248
    %v3250 = vpop.f32.mrb[0].mxu0
    %v3251 = vpop.f32.mrb[0].mxu0
    %3252 = vdwg.mxu0
    %3253 = vmatprep.subr.bf16.mxu0 %v3087
    %3254 = vmatpush1.bf16.msra.mxu0 %v3086
    %3255 = vmatprep.subr.bf16.mxu0 %v3095
    %3256 = vmatpush1.bf16.msra.mxu0 %v3094
    %3257 = vmatprep.subr.bf16.mxu0 %v3103
    %3258 = vmatpush1.bf16.msra.mxu0 %v3102
    %3259 = vmatprep.subr.bf16.mxu0 %v3111
    %3260 = vmatpush1.bf16.msra.mxu0 %v3110
    %3261 = vmatprep.subr.bf16.mxu0 %v3119
    %3262 = vmatpush1.bf16.msra.mxu0 %v3118
    %3263 = vmatprep.subr.bf16.mxu0 %v3127
    %3264 = vmatpush1.bf16.msra.mxu0 %v3126
    %3265 = vmatprep.subr.bf16.mxu0 %v3135
    %3266 = vmatpush1.bf16.msra.mxu0 %v3134
    %3267 = vmatprep.subr.bf16.mxu0 %v3143
    %3268 = vmatpush1.bf16.msra.mxu0 %v3142
    %3269 = vmatprep.subr.bf16.mxu0 0
    %3270 = vmatpush1.bf16.msra.mxu0 0
    %3271 = vmatprep.subr.bf16.mxu0 0
    %3272 = vmatpush1.bf16.msra.mxu0 0
    %3273 = vmatprep.subr.bf16.mxu0 0
    %3274 = vmatpush1.bf16.msra.mxu0 0
    %3275 = vmatprep.subr.bf16.mxu0 0
    %3276 = vmatpush1.bf16.msra.mxu0 0
    %3277 = vmatprep.subr.bf16.mxu0 0
    %3278 = vmatpush1.bf16.msra.mxu0 0
    %3279 = vmatprep.subr.bf16.mxu0 0
    %3280 = vmatpush1.bf16.msra.mxu0 0
    %3281 = vmatprep.subr.bf16.mxu0 0
    %3282 = vmatpush1.bf16.msra.mxu0 0
    %3283 = vmatprep.subr.bf16.mxu0 0
    %3284 = vmatpush1.bf16.msra.mxu0 0
    %3285 = vmatprep.mubr.bf16.mxu0 0
    %3286 = vmatmul.mubr.bf16.gmra.mrb[0].mxu0 %v2890
    %v3287 = vpop.f32.mrb[0].mxu0
    %v3288 = vadd.f32 0.0, %v3287
    %v3289 = vpop.f32.mrb[0].mxu0
    %v3290 = vadd.f32 0.0, %v3289
    %v3291 = vpop.f32.mrb[0].mxu0
    %v3292 = vpop.f32.mrb[0].mxu0
    %3293 = vdwg.mxu0
    %3294 = vmatprep.subr.bf16.mxu0 %v3089
    %3295 = vmatpush1.bf16.msra.mxu0 %v3088
    %3296 = vmatprep.subr.bf16.mxu0 %v3097
    %3297 = vmatpush1.bf16.msra.mxu0 %v3096
    %3298 = vmatprep.subr.bf16.mxu0 %v3105
    %3299 = vmatpush1.bf16.msra.mxu0 %v3104
    %3300 = vmatprep.subr.bf16.mxu0 %v3113
    %3301 = vmatpush1.bf16.msra.mxu0 %v3112
    %3302 = vmatprep.subr.bf16.mxu0 %v3121
    %3303 = vmatpush1.bf16.msra.mxu0 %v3120
    %3304 = vmatprep.subr.bf16.mxu0 %v3129
    %3305 = vmatpush1.bf16.msra.mxu0 %v3128
    %3306 = vmatprep.subr.bf16.mxu0 %v3137
    %3307 = vmatpush1.bf16.msra.mxu0 %v3136
    %3308 = vmatprep.subr.bf16.mxu0 %v3145
    %3309 = vmatpush1.bf16.msra.mxu0 %v3144
    %3310 = vmatprep.subr.bf16.mxu0 0
    %3311 = vmatpush1.bf16.msra.mxu0 0
    %3312 = vmatprep.subr.bf16.mxu0 0
    %3313 = vmatpush1.bf16.msra.mxu0 0
    %3314 = vmatprep.subr.bf16.mxu0 0
    %3315 = vmatpush1.bf16.msra.mxu0 0
    %3316 = vmatprep.subr.bf16.mxu0 0
    %3317 = vmatpush1.bf16.msra.mxu0 0
    %3318 = vmatprep.subr.bf16.mxu0 0
    %3319 = vmatpush1.bf16.msra.mxu0 0
    %3320 = vmatprep.subr.bf16.mxu0 0
    %3321 = vmatpush1.bf16.msra.mxu0 0
    %3322 = vmatprep.subr.bf16.mxu0 0
    %3323 = vmatpush1.bf16.msra.mxu0 0
    %3324 = vmatprep.subr.bf16.mxu0 0
    %3325 = vmatpush1.bf16.msra.mxu0 0
    %3326 = vmatprep.mubr.bf16.mxu0 0
    %3327 = vmatmul.mubr.bf16.gmra.mrb[0].mxu0 %v2890
    %v3328 = vpop.f32.mrb[0].mxu0
    %v3329 = vadd.f32 0.0, %v3328
    %v3330 = vpop.f32.mrb[0].mxu0
    %v3331 = vadd.f32 0.0, %v3330
    %v3332 = vpop.f32.mrb[0].mxu0
    %v3333 = vpop.f32.mrb[0].mxu0
    %3334 = vdwg.mxu0
    %3335 = vmatprep.subr.bf16.mxu0 %v3091
    %3336 = vmatpush1.bf16.msra.mxu0 %v3090
    %3337 = vmatprep.subr.bf16.mxu0 %v3099
    %3338 = vmatpush1.bf16.msra.mxu0 %v3098
    %3339 = vmatprep.subr.bf16.mxu0 %v3107
    %3340 = vmatpush1.bf16.msra.mxu0 %v3106
    %3341 = vmatprep.subr.bf16.mxu0 %v3115
    %3342 = vmatpush1.bf16.msra.mxu0 %v3114
    %3343 = vmatprep.subr.bf16.mxu0 %v3123
    %3344 = vmatpush1.bf16.msra.mxu0 %v3122
    %3345 = vmatprep.subr.bf16.mxu0 %v3131
    %3346 = vmatpush1.bf16.msra.mxu0 %v3130
    %3347 = vmatprep.subr.bf16.mxu0 %v3139
    %3348 = vmatpush1.bf16.msra.mxu0 %v3138
    %3349 = vmatprep.subr.bf16.mxu0 %v3147
    %3350 = vmatpush1.bf16.msra.mxu0 %v3146
    %3351 = vmatprep.subr.bf16.mxu0 0
    %3352 = vmatpush1.bf16.msra.mxu0 0
    %3353 = vmatprep.subr.bf16.mxu0 0
    %3354 = vmatpush1.bf16.msra.mxu0 0
    %3355 = vmatprep.subr.bf16.mxu0 0
    %3356 = vmatpush1.bf16.msra.mxu0 0
    %3357 = vmatprep.subr.bf16.mxu0 0
    %3358 = vmatpush1.bf16.msra.mxu0 0
    %3359 = vmatprep.subr.bf16.mxu0 0
    %3360 = vmatpush1.bf16.msra.mxu0 0
    %3361 = vmatprep.subr.bf16.mxu0 0
    %3362 = vmatpush1.bf16.msra.mxu0 0
    %3363 = vmatprep.subr.bf16.mxu0 0
    %3364 = vmatpush1.bf16.msra.mxu0 0
    %3365 = vmatprep.subr.bf16.mxu0 0
    %3366 = vmatpush1.bf16.msra.mxu0 0
    %3367 = vmatprep.mubr.bf16.mxu0 0
    %3368 = vmatmul.mubr.bf16.gmra.mrb[0].mxu0 %v2890
    %v3369 = vpop.f32.mrb[0].mxu0
    %v3370 = vadd.f32 0.0, %v3369
    %v3371 = vpop.f32.mrb[0].mxu0
    %v3372 = vadd.f32 0.0, %v3371
    %v3373 = vpop.f32.mrb[0].mxu0
    %v3374 = vpop.f32.mrb[0].mxu0
    %3375 = vdwg.mxu0
    %v3376 = vadd.f32 %v2643, %v3247
    %v3377 = vadd.f32 %v2644, %v3249
    %v3378 = vadd.f32 %v2645, %v3288
    %v3379 = vadd.f32 %v2646, %v3290
    %v3380 = vadd.f32 %v2647, %v3329
    %v3381 = vadd.f32 %v2648, %v3331
    %v3382 = vadd.f32 %v2649, %v3370
    %v3383 = vadd.f32 %v2650, %v3372
    %v3384 = vrot.slane %v1761, 1
    %3386 = vmatprep.subr.bf16.mxu0 %v3085
    %3387 = vmatpush1.bf16.msra.mxu0 %v3084
    %3388 = vmatprep.subr.bf16.mxu0 %v3093
    %3389 = vmatpush1.bf16.msra.mxu0 %v3092
    %3390 = vmatprep.subr.bf16.mxu0 %v3101
    %3391 = vmatpush1.bf16.msra.mxu0 %v3100
    %3392 = vmatprep.subr.bf16.mxu0 %v3109
    %3393 = vmatpush1.bf16.msra.mxu0 %v3108
    %3394 = vmatprep.subr.bf16.mxu0 %v3117
    %3395 = vmatpush1.bf16.msra.mxu0 %v3116
    %3396 = vmatprep.subr.bf16.mxu0 %v3125
    %3397 = vmatpush1.bf16.msra.mxu0 %v3124
    %3398 = vmatprep.subr.bf16.mxu0 %v3133
    %3399 = vmatpush1.bf16.msra.mxu0 %v3132
    %3400 = vmatprep.subr.bf16.mxu0 %v3141
    %3401 = vmatpush1.bf16.msra.mxu0 %v3140
    %3402 = vmatprep.subr.bf16.mxu0 0
    %3403 = vmatpush1.bf16.msra.mxu0 0
    %3404 = vmatprep.subr.bf16.mxu0 0
    %3405 = vmatpush1.bf16.msra.mxu0 0
    %3406 = vmatprep.subr.bf16.mxu0 0
    %3407 = vmatpush1.bf16.msra.mxu0 0
    %3408 = vmatprep.subr.bf16.mxu0 0
    %3409 = vmatpush1.bf16.msra.mxu0 0
    %3410 = vmatprep.subr.bf16.mxu0 0
    %3411 = vmatpush1.bf16.msra.mxu0 0
    %3412 = vmatprep.subr.bf16.mxu0 0
    %3413 = vmatpush1.bf16.msra.mxu0 0
    %3414 = vmatprep.subr.bf16.mxu0 0
    %3415 = vmatpush1.bf16.msra.mxu0 0
    %3416 = vmatprep.subr.bf16.mxu0 0
    %3417 = vmatpush1.bf16.msra.mxu0 0
    %3418 = vmatprep.mubr.bf16.mxu0 0
    %3419 = vmatmul.mubr.bf16.gmra.mrb[0].mxu0 %v3384
    %v3420 = vpop.f32.mrb[0].mxu0
    %v3421 = vadd.f32 0.0, %v3420
    %v3422 = vpop.f32.mrb[0].mxu0
    %v3423 = vadd.f32 0.0, %v3422
    %v3424 = vpop.f32.mrb[0].mxu0
    %v3425 = vpop.f32.mrb[0].mxu0
    %3426 = vdwg.mxu0
    %3427 = vmatprep.subr.bf16.mxu0 %v3087
    %3428 = vmatpush1.bf16.msra.mxu0 %v3086
    %3429 = vmatprep.subr.bf16.mxu0 %v3095
    %3430 = vmatpush1.bf16.msra.mxu0 %v3094
    %3431 = vmatprep.subr.bf16.mxu0 %v3103
    %3432 = vmatpush1.bf16.msra.mxu0 %v3102
    %3433 = vmatprep.subr.bf16.mxu0 %v3111
    %3434 = vmatpush1.bf16.msra.mxu0 %v3110
    %3435 = vmatprep.subr.bf16.mxu0 %v3119
    %3436 = vmatpush1.bf16.msra.mxu0 %v3118
    %3437 = vmatprep.subr.bf16.mxu0 %v3127
    %3438 = vmatpush1.bf16.msra.mxu0 %v3126
    %3439 = vmatprep.subr.bf16.mxu0 %v3135
    %3440 = vmatpush1.bf16.msra.mxu0 %v3134
    %3441 = vmatprep.subr.bf16.mxu0 %v3143
    %3442 = vmatpush1.bf16.msra.mxu0 %v3142
    %3443 = vmatprep.subr.bf16.mxu0 0
    %3444 = vmatpush1.bf16.msra.mxu0 0
    %3445 = vmatprep.subr.bf16.mxu0 0
    %3446 = vmatpush1.bf16.msra.mxu0 0
    %3447 = vmatprep.subr.bf16.mxu0 0
    %3448 = vmatpush1.bf16.msra.mxu0 0
    %3449 = vmatprep.subr.bf16.mxu0 0
    %3450 = vmatpush1.bf16.msra.mxu0 0
    %3451 = vmatprep.subr.bf16.mxu0 0
    %3452 = vmatpush1.bf16.msra.mxu0 0
    %3453 = vmatprep.subr.bf16.mxu0 0
    %3454 = vmatpush1.bf16.msra.mxu0 0
    %3455 = vmatprep.subr.bf16.mxu0 0
    %3456 = vmatpush1.bf16.msra.mxu0 0
    %3457 = vmatprep.subr.bf16.mxu0 0
    %3458 = vmatpush1.bf16.msra.mxu0 0
    %3459 = vmatprep.mubr.bf16.mxu0 0
    %3460 = vmatmul.mubr.bf16.gmra.mrb[0].mxu0 %v3384
    %v3461 = vpop.f32.mrb[0].mxu0
    %v3462 = vadd.f32 0.0, %v3461
    %v3463 = vpop.f32.mrb[0].mxu0
    %v3464 = vadd.f32 0.0, %v3463
    %v3465 = vpop.f32.mrb[0].mxu0
    %v3466 = vpop.f32.mrb[0].mxu0
    %3467 = vdwg.mxu0
    %3468 = vmatprep.subr.bf16.mxu0 %v3089
    %3469 = vmatpush1.bf16.msra.mxu0 %v3088
    %3470 = vmatprep.subr.bf16.mxu0 %v3097
    %3471 = vmatpush1.bf16.msra.mxu0 %v3096
    %3472 = vmatprep.subr.bf16.mxu0 %v3105
    %3473 = vmatpush1.bf16.msra.mxu0 %v3104
    %3474 = vmatprep.subr.bf16.mxu0 %v3113
    %3475 = vmatpush1.bf16.msra.mxu0 %v3112
    %3476 = vmatprep.subr.bf16.mxu0 %v3121
    %3477 = vmatpush1.bf16.msra.mxu0 %v3120
    %3478 = vmatprep.subr.bf16.mxu0 %v3129
    %3479 = vmatpush1.bf16.msra.mxu0 %v3128
    %3480 = vmatprep.subr.bf16.mxu0 %v3137
    %3481 = vmatpush1.bf16.msra.mxu0 %v3136
    %3482 = vmatprep.subr.bf16.mxu0 %v3145
    %3483 = vmatpush1.bf16.msra.mxu0 %v3144
    %3484 = vmatprep.subr.bf16.mxu0 0
    %3485 = vmatpush1.bf16.msra.mxu0 0
    %3486 = vmatprep.subr.bf16.mxu0 0
    %3487 = vmatpush1.bf16.msra.mxu0 0
    %3488 = vmatprep.subr.bf16.mxu0 0
    %3489 = vmatpush1.bf16.msra.mxu0 0
    %3490 = vmatprep.subr.bf16.mxu0 0
    %3491 = vmatpush1.bf16.msra.mxu0 0
    %3492 = vmatprep.subr.bf16.mxu0 0
    %3493 = vmatpush1.bf16.msra.mxu0 0
    %3494 = vmatprep.subr.bf16.mxu0 0
    %3495 = vmatpush1.bf16.msra.mxu0 0
    %3496 = vmatprep.subr.bf16.mxu0 0
    %3497 = vmatpush1.bf16.msra.mxu0 0
    %3498 = vmatprep.subr.bf16.mxu0 0
    %3499 = vmatpush1.bf16.msra.mxu0 0
    %3500 = vmatprep.mubr.bf16.mxu0 0
    %3501 = vmatmul.mubr.bf16.gmra.mrb[0].mxu0 %v3384
    %v3502 = vpop.f32.mrb[0].mxu0
    %v3503 = vadd.f32 0.0, %v3502
    %v3504 = vpop.f32.mrb[0].mxu0
    %v3505 = vadd.f32 0.0, %v3504
    %v3506 = vpop.f32.mrb[0].mxu0
    %v3507 = vpop.f32.mrb[0].mxu0
    %3508 = vdwg.mxu0
    %3509 = vmatprep.subr.bf16.mxu0 %v3091
    %3510 = vmatpush1.bf16.msra.mxu0 %v3090
    %3511 = vmatprep.subr.bf16.mxu0 %v3099
    %3512 = vmatpush1.bf16.msra.mxu0 %v3098
    %3513 = vmatprep.subr.bf16.mxu0 %v3107
    %3514 = vmatpush1.bf16.msra.mxu0 %v3106
    %3515 = vmatprep.subr.bf16.mxu0 %v3115
    %3516 = vmatpush1.bf16.msra.mxu0 %v3114
    %3517 = vmatprep.subr.bf16.mxu0 %v3123
    %3518 = vmatpush1.bf16.msra.mxu0 %v3122
    %3519 = vmatprep.subr.bf16.mxu0 %v3131
    %3520 = vmatpush1.bf16.msra.mxu0 %v3130
    %3521 = vmatprep.subr.bf16.mxu0 %v3139
    %3522 = vmatpush1.bf16.msra.mxu0 %v3138
    %3523 = vmatprep.subr.bf16.mxu0 %v3147
    %3524 = vmatpush1.bf16.msra.mxu0 %v3146
    %3525 = vmatprep.subr.bf16.mxu0 0
    %3526 = vmatpush1.bf16.msra.mxu0 0
    %3527 = vmatprep.subr.bf16.mxu0 0
    %3528 = vmatpush1.bf16.msra.mxu0 0
    %3529 = vmatprep.subr.bf16.mxu0 0
    %3530 = vmatpush1.bf16.msra.mxu0 0
    %3531 = vmatprep.subr.bf16.mxu0 0
    %3532 = vmatpush1.bf16.msra.mxu0 0
    %3533 = vmatprep.subr.bf16.mxu0 0
    %3534 = vmatpush1.bf16.msra.mxu0 0
    %3535 = vmatprep.subr.bf16.mxu0 0
    %3536 = vmatpush1.bf16.msra.mxu0 0
    %3537 = vmatprep.subr.bf16.mxu0 0
    %3538 = vmatpush1.bf16.msra.mxu0 0
    %3539 = vmatprep.subr.bf16.mxu0 0
    %3540 = vmatpush1.bf16.msra.mxu0 0
    %3541 = vmatprep.mubr.bf16.mxu0 0
    %3542 = vmatmul.mubr.bf16.gmra.mrb[0].mxu0 %v3384
    %v3543 = vpop.f32.mrb[0].mxu0
    %v3544 = vadd.f32 0.0, %v3543
    %v3545 = vpop.f32.mrb[0].mxu0
    %v3546 = vadd.f32 0.0, %v3545
    %v3547 = vpop.f32.mrb[0].mxu0
    %v3548 = vpop.f32.mrb[0].mxu0
    %3549 = vdwg.mxu0
    %v3550 = vadd.f32 %v2818, %v3421
    %v3551 = vadd.f32 %v2819, %v3423
    %v3552 = vadd.f32 %v2820, %v3462
    %v3553 = vadd.f32 %v2821, %v3464
    %v3554 = vadd.f32 %v2822, %v3503
    %v3555 = vadd.f32 %v2823, %v3505
    %v3556 = vadd.f32 %v2824, %v3544
    %v3557 = vadd.f32 %v2825, %v3546
    %v3558 = vld [vmem:[#allocation10 + $0x800] sm:$0xff]
    %v3559 = vld [vmem:[#allocation10 + $0x808] sm:$0xff]
    %v3560 = vld [vmem:[#allocation10 + $0x810] sm:$0xff]
    %v3561 = vld [vmem:[#allocation10 + $0x818] sm:$0xff]
    %v3562 = vld [vmem:[#allocation10 + $0x820] sm:$0xff]
    %v3563 = vld [vmem:[#allocation10 + $0x828] sm:$0xff]
    %v3564 = vld [vmem:[#allocation10 + $0x830] sm:$0xff]
    %v3565 = vld [vmem:[#allocation10 + $0x838] sm:$0xff]
    %v3566 = vld [vmem:[#allocation10 + $0x840] sm:$0xff]
    %v3567 = vld [vmem:[#allocation10 + $0x848] sm:$0xff]
    %v3568 = vld [vmem:[#allocation10 + $0x850] sm:$0xff]
    %v3569 = vld [vmem:[#allocation10 + $0x858] sm:$0xff]
    %v3570 = vld [vmem:[#allocation10 + $0x860] sm:$0xff]
    %v3571 = vld [vmem:[#allocation10 + $0x868] sm:$0xff]
    %v3572 = vld [vmem:[#allocation10 + $0x870] sm:$0xff]
    %v3573 = vld [vmem:[#allocation10 + $0x878] sm:$0xff]
    %v3574 = vld [vmem:[#allocation10 + $0x880] sm:$0xff]
    %v3575 = vld [vmem:[#allocation10 + $0x888] sm:$0xff]
    %v3576 = vld [vmem:[#allocation10 + $0x890] sm:$0xff]
    %v3577 = vld [vmem:[#allocation10 + $0x898] sm:$0xff]
    %v3578 = vld [vmem:[#allocation10 + $0x8a0] sm:$0xff]
    %v3579 = vld [vmem:[#allocation10 + $0x8a8] sm:$0xff]
    %v3580 = vld [vmem:[#allocation10 + $0x8b0] sm:$0xff]
    %v3581 = vld [vmem:[#allocation10 + $0x8b8] sm:$0xff]
    %v3582 = vld [vmem:[#allocation10 + $0x8c0] sm:$0xff]
    %v3583 = vld [vmem:[#allocation10 + $0x8c8] sm:$0xff]
    %v3584 = vld [vmem:[#allocation10 + $0x8d0] sm:$0xff]
    %v3585 = vld [vmem:[#allocation10 + $0x8d8] sm:$0xff]
    %v3586 = vld [vmem:[#allocation10 + $0x8e0] sm:$0xff]
    %v3587 = vld [vmem:[#allocation10 + $0x8e8] sm:$0xff]
    %v3588 = vld [vmem:[#allocation10 + $0x8f0] sm:$0xff]
    %v3589 = vld [vmem:[#allocation10 + $0x8f8] sm:$0xff]
    %v3590 = vld [vmem:[#allocation10 + $0x900] sm:$0xff]
    %v3591 = vld [vmem:[#allocation10 + $0x908] sm:$0xff]
    %v3592 = vld [vmem:[#allocation10 + $0x910] sm:$0xff]
    %v3593 = vld [vmem:[#allocation10 + $0x918] sm:$0xff]
    %v3594 = vld [vmem:[#allocation10 + $0x920] sm:$0xff]
    %v3595 = vld [vmem:[#allocation10 + $0x928] sm:$0xff]
    %v3596 = vld [vmem:[#allocation10 + $0x930] sm:$0xff]
    %v3597 = vld [vmem:[#allocation10 + $0x938] sm:$0xff]
    %v3598 = vld [vmem:[#allocation10 + $0x940] sm:$0xff]
    %v3599 = vld [vmem:[#allocation10 + $0x948] sm:$0xff]
    %v3600 = vld [vmem:[#allocation10 + $0x950] sm:$0xff]
    %v3601 = vld [vmem:[#allocation10 + $0x958] sm:$0xff]
    %v3602 = vld [vmem:[#allocation10 + $0x960] sm:$0xff]
    %v3603 = vld [vmem:[#allocation10 + $0x968] sm:$0xff]
    %v3604 = vld [vmem:[#allocation10 + $0x970] sm:$0xff]
    %v3605 = vld [vmem:[#allocation10 + $0x978] sm:$0xff]
    %v3606 = vld [vmem:[#allocation10 + $0x980] sm:$0xff]
    %v3607 = vld [vmem:[#allocation10 + $0x988] sm:$0xff]
    %v3608 = vld [vmem:[#allocation10 + $0x990] sm:$0xff]
    %v3609 = vld [vmem:[#allocation10 + $0x998] sm:$0xff]
    %v3610 = vld [vmem:[#allocation10 + $0x9a0] sm:$0xff]
    %v3611 = vld [vmem:[#allocation10 + $0x9a8] sm:$0xff]
    %v3612 = vld [vmem:[#allocation10 + $0x9b0] sm:$0xff]
    %v3613 = vld [vmem:[#allocation10 + $0x9b8] sm:$0xff]
    %v3614 = vld [vmem:[#allocation10 + $0x9c0] sm:$0xff]
    %v3615 = vld [vmem:[#allocation10 + $0x9c8] sm:$0xff]
    %v3616 = vld [vmem:[#allocation10 + $0x9d0] sm:$0xff]
    %v3617 = vld [vmem:[#allocation10 + $0x9d8] sm:$0xff]
    %v3618 = vld [vmem:[#allocation10 + $0x9e0] sm:$0xff]
    %v3619 = vld [vmem:[#allocation10 + $0x9e8] sm:$0xff]
    %v3620 = vld [vmem:[#allocation10 + $0x9f0] sm:$0xff]
    %v3621 = vld [vmem:[#allocation10 + $0x9f8] sm:$0xff]
    %v3622 = vrot.slane %v722, 2
    %v3688 = vunpack.c.l.b16 %v3558
    %v3689 = vunpack.c.h.b16 %v3558
    %v3690 = vunpack.c.l.b16 %v3559
    %v3691 = vunpack.c.h.b16 %v3559
    %v3692 = vunpack.c.l.b16 %v3560
    %v3693 = vunpack.c.h.b16 %v3560
    %v3694 = vunpack.c.l.b16 %v3561
    %v3695 = vunpack.c.h.b16 %v3561
    %v3696 = vunpack.c.l.b16 %v3562
    %v3697 = vunpack.c.h.b16 %v3562
    %v3698 = vunpack.c.l.b16 %v3563
    %v3699 = vunpack.c.h.b16 %v3563
    %v3700 = vunpack.c.l.b16 %v3564
    %v3701 = vunpack.c.h.b16 %v3564
    %v3702 = vunpack.c.l.b16 %v3565
    %v3703 = vunpack.c.h.b16 %v3565
    %v3704 = vunpack.c.l.b16 %v3566
    %v3705 = vunpack.c.h.b16 %v3566
    %v3706 = vunpack.c.l.b16 %v3567
    %v3707 = vunpack.c.h.b16 %v3567
    %v3708 = vunpack.c.l.b16 %v3568
    %v3709 = vunpack.c.h.b16 %v3568
    %v3710 = vunpack.c.l.b16 %v3569
    %v3711 = vunpack.c.h.b16 %v3569
    %v3712 = vunpack.c.l.b16 %v3570
    %v3713 = vunpack.c.h.b16 %v3570
    %v3714 = vunpack.c.l.b16 %v3571
    %v3715 = vunpack.c.h.b16 %v3571
    %v3716 = vunpack.c.l.b16 %v3572
    %v3717 = vunpack.c.h.b16 %v3572
    %v3718 = vunpack.c.l.b16 %v3573
    %v3719 = vunpack.c.h.b16 %v3573
    %v3720 = vunpack.c.l.b16 %v3574
    %v3721 = vunpack.c.h.b16 %v3574
    %v3722 = vunpack.c.l.b16 %v3575
    %v3723 = vunpack.c.h.b16 %v3575
    %v3724 = vunpack.c.l.b16 %v3576
    %v3725 = vunpack.c.h.b16 %v3576
    %v3726 = vunpack.c.l.b16 %v3577
    %v3727 = vunpack.c.h.b16 %v3577
    %v3728 = vunpack.c.l.b16 %v3578
    %v3729 = vunpack.c.h.b16 %v3578
    %v3730 = vunpack.c.l.b16 %v3579
    %v3731 = vunpack.c.h.b16 %v3579
    %v3732 = vunpack.c.l.b16 %v3580
    %v3733 = vunpack.c.h.b16 %v3580
    %v3734 = vunpack.c.l.b16 %v3581
    %v3735 = vunpack.c.h.b16 %v3581
    %v3736 = vunpack.c.l.b16 %v3582
    %v3737 = vunpack.c.h.b16 %v3582
    %v3738 = vunpack.c.l.b16 %v3583
    %v3739 = vunpack.c.h.b16 %v3583
    %v3740 = vunpack.c.l.b16 %v3584
    %v3741 = vunpack.c.h.b16 %v3584
    %v3742 = vunpack.c.l.b16 %v3585
    %v3743 = vunpack.c.h.b16 %v3585
    %v3744 = vunpack.c.l.b16 %v3586
    %v3745 = vunpack.c.h.b16 %v3586
    %v3746 = vunpack.c.l.b16 %v3587
    %v3747 = vunpack.c.h.b16 %v3587
    %v3748 = vunpack.c.l.b16 %v3588
    %v3749 = vunpack.c.h.b16 %v3588
    %v3750 = vunpack.c.l.b16 %v3589
    %v3751 = vunpack.c.h.b16 %v3589
    %v3752 = vunpack.c.l.b16 %v3590
    %v3753 = vunpack.c.h.b16 %v3590
    %v3754 = vunpack.c.l.b16 %v3591
    %v3755 = vunpack.c.h.b16 %v3591
    %v3756 = vunpack.c.l.b16 %v3592
    %v3757 = vunpack.c.h.b16 %v3592
    %v3758 = vunpack.c.l.b16 %v3593
    %v3759 = vunpack.c.h.b16 %v3593
    %v3760 = vunpack.c.l.b16 %v3594
    %v3761 = vunpack.c.h.b16 %v3594
    %v3762 = vunpack.c.l.b16 %v3595
    %v3763 = vunpack.c.h.b16 %v3595
    %v3764 = vunpack.c.l.b16 %v3596
    %v3765 = vunpack.c.h.b16 %v3596
    %v3766 = vunpack.c.l.b16 %v3597
    %v3767 = vunpack.c.h.b16 %v3597
    %v3768 = vunpack.c.l.b16 %v3598
    %v3769 = vunpack.c.h.b16 %v3598
    %v3770 = vunpack.c.l.b16 %v3599
    %v3771 = vunpack.c.h.b16 %v3599
    %v3772 = vunpack.c.l.b16 %v3600
    %v3773 = vunpack.c.h.b16 %v3600
    %v3774 = vunpack.c.l.b16 %v3601
    %v3775 = vunpack.c.h.b16 %v3601
    %v3776 = vunpack.c.l.b16 %v3602
    %v3777 = vunpack.c.h.b16 %v3602
    %v3778 = vunpack.c.l.b16 %v3603
    %v3779 = vunpack.c.h.b16 %v3603
    %v3780 = vunpack.c.l.b16 %v3604
    %v3781 = vunpack.c.h.b16 %v3604
    %v3782 = vunpack.c.l.b16 %v3605
    %v3783 = vunpack.c.h.b16 %v3605
    %v3784 = vunpack.c.l.b16 %v3606
    %v3785 = vunpack.c.h.b16 %v3606
    %v3786 = vunpack.c.l.b16 %v3607
    %v3787 = vunpack.c.h.b16 %v3607
    %v3788 = vunpack.c.l.b16 %v3608
    %v3789 = vunpack.c.h.b16 %v3608
    %v3790 = vunpack.c.l.b16 %v3609
    %v3791 = vunpack.c.h.b16 %v3609
    %v3792 = vunpack.c.l.b16 %v3610
    %v3793 = vunpack.c.h.b16 %v3610
    %v3794 = vunpack.c.l.b16 %v3611
    %v3795 = vunpack.c.h.b16 %v3611
    %v3796 = vunpack.c.l.b16 %v3612
    %v3797 = vunpack.c.h.b16 %v3612
    %v3798 = vunpack.c.l.b16 %v3613
    %v3799 = vunpack.c.h.b16 %v3613
    %v3800 = vunpack.c.l.b16 %v3614
    %v3801 = vunpack.c.h.b16 %v3614
    %v3802 = vunpack.c.l.b16 %v3615
    %v3803 = vunpack.c.h.b16 %v3615
    %v3804 = vunpack.c.l.b16 %v3616
    %v3805 = vunpack.c.h.b16 %v3616
    %v3806 = vunpack.c.l.b16 %v3617
    %v3807 = vunpack.c.h.b16 %v3617
    %v3808 = vunpack.c.l.b16 %v3618
    %v3809 = vunpack.c.h.b16 %v3618
    %v3810 = vunpack.c.l.b16 %v3619
    %v3811 = vunpack.c.h.b16 %v3619
    %v3812 = vunpack.c.l.b16 %v3620
    %v3813 = vunpack.c.h.b16 %v3620
    %v3814 = vunpack.c.l.b16 %v3621
    %v3815 = vunpack.c.h.b16 %v3621
    %v3816 = vpack.c.b16 %v3696, %v3688
    %v3817 = vpack.c.b16 %v3697, %v3689
    %v3818 = vpack.c.b16 %v3698, %v3690
    %v3819 = vpack.c.b16 %v3699, %v3691
    %v3820 = vpack.c.b16 %v3700, %v3692
    %v3821 = vpack.c.b16 %v3701, %v3693
    %v3822 = vpack.c.b16 %v3702, %v3694
    %v3823 = vpack.c.b16 %v3703, %v3695
    %v3824 = vpack.c.b16 %v3712, %v3704
    %v3825 = vpack.c.b16 %v3713, %v3705
    %v3826 = vpack.c.b16 %v3714, %v3706
    %v3827 = vpack.c.b16 %v3715, %v3707
    %v3828 = vpack.c.b16 %v3716, %v3708
    %v3829 = vpack.c.b16 %v3717, %v3709
    %v3830 = vpack.c.b16 %v3718, %v3710
    %v3831 = vpack.c.b16 %v3719, %v3711
    %v3832 = vpack.c.b16 %v3728, %v3720
    %v3833 = vpack.c.b16 %v3729, %v3721
    %v3834 = vpack.c.b16 %v3730, %v3722
    %v3835 = vpack.c.b16 %v3731, %v3723
    %v3836 = vpack.c.b16 %v3732, %v3724
    %v3837 = vpack.c.b16 %v3733, %v3725
    %v3838 = vpack.c.b16 %v3734, %v3726
    %v3839 = vpack.c.b16 %v3735, %v3727
    %v3840 = vpack.c.b16 %v3744, %v3736
    %v3841 = vpack.c.b16 %v3745, %v3737
    %v3842 = vpack.c.b16 %v3746, %v3738
    %v3843 = vpack.c.b16 %v3747, %v3739
    %v3844 = vpack.c.b16 %v3748, %v3740
    %v3845 = vpack.c.b16 %v3749, %v3741
    %v3846 = vpack.c.b16 %v3750, %v3742
    %v3847 = vpack.c.b16 %v3751, %v3743
    %v3848 = vpack.c.b16 %v3760, %v3752
    %v3849 = vpack.c.b16 %v3761, %v3753
    %v3850 = vpack.c.b16 %v3762, %v3754
    %v3851 = vpack.c.b16 %v3763, %v3755
    %v3852 = vpack.c.b16 %v3764, %v3756
    %v3853 = vpack.c.b16 %v3765, %v3757
    %v3854 = vpack.c.b16 %v3766, %v3758
    %v3855 = vpack.c.b16 %v3767, %v3759
    %v3856 = vpack.c.b16 %v3776, %v3768
    %v3857 = vpack.c.b16 %v3777, %v3769
    %v3858 = vpack.c.b16 %v3778, %v3770
    %v3859 = vpack.c.b16 %v3779, %v3771
    %v3860 = vpack.c.b16 %v3780, %v3772
    %v3861 = vpack.c.b16 %v3781, %v3773
    %v3862 = vpack.c.b16 %v3782, %v3774
    %v3863 = vpack.c.b16 %v3783, %v3775
    %v3864 = vpack.c.b16 %v3792, %v3784
    %v3865 = vpack.c.b16 %v3793, %v3785
    %v3866 = vpack.c.b16 %v3794, %v3786
    %v3867 = vpack.c.b16 %v3795, %v3787
    %v3868 = vpack.c.b16 %v3796, %v3788
    %v3869 = vpack.c.b16 %v3797, %v3789
    %v3870 = vpack.c.b16 %v3798, %v3790
    %v3871 = vpack.c.b16 %v3799, %v3791
    %v3872 = vpack.c.b16 %v3808, %v3800
    %v3873 = vpack.c.b16 %v3809, %v3801
    %v3874 = vpack.c.b16 %v3810, %v3802
    %v3875 = vpack.c.b16 %v3811, %v3803
    %v3876 = vpack.c.b16 %v3812, %v3804
    %v3877 = vpack.c.b16 %v3813, %v3805
    %v3878 = vpack.c.b16 %v3814, %v3806
    %v3879 = vpack.c.b16 %v3815, %v3807
    %3944 = vmatprep.subr.bf16.mxu0 %v3817
    %3945 = vmatpush1.bf16.msra.mxu0 %v3816
    %3946 = vmatprep.subr.bf16.mxu0 %v3825
    %3947 = vmatpush1.bf16.msra.mxu0 %v3824
    %3948 = vmatprep.subr.bf16.mxu0 %v3833
    %3949 = vmatpush1.bf16.msra.mxu0 %v3832
    %3950 = vmatprep.subr.bf16.mxu0 %v3841
    %3951 = vmatpush1.bf16.msra.mxu0 %v3840
    %3952 = vmatprep.subr.bf16.mxu0 %v3849
    %3953 = vmatpush1.bf16.msra.mxu0 %v3848
    %3954 = vmatprep.subr.bf16.mxu0 %v3857
    %3955 = vmatpush1.bf16.msra.mxu0 %v3856
    %3956 = vmatprep.subr.bf16.mxu0 %v3865
    %3957 = vmatpush1.bf16.msra.mxu0 %v3864
    %3958 = vmatprep.subr.bf16.mxu0 %v3873
    %3959 = vmatpush1.bf16.msra.mxu0 %v3872
    %3960 = vmatprep.subr.bf16.mxu0 0
    %3961 = vmatpush1.bf16.msra.mxu0 0
    %3962 = vmatprep.subr.bf16.mxu0 0
    %3963 = vmatpush1.bf16.msra.mxu0 0
    %3964 = vmatprep.subr.bf16.mxu0 0
    %3965 = vmatpush1.bf16.msra.mxu0 0
    %3966 = vmatprep.subr.bf16.mxu0 0
    %3967 = vmatpush1.bf16.msra.mxu0 0
    %3968 = vmatprep.subr.bf16.mxu0 0
    %3969 = vmatpush1.bf16.msra.mxu0 0
    %3970 = vmatprep.subr.bf16.mxu0 0
    %3971 = vmatpush1.bf16.msra.mxu0 0
    %3972 = vmatprep.subr.bf16.mxu0 0
    %3973 = vmatpush1.bf16.msra.mxu0 0
    %3974 = vmatprep.subr.bf16.mxu0 0
    %3975 = vmatpush1.bf16.msra.mxu0 0
    %3976 = vmatprep.mubr.bf16.mxu0 0
    %3977 = vmatmul.mubr.bf16.gmra.mrb[0].mxu0 %v3622
    %v3978 = vpop.f32.mrb[0].mxu0
    %v3979 = vadd.f32 0.0, %v3978
    %v3980 = vpop.f32.mrb[0].mxu0
    %v3981 = vadd.f32 0.0, %v3980
    %v3982 = vpop.f32.mrb[0].mxu0
    %v3983 = vpop.f32.mrb[0].mxu0
    %3984 = vdwg.mxu0
    %3985 = vmatprep.subr.bf16.mxu0 %v3819
    %3986 = vmatpush1.bf16.msra.mxu0 %v3818
    %3987 = vmatprep.subr.bf16.mxu0 %v3827
    %3988 = vmatpush1.bf16.msra.mxu0 %v3826
    %3989 = vmatprep.subr.bf16.mxu0 %v3835
    %3990 = vmatpush1.bf16.msra.mxu0 %v3834
    %3991 = vmatprep.subr.bf16.mxu0 %v3843
    %3992 = vmatpush1.bf16.msra.mxu0 %v3842
    %3993 = vmatprep.subr.bf16.mxu0 %v3851
    %3994 = vmatpush1.bf16.msra.mxu0 %v3850
    %3995 = vmatprep.subr.bf16.mxu0 %v3859
    %3996 = vmatpush1.bf16.msra.mxu0 %v3858
    %3997 = vmatprep.subr.bf16.mxu0 %v3867
    %3998 = vmatpush1.bf16.msra.mxu0 %v3866
    %3999 = vmatprep.subr.bf16.mxu0 %v3875
    %4000 = vmatpush1.bf16.msra.mxu0 %v3874
    %4001 = vmatprep.subr.bf16.mxu0 0
    %4002 = vmatpush1.bf16.msra.mxu0 0
    %4003 = vmatprep.subr.bf16.mxu0 0
    %4004 = vmatpush1.bf16.msra.mxu0 0
    %4005 = vmatprep.subr.bf16.mxu0 0
    %4006 = vmatpush1.bf16.msra.mxu0 0
    %4007 = vmatprep.subr.bf16.mxu0 0
    %4008 = vmatpush1.bf16.msra.mxu0 0
    %4009 = vmatprep.subr.bf16.mxu0 0
    %4010 = vmatpush1.bf16.msra.mxu0 0
    %4011 = vmatprep.subr.bf16.mxu0 0
    %4012 = vmatpush1.bf16.msra.mxu0 0
    %4013 = vmatprep.subr.bf16.mxu0 0
    %4014 = vmatpush1.bf16.msra.mxu0 0
    %4015 = vmatprep.subr.bf16.mxu0 0
    %4016 = vmatpush1.bf16.msra.mxu0 0
    %4017 = vmatprep.mubr.bf16.mxu0 0
    %4018 = vmatmul.mubr.bf16.gmra.mrb[0].mxu0 %v3622
    %v4019 = vpop.f32.mrb[0].mxu0
    %v4020 = vadd.f32 0.0, %v4019
    %v4021 = vpop.f32.mrb[0].mxu0
    %v4022 = vadd.f32 0.0, %v4021
    %v4023 = vpop.f32.mrb[0].mxu0
    %v4024 = vpop.f32.mrb[0].mxu0
    %4025 = vdwg.mxu0
    %4026 = vmatprep.subr.bf16.mxu0 %v3821
    %4027 = vmatpush1.bf16.msra.mxu0 %v3820
    %4028 = vmatprep.subr.bf16.mxu0 %v3829
    %4029 = vmatpush1.bf16.msra.mxu0 %v3828
    %4030 = vmatprep.subr.bf16.mxu0 %v3837
    %4031 = vmatpush1.bf16.msra.mxu0 %v3836
    %4032 = vmatprep.subr.bf16.mxu0 %v3845
    %4033 = vmatpush1.bf16.msra.mxu0 %v3844
    %4034 = vmatprep.subr.bf16.mxu0 %v3853
    %4035 = vmatpush1.bf16.msra.mxu0 %v3852
    %4036 = vmatprep.subr.bf16.mxu0 %v3861
    %4037 = vmatpush1.bf16.msra.mxu0 %v3860
    %4038 = vmatprep.subr.bf16.mxu0 %v3869
    %4039 = vmatpush1.bf16.msra.mxu0 %v3868
    %4040 = vmatprep.subr.bf16.mxu0 %v3877
    %4041 = vmatpush1.bf16.msra.mxu0 %v3876
    %4042 = vmatprep.subr.bf16.mxu0 0
    %4043 = vmatpush1.bf16.msra.mxu0 0
    %4044 = vmatprep.subr.bf16.mxu0 0
    %4045 = vmatpush1.bf16.msra.mxu0 0
    %4046 = vmatprep.subr.bf16.mxu0 0
    %4047 = vmatpush1.bf16.msra.mxu0 0
    %4048 = vmatprep.subr.bf16.mxu0 0
    %4049 = vmatpush1.bf16.msra.mxu0 0
    %4050 = vmatprep.subr.bf16.mxu0 0
    %4051 = vmatpush1.bf16.msra.mxu0 0
    %4052 = vmatprep.subr.bf16.mxu0 0
    %4053 = vmatpush1.bf16.msra.mxu0 0
    %4054 = vmatprep.subr.bf16.mxu0 0
    %4055 = vmatpush1.bf16.msra.mxu0 0
    %4056 = vmatprep.subr.bf16.mxu0 0
    %4057 = vmatpush1.bf16.msra.mxu0 0
    %4058 = vmatprep.mubr.bf16.mxu0 0
    %4059 = vmatmul.mubr.bf16.gmra.mrb[0].mxu0 %v3622
    %v4060 = vpop.f32.mrb[0].mxu0
    %v4061 = vadd.f32 0.0, %v4060
    %v4062 = vpop.f32.mrb[0].mxu0
    %v4063 = vadd.f32 0.0, %v4062
    %v4064 = vpop.f32.mrb[0].mxu0
    %v4065 = vpop.f32.mrb[0].mxu0
    %4066 = vdwg.mxu0
    %4067 = vmatprep.subr.bf16.mxu0 %v3823
    %4068 = vmatpush1.bf16.msra.mxu0 %v3822
    %4069 = vmatprep.subr.bf16.mxu0 %v3831
    %4070 = vmatpush1.bf16.msra.mxu0 %v3830
    %4071 = vmatprep.subr.bf16.mxu0 %v3839
    %4072 = vmatpush1.bf16.msra.mxu0 %v3838
    %4073 = vmatprep.subr.bf16.mxu0 %v3847
    %4074 = vmatpush1.bf16.msra.mxu0 %v3846
    %4075 = vmatprep.subr.bf16.mxu0 %v3855
    %4076 = vmatpush1.bf16.msra.mxu0 %v3854
    %4077 = vmatprep.subr.bf16.mxu0 %v3863
    %4078 = vmatpush1.bf16.msra.mxu0 %v3862
    %4079 = vmatprep.subr.bf16.mxu0 %v3871
    %4080 = vmatpush1.bf16.msra.mxu0 %v3870
    %4081 = vmatprep.subr.bf16.mxu0 %v3879
    %4082 = vmatpush1.bf16.msra.mxu0 %v3878
    %4083 = vmatprep.subr.bf16.mxu0 0
    %4084 = vmatpush1.bf16.msra.mxu0 0
    %4085 = vmatprep.subr.bf16.mxu0 0
    %4086 = vmatpush1.bf16.msra.mxu0 0
    %4087 = vmatprep.subr.bf16.mxu0 0
    %4088 = vmatpush1.bf16.msra.mxu0 0
    %4089 = vmatprep.subr.bf16.mxu0 0
    %4090 = vmatpush1.bf16.msra.mxu0 0
    %4091 = vmatprep.subr.bf16.mxu0 0
    %4092 = vmatpush1.bf16.msra.mxu0 0
    %4093 = vmatprep.subr.bf16.mxu0 0
    %4094 = vmatpush1.bf16.msra.mxu0 0
    %4095 = vmatprep.subr.bf16.mxu0 0
    %4096 = vmatpush1.bf16.msra.mxu0 0
    %4097 = vmatprep.subr.bf16.mxu0 0
    %4098 = vmatpush1.bf16.msra.mxu0 0
    %4099 = vmatprep.mubr.bf16.mxu0 0
    %4100 = vmatmul.mubr.bf16.gmra.mrb[0].mxu0 %v3622
    %v4101 = vpop.f32.mrb[0].mxu0
    %v4102 = vadd.f32 0.0, %v4101
    %v4103 = vpop.f32.mrb[0].mxu0
    %v4104 = vadd.f32 0.0, %v4103
    %v4105 = vpop.f32.mrb[0].mxu0
    %v4106 = vpop.f32.mrb[0].mxu0
    %4107 = vdwg.mxu0
    %v4108 = vadd.f32 %v3376, %v3979
    %v4109 = vadd.f32 %v3377, %v3981
    %v4110 = vadd.f32 %v3378, %v4020
    %v4111 = vadd.f32 %v3379, %v4022
    %v4112 = vadd.f32 %v3380, %v4061
    %v4113 = vadd.f32 %v3381, %v4063
    %v4114 = vadd.f32 %v3382, %v4102
    %v4115 = vadd.f32 %v3383, %v4104
    %v4116 = vrot.slane %v723, 2
    %4118 = vmatprep.subr.bf16.mxu0 %v3817
    %4119 = vmatpush1.bf16.msra.mxu0 %v3816
    %4120 = vmatprep.subr.bf16.mxu0 %v3825
    %4121 = vmatpush1.bf16.msra.mxu0 %v3824
    %4122 = vmatprep.subr.bf16.mxu0 %v3833
    %4123 = vmatpush1.bf16.msra.mxu0 %v3832
    %4124 = vmatprep.subr.bf16.mxu0 %v3841
    %4125 = vmatpush1.bf16.msra.mxu0 %v3840
    %4126 = vmatprep.subr.bf16.mxu0 %v3849
    %4127 = vmatpush1.bf16.msra.mxu0 %v3848
    %4128 = vmatprep.subr.bf16.mxu0 %v3857
    %4129 = vmatpush1.bf16.msra.mxu0 %v3856
    %4130 = vmatprep.subr.bf16.mxu0 %v3865
    %4131 = vmatpush1.bf16.msra.mxu0 %v3864
    %4132 = vmatprep.subr.bf16.mxu0 %v3873
    %4133 = vmatpush1.bf16.msra.mxu0 %v3872
    %4134 = vmatprep.subr.bf16.mxu0 0
    %4135 = vmatpush1.bf16.msra.mxu0 0
    %4136 = vmatprep.subr.bf16.mxu0 0
    %4137 = vmatpush1.bf16.msra.mxu0 0
    %4138 = vmatprep.subr.bf16.mxu0 0
    %4139 = vmatpush1.bf16.msra.mxu0 0
    %4140 = vmatprep.subr.bf16.mxu0 0
    %4141 = vmatpush1.bf16.msra.mxu0 0
    %4142 = vmatprep.subr.bf16.mxu0 0
    %4143 = vmatpush1.bf16.msra.mxu0 0
    %4144 = vmatprep.subr.bf16.mxu0 0
    %4145 = vmatpush1.bf16.msra.mxu0 0
    %4146 = vmatprep.subr.bf16.mxu0 0
    %4147 = vmatpush1.bf16.msra.mxu0 0
    %4148 = vmatprep.subr.bf16.mxu0 0
    %4149 = vmatpush1.bf16.msra.mxu0 0
    %4150 = vmatprep.mubr.bf16.mxu0 0
    %4151 = vmatmul.mubr.bf16.gmra.mrb[0].mxu0 %v4116
    %v4152 = vpop.f32.mrb[0].mxu0
    %v4153 = vadd.f32 0.0, %v4152
    %v4154 = vpop.f32.mrb[0].mxu0
    %v4155 = vadd.f32 0.0, %v4154
    %v4156 = vpop.f32.mrb[0].mxu0
    %v4157 = vpop.f32.mrb[0].mxu0
    %4158 = vdwg.mxu0
    %4159 = vmatprep.subr.bf16.mxu0 %v3819
    %4160 = vmatpush1.bf16.msra.mxu0 %v3818
    %4161 = vmatprep.subr.bf16.mxu0 %v3827
    %4162 = vmatpush1.bf16.msra.mxu0 %v3826
    %4163 = vmatprep.subr.bf16.mxu0 %v3835
    %4164 = vmatpush1.bf16.msra.mxu0 %v3834
    %4165 = vmatprep.subr.bf16.mxu0 %v3843
    %4166 = vmatpush1.bf16.msra.mxu0 %v3842
    %4167 = vmatprep.subr.bf16.mxu0 %v3851
    %4168 = vmatpush1.bf16.msra.mxu0 %v3850
    %4169 = vmatprep.subr.bf16.mxu0 %v3859
    %4170 = vmatpush1.bf16.msra.mxu0 %v3858
    %4171 = vmatprep.subr.bf16.mxu0 %v3867
    %4172 = vmatpush1.bf16.msra.mxu0 %v3866
    %4173 = vmatprep.subr.bf16.mxu0 %v3875
    %4174 = vmatpush1.bf16.msra.mxu0 %v3874
    %4175 = vmatprep.subr.bf16.mxu0 0
    %4176 = vmatpush1.bf16.msra.mxu0 0
    %4177 = vmatprep.subr.bf16.mxu0 0
    %4178 = vmatpush1.bf16.msra.mxu0 0
    %4179 = vmatprep.subr.bf16.mxu0 0
    %4180 = vmatpush1.bf16.msra.mxu0 0
    %4181 = vmatprep.subr.bf16.mxu0 0
    %4182 = vmatpush1.bf16.msra.mxu0 0
    %4183 = vmatprep.subr.bf16.mxu0 0
    %4184 = vmatpush1.bf16.msra.mxu0 0
    %4185 = vmatprep.subr.bf16.mxu0 0
    %4186 = vmatpush1.bf16.msra.mxu0 0
    %4187 = vmatprep.subr.bf16.mxu0 0
    %4188 = vmatpush1.bf16.msra.mxu0 0
    %4189 = vmatprep.subr.bf16.mxu0 0
    %4190 = vmatpush1.bf16.msra.mxu0 0
    %4191 = vmatprep.mubr.bf16.mxu0 0
    %4192 = vmatmul.mubr.bf16.gmra.mrb[0].mxu0 %v4116
    %v4193 = vpop.f32.mrb[0].mxu0
    %v4194 = vadd.f32 0.0, %v4193
    %v4195 = vpop.f32.mrb[0].mxu0
    %v4196 = vadd.f32 0.0, %v4195
    %v4197 = vpop.f32.mrb[0].mxu0
    %v4198 = vpop.f32.mrb[0].mxu0
    %4199 = vdwg.mxu0
    %4200 = vmatprep.subr.bf16.mxu0 %v3821
    %4201 = vmatpush1.bf16.msra.mxu0 %v3820
    %4202 = vmatprep.subr.bf16.mxu0 %v3829
    %4203 = vmatpush1.bf16.msra.mxu0 %v3828
    %4204 = vmatprep.subr.bf16.mxu0 %v3837
    %4205 = vmatpush1.bf16.msra.mxu0 %v3836
    %4206 = vmatprep.subr.bf16.mxu0 %v3845
    %4207 = vmatpush1.bf16.msra.mxu0 %v3844
    %4208 = vmatprep.subr.bf16.mxu0 %v3853
    %4209 = vmatpush1.bf16.msra.mxu0 %v3852
    %4210 = vmatprep.subr.bf16.mxu0 %v3861
    %4211 = vmatpush1.bf16.msra.mxu0 %v3860
    %4212 = vmatprep.subr.bf16.mxu0 %v3869
    %4213 = vmatpush1.bf16.msra.mxu0 %v3868
    %4214 = vmatprep.subr.bf16.mxu0 %v3877
    %4215 = vmatpush1.bf16.msra.mxu0 %v3876
    %4216 = vmatprep.subr.bf16.mxu0 0
    %4217 = vmatpush1.bf16.msra.mxu0 0
    %4218 = vmatprep.subr.bf16.mxu0 0
    %4219 = vmatpush1.bf16.msra.mxu0 0
    %4220 = vmatprep.subr.bf16.mxu0 0
    %4221 = vmatpush1.bf16.msra.mxu0 0
    %4222 = vmatprep.subr.bf16.mxu0 0
    %4223 = vmatpush1.bf16.msra.mxu0 0
    %4224 = vmatprep.subr.bf16.mxu0 0
    %4225 = vmatpush1.bf16.msra.mxu0 0
    %4226 = vmatprep.subr.bf16.mxu0 0
    %4227 = vmatpush1.bf16.msra.mxu0 0
    %4228 = vmatprep.subr.bf16.mxu0 0
    %4229 = vmatpush1.bf16.msra.mxu0 0
    %4230 = vmatprep.subr.bf16.mxu0 0
    %4231 = vmatpush1.bf16.msra.mxu0 0
    %4232 = vmatprep.mubr.bf16.mxu0 0
    %4233 = vmatmul.mubr.bf16.gmra.mrb[0].mxu0 %v4116
    %v4234 = vpop.f32.mrb[0].mxu0
    %v4235 = vadd.f32 0.0, %v4234
    %v4236 = vpop.f32.mrb[0].mxu0
    %v4237 = vadd.f32 0.0, %v4236
    %v4238 = vpop.f32.mrb[0].mxu0
    %v4239 = vpop.f32.mrb[0].mxu0
    %4240 = vdwg.mxu0
    %4241 = vmatprep.subr.bf16.mxu0 %v3823
    %4242 = vmatpush1.bf16.msra.mxu0 %v3822
    %4243 = vmatprep.subr.bf16.mxu0 %v3831
    %4244 = vmatpush1.bf16.msra.mxu0 %v3830
    %4245 = vmatprep.subr.bf16.mxu0 %v3839
    %4246 = vmatpush1.bf16.msra.mxu0 %v3838
    %4247 = vmatprep.subr.bf16.mxu0 %v3847
    %4248 = vmatpush1.bf16.msra.mxu0 %v3846
    %4249 = vmatprep.subr.bf16.mxu0 %v3855
    %4250 = vmatpush1.bf16.msra.mxu0 %v3854
    %4251 = vmatprep.subr.bf16.mxu0 %v3863
    %4252 = vmatpush1.bf16.msra.mxu0 %v3862
    %4253 = vmatprep.subr.bf16.mxu0 %v3871
    %4254 = vmatpush1.bf16.msra.mxu0 %v3870
    %4255 = vmatprep.subr.bf16.mxu0 %v3879
    %4256 = vmatpush1.bf16.msra.mxu0 %v3878
    %4257 = vmatprep.subr.bf16.mxu0 0
    %4258 = vmatpush1.bf16.msra.mxu0 0
    %4259 = vmatprep.subr.bf16.mxu0 0
    %4260 = vmatpush1.bf16.msra.mxu0 0
    %4261 = vmatprep.subr.bf16.mxu0 0
    %4262 = vmatpush1.bf16.msra.mxu0 0
    %4263 = vmatprep.subr.bf16.mxu0 0
    %4264 = vmatpush1.bf16.msra.mxu0 0
    %4265 = vmatprep.subr.bf16.mxu0 0
    %4266 = vmatpush1.bf16.msra.mxu0 0
    %4267 = vmatprep.subr.bf16.mxu0 0
    %4268 = vmatpush1.bf16.msra.mxu0 0
    %4269 = vmatprep.subr.bf16.mxu0 0
    %4270 = vmatpush1.bf16.msra.mxu0 0
    %4271 = vmatprep.subr.bf16.mxu0 0
    %4272 = vmatpush1.bf16.msra.mxu0 0
    %4273 = vmatprep.mubr.bf16.mxu0 0
    %4274 = vmatmul.mubr.bf16.gmra.mrb[0].mxu0 %v4116
    %v4275 = vpop.f32.mrb[0].mxu0
    %v4276 = vadd.f32 0.0, %v4275
    %v4277 = vpop.f32.mrb[0].mxu0
    %v4278 = vadd.f32 0.0, %v4277
    %v4279 = vpop.f32.mrb[0].mxu0
    %v4280 = vpop.f32.mrb[0].mxu0
    %4281 = vdwg.mxu0
    %v4282 = vadd.f32 %v3550, %v4153
    %v4283 = vadd.f32 %v3551, %v4155
    %v4284 = vadd.f32 %v3552, %v4194
    %v4285 = vadd.f32 %v3553, %v4196
    %v4286 = vadd.f32 %v3554, %v4235
    %v4287 = vadd.f32 %v3555, %v4237
    %v4288 = vadd.f32 %v3556, %v4276
    %v4289 = vadd.f32 %v3557, %v4278
    %v4290 = vld [vmem:[#allocation10 + $0xa00] sm:$0xff]
    %v4291 = vld [vmem:[#allocation10 + $0xa08] sm:$0xff]
    %v4292 = vld [vmem:[#allocation10 + $0xa10] sm:$0xff]
    %v4293 = vld [vmem:[#allocation10 + $0xa18] sm:$0xff]
    %v4294 = vld [vmem:[#allocation10 + $0xa20] sm:$0xff]
    %v4295 = vld [vmem:[#allocation10 + $0xa28] sm:$0xff]
    %v4296 = vld [vmem:[#allocation10 + $0xa30] sm:$0xff]
    %v4297 = vld [vmem:[#allocation10 + $0xa38] sm:$0xff]
    %v4298 = vld [vmem:[#allocation10 + $0xa40] sm:$0xff]
    %v4299 = vld [vmem:[#allocation10 + $0xa48] sm:$0xff]
    %v4300 = vld [vmem:[#allocation10 + $0xa50] sm:$0xff]
    %v4301 = vld [vmem:[#allocation10 + $0xa58] sm:$0xff]
    %v4302 = vld [vmem:[#allocation10 + $0xa60] sm:$0xff]
    %v4303 = vld [vmem:[#allocation10 + $0xa68] sm:$0xff]
    %v4304 = vld [vmem:[#allocation10 + $0xa70] sm:$0xff]
    %v4305 = vld [vmem:[#allocation10 + $0xa78] sm:$0xff]
    %v4306 = vld [vmem:[#allocation10 + $0xa80] sm:$0xff]
    %v4307 = vld [vmem:[#allocation10 + $0xa88] sm:$0xff]
    %v4308 = vld [vmem:[#allocation10 + $0xa90] sm:$0xff]
    %v4309 = vld [vmem:[#allocation10 + $0xa98] sm:$0xff]
    %v4310 = vld [vmem:[#allocation10 + $0xaa0] sm:$0xff]
    %v4311 = vld [vmem:[#allocation10 + $0xaa8] sm:$0xff]
    %v4312 = vld [vmem:[#allocation10 + $0xab0] sm:$0xff]
    %v4313 = vld [vmem:[#allocation10 + $0xab8] sm:$0xff]
    %v4314 = vld [vmem:[#allocation10 + $0xac0] sm:$0xff]
    %v4315 = vld [vmem:[#allocation10 + $0xac8] sm:$0xff]
    %v4316 = vld [vmem:[#allocation10 + $0xad0] sm:$0xff]
    %v4317 = vld [vmem:[#allocation10 + $0xad8] sm:$0xff]
    %v4318 = vld [vmem:[#allocation10 + $0xae0] sm:$0xff]
    %v4319 = vld [vmem:[#allocation10 + $0xae8] sm:$0xff]
    %v4320 = vld [vmem:[#allocation10 + $0xaf0] sm:$0xff]
    %v4321 = vld [vmem:[#allocation10 + $0xaf8] sm:$0xff]
    %v4322 = vld [vmem:[#allocation10 + $0xb00] sm:$0xff]
    %v4323 = vld [vmem:[#allocation10 + $0xb08] sm:$0xff]
    %v4324 = vld [vmem:[#allocation10 + $0xb10] sm:$0xff]
    %v4325 = vld [vmem:[#allocation10 + $0xb18] sm:$0xff]
    %v4326 = vld [vmem:[#allocation10 + $0xb20] sm:$0xff]
    %v4327 = vld [vmem:[#allocation10 + $0xb28] sm:$0xff]
    %v4328 = vld [vmem:[#allocation10 + $0xb30] sm:$0xff]
    %v4329 = vld [vmem:[#allocation10 + $0xb38] sm:$0xff]
    %v4330 = vld [vmem:[#allocation10 + $0xb40] sm:$0xff]
    %v4331 = vld [vmem:[#allocation10 + $0xb48] sm:$0xff]
    %v4332 = vld [vmem:[#allocation10 + $0xb50] sm:$0xff]
    %v4333 = vld [vmem:[#allocation10 + $0xb58] sm:$0xff]
    %v4334 = vld [vmem:[#allocation10 + $0xb60] sm:$0xff]
    %v4335 = vld [vmem:[#allocation10 + $0xb68] sm:$0xff]
    %v4336 = vld [vmem:[#allocation10 + $0xb70] sm:$0xff]
    %v4337 = vld [vmem:[#allocation10 + $0xb78] sm:$0xff]
    %v4338 = vld [vmem:[#allocation10 + $0xb80] sm:$0xff]
    %v4339 = vld [vmem:[#allocation10 + $0xb88] sm:$0xff]
    %v4340 = vld [vmem:[#allocation10 + $0xb90] sm:$0xff]
    %v4341 = vld [vmem:[#allocation10 + $0xb98] sm:$0xff]
    %v4342 = vld [vmem:[#allocation10 + $0xba0] sm:$0xff]
    %v4343 = vld [vmem:[#allocation10 + $0xba8] sm:$0xff]
    %v4344 = vld [vmem:[#allocation10 + $0xbb0] sm:$0xff]
    %v4345 = vld [vmem:[#allocation10 + $0xbb8] sm:$0xff]
    %v4346 = vld [vmem:[#allocation10 + $0xbc0] sm:$0xff]
    %v4347 = vld [vmem:[#allocation10 + $0xbc8] sm:$0xff]
    %v4348 = vld [vmem:[#allocation10 + $0xbd0] sm:$0xff]
    %v4349 = vld [vmem:[#allocation10 + $0xbd8] sm:$0xff]
    %v4350 = vld [vmem:[#allocation10 + $0xbe0] sm:$0xff]
    %v4351 = vld [vmem:[#allocation10 + $0xbe8] sm:$0xff]
    %v4352 = vld [vmem:[#allocation10 + $0xbf0] sm:$0xff]
    %v4353 = vld [vmem:[#allocation10 + $0xbf8] sm:$0xff]
    %v4354 = vrot.slane %v789, 2
    %v4420 = vunpack.c.l.b16 %v4290
    %v4421 = vunpack.c.h.b16 %v4290
    %v4422 = vunpack.c.l.b16 %v4291
    %v4423 = vunpack.c.h.b16 %v4291
    %v4424 = vunpack.c.l.b16 %v4292
    %v4425 = vunpack.c.h.b16 %v4292
    %v4426 = vunpack.c.l.b16 %v4293
    %v4427 = vunpack.c.h.b16 %v4293
    %v4428 = vunpack.c.l.b16 %v4294
    %v4429 = vunpack.c.h.b16 %v4294
    %v4430 = vunpack.c.l.b16 %v4295
    %v4431 = vunpack.c.h.b16 %v4295
    %v4432 = vunpack.c.l.b16 %v4296
    %v4433 = vunpack.c.h.b16 %v4296
    %v4434 = vunpack.c.l.b16 %v4297
    %v4435 = vunpack.c.h.b16 %v4297
    %v4436 = vunpack.c.l.b16 %v4298
    %v4437 = vunpack.c.h.b16 %v4298
    %v4438 = vunpack.c.l.b16 %v4299
    %v4439 = vunpack.c.h.b16 %v4299
    %v4440 = vunpack.c.l.b16 %v4300
    %v4441 = vunpack.c.h.b16 %v4300
    %v4442 = vunpack.c.l.b16 %v4301
    %v4443 = vunpack.c.h.b16 %v4301
    %v4444 = vunpack.c.l.b16 %v4302
    %v4445 = vunpack.c.h.b16 %v4302
    %v4446 = vunpack.c.l.b16 %v4303
    %v4447 = vunpack.c.h.b16 %v4303
    %v4448 = vunpack.c.l.b16 %v4304
    %v4449 = vunpack.c.h.b16 %v4304
    %v4450 = vunpack.c.l.b16 %v4305
    %v4451 = vunpack.c.h.b16 %v4305
    %v4452 = vunpack.c.l.b16 %v4306
    %v4453 = vunpack.c.h.b16 %v4306
    %v4454 = vunpack.c.l.b16 %v4307
    %v4455 = vunpack.c.h.b16 %v4307
    %v4456 = vunpack.c.l.b16 %v4308
    %v4457 = vunpack.c.h.b16 %v4308
    %v4458 = vunpack.c.l.b16 %v4309
    %v4459 = vunpack.c.h.b16 %v4309
    %v4460 = vunpack.c.l.b16 %v4310
    %v4461 = vunpack.c.h.b16 %v4310
    %v4462 = vunpack.c.l.b16 %v4311
    %v4463 = vunpack.c.h.b16 %v4311
    %v4464 = vunpack.c.l.b16 %v4312
    %v4465 = vunpack.c.h.b16 %v4312
    %v4466 = vunpack.c.l.b16 %v4313
    %v4467 = vunpack.c.h.b16 %v4313
    %v4468 = vunpack.c.l.b16 %v4314
    %v4469 = vunpack.c.h.b16 %v4314
    %v4470 = vunpack.c.l.b16 %v4315
    %v4471 = vunpack.c.h.b16 %v4315
    %v4472 = vunpack.c.l.b16 %v4316
    %v4473 = vunpack.c.h.b16 %v4316
    %v4474 = vunpack.c.l.b16 %v4317
    %v4475 = vunpack.c.h.b16 %v4317
    %v4476 = vunpack.c.l.b16 %v4318
    %v4477 = vunpack.c.h.b16 %v4318
    %v4478 = vunpack.c.l.b16 %v4319
    %v4479 = vunpack.c.h.b16 %v4319
    %v4480 = vunpack.c.l.b16 %v4320
    %v4481 = vunpack.c.h.b16 %v4320
    %v4482 = vunpack.c.l.b16 %v4321
    %v4483 = vunpack.c.h.b16 %v4321
    %v4484 = vunpack.c.l.b16 %v4322
    %v4485 = vunpack.c.h.b16 %v4322
    %v4486 = vunpack.c.l.b16 %v4323
    %v4487 = vunpack.c.h.b16 %v4323
    %v4488 = vunpack.c.l.b16 %v4324
    %v4489 = vunpack.c.h.b16 %v4324
    %v4490 = vunpack.c.l.b16 %v4325
    %v4491 = vunpack.c.h.b16 %v4325
    %v4492 = vunpack.c.l.b16 %v4326
    %v4493 = vunpack.c.h.b16 %v4326
    %v4494 = vunpack.c.l.b16 %v4327
    %v4495 = vunpack.c.h.b16 %v4327
    %v4496 = vunpack.c.l.b16 %v4328
    %v4497 = vunpack.c.h.b16 %v4328
    %v4498 = vunpack.c.l.b16 %v4329
    %v4499 = vunpack.c.h.b16 %v4329
    %v4500 = vunpack.c.l.b16 %v4330
    %v4501 = vunpack.c.h.b16 %v4330
    %v4502 = vunpack.c.l.b16 %v4331
    %v4503 = vunpack.c.h.b16 %v4331
    %v4504 = vunpack.c.l.b16 %v4332
    %v4505 = vunpack.c.h.b16 %v4332
    %v4506 = vunpack.c.l.b16 %v4333
    %v4507 = vunpack.c.h.b16 %v4333
    %v4508 = vunpack.c.l.b16 %v4334
    %v4509 = vunpack.c.h.b16 %v4334
    %v4510 = vunpack.c.l.b16 %v4335
    %v4511 = vunpack.c.h.b16 %v4335
    %v4512 = vunpack.c.l.b16 %v4336
    %v4513 = vunpack.c.h.b16 %v4336
    %v4514 = vunpack.c.l.b16 %v4337
    %v4515 = vunpack.c.h.b16 %v4337
    %v4516 = vunpack.c.l.b16 %v4338
    %v4517 = vunpack.c.h.b16 %v4338
    %v4518 = vunpack.c.l.b16 %v4339
    %v4519 = vunpack.c.h.b16 %v4339
    %v4520 = vunpack.c.l.b16 %v4340
    %v4521 = vunpack.c.h.b16 %v4340
    %v4522 = vunpack.c.l.b16 %v4341
    %v4523 = vunpack.c.h.b16 %v4341
    %v4524 = vunpack.c.l.b16 %v4342
    %v4525 = vunpack.c.h.b16 %v4342
    %v4526 = vunpack.c.l.b16 %v4343
    %v4527 = vunpack.c.h.b16 %v4343
    %v4528 = vunpack.c.l.b16 %v4344
    %v4529 = vunpack.c.h.b16 %v4344
    %v4530 = vunpack.c.l.b16 %v4345
    %v4531 = vunpack.c.h.b16 %v4345
    %v4532 = vunpack.c.l.b16 %v4346
    %v4533 = vunpack.c.h.b16 %v4346
    %v4534 = vunpack.c.l.b16 %v4347
    %v4535 = vunpack.c.h.b16 %v4347
    %v4536 = vunpack.c.l.b16 %v4348
    %v4537 = vunpack.c.h.b16 %v4348
    %v4538 = vunpack.c.l.b16 %v4349
    %v4539 = vunpack.c.h.b16 %v4349
    %v4540 = vunpack.c.l.b16 %v4350
    %v4541 = vunpack.c.h.b16 %v4350
    %v4542 = vunpack.c.l.b16 %v4351
    %v4543 = vunpack.c.h.b16 %v4351
    %v4544 = vunpack.c.l.b16 %v4352
    %v4545 = vunpack.c.h.b16 %v4352
    %v4546 = vunpack.c.l.b16 %v4353
    %v4547 = vunpack.c.h.b16 %v4353
    %v4548 = vpack.c.b16 %v4428, %v4420
    %v4549 = vpack.c.b16 %v4429, %v4421
    %v4550 = vpack.c.b16 %v4430, %v4422
    %v4551 = vpack.c.b16 %v4431, %v4423
    %v4552 = vpack.c.b16 %v4432, %v4424
    %v4553 = vpack.c.b16 %v4433, %v4425
    %v4554 = vpack.c.b16 %v4434, %v4426
    %v4555 = vpack.c.b16 %v4435, %v4427
    %v4556 = vpack.c.b16 %v4444, %v4436
    %v4557 = vpack.c.b16 %v4445, %v4437
    %v4558 = vpack.c.b16 %v4446, %v4438
    %v4559 = vpack.c.b16 %v4447, %v4439
    %v4560 = vpack.c.b16 %v4448, %v4440
    %v4561 = vpack.c.b16 %v4449, %v4441
    %v4562 = vpack.c.b16 %v4450, %v4442
    %v4563 = vpack.c.b16 %v4451, %v4443
    %v4564 = vpack.c.b16 %v4460, %v4452
    %v4565 = vpack.c.b16 %v4461, %v4453
    %v4566 = vpack.c.b16 %v4462, %v4454
    %v4567 = vpack.c.b16 %v4463, %v4455
    %v4568 = vpack.c.b16 %v4464, %v4456
    %v4569 = vpack.c.b16 %v4465, %v4457
    %v4570 = vpack.c.b16 %v4466, %v4458
    %v4571 = vpack.c.b16 %v4467, %v4459
    %v4572 = vpack.c.b16 %v4476, %v4468
    %v4573 = vpack.c.b16 %v4477, %v4469
    %v4574 = vpack.c.b16 %v4478, %v4470
    %v4575 = vpack.c.b16 %v4479, %v4471
    %v4576 = vpack.c.b16 %v4480, %v4472
    %v4577 = vpack.c.b16 %v4481, %v4473
    %v4578 = vpack.c.b16 %v4482, %v4474
    %v4579 = vpack.c.b16 %v4483, %v4475
    %v4580 = vpack.c.b16 %v4492, %v4484
    %v4581 = vpack.c.b16 %v4493, %v4485
    %v4582 = vpack.c.b16 %v4494, %v4486
    %v4583 = vpack.c.b16 %v4495, %v4487
    %v4584 = vpack.c.b16 %v4496, %v4488
    %v4585 = vpack.c.b16 %v4497, %v4489
    %v4586 = vpack.c.b16 %v4498, %v4490
    %v4587 = vpack.c.b16 %v4499, %v4491
    %v4588 = vpack.c.b16 %v4508, %v4500
    %v4589 = vpack.c.b16 %v4509, %v4501
    %v4590 = vpack.c.b16 %v4510, %v4502
    %v4591 = vpack.c.b16 %v4511, %v4503
    %v4592 = vpack.c.b16 %v4512, %v4504
    %v4593 = vpack.c.b16 %v4513, %v4505
    %v4594 = vpack.c.b16 %v4514, %v4506
    %v4595 = vpack.c.b16 %v4515, %v4507
    %v4596 = vpack.c.b16 %v4524, %v4516
    %v4597 = vpack.c.b16 %v4525, %v4517
    %v4598 = vpack.c.b16 %v4526, %v4518
    %v4599 = vpack.c.b16 %v4527, %v4519
    %v4600 = vpack.c.b16 %v4528, %v4520
    %v4601 = vpack.c.b16 %v4529, %v4521
    %v4602 = vpack.c.b16 %v4530, %v4522
    %v4603 = vpack.c.b16 %v4531, %v4523
    %v4604 = vpack.c.b16 %v4540, %v4532
    %v4605 = vpack.c.b16 %v4541, %v4533
    %v4606 = vpack.c.b16 %v4542, %v4534
    %v4607 = vpack.c.b16 %v4543, %v4535
    %v4608 = vpack.c.b16 %v4544, %v4536
    %v4609 = vpack.c.b16 %v4545, %v4537
    %v4610 = vpack.c.b16 %v4546, %v4538
    %v4611 = vpack.c.b16 %v4547, %v4539
    %4676 = vmatprep.subr.bf16.mxu0 %v4549
    %4677 = vmatpush1.bf16.msra.mxu0 %v4548
    %4678 = vmatprep.subr.bf16.mxu0 %v4557
    %4679 = vmatpush1.bf16.msra.mxu0 %v4556
    %4680 = vmatprep.subr.bf16.mxu0 %v4565
    %4681 = vmatpush1.bf16.msra.mxu0 %v4564
    %4682 = vmatprep.subr.bf16.mxu0 %v4573
    %4683 = vmatpush1.bf16.msra.mxu0 %v4572
    %4684 = vmatprep.subr.bf16.mxu0 %v4581
    %4685 = vmatpush1.bf16.msra.mxu0 %v4580
    %4686 = vmatprep.subr.bf16.mxu0 %v4589
    %4687 = vmatpush1.bf16.msra.mxu0 %v4588
    %4688 = vmatprep.subr.bf16.mxu0 %v4597
    %4689 = vmatpush1.bf16.msra.mxu0 %v4596
    %4690 = vmatprep.subr.bf16.mxu0 %v4605
    %4691 = vmatpush1.bf16.msra.mxu0 %v4604
    %4692 = vmatprep.subr.bf16.mxu0 0
    %4693 = vmatpush1.bf16.msra.mxu0 0
    %4694 = vmatprep.subr.bf16.mxu0 0
    %4695 = vmatpush1.bf16.msra.mxu0 0
    %4696 = vmatprep.subr.bf16.mxu0 0
    %4697 = vmatpush1.bf16.msra.mxu0 0
    %4698 = vmatprep.subr.bf16.mxu0 0
    %4699 = vmatpush1.bf16.msra.mxu0 0
    %4700 = vmatprep.subr.bf16.mxu0 0
    %4701 = vmatpush1.bf16.msra.mxu0 0
    %4702 = vmatprep.subr.bf16.mxu0 0
    %4703 = vmatpush1.bf16.msra.mxu0 0
    %4704 = vmatprep.subr.bf16.mxu0 0
    %4705 = vmatpush1.bf16.msra.mxu0 0
    %4706 = vmatprep.subr.bf16.mxu0 0
    %4707 = vmatpush1.bf16.msra.mxu0 0
    %4708 = vmatprep.mubr.bf16.mxu0 0
    %4709 = vmatmul.mubr.bf16.gmra.mrb[0].mxu0 %v4354
    %v4710 = vpop.f32.mrb[0].mxu0
    %v4711 = vadd.f32 0.0, %v4710
    %v4712 = vpop.f32.mrb[0].mxu0
    %v4713 = vadd.f32 0.0, %v4712
    %v4714 = vpop.f32.mrb[0].mxu0
    %v4715 = vpop.f32.mrb[0].mxu0
    %4716 = vdwg.mxu0
    %4717 = vmatprep.subr.bf16.mxu0 %v4551
    %4718 = vmatpush1.bf16.msra.mxu0 %v4550
    %4719 = vmatprep.subr.bf16.mxu0 %v4559
    %4720 = vmatpush1.bf16.msra.mxu0 %v4558
    %4721 = vmatprep.subr.bf16.mxu0 %v4567
    %4722 = vmatpush1.bf16.msra.mxu0 %v4566
    %4723 = vmatprep.subr.bf16.mxu0 %v4575
    %4724 = vmatpush1.bf16.msra.mxu0 %v4574
    %4725 = vmatprep.subr.bf16.mxu0 %v4583
    %4726 = vmatpush1.bf16.msra.mxu0 %v4582
    %4727 = vmatprep.subr.bf16.mxu0 %v4591
    %4728 = vmatpush1.bf16.msra.mxu0 %v4590
    %4729 = vmatprep.subr.bf16.mxu0 %v4599
    %4730 = vmatpush1.bf16.msra.mxu0 %v4598
    %4731 = vmatprep.subr.bf16.mxu0 %v4607
    %4732 = vmatpush1.bf16.msra.mxu0 %v4606
    %4733 = vmatprep.subr.bf16.mxu0 0
    %4734 = vmatpush1.bf16.msra.mxu0 0
    %4735 = vmatprep.subr.bf16.mxu0 0
    %4736 = vmatpush1.bf16.msra.mxu0 0
    %4737 = vmatprep.subr.bf16.mxu0 0
    %4738 = vmatpush1.bf16.msra.mxu0 0
    %4739 = vmatprep.subr.bf16.mxu0 0
    %4740 = vmatpush1.bf16.msra.mxu0 0
    %4741 = vmatprep.subr.bf16.mxu0 0
    %4742 = vmatpush1.bf16.msra.mxu0 0
    %4743 = vmatprep.subr.bf16.mxu0 0
    %4744 = vmatpush1.bf16.msra.mxu0 0
    %4745 = vmatprep.subr.bf16.mxu0 0
    %4746 = vmatpush1.bf16.msra.mxu0 0
    %4747 = vmatprep.subr.bf16.mxu0 0
    %4748 = vmatpush1.bf16.msra.mxu0 0
    %4749 = vmatprep.mubr.bf16.mxu0 0
    %4750 = vmatmul.mubr.bf16.gmra.mrb[0].mxu0 %v4354
    %v4751 = vpop.f32.mrb[0].mxu0
    %v4752 = vadd.f32 0.0, %v4751
    %v4753 = vpop.f32.mrb[0].mxu0
    %v4754 = vadd.f32 0.0, %v4753
    %v4755 = vpop.f32.mrb[0].mxu0
    %v4756 = vpop.f32.mrb[0].mxu0
    %4757 = vdwg.mxu0
    %4758 = vmatprep.subr.bf16.mxu0 %v4553
    %4759 = vmatpush1.bf16.msra.mxu0 %v4552
    %4760 = vmatprep.subr.bf16.mxu0 %v4561
    %4761 = vmatpush1.bf16.msra.mxu0 %v4560
    %4762 = vmatprep.subr.bf16.mxu0 %v4569
    %4763 = vmatpush1.bf16.msra.mxu0 %v4568
    %4764 = vmatprep.subr.bf16.mxu0 %v4577
    %4765 = vmatpush1.bf16.msra.mxu0 %v4576
    %4766 = vmatprep.subr.bf16.mxu0 %v4585
    %4767 = vmatpush1.bf16.msra.mxu0 %v4584
    %4768 = vmatprep.subr.bf16.mxu0 %v4593
    %4769 = vmatpush1.bf16.msra.mxu0 %v4592
    %4770 = vmatprep.subr.bf16.mxu0 %v4601
    %4771 = vmatpush1.bf16.msra.mxu0 %v4600
    %4772 = vmatprep.subr.bf16.mxu0 %v4609
    %4773 = vmatpush1.bf16.msra.mxu0 %v4608
    %4774 = vmatprep.subr.bf16.mxu0 0
    %4775 = vmatpush1.bf16.msra.mxu0 0
    %4776 = vmatprep.subr.bf16.mxu0 0
    %4777 = vmatpush1.bf16.msra.mxu0 0
    %4778 = vmatprep.subr.bf16.mxu0 0
    %4779 = vmatpush1.bf16.msra.mxu0 0
    %4780 = vmatprep.subr.bf16.mxu0 0
    %4781 = vmatpush1.bf16.msra.mxu0 0
    %4782 = vmatprep.subr.bf16.mxu0 0
    %4783 = vmatpush1.bf16.msra.mxu0 0
    %4784 = vmatprep.subr.bf16.mxu0 0
    %4785 = vmatpush1.bf16.msra.mxu0 0
    %4786 = vmatprep.subr.bf16.mxu0 0
    %4787 = vmatpush1.bf16.msra.mxu0 0
    %4788 = vmatprep.subr.bf16.mxu0 0
    %4789 = vmatpush1.bf16.msra.mxu0 0
    %4790 = vmatprep.mubr.bf16.mxu0 0
    %4791 = vmatmul.mubr.bf16.gmra.mrb[0].mxu0 %v4354
    %v4792 = vpop.f32.mrb[0].mxu0
    %v4793 = vadd.f32 0.0, %v4792
    %v4794 = vpop.f32.mrb[0].mxu0
    %v4795 = vadd.f32 0.0, %v4794
    %v4796 = vpop.f32.mrb[0].mxu0
    %v4797 = vpop.f32.mrb[0].mxu0
    %4798 = vdwg.mxu0
    %4799 = vmatprep.subr.bf16.mxu0 %v4555
    %4800 = vmatpush1.bf16.msra.mxu0 %v4554
    %4801 = vmatprep.subr.bf16.mxu0 %v4563
    %4802 = vmatpush1.bf16.msra.mxu0 %v4562
    %4803 = vmatprep.subr.bf16.mxu0 %v4571
    %4804 = vmatpush1.bf16.msra.mxu0 %v4570
    %4805 = vmatprep.subr.bf16.mxu0 %v4579
    %4806 = vmatpush1.bf16.msra.mxu0 %v4578
    %4807 = vmatprep.subr.bf16.mxu0 %v4587
    %4808 = vmatpush1.bf16.msra.mxu0 %v4586
    %4809 = vmatprep.subr.bf16.mxu0 %v4595
    %4810 = vmatpush1.bf16.msra.mxu0 %v4594
    %4811 = vmatprep.subr.bf16.mxu0 %v4603
    %4812 = vmatpush1.bf16.msra.mxu0 %v4602
    %4813 = vmatprep.subr.bf16.mxu0 %v4611
    %4814 = vmatpush1.bf16.msra.mxu0 %v4610
    %4815 = vmatprep.subr.bf16.mxu0 0
    %4816 = vmatpush1.bf16.msra.mxu0 0
    %4817 = vmatprep.subr.bf16.mxu0 0
    %4818 = vmatpush1.bf16.msra.mxu0 0
    %4819 = vmatprep.subr.bf16.mxu0 0
    %4820 = vmatpush1.bf16.msra.mxu0 0
    %4821 = vmatprep.subr.bf16.mxu0 0
    %4822 = vmatpush1.bf16.msra.mxu0 0
    %4823 = vmatprep.subr.bf16.mxu0 0
    %4824 = vmatpush1.bf16.msra.mxu0 0
    %4825 = vmatprep.subr.bf16.mxu0 0
    %4826 = vmatpush1.bf16.msra.mxu0 0
    %4827 = vmatprep.subr.bf16.mxu0 0
    %4828 = vmatpush1.bf16.msra.mxu0 0
    %4829 = vmatprep.subr.bf16.mxu0 0
    %4830 = vmatpush1.bf16.msra.mxu0 0
    %4831 = vmatprep.mubr.bf16.mxu0 0
    %4832 = vmatmul.mubr.bf16.gmra.mrb[0].mxu0 %v4354
    %v4833 = vpop.f32.mrb[0].mxu0
    %v4834 = vadd.f32 0.0, %v4833
    %v4835 = vpop.f32.mrb[0].mxu0
    %v4836 = vadd.f32 0.0, %v4835
    %v4837 = vpop.f32.mrb[0].mxu0
    %v4838 = vpop.f32.mrb[0].mxu0
    %4839 = vdwg.mxu0
    %v4840 = vadd.f32 %v4108, %v4711
    %v4841 = vadd.f32 %v4109, %v4713
    %v4842 = vadd.f32 %v4110, %v4752
    %v4843 = vadd.f32 %v4111, %v4754
    %v4844 = vadd.f32 %v4112, %v4793
    %v4845 = vadd.f32 %v4113, %v4795
    %v4846 = vadd.f32 %v4114, %v4834
    %v4847 = vadd.f32 %v4115, %v4836
    %v4848 = vrot.slane %v1761, 2
    %4850 = vmatprep.subr.bf16.mxu0 %v4549
    %4851 = vmatpush1.bf16.msra.mxu0 %v4548
    %4852 = vmatprep.subr.bf16.mxu0 %v4557
    %4853 = vmatpush1.bf16.msra.mxu0 %v4556
    %4854 = vmatprep.subr.bf16.mxu0 %v4565
    %4855 = vmatpush1.bf16.msra.mxu0 %v4564
    %4856 = vmatprep.subr.bf16.mxu0 %v4573
    %4857 = vmatpush1.bf16.msra.mxu0 %v4572
    %4858 = vmatprep.subr.bf16.mxu0 %v4581
    %4859 = vmatpush1.bf16.msra.mxu0 %v4580
    %4860 = vmatprep.subr.bf16.mxu0 %v4589
    %4861 = vmatpush1.bf16.msra.mxu0 %v4588
    %4862 = vmatprep.subr.bf16.mxu0 %v4597
    %4863 = vmatpush1.bf16.msra.mxu0 %v4596
    %4864 = vmatprep.subr.bf16.mxu0 %v4605
    %4865 = vmatpush1.bf16.msra.mxu0 %v4604
    %4866 = vmatprep.subr.bf16.mxu0 0
    %4867 = vmatpush1.bf16.msra.mxu0 0
    %4868 = vmatprep.subr.bf16.mxu0 0
    %4869 = vmatpush1.bf16.msra.mxu0 0
    %4870 = vmatprep.subr.bf16.mxu0 0
    %4871 = vmatpush1.bf16.msra.mxu0 0
    %4872 = vmatprep.subr.bf16.mxu0 0
    %4873 = vmatpush1.bf16.msra.mxu0 0
    %4874 = vmatprep.subr.bf16.mxu0 0
    %4875 = vmatpush1.bf16.msra.mxu0 0
    %4876 = vmatprep.subr.bf16.mxu0 0
    %4877 = vmatpush1.bf16.msra.mxu0 0
    %4878 = vmatprep.subr.bf16.mxu0 0
    %4879 = vmatpush1.bf16.msra.mxu0 0
    %4880 = vmatprep.subr.bf16.mxu0 0
    %4881 = vmatpush1.bf16.msra.mxu0 0
    %4882 = vmatprep.mubr.bf16.mxu0 0
    %4883 = vmatmul.mubr.bf16.gmra.mrb[0].mxu0 %v4848
    %v4884 = vpop.f32.mrb[0].mxu0
    %v4885 = vadd.f32 0.0, %v4884
    %v4886 = vpop.f32.mrb[0].mxu0
    %v4887 = vadd.f32 0.0, %v4886
    %v4888 = vpop.f32.mrb[0].mxu0
    %v4889 = vpop.f32.mrb[0].mxu0
    %4890 = vdwg.mxu0
    %4891 = vmatprep.subr.bf16.mxu0 %v4551
    %4892 = vmatpush1.bf16.msra.mxu0 %v4550
    %4893 = vmatprep.subr.bf16.mxu0 %v4559
    %4894 = vmatpush1.bf16.msra.mxu0 %v4558
    %4895 = vmatprep.subr.bf16.mxu0 %v4567
    %4896 = vmatpush1.bf16.msra.mxu0 %v4566
    %4897 = vmatprep.subr.bf16.mxu0 %v4575
    %4898 = vmatpush1.bf16.msra.mxu0 %v4574
    %4899 = vmatprep.subr.bf16.mxu0 %v4583
    %4900 = vmatpush1.bf16.msra.mxu0 %v4582
    %4901 = vmatprep.subr.bf16.mxu0 %v4591
    %4902 = vmatpush1.bf16.msra.mxu0 %v4590
    %4903 = vmatprep.subr.bf16.mxu0 %v4599
    %4904 = vmatpush1.bf16.msra.mxu0 %v4598
    %4905 = vmatprep.subr.bf16.mxu0 %v4607
    %4906 = vmatpush1.bf16.msra.mxu0 %v4606
    %4907 = vmatprep.subr.bf16.mxu0 0
    %4908 = vmatpush1.bf16.msra.mxu0 0
    %4909 = vmatprep.subr.bf16.mxu0 0
    %4910 = vmatpush1.bf16.msra.mxu0 0
    %4911 = vmatprep.subr.bf16.mxu0 0
    %4912 = vmatpush1.bf16.msra.mxu0 0
    %4913 = vmatprep.subr.bf16.mxu0 0
    %4914 = vmatpush1.bf16.msra.mxu0 0
    %4915 = vmatprep.subr.bf16.mxu0 0
    %4916 = vmatpush1.bf16.msra.mxu0 0
    %4917 = vmatprep.subr.bf16.mxu0 0
    %4918 = vmatpush1.bf16.msra.mxu0 0
    %4919 = vmatprep.subr.bf16.mxu0 0
    %4920 = vmatpush1.bf16.msra.mxu0 0
    %4921 = vmatprep.subr.bf16.mxu0 0
    %4922 = vmatpush1.bf16.msra.mxu0 0
    %4923 = vmatprep.mubr.bf16.mxu0 0
    %4924 = vmatmul.mubr.bf16.gmra.mrb[0].mxu0 %v4848
    %v4925 = vpop.f32.mrb[0].mxu0
    %v4926 = vadd.f32 0.0, %v4925
    %v4927 = vpop.f32.mrb[0].mxu0
    %v4928 = vadd.f32 0.0, %v4927
    %v4929 = vpop.f32.mrb[0].mxu0
    %v4930 = vpop.f32.mrb[0].mxu0
    %4931 = vdwg.mxu0
    %4932 = vmatprep.subr.bf16.mxu0 %v4553
    %4933 = vmatpush1.bf16.msra.mxu0 %v4552
    %4934 = vmatprep.subr.bf16.mxu0 %v4561
    %4935 = vmatpush1.bf16.msra.mxu0 %v4560
    %4936 = vmatprep.subr.bf16.mxu0 %v4569
    %4937 = vmatpush1.bf16.msra.mxu0 %v4568
    %4938 = vmatprep.subr.bf16.mxu0 %v4577
    %4939 = vmatpush1.bf16.msra.mxu0 %v4576
    %4940 = vmatprep.subr.bf16.mxu0 %v4585
    %4941 = vmatpush1.bf16.msra.mxu0 %v4584
    %4942 = vmatprep.subr.bf16.mxu0 %v4593
    %4943 = vmatpush1.bf16.msra.mxu0 %v4592
    %4944 = vmatprep.subr.bf16.mxu0 %v4601
    %4945 = vmatpush1.bf16.msra.mxu0 %v4600
    %4946 = vmatprep.subr.bf16.mxu0 %v4609
    %4947 = vmatpush1.bf16.msra.mxu0 %v4608
    %4948 = vmatprep.subr.bf16.mxu0 0
    %4949 = vmatpush1.bf16.msra.mxu0 0
    %4950 = vmatprep.subr.bf16.mxu0 0
    %4951 = vmatpush1.bf16.msra.mxu0 0
    %4952 = vmatprep.subr.bf16.mxu0 0
    %4953 = vmatpush1.bf16.msra.mxu0 0
    %4954 = vmatprep.subr.bf16.mxu0 0
    %4955 = vmatpush1.bf16.msra.mxu0 0
    %4956 = vmatprep.subr.bf16.mxu0 0
    %4957 = vmatpush1.bf16.msra.mxu0 0
    %4958 = vmatprep.subr.bf16.mxu0 0
    %4959 = vmatpush1.bf16.msra.mxu0 0
    %4960 = vmatprep.subr.bf16.mxu0 0
    %4961 = vmatpush1.bf16.msra.mxu0 0
    %4962 = vmatprep.subr.bf16.mxu0 0
    %4963 = vmatpush1.bf16.msra.mxu0 0
    %4964 = vmatprep.mubr.bf16.mxu0 0
    %4965 = vmatmul.mubr.bf16.gmra.mrb[0].mxu0 %v4848
    %v4966 = vpop.f32.mrb[0].mxu0
    %v4967 = vadd.f32 0.0, %v4966
    %v4968 = vpop.f32.mrb[0].mxu0
    %v4969 = vadd.f32 0.0, %v4968
    %v4970 = vpop.f32.mrb[0].mxu0
    %v4971 = vpop.f32.mrb[0].mxu0
    %4972 = vdwg.mxu0
    %4973 = vmatprep.subr.bf16.mxu0 %v4555
    %4974 = vmatpush1.bf16.msra.mxu0 %v4554
    %4975 = vmatprep.subr.bf16.mxu0 %v4563
    %4976 = vmatpush1.bf16.msra.mxu0 %v4562
    %4977 = vmatprep.subr.bf16.mxu0 %v4571
    %4978 = vmatpush1.bf16.msra.mxu0 %v4570
    %4979 = vmatprep.subr.bf16.mxu0 %v4579
    %4980 = vmatpush1.bf16.msra.mxu0 %v4578
    %4981 = vmatprep.subr.bf16.mxu0 %v4587
    %4982 = vmatpush1.bf16.msra.mxu0 %v4586
    %4983 = vmatprep.subr.bf16.mxu0 %v4595
    %4984 = vmatpush1.bf16.msra.mxu0 %v4594
    %4985 = vmatprep.subr.bf16.mxu0 %v4603
    %4986 = vmatpush1.bf16.msra.mxu0 %v4602
    %4987 = vmatprep.subr.bf16.mxu0 %v4611
    %4988 = vmatpush1.bf16.msra.mxu0 %v4610
    %4989 = vmatprep.subr.bf16.mxu0 0
    %4990 = vmatpush1.bf16.msra.mxu0 0
    %4991 = vmatprep.subr.bf16.mxu0 0
    %4992 = vmatpush1.bf16.msra.mxu0 0
    %4993 = vmatprep.subr.bf16.mxu0 0
    %4994 = vmatpush1.bf16.msra.mxu0 0
    %4995 = vmatprep.subr.bf16.mxu0 0
    %4996 = vmatpush1.bf16.msra.mxu0 0
    %4997 = vmatprep.subr.bf16.mxu0 0
    %4998 = vmatpush1.bf16.msra.mxu0 0
    %4999 = vmatprep.subr.bf16.mxu0 0
    %5000 = vmatpush1.bf16.msra.mxu0 0
    %5001 = vmatprep.subr.bf16.mxu0 0
    %5002 = vmatpush1.bf16.msra.mxu0 0
    %5003 = vmatprep.subr.bf16.mxu0 0
    %5004 = vmatpush1.bf16.msra.mxu0 0
    %5005 = vmatprep.mubr.bf16.mxu0 0
    %5006 = vmatmul.mubr.bf16.gmra.mrb[0].mxu0 %v4848
    %v5007 = vpop.f32.mrb[0].mxu0
    %v5008 = vadd.f32 0.0, %v5007
    %v5009 = vpop.f32.mrb[0].mxu0
    %v5010 = vadd.f32 0.0, %v5009
    %v5011 = vpop.f32.mrb[0].mxu0
    %v5012 = vpop.f32.mrb[0].mxu0
    %5013 = vdwg.mxu0
    %v5014 = vadd.f32 %v4282, %v4885
    %v5015 = vadd.f32 %v4283, %v4887
    %v5016 = vadd.f32 %v4284, %v4926
    %v5017 = vadd.f32 %v4285, %v4928
    %v5018 = vadd.f32 %v4286, %v4967
    %v5019 = vadd.f32 %v4287, %v4969
    %v5020 = vadd.f32 %v4288, %v5008
    %v5021 = vadd.f32 %v4289, %v5010
    %v5022 = vld [vmem:[#allocation10 + $0xc00] sm:$0xff]
    %v5023 = vld [vmem:[#allocation10 + $0xc08] sm:$0xff]
    %v5024 = vld [vmem:[#allocation10 + $0xc10] sm:$0xff]
    %v5025 = vld [vmem:[#allocation10 + $0xc18] sm:$0xff]
    %v5026 = vld [vmem:[#allocation10 + $0xc20] sm:$0xff]
    %v5027 = vld [vmem:[#allocation10 + $0xc28] sm:$0xff]
    %v5028 = vld [vmem:[#allocation10 + $0xc30] sm:$0xff]
    %v5029 = vld [vmem:[#allocation10 + $0xc38] sm:$0xff]
    %v5030 = vld [vmem:[#allocation10 + $0xc40] sm:$0xff]
    %v5031 = vld [vmem:[#allocation10 + $0xc48] sm:$0xff]
    %v5032 = vld [vmem:[#allocation10 + $0xc50] sm:$0xff]
    %v5033 = vld [vmem:[#allocation10 + $0xc58] sm:$0xff]
    %v5034 = vld [vmem:[#allocation10 + $0xc60] sm:$0xff]
    %v5035 = vld [vmem:[#allocation10 + $0xc68] sm:$0xff]
    %v5036 = vld [vmem:[#allocation10 + $0xc70] sm:$0xff]
    %v5037 = vld [vmem:[#allocation10 + $0xc78] sm:$0xff]
    %v5038 = vld [vmem:[#allocation10 + $0xc80] sm:$0xff]
    %v5039 = vld [vmem:[#allocation10 + $0xc88] sm:$0xff]
    %v5040 = vld [vmem:[#allocation10 + $0xc90] sm:$0xff]
    %v5041 = vld [vmem:[#allocation10 + $0xc98] sm:$0xff]
    %v5042 = vld [vmem:[#allocation10 + $0xca0] sm:$0xff]
    %v5043 = vld [vmem:[#allocation10 + $0xca8] sm:$0xff]
    %v5044 = vld [vmem:[#allocation10 + $0xcb0] sm:$0xff]
    %v5045 = vld [vmem:[#allocation10 + $0xcb8] sm:$0xff]
    %v5046 = vld [vmem:[#allocation10 + $0xcc0] sm:$0xff]
    %v5047 = vld [vmem:[#allocation10 + $0xcc8] sm:$0xff]
    %v5048 = vld [vmem:[#allocation10 + $0xcd0] sm:$0xff]
    %v5049 = vld [vmem:[#allocation10 + $0xcd8] sm:$0xff]
    %v5050 = vld [vmem:[#allocation10 + $0xce0] sm:$0xff]
    %v5051 = vld [vmem:[#allocation10 + $0xce8] sm:$0xff]
    %v5052 = vld [vmem:[#allocation10 + $0xcf0] sm:$0xff]
    %v5053 = vld [vmem:[#allocation10 + $0xcf8] sm:$0xff]
    %v5054 = vld [vmem:[#allocation10 + $0xd00] sm:$0xff]
    %v5055 = vld [vmem:[#allocation10 + $0xd08] sm:$0xff]
    %v5056 = vld [vmem:[#allocation10 + $0xd10] sm:$0xff]
    %v5057 = vld [vmem:[#allocation10 + $0xd18] sm:$0xff]
    %v5058 = vld [vmem:[#allocation10 + $0xd20] sm:$0xff]
    %v5059 = vld [vmem:[#allocation10 + $0xd28] sm:$0xff]
    %v5060 = vld [vmem:[#allocation10 + $0xd30] sm:$0xff]
    %v5061 = vld [vmem:[#allocation10 + $0xd38] sm:$0xff]
    %v5062 = vld [vmem:[#allocation10 + $0xd40] sm:$0xff]
    %v5063 = vld [vmem:[#allocation10 + $0xd48] sm:$0xff]
    %v5064 = vld [vmem:[#allocation10 + $0xd50] sm:$0xff]
    %v5065 = vld [vmem:[#allocation10 + $0xd58] sm:$0xff]
    %v5066 = vld [vmem:[#allocation10 + $0xd60] sm:$0xff]
    %v5067 = vld [vmem:[#allocation10 + $0xd68] sm:$0xff]
    %v5068 = vld [vmem:[#allocation10 + $0xd70] sm:$0xff]
    %v5069 = vld [vmem:[#allocation10 + $0xd78] sm:$0xff]
    %v5070 = vld [vmem:[#allocation10 + $0xd80] sm:$0xff]
    %v5071 = vld [vmem:[#allocation10 + $0xd88] sm:$0xff]
    %v5072 = vld [vmem:[#allocation10 + $0xd90] sm:$0xff]
    %v5073 = vld [vmem:[#allocation10 + $0xd98] sm:$0xff]
    %v5074 = vld [vmem:[#allocation10 + $0xda0] sm:$0xff]
    %v5075 = vld [vmem:[#allocation10 + $0xda8] sm:$0xff]
    %v5076 = vld [vmem:[#allocation10 + $0xdb0] sm:$0xff]
    %v5077 = vld [vmem:[#allocation10 + $0xdb8] sm:$0xff]
    %v5078 = vld [vmem:[#allocation10 + $0xdc0] sm:$0xff]
    %v5079 = vld [vmem:[#allocation10 + $0xdc8] sm:$0xff]
    %v5080 = vld [vmem:[#allocation10 + $0xdd0] sm:$0xff]
    %v5081 = vld [vmem:[#allocation10 + $0xdd8] sm:$0xff]
    %v5082 = vld [vmem:[#allocation10 + $0xde0] sm:$0xff]
    %v5083 = vld [vmem:[#allocation10 + $0xde8] sm:$0xff]
    %v5084 = vld [vmem:[#allocation10 + $0xdf0] sm:$0xff]
    %v5085 = vld [vmem:[#allocation10 + $0xdf8] sm:$0xff]
    %v5086 = vrot.slane %v722, 3
    %v5152 = vunpack.c.l.b16 %v5022
    %v5153 = vunpack.c.h.b16 %v5022
    %v5154 = vunpack.c.l.b16 %v5023
    %v5155 = vunpack.c.h.b16 %v5023
    %v5156 = vunpack.c.l.b16 %v5024
    %v5157 = vunpack.c.h.b16 %v5024
    %v5158 = vunpack.c.l.b16 %v5025
    %v5159 = vunpack.c.h.b16 %v5025
    %v5160 = vunpack.c.l.b16 %v5026
    %v5161 = vunpack.c.h.b16 %v5026
    %v5162 = vunpack.c.l.b16 %v5027
    %v5163 = vunpack.c.h.b16 %v5027
    %v5164 = vunpack.c.l.b16 %v5028
    %v5165 = vunpack.c.h.b16 %v5028
    %v5166 = vunpack.c.l.b16 %v5029
    %v5167 = vunpack.c.h.b16 %v5029
    %v5168 = vunpack.c.l.b16 %v5030
    %v5169 = vunpack.c.h.b16 %v5030
    %v5170 = vunpack.c.l.b16 %v5031
    %v5171 = vunpack.c.h.b16 %v5031
    %v5172 = vunpack.c.l.b16 %v5032
    %v5173 = vunpack.c.h.b16 %v5032
    %v5174 = vunpack.c.l.b16 %v5033
    %v5175 = vunpack.c.h.b16 %v5033
    %v5176 = vunpack.c.l.b16 %v5034
    %v5177 = vunpack.c.h.b16 %v5034
    %v5178 = vunpack.c.l.b16 %v5035
    %v5179 = vunpack.c.h.b16 %v5035
    %v5180 = vunpack.c.l.b16 %v5036
    %v5181 = vunpack.c.h.b16 %v5036
    %v5182 = vunpack.c.l.b16 %v5037
    %v5183 = vunpack.c.h.b16 %v5037
    %v5184 = vunpack.c.l.b16 %v5038
    %v5185 = vunpack.c.h.b16 %v5038
    %v5186 = vunpack.c.l.b16 %v5039
    %v5187 = vunpack.c.h.b16 %v5039
    %v5188 = vunpack.c.l.b16 %v5040
    %v5189 = vunpack.c.h.b16 %v5040
    %v5190 = vunpack.c.l.b16 %v5041
    %v5191 = vunpack.c.h.b16 %v5041
    %v5192 = vunpack.c.l.b16 %v5042
    %v5193 = vunpack.c.h.b16 %v5042
    %v5194 = vunpack.c.l.b16 %v5043
    %v5195 = vunpack.c.h.b16 %v5043
    %v5196 = vunpack.c.l.b16 %v5044
    %v5197 = vunpack.c.h.b16 %v5044
    %v5198 = vunpack.c.l.b16 %v5045
    %v5199 = vunpack.c.h.b16 %v5045
    %v5200 = vunpack.c.l.b16 %v5046
    %v5201 = vunpack.c.h.b16 %v5046
    %v5202 = vunpack.c.l.b16 %v5047
    %v5203 = vunpack.c.h.b16 %v5047
    %v5204 = vunpack.c.l.b16 %v5048
    %v5205 = vunpack.c.h.b16 %v5048
    %v5206 = vunpack.c.l.b16 %v5049
    %v5207 = vunpack.c.h.b16 %v5049
    %v5208 = vunpack.c.l.b16 %v5050
    %v5209 = vunpack.c.h.b16 %v5050
    %v5210 = vunpack.c.l.b16 %v5051
    %v5211 = vunpack.c.h.b16 %v5051
    %v5212 = vunpack.c.l.b16 %v5052
    %v5213 = vunpack.c.h.b16 %v5052
    %v5214 = vunpack.c.l.b16 %v5053
    %v5215 = vunpack.c.h.b16 %v5053
    %v5216 = vunpack.c.l.b16 %v5054
    %v5217 = vunpack.c.h.b16 %v5054
    %v5218 = vunpack.c.l.b16 %v5055
    %v5219 = vunpack.c.h.b16 %v5055
    %v5220 = vunpack.c.l.b16 %v5056
    %v5221 = vunpack.c.h.b16 %v5056
    %v5222 = vunpack.c.l.b16 %v5057
    %v5223 = vunpack.c.h.b16 %v5057
    %v5224 = vunpack.c.l.b16 %v5058
    %v5225 = vunpack.c.h.b16 %v5058
    %v5226 = vunpack.c.l.b16 %v5059
    %v5227 = vunpack.c.h.b16 %v5059
    %v5228 = vunpack.c.l.b16 %v5060
    %v5229 = vunpack.c.h.b16 %v5060
    %v5230 = vunpack.c.l.b16 %v5061
    %v5231 = vunpack.c.h.b16 %v5061
    %v5232 = vunpack.c.l.b16 %v5062
    %v5233 = vunpack.c.h.b16 %v5062
    %v5234 = vunpack.c.l.b16 %v5063
    %v5235 = vunpack.c.h.b16 %v5063
    %v5236 = vunpack.c.l.b16 %v5064
    %v5237 = vunpack.c.h.b16 %v5064
    %v5238 = vunpack.c.l.b16 %v5065
    %v5239 = vunpack.c.h.b16 %v5065
    %v5240 = vunpack.c.l.b16 %v5066
    %v5241 = vunpack.c.h.b16 %v5066
    %v5242 = vunpack.c.l.b16 %v5067
    %v5243 = vunpack.c.h.b16 %v5067
    %v5244 = vunpack.c.l.b16 %v5068
    %v5245 = vunpack.c.h.b16 %v5068
    %v5246 = vunpack.c.l.b16 %v5069
    %v5247 = vunpack.c.h.b16 %v5069
    %v5248 = vunpack.c.l.b16 %v5070
    %v5249 = vunpack.c.h.b16 %v5070
    %v5250 = vunpack.c.l.b16 %v5071
    %v5251 = vunpack.c.h.b16 %v5071
    %v5252 = vunpack.c.l.b16 %v5072
    %v5253 = vunpack.c.h.b16 %v5072
    %v5254 = vunpack.c.l.b16 %v5073
    %v5255 = vunpack.c.h.b16 %v5073
    %v5256 = vunpack.c.l.b16 %v5074
    %v5257 = vunpack.c.h.b16 %v5074
    %v5258 = vunpack.c.l.b16 %v5075
    %v5259 = vunpack.c.h.b16 %v5075
    %v5260 = vunpack.c.l.b16 %v5076
    %v5261 = vunpack.c.h.b16 %v5076
    %v5262 = vunpack.c.l.b16 %v5077
    %v5263 = vunpack.c.h.b16 %v5077
    %v5264 = vunpack.c.l.b16 %v5078
    %v5265 = vunpack.c.h.b16 %v5078
    %v5266 = vunpack.c.l.b16 %v5079
    %v5267 = vunpack.c.h.b16 %v5079
    %v5268 = vunpack.c.l.b16 %v5080
    %v5269 = vunpack.c.h.b16 %v5080
    %v5270 = vunpack.c.l.b16 %v5081
    %v5271 = vunpack.c.h.b16 %v5081
    %v5272 = vunpack.c.l.b16 %v5082
    %v5273 = vunpack.c.h.b16 %v5082
    %v5274 = vunpack.c.l.b16 %v5083
    %v5275 = vunpack.c.h.b16 %v5083
    %v5276 = vunpack.c.l.b16 %v5084
    %v5277 = vunpack.c.h.b16 %v5084
    %v5278 = vunpack.c.l.b16 %v5085
    %v5279 = vunpack.c.h.b16 %v5085
    %v5280 = vpack.c.b16 %v5160, %v5152
    %v5281 = vpack.c.b16 %v5161, %v5153
    %v5282 = vpack.c.b16 %v5162, %v5154
    %v5283 = vpack.c.b16 %v5163, %v5155
    %v5284 = vpack.c.b16 %v5164, %v5156
    %v5285 = vpack.c.b16 %v5165, %v5157
    %v5286 = vpack.c.b16 %v5166, %v5158
    %v5287 = vpack.c.b16 %v5167, %v5159
    %v5288 = vpack.c.b16 %v5176, %v5168
    %v5289 = vpack.c.b16 %v5177, %v5169
    %v5290 = vpack.c.b16 %v5178, %v5170
    %v5291 = vpack.c.b16 %v5179, %v5171
    %v5292 = vpack.c.b16 %v5180, %v5172
    %v5293 = vpack.c.b16 %v5181, %v5173
    %v5294 = vpack.c.b16 %v5182, %v5174
    %v5295 = vpack.c.b16 %v5183, %v5175
    %v5296 = vpack.c.b16 %v5192, %v5184
    %v5297 = vpack.c.b16 %v5193, %v5185
    %v5298 = vpack.c.b16 %v5194, %v5186
    %v5299 = vpack.c.b16 %v5195, %v5187
    %v5300 = vpack.c.b16 %v5196, %v5188
    %v5301 = vpack.c.b16 %v5197, %v5189
    %v5302 = vpack.c.b16 %v5198, %v5190
    %v5303 = vpack.c.b16 %v5199, %v5191
    %v5304 = vpack.c.b16 %v5208, %v5200
    %v5305 = vpack.c.b16 %v5209, %v5201
    %v5306 = vpack.c.b16 %v5210, %v5202
    %v5307 = vpack.c.b16 %v5211, %v5203
    %v5308 = vpack.c.b16 %v5212, %v5204
    %v5309 = vpack.c.b16 %v5213, %v5205
    %v5310 = vpack.c.b16 %v5214, %v5206
    %v5311 = vpack.c.b16 %v5215, %v5207
    %v5312 = vpack.c.b16 %v5224, %v5216
    %v5313 = vpack.c.b16 %v5225, %v5217
    %v5314 = vpack.c.b16 %v5226, %v5218
    %v5315 = vpack.c.b16 %v5227, %v5219
    %v5316 = vpack.c.b16 %v5228, %v5220
    %v5317 = vpack.c.b16 %v5229, %v5221
    %v5318 = vpack.c.b16 %v5230, %v5222
    %v5319 = vpack.c.b16 %v5231, %v5223
    %v5320 = vpack.c.b16 %v5240, %v5232
    %v5321 = vpack.c.b16 %v5241, %v5233
    %v5322 = vpack.c.b16 %v5242, %v5234
    %v5323 = vpack.c.b16 %v5243, %v5235
    %v5324 = vpack.c.b16 %v5244, %v5236
    %v5325 = vpack.c.b16 %v5245, %v5237
    %v5326 = vpack.c.b16 %v5246, %v5238
    %v5327 = vpack.c.b16 %v5247, %v5239
    %v5328 = vpack.c.b16 %v5256, %v5248
    %v5329 = vpack.c.b16 %v5257, %v5249
    %v5330 = vpack.c.b16 %v5258, %v5250
    %v5331 = vpack.c.b16 %v5259, %v5251
    %v5332 = vpack.c.b16 %v5260, %v5252
    %v5333 = vpack.c.b16 %v5261, %v5253
    %v5334 = vpack.c.b16 %v5262, %v5254
    %v5335 = vpack.c.b16 %v5263, %v5255
    %v5336 = vpack.c.b16 %v5272, %v5264
    %v5337 = vpack.c.b16 %v5273, %v5265
    %v5338 = vpack.c.b16 %v5274, %v5266
    %v5339 = vpack.c.b16 %v5275, %v5267
    %v5340 = vpack.c.b16 %v5276, %v5268
    %v5341 = vpack.c.b16 %v5277, %v5269
    %v5342 = vpack.c.b16 %v5278, %v5270
    %v5343 = vpack.c.b16 %v5279, %v5271
    %5408 = vmatprep.subr.bf16.mxu0 %v5281
    %5409 = vmatpush1.bf16.msra.mxu0 %v5280
    %5410 = vmatprep.subr.bf16.mxu0 %v5289
    %5411 = vmatpush1.bf16.msra.mxu0 %v5288
    %5412 = vmatprep.subr.bf16.mxu0 %v5297
    %5413 = vmatpush1.bf16.msra.mxu0 %v5296
    %5414 = vmatprep.subr.bf16.mxu0 %v5305
    %5415 = vmatpush1.bf16.msra.mxu0 %v5304
    %5416 = vmatprep.subr.bf16.mxu0 %v5313
    %5417 = vmatpush1.bf16.msra.mxu0 %v5312
    %5418 = vmatprep.subr.bf16.mxu0 %v5321
    %5419 = vmatpush1.bf16.msra.mxu0 %v5320
    %5420 = vmatprep.subr.bf16.mxu0 %v5329
    %5421 = vmatpush1.bf16.msra.mxu0 %v5328
    %5422 = vmatprep.subr.bf16.mxu0 %v5337
    %5423 = vmatpush1.bf16.msra.mxu0 %v5336
    %5424 = vmatprep.subr.bf16.mxu0 0
    %5425 = vmatpush1.bf16.msra.mxu0 0
    %5426 = vmatprep.subr.bf16.mxu0 0
    %5427 = vmatpush1.bf16.msra.mxu0 0
    %5428 = vmatprep.subr.bf16.mxu0 0
    %5429 = vmatpush1.bf16.msra.mxu0 0
    %5430 = vmatprep.subr.bf16.mxu0 0
    %5431 = vmatpush1.bf16.msra.mxu0 0
    %5432 = vmatprep.subr.bf16.mxu0 0
    %5433 = vmatpush1.bf16.msra.mxu0 0
    %5434 = vmatprep.subr.bf16.mxu0 0
    %5435 = vmatpush1.bf16.msra.mxu0 0
    %5436 = vmatprep.subr.bf16.mxu0 0
    %5437 = vmatpush1.bf16.msra.mxu0 0
    %5438 = vmatprep.subr.bf16.mxu0 0
    %5439 = vmatpush1.bf16.msra.mxu0 0
    %5440 = vmatprep.mubr.bf16.mxu0 0
    %5441 = vmatmul.mubr.bf16.gmra.mrb[0].mxu0 %v5086
    %v5442 = vpop.f32.mrb[0].mxu0
    %v5443 = vadd.f32 0.0, %v5442
    %v5444 = vpop.f32.mrb[0].mxu0
    %v5445 = vadd.f32 0.0, %v5444
    %v5446 = vpop.f32.mrb[0].mxu0
    %v5447 = vpop.f32.mrb[0].mxu0
    %5448 = vdwg.mxu0
    %5449 = vmatprep.subr.bf16.mxu0 %v5283
    %5450 = vmatpush1.bf16.msra.mxu0 %v5282
    %5451 = vmatprep.subr.bf16.mxu0 %v5291
    %5452 = vmatpush1.bf16.msra.mxu0 %v5290
    %5453 = vmatprep.subr.bf16.mxu0 %v5299
    %5454 = vmatpush1.bf16.msra.mxu0 %v5298
    %5455 = vmatprep.subr.bf16.mxu0 %v5307
    %5456 = vmatpush1.bf16.msra.mxu0 %v5306
    %5457 = vmatprep.subr.bf16.mxu0 %v5315
    %5458 = vmatpush1.bf16.msra.mxu0 %v5314
    %5459 = vmatprep.subr.bf16.mxu0 %v5323
    %5460 = vmatpush1.bf16.msra.mxu0 %v5322
    %5461 = vmatprep.subr.bf16.mxu0 %v5331
    %5462 = vmatpush1.bf16.msra.mxu0 %v5330
    %5463 = vmatprep.subr.bf16.mxu0 %v5339
    %5464 = vmatpush1.bf16.msra.mxu0 %v5338
    %5465 = vmatprep.subr.bf16.mxu0 0
    %5466 = vmatpush1.bf16.msra.mxu0 0
    %5467 = vmatprep.subr.bf16.mxu0 0
    %5468 = vmatpush1.bf16.msra.mxu0 0
    %5469 = vmatprep.subr.bf16.mxu0 0
    %5470 = vmatpush1.bf16.msra.mxu0 0
    %5471 = vmatprep.subr.bf16.mxu0 0
    %5472 = vmatpush1.bf16.msra.mxu0 0
    %5473 = vmatprep.subr.bf16.mxu0 0
    %5474 = vmatpush1.bf16.msra.mxu0 0
    %5475 = vmatprep.subr.bf16.mxu0 0
    %5476 = vmatpush1.bf16.msra.mxu0 0
    %5477 = vmatprep.subr.bf16.mxu0 0
    %5478 = vmatpush1.bf16.msra.mxu0 0
    %5479 = vmatprep.subr.bf16.mxu0 0
    %5480 = vmatpush1.bf16.msra.mxu0 0
    %5481 = vmatprep.mubr.bf16.mxu0 0
    %5482 = vmatmul.mubr.bf16.gmra.mrb[0].mxu0 %v5086
    %v5483 = vpop.f32.mrb[0].mxu0
    %v5484 = vadd.f32 0.0, %v5483
    %v5485 = vpop.f32.mrb[0].mxu0
    %v5486 = vadd.f32 0.0, %v5485
    %v5487 = vpop.f32.mrb[0].mxu0
    %v5488 = vpop.f32.mrb[0].mxu0
    %5489 = vdwg.mxu0
    %5490 = vmatprep.subr.bf16.mxu0 %v5285
    %5491 = vmatpush1.bf16.msra.mxu0 %v5284
    %5492 = vmatprep.subr.bf16.mxu0 %v5293
    %5493 = vmatpush1.bf16.msra.mxu0 %v5292
    %5494 = vmatprep.subr.bf16.mxu0 %v5301
    %5495 = vmatpush1.bf16.msra.mxu0 %v5300
    %5496 = vmatprep.subr.bf16.mxu0 %v5309
    %5497 = vmatpush1.bf16.msra.mxu0 %v5308
    %5498 = vmatprep.subr.bf16.mxu0 %v5317
    %5499 = vmatpush1.bf16.msra.mxu0 %v5316
    %5500 = vmatprep.subr.bf16.mxu0 %v5325
    %5501 = vmatpush1.bf16.msra.mxu0 %v5324
    %5502 = vmatprep.subr.bf16.mxu0 %v5333
    %5503 = vmatpush1.bf16.msra.mxu0 %v5332
    %5504 = vmatprep.subr.bf16.mxu0 %v5341
    %5505 = vmatpush1.bf16.msra.mxu0 %v5340
    %5506 = vmatprep.subr.bf16.mxu0 0
    %5507 = vmatpush1.bf16.msra.mxu0 0
    %5508 = vmatprep.subr.bf16.mxu0 0
    %5509 = vmatpush1.bf16.msra.mxu0 0
    %5510 = vmatprep.subr.bf16.mxu0 0
    %5511 = vmatpush1.bf16.msra.mxu0 0
    %5512 = vmatprep.subr.bf16.mxu0 0
    %5513 = vmatpush1.bf16.msra.mxu0 0
    %5514 = vmatprep.subr.bf16.mxu0 0
    %5515 = vmatpush1.bf16.msra.mxu0 0
    %5516 = vmatprep.subr.bf16.mxu0 0
    %5517 = vmatpush1.bf16.msra.mxu0 0
    %5518 = vmatprep.subr.bf16.mxu0 0
    %5519 = vmatpush1.bf16.msra.mxu0 0
    %5520 = vmatprep.subr.bf16.mxu0 0
    %5521 = vmatpush1.bf16.msra.mxu0 0
    %5522 = vmatprep.mubr.bf16.mxu0 0
    %5523 = vmatmul.mubr.bf16.gmra.mrb[0].mxu0 %v5086
    %v5524 = vpop.f32.mrb[0].mxu0
    %v5525 = vadd.f32 0.0, %v5524
    %v5526 = vpop.f32.mrb[0].mxu0
    %v5527 = vadd.f32 0.0, %v5526
    %v5528 = vpop.f32.mrb[0].mxu0
    %v5529 = vpop.f32.mrb[0].mxu0
    %5530 = vdwg.mxu0
    %5531 = vmatprep.subr.bf16.mxu0 %v5287
    %5532 = vmatpush1.bf16.msra.mxu0 %v5286
    %5533 = vmatprep.subr.bf16.mxu0 %v5295
    %5534 = vmatpush1.bf16.msra.mxu0 %v5294
    %5535 = vmatprep.subr.bf16.mxu0 %v5303
    %5536 = vmatpush1.bf16.msra.mxu0 %v5302
    %5537 = vmatprep.subr.bf16.mxu0 %v5311
    %5538 = vmatpush1.bf16.msra.mxu0 %v5310
    %5539 = vmatprep.subr.bf16.mxu0 %v5319
    %5540 = vmatpush1.bf16.msra.mxu0 %v5318
    %5541 = vmatprep.subr.bf16.mxu0 %v5327
    %5542 = vmatpush1.bf16.msra.mxu0 %v5326
    %5543 = vmatprep.subr.bf16.mxu0 %v5335
    %5544 = vmatpush1.bf16.msra.mxu0 %v5334
    %5545 = vmatprep.subr.bf16.mxu0 %v5343
    %5546 = vmatpush1.bf16.msra.mxu0 %v5342
    %5547 = vmatprep.subr.bf16.mxu0 0
    %5548 = vmatpush1.bf16.msra.mxu0 0
    %5549 = vmatprep.subr.bf16.mxu0 0
    %5550 = vmatpush1.bf16.msra.mxu0 0
    %5551 = vmatprep.subr.bf16.mxu0 0
    %5552 = vmatpush1.bf16.msra.mxu0 0
    %5553 = vmatprep.subr.bf16.mxu0 0
    %5554 = vmatpush1.bf16.msra.mxu0 0
    %5555 = vmatprep.subr.bf16.mxu0 0
    %5556 = vmatpush1.bf16.msra.mxu0 0
    %5557 = vmatprep.subr.bf16.mxu0 0
    %5558 = vmatpush1.bf16.msra.mxu0 0
    %5559 = vmatprep.subr.bf16.mxu0 0
    %5560 = vmatpush1.bf16.msra.mxu0 0
    %5561 = vmatprep.subr.bf16.mxu0 0
    %5562 = vmatpush1.bf16.msra.mxu0 0
    %5563 = vmatprep.mubr.bf16.mxu0 0
    %5564 = vmatmul.mubr.bf16.gmra.mrb[0].mxu0 %v5086
    %v5565 = vpop.f32.mrb[0].mxu0
    %v5566 = vadd.f32 0.0, %v5565
    %v5567 = vpop.f32.mrb[0].mxu0
    %v5568 = vadd.f32 0.0, %v5567
    %v5569 = vpop.f32.mrb[0].mxu0
    %v5570 = vpop.f32.mrb[0].mxu0
    %5571 = vdwg.mxu0
    %v5572 = vadd.f32 %v4840, %v5443
    %v5573 = vadd.f32 %v4841, %v5445
    %v5574 = vadd.f32 %v4842, %v5484
    %v5575 = vadd.f32 %v4843, %v5486
    %v5576 = vadd.f32 %v4844, %v5525
    %v5577 = vadd.f32 %v4845, %v5527
    %v5578 = vadd.f32 %v4846, %v5566
    %v5579 = vadd.f32 %v4847, %v5568
    %v5580 = vrot.slane %v723, 3
    %5582 = vmatprep.subr.bf16.mxu0 %v5281
    %5583 = vmatpush1.bf16.msra.mxu0 %v5280
    %5584 = vmatprep.subr.bf16.mxu0 %v5289
    %5585 = vmatpush1.bf16.msra.mxu0 %v5288
    %5586 = vmatprep.subr.bf16.mxu0 %v5297
    %5587 = vmatpush1.bf16.msra.mxu0 %v5296
    %5588 = vmatprep.subr.bf16.mxu0 %v5305
    %5589 = vmatpush1.bf16.msra.mxu0 %v5304
    %5590 = vmatprep.subr.bf16.mxu0 %v5313
    %5591 = vmatpush1.bf16.msra.mxu0 %v5312
    %5592 = vmatprep.subr.bf16.mxu0 %v5321
    %5593 = vmatpush1.bf16.msra.mxu0 %v5320
    %5594 = vmatprep.subr.bf16.mxu0 %v5329
    %5595 = vmatpush1.bf16.msra.mxu0 %v5328
    %5596 = vmatprep.subr.bf16.mxu0 %v5337
    %5597 = vmatpush1.bf16.msra.mxu0 %v5336
    %5598 = vmatprep.subr.bf16.mxu0 0
    %5599 = vmatpush1.bf16.msra.mxu0 0
    %5600 = vmatprep.subr.bf16.mxu0 0
    %5601 = vmatpush1.bf16.msra.mxu0 0
    %5602 = vmatprep.subr.bf16.mxu0 0
    %5603 = vmatpush1.bf16.msra.mxu0 0
    %5604 = vmatprep.subr.bf16.mxu0 0
    %5605 = vmatpush1.bf16.msra.mxu0 0
    %5606 = vmatprep.subr.bf16.mxu0 0
    %5607 = vmatpush1.bf16.msra.mxu0 0
    %5608 = vmatprep.subr.bf16.mxu0 0
    %5609 = vmatpush1.bf16.msra.mxu0 0
    %5610 = vmatprep.subr.bf16.mxu0 0
    %5611 = vmatpush1.bf16.msra.mxu0 0
    %5612 = vmatprep.subr.bf16.mxu0 0
    %5613 = vmatpush1.bf16.msra.mxu0 0
    %5614 = vmatprep.mubr.bf16.mxu0 0
    %5615 = vmatmul.mubr.bf16.gmra.mrb[0].mxu0 %v5580
    %v5616 = vpop.f32.mrb[0].mxu0
    %v5617 = vadd.f32 0.0, %v5616
    %v5618 = vpop.f32.mrb[0].mxu0
    %v5619 = vadd.f32 0.0, %v5618
    %v5620 = vpop.f32.mrb[0].mxu0
    %v5621 = vpop.f32.mrb[0].mxu0
    %5622 = vdwg.mxu0
    %5623 = vmatprep.subr.bf16.mxu0 %v5283
    %5624 = vmatpush1.bf16.msra.mxu0 %v5282
    %5625 = vmatprep.subr.bf16.mxu0 %v5291
    %5626 = vmatpush1.bf16.msra.mxu0 %v5290
    %5627 = vmatprep.subr.bf16.mxu0 %v5299
    %5628 = vmatpush1.bf16.msra.mxu0 %v5298
    %5629 = vmatprep.subr.bf16.mxu0 %v5307
    %5630 = vmatpush1.bf16.msra.mxu0 %v5306
    %5631 = vmatprep.subr.bf16.mxu0 %v5315
    %5632 = vmatpush1.bf16.msra.mxu0 %v5314
    %5633 = vmatprep.subr.bf16.mxu0 %v5323
    %5634 = vmatpush1.bf16.msra.mxu0 %v5322
    %5635 = vmatprep.subr.bf16.mxu0 %v5331
    %5636 = vmatpush1.bf16.msra.mxu0 %v5330
    %5637 = vmatprep.subr.bf16.mxu0 %v5339
    %5638 = vmatpush1.bf16.msra.mxu0 %v5338
    %5639 = vmatprep.subr.bf16.mxu0 0
    %5640 = vmatpush1.bf16.msra.mxu0 0
    %5641 = vmatprep.subr.bf16.mxu0 0
    %5642 = vmatpush1.bf16.msra.mxu0 0
    %5643 = vmatprep.subr.bf16.mxu0 0
    %5644 = vmatpush1.bf16.msra.mxu0 0
    %5645 = vmatprep.subr.bf16.mxu0 0
    %5646 = vmatpush1.bf16.msra.mxu0 0
    %5647 = vmatprep.subr.bf16.mxu0 0
    %5648 = vmatpush1.bf16.msra.mxu0 0
    %5649 = vmatprep.subr.bf16.mxu0 0
    %5650 = vmatpush1.bf16.msra.mxu0 0
    %5651 = vmatprep.subr.bf16.mxu0 0
    %5652 = vmatpush1.bf16.msra.mxu0 0
    %5653 = vmatprep.subr.bf16.mxu0 0
    %5654 = vmatpush1.bf16.msra.mxu0 0
    %5655 = vmatprep.mubr.bf16.mxu0 0
    %5656 = vmatmul.mubr.bf16.gmra.mrb[0].mxu0 %v5580
    %v5657 = vpop.f32.mrb[0].mxu0
    %v5658 = vadd.f32 0.0, %v5657
    %v5659 = vpop.f32.mrb[0].mxu0
    %v5660 = vadd.f32 0.0, %v5659
    %v5661 = vpop.f32.mrb[0].mxu0
    %v5662 = vpop.f32.mrb[0].mxu0
    %5663 = vdwg.mxu0
    %5664 = vmatprep.subr.bf16.mxu0 %v5285
    %5665 = vmatpush1.bf16.msra.mxu0 %v5284
    %5666 = vmatprep.subr.bf16.mxu0 %v5293
    %5667 = vmatpush1.bf16.msra.mxu0 %v5292
    %5668 = vmatprep.subr.bf16.mxu0 %v5301
    %5669 = vmatpush1.bf16.msra.mxu0 %v5300
    %5670 = vmatprep.subr.bf16.mxu0 %v5309
    %5671 = vmatpush1.bf16.msra.mxu0 %v5308
    %5672 = vmatprep.subr.bf16.mxu0 %v5317
    %5673 = vmatpush1.bf16.msra.mxu0 %v5316
    %5674 = vmatprep.subr.bf16.mxu0 %v5325
    %5675 = vmatpush1.bf16.msra.mxu0 %v5324
    %5676 = vmatprep.subr.bf16.mxu0 %v5333
    %5677 = vmatpush1.bf16.msra.mxu0 %v5332
    %5678 = vmatprep.subr.bf16.mxu0 %v5341
    %5679 = vmatpush1.bf16.msra.mxu0 %v5340
    %5680 = vmatprep.subr.bf16.mxu0 0
    %5681 = vmatpush1.bf16.msra.mxu0 0
    %5682 = vmatprep.subr.bf16.mxu0 0
    %5683 = vmatpush1.bf16.msra.mxu0 0
    %5684 = vmatprep.subr.bf16.mxu0 0
    %5685 = vmatpush1.bf16.msra.mxu0 0
    %5686 = vmatprep.subr.bf16.mxu0 0
    %5687 = vmatpush1.bf16.msra.mxu0 0
    %5688 = vmatprep.subr.bf16.mxu0 0
    %5689 = vmatpush1.bf16.msra.mxu0 0
    %5690 = vmatprep.subr.bf16.mxu0 0
    %5691 = vmatpush1.bf16.msra.mxu0 0
    %5692 = vmatprep.subr.bf16.mxu0 0
    %5693 = vmatpush1.bf16.msra.mxu0 0
    %5694 = vmatprep.subr.bf16.mxu0 0
    %5695 = vmatpush1.bf16.msra.mxu0 0
    %5696 = vmatprep.mubr.bf16.mxu0 0
    %5697 = vmatmul.mubr.bf16.gmra.mrb[0].mxu0 %v5580
    %v5698 = vpop.f32.mrb[0].mxu0
    %v5699 = vadd.f32 0.0, %v5698
    %v5700 = vpop.f32.mrb[0].mxu0
    %v5701 = vadd.f32 0.0, %v5700
    %v5702 = vpop.f32.mrb[0].mxu0
    %v5703 = vpop.f32.mrb[0].mxu0
    %5704 = vdwg.mxu0
    %5705 = vmatprep.subr.bf16.mxu0 %v5287
    %5706 = vmatpush1.bf16.msra.mxu0 %v5286
    %5707 = vmatprep.subr.bf16.mxu0 %v5295
    %5708 = vmatpush1.bf16.msra.mxu0 %v5294
    %5709 = vmatprep.subr.bf16.mxu0 %v5303
    %5710 = vmatpush1.bf16.msra.mxu0 %v5302
    %5711 = vmatprep.subr.bf16.mxu0 %v5311
    %5712 = vmatpush1.bf16.msra.mxu0 %v5310
    %5713 = vmatprep.subr.bf16.mxu0 %v5319
    %5714 = vmatpush1.bf16.msra.mxu0 %v5318
    %5715 = vmatprep.subr.bf16.mxu0 %v5327
    %5716 = vmatpush1.bf16.msra.mxu0 %v5326
    %5717 = vmatprep.subr.bf16.mxu0 %v5335
    %5718 = vmatpush1.bf16.msra.mxu0 %v5334
    %5719 = vmatprep.subr.bf16.mxu0 %v5343
    %5720 = vmatpush1.bf16.msra.mxu0 %v5342
    %5721 = vmatprep.subr.bf16.mxu0 0
    %5722 = vmatpush1.bf16.msra.mxu0 0
    %5723 = vmatprep.subr.bf16.mxu0 0
    %5724 = vmatpush1.bf16.msra.mxu0 0
    %5725 = vmatprep.subr.bf16.mxu0 0
    %5726 = vmatpush1.bf16.msra.mxu0 0
    %5727 = vmatprep.subr.bf16.mxu0 0
    %5728 = vmatpush1.bf16.msra.mxu0 0
    %5729 = vmatprep.subr.bf16.mxu0 0
    %5730 = vmatpush1.bf16.msra.mxu0 0
    %5731 = vmatprep.subr.bf16.mxu0 0
    %5732 = vmatpush1.bf16.msra.mxu0 0
    %5733 = vmatprep.subr.bf16.mxu0 0
    %5734 = vmatpush1.bf16.msra.mxu0 0
    %5735 = vmatprep.subr.bf16.mxu0 0
    %5736 = vmatpush1.bf16.msra.mxu0 0
    %5737 = vmatprep.mubr.bf16.mxu0 0
    %5738 = vmatmul.mubr.bf16.gmra.mrb[0].mxu0 %v5580
    %v5739 = vpop.f32.mrb[0].mxu0
    %v5740 = vadd.f32 0.0, %v5739
    %v5741 = vpop.f32.mrb[0].mxu0
    %v5742 = vadd.f32 0.0, %v5741
    %v5743 = vpop.f32.mrb[0].mxu0
    %v5744 = vpop.f32.mrb[0].mxu0
    %5745 = vdwg.mxu0
    %v5746 = vadd.f32 %v5014, %v5617
    %v5747 = vadd.f32 %v5015, %v5619
    %v5748 = vadd.f32 %v5016, %v5658
    %v5749 = vadd.f32 %v5017, %v5660
    %v5750 = vadd.f32 %v5018, %v5699
    %v5751 = vadd.f32 %v5019, %v5701
    %v5752 = vadd.f32 %v5020, %v5740
    %v5753 = vadd.f32 %v5021, %v5742
    %v5754 = vld [vmem:[#allocation10 + $0xe00] sm:$0xff]
    %v5755 = vld [vmem:[#allocation10 + $0xe08] sm:$0xff]
    %v5756 = vld [vmem:[#allocation10 + $0xe10] sm:$0xff]
    %v5757 = vld [vmem:[#allocation10 + $0xe18] sm:$0xff]
    %v5758 = vld [vmem:[#allocation10 + $0xe20] sm:$0xff]
    %v5759 = vld [vmem:[#allocation10 + $0xe28] sm:$0xff]
    %v5760 = vld [vmem:[#allocation10 + $0xe30] sm:$0xff]
    %v5761 = vld [vmem:[#allocation10 + $0xe38] sm:$0xff]
    %v5762 = vld [vmem:[#allocation10 + $0xe40] sm:$0xff]
    %v5763 = vld [vmem:[#allocation10 + $0xe48] sm:$0xff]
    %v5764 = vld [vmem:[#allocation10 + $0xe50] sm:$0xff]
    %v5765 = vld [vmem:[#allocation10 + $0xe58] sm:$0xff]
    %v5766 = vld [vmem:[#allocation10 + $0xe60] sm:$0xff]
    %v5767 = vld [vmem:[#allocation10 + $0xe68] sm:$0xff]
    %v5768 = vld [vmem:[#allocation10 + $0xe70] sm:$0xff]
    %v5769 = vld [vmem:[#allocation10 + $0xe78] sm:$0xff]
    %v5770 = vld [vmem:[#allocation10 + $0xe80] sm:$0xff]
    %v5771 = vld [vmem:[#allocation10 + $0xe88] sm:$0xff]
    %v5772 = vld [vmem:[#allocation10 + $0xe90] sm:$0xff]
    %v5773 = vld [vmem:[#allocation10 + $0xe98] sm:$0xff]
    %v5774 = vld [vmem:[#allocation10 + $0xea0] sm:$0xff]
    %v5775 = vld [vmem:[#allocation10 + $0xea8] sm:$0xff]
    %v5776 = vld [vmem:[#allocation10 + $0xeb0] sm:$0xff]
    %v5777 = vld [vmem:[#allocation10 + $0xeb8] sm:$0xff]
    %v5778 = vld [vmem:[#allocation10 + $0xec0] sm:$0xff]
    %v5779 = vld [vmem:[#allocation10 + $0xec8] sm:$0xff]
    %v5780 = vld [vmem:[#allocation10 + $0xed0] sm:$0xff]
    %v5781 = vld [vmem:[#allocation10 + $0xed8] sm:$0xff]
    %v5782 = vld [vmem:[#allocation10 + $0xee0] sm:$0xff]
    %v5783 = vld [vmem:[#allocation10 + $0xee8] sm:$0xff]
    %v5784 = vld [vmem:[#allocation10 + $0xef0] sm:$0xff]
    %v5785 = vld [vmem:[#allocation10 + $0xef8] sm:$0xff]
    %v5786 = vld [vmem:[#allocation10 + $0xf00] sm:$0xff]
    %v5787 = vld [vmem:[#allocation10 + $0xf08] sm:$0xff]
    %v5788 = vld [vmem:[#allocation10 + $0xf10] sm:$0xff]
    %v5789 = vld [vmem:[#allocation10 + $0xf18] sm:$0xff]
    %v5790 = vld [vmem:[#allocation10 + $0xf20] sm:$0xff]
    %v5791 = vld [vmem:[#allocation10 + $0xf28] sm:$0xff]
    %v5792 = vld [vmem:[#allocation10 + $0xf30] sm:$0xff]
    %v5793 = vld [vmem:[#allocation10 + $0xf38] sm:$0xff]
    %v5794 = vld [vmem:[#allocation10 + $0xf40] sm:$0xff]
    %v5795 = vld [vmem:[#allocation10 + $0xf48] sm:$0xff]
    %v5796 = vld [vmem:[#allocation10 + $0xf50] sm:$0xff]
    %v5797 = vld [vmem:[#allocation10 + $0xf58] sm:$0xff]
    %v5798 = vld [vmem:[#allocation10 + $0xf60] sm:$0xff]
    %v5799 = vld [vmem:[#allocation10 + $0xf68] sm:$0xff]
    %v5800 = vld [vmem:[#allocation10 + $0xf70] sm:$0xff]
    %v5801 = vld [vmem:[#allocation10 + $0xf78] sm:$0xff]
    %v5802 = vld [vmem:[#allocation10 + $0xf80] sm:$0xff]
    %v5803 = vld [vmem:[#allocation10 + $0xf88] sm:$0xff]
    %v5804 = vld [vmem:[#allocation10 + $0xf90] sm:$0xff]
    %v5805 = vld [vmem:[#allocation10 + $0xf98] sm:$0xff]
    %v5806 = vld [vmem:[#allocation10 + $0xfa0] sm:$0xff]
    %v5807 = vld [vmem:[#allocation10 + $0xfa8] sm:$0xff]
    %v5808 = vld [vmem:[#allocation10 + $0xfb0] sm:$0xff]
    %v5809 = vld [vmem:[#allocation10 + $0xfb8] sm:$0xff]
    %v5810 = vld [vmem:[#allocation10 + $0xfc0] sm:$0xff]
    %v5811 = vld [vmem:[#allocation10 + $0xfc8] sm:$0xff]
    %v5812 = vld [vmem:[#allocation10 + $0xfd0] sm:$0xff]
    %v5813 = vld [vmem:[#allocation10 + $0xfd8] sm:$0xff]
    %v5814 = vld [vmem:[#allocation10 + $0xfe0] sm:$0xff]
    %v5815 = vld [vmem:[#allocation10 + $0xfe8] sm:$0xff]
    %v5816 = vld [vmem:[#allocation10 + $0xff0] sm:$0xff]
    %v5817 = vld [vmem:[#allocation10 + $0xff8] sm:$0xff]
    %v5818 = vrot.slane %v789, 3
    %v5884 = vunpack.c.l.b16 %v5754
    %v5885 = vunpack.c.h.b16 %v5754
    %v5886 = vunpack.c.l.b16 %v5755
    %v5887 = vunpack.c.h.b16 %v5755
    %v5888 = vunpack.c.l.b16 %v5756
    %v5889 = vunpack.c.h.b16 %v5756
    %v5890 = vunpack.c.l.b16 %v5757
    %v5891 = vunpack.c.h.b16 %v5757
    %v5892 = vunpack.c.l.b16 %v5758
    %v5893 = vunpack.c.h.b16 %v5758
    %v5894 = vunpack.c.l.b16 %v5759
    %v5895 = vunpack.c.h.b16 %v5759
    %v5896 = vunpack.c.l.b16 %v5760
    %v5897 = vunpack.c.h.b16 %v5760
    %v5898 = vunpack.c.l.b16 %v5761
    %v5899 = vunpack.c.h.b16 %v5761
    %v5900 = vunpack.c.l.b16 %v5762
    %v5901 = vunpack.c.h.b16 %v5762
    %v5902 = vunpack.c.l.b16 %v5763
    %v5903 = vunpack.c.h.b16 %v5763
    %v5904 = vunpack.c.l.b16 %v5764
    %v5905 = vunpack.c.h.b16 %v5764
    %v5906 = vunpack.c.l.b16 %v5765
    %v5907 = vunpack.c.h.b16 %v5765
    %v5908 = vunpack.c.l.b16 %v5766
    %v5909 = vunpack.c.h.b16 %v5766
    %v5910 = vunpack.c.l.b16 %v5767
    %v5911 = vunpack.c.h.b16 %v5767
    %v5912 = vunpack.c.l.b16 %v5768
    %v5913 = vunpack.c.h.b16 %v5768
    %v5914 = vunpack.c.l.b16 %v5769
    %v5915 = vunpack.c.h.b16 %v5769
    %v5916 = vunpack.c.l.b16 %v5770
    %v5917 = vunpack.c.h.b16 %v5770
    %v5918 = vunpack.c.l.b16 %v5771
    %v5919 = vunpack.c.h.b16 %v5771
    %v5920 = vunpack.c.l.b16 %v5772
    %v5921 = vunpack.c.h.b16 %v5772
    %v5922 = vunpack.c.l.b16 %v5773
    %v5923 = vunpack.c.h.b16 %v5773
    %v5924 = vunpack.c.l.b16 %v5774
    %v5925 = vunpack.c.h.b16 %v5774
    %v5926 = vunpack.c.l.b16 %v5775
    %v5927 = vunpack.c.h.b16 %v5775
    %v5928 = vunpack.c.l.b16 %v5776
    %v5929 = vunpack.c.h.b16 %v5776
    %v5930 = vunpack.c.l.b16 %v5777
    %v5931 = vunpack.c.h.b16 %v5777
    %v5932 = vunpack.c.l.b16 %v5778
    %v5933 = vunpack.c.h.b16 %v5778
    %v5934 = vunpack.c.l.b16 %v5779
    %v5935 = vunpack.c.h.b16 %v5779
    %v5936 = vunpack.c.l.b16 %v5780
    %v5937 = vunpack.c.h.b16 %v5780
    %v5938 = vunpack.c.l.b16 %v5781
    %v5939 = vunpack.c.h.b16 %v5781
    %v5940 = vunpack.c.l.b16 %v5782
    %v5941 = vunpack.c.h.b16 %v5782
    %v5942 = vunpack.c.l.b16 %v5783
    %v5943 = vunpack.c.h.b16 %v5783
    %v5944 = vunpack.c.l.b16 %v5784
    %v5945 = vunpack.c.h.b16 %v5784
    %v5946 = vunpack.c.l.b16 %v5785
    %v5947 = vunpack.c.h.b16 %v5785
    %v5948 = vunpack.c.l.b16 %v5786
    %v5949 = vunpack.c.h.b16 %v5786
    %v5950 = vunpack.c.l.b16 %v5787
    %v5951 = vunpack.c.h.b16 %v5787
    %v5952 = vunpack.c.l.b16 %v5788
    %v5953 = vunpack.c.h.b16 %v5788
    %v5954 = vunpack.c.l.b16 %v5789
    %v5955 = vunpack.c.h.b16 %v5789
    %v5956 = vunpack.c.l.b16 %v5790
    %v5957 = vunpack.c.h.b16 %v5790
    %v5958 = vunpack.c.l.b16 %v5791
    %v5959 = vunpack.c.h.b16 %v5791
    %v5960 = vunpack.c.l.b16 %v5792
    %v5961 = vunpack.c.h.b16 %v5792
    %v5962 = vunpack.c.l.b16 %v5793
    %v5963 = vunpack.c.h.b16 %v5793
    %v5964 = vunpack.c.l.b16 %v5794
    %v5965 = vunpack.c.h.b16 %v5794
    %v5966 = vunpack.c.l.b16 %v5795
    %v5967 = vunpack.c.h.b16 %v5795
    %v5968 = vunpack.c.l.b16 %v5796
    %v5969 = vunpack.c.h.b16 %v5796
    %v5970 = vunpack.c.l.b16 %v5797
    %v5971 = vunpack.c.h.b16 %v5797
    %v5972 = vunpack.c.l.b16 %v5798
    %v5973 = vunpack.c.h.b16 %v5798
    %v5974 = vunpack.c.l.b16 %v5799
    %v5975 = vunpack.c.h.b16 %v5799
    %v5976 = vunpack.c.l.b16 %v5800
    %v5977 = vunpack.c.h.b16 %v5800
    %v5978 = vunpack.c.l.b16 %v5801
    %v5979 = vunpack.c.h.b16 %v5801
    %v5980 = vunpack.c.l.b16 %v5802
    %v5981 = vunpack.c.h.b16 %v5802
    %v5982 = vunpack.c.l.b16 %v5803
    %v5983 = vunpack.c.h.b16 %v5803
    %v5984 = vunpack.c.l.b16 %v5804
    %v5985 = vunpack.c.h.b16 %v5804
    %v5986 = vunpack.c.l.b16 %v5805
    %v5987 = vunpack.c.h.b16 %v5805
    %v5988 = vunpack.c.l.b16 %v5806
    %v5989 = vunpack.c.h.b16 %v5806
    %v5990 = vunpack.c.l.b16 %v5807
    %v5991 = vunpack.c.h.b16 %v5807
    %v5992 = vunpack.c.l.b16 %v5808
    %v5993 = vunpack.c.h.b16 %v5808
    %v5994 = vunpack.c.l.b16 %v5809
    %v5995 = vunpack.c.h.b16 %v5809
    %v5996 = vunpack.c.l.b16 %v5810
    %v5997 = vunpack.c.h.b16 %v5810
    %v5998 = vunpack.c.l.b16 %v5811
    %v5999 = vunpack.c.h.b16 %v5811
    %v6000 = vunpack.c.l.b16 %v5812
    %v6001 = vunpack.c.h.b16 %v5812
    %v6002 = vunpack.c.l.b16 %v5813
    %v6003 = vunpack.c.h.b16 %v5813
    %v6004 = vunpack.c.l.b16 %v5814
    %v6005 = vunpack.c.h.b16 %v5814
    %v6006 = vunpack.c.l.b16 %v5815
    %v6007 = vunpack.c.h.b16 %v5815
    %v6008 = vunpack.c.l.b16 %v5816
    %v6009 = vunpack.c.h.b16 %v5816
    %v6010 = vunpack.c.l.b16 %v5817
    %v6011 = vunpack.c.h.b16 %v5817
    %v6012 = vpack.c.b16 %v5892, %v5884
    %v6013 = vpack.c.b16 %v5893, %v5885
    %v6014 = vpack.c.b16 %v5894, %v5886
    %v6015 = vpack.c.b16 %v5895, %v5887
    %v6016 = vpack.c.b16 %v5896, %v5888
    %v6017 = vpack.c.b16 %v5897, %v5889
    %v6018 = vpack.c.b16 %v5898, %v5890
    %v6019 = vpack.c.b16 %v5899, %v5891
    %v6020 = vpack.c.b16 %v5908, %v5900
    %v6021 = vpack.c.b16 %v5909, %v5901
    %v6022 = vpack.c.b16 %v5910, %v5902
    %v6023 = vpack.c.b16 %v5911, %v5903
    %v6024 = vpack.c.b16 %v5912, %v5904
    %v6025 = vpack.c.b16 %v5913, %v5905
    %v6026 = vpack.c.b16 %v5914, %v5906
    %v6027 = vpack.c.b16 %v5915, %v5907
    %v6028 = vpack.c.b16 %v5924, %v5916
    %v6029 = vpack.c.b16 %v5925, %v5917
    %v6030 = vpack.c.b16 %v5926, %v5918
    %v6031 = vpack.c.b16 %v5927, %v5919
    %v6032 = vpack.c.b16 %v5928, %v5920
    %v6033 = vpack.c.b16 %v5929, %v5921
    %v6034 = vpack.c.b16 %v5930, %v5922
    %v6035 = vpack.c.b16 %v5931, %v5923
    %v6036 = vpack.c.b16 %v5940, %v5932
    %v6037 = vpack.c.b16 %v5941, %v5933
    %v6038 = vpack.c.b16 %v5942, %v5934
    %v6039 = vpack.c.b16 %v5943, %v5935
    %v6040 = vpack.c.b16 %v5944, %v5936
    %v6041 = vpack.c.b16 %v5945, %v5937
    %v6042 = vpack.c.b16 %v5946, %v5938
    %v6043 = vpack.c.b16 %v5947, %v5939
    %v6044 = vpack.c.b16 %v5956, %v5948
    %v6045 = vpack.c.b16 %v5957, %v5949
    %v6046 = vpack.c.b16 %v5958, %v5950
    %v6047 = vpack.c.b16 %v5959, %v5951
    %v6048 = vpack.c.b16 %v5960, %v5952
    %v6049 = vpack.c.b16 %v5961, %v5953
    %v6050 = vpack.c.b16 %v5962, %v5954
    %v6051 = vpack.c.b16 %v5963, %v5955
    %v6052 = vpack.c.b16 %v5972, %v5964
    %v6053 = vpack.c.b16 %v5973, %v5965
    %v6054 = vpack.c.b16 %v5974, %v5966
    %v6055 = vpack.c.b16 %v5975, %v5967
    %v6056 = vpack.c.b16 %v5976, %v5968
    %v6057 = vpack.c.b16 %v5977, %v5969
    %v6058 = vpack.c.b16 %v5978, %v5970
    %v6059 = vpack.c.b16 %v5979, %v5971
    %v6060 = vpack.c.b16 %v5988, %v5980
    %v6061 = vpack.c.b16 %v5989, %v5981
    %v6062 = vpack.c.b16 %v5990, %v5982
    %v6063 = vpack.c.b16 %v5991, %v5983
    %v6064 = vpack.c.b16 %v5992, %v5984
    %v6065 = vpack.c.b16 %v5993, %v5985
    %v6066 = vpack.c.b16 %v5994, %v5986
    %v6067 = vpack.c.b16 %v5995, %v5987
    %v6068 = vpack.c.b16 %v6004, %v5996
    %v6069 = vpack.c.b16 %v6005, %v5997
    %v6070 = vpack.c.b16 %v6006, %v5998
    %v6071 = vpack.c.b16 %v6007, %v5999
    %v6072 = vpack.c.b16 %v6008, %v6000
    %v6073 = vpack.c.b16 %v6009, %v6001
    %v6074 = vpack.c.b16 %v6010, %v6002
    %v6075 = vpack.c.b16 %v6011, %v6003
    %6140 = vmatprep.subr.bf16.mxu0 %v6013
    %6141 = vmatpush1.bf16.msra.mxu0 %v6012
    %6142 = vmatprep.subr.bf16.mxu0 %v6021
    %6143 = vmatpush1.bf16.msra.mxu0 %v6020
    %6144 = vmatprep.subr.bf16.mxu0 %v6029
    %6145 = vmatpush1.bf16.msra.mxu0 %v6028
    %6146 = vmatprep.subr.bf16.mxu0 %v6037
    %6147 = vmatpush1.bf16.msra.mxu0 %v6036
    %6148 = vmatprep.subr.bf16.mxu0 %v6045
    %6149 = vmatpush1.bf16.msra.mxu0 %v6044
    %6150 = vmatprep.subr.bf16.mxu0 %v6053
    %6151 = vmatpush1.bf16.msra.mxu0 %v6052
    %6152 = vmatprep.subr.bf16.mxu0 %v6061
    %6153 = vmatpush1.bf16.msra.mxu0 %v6060
    %6154 = vmatprep.subr.bf16.mxu0 %v6069
    %6155 = vmatpush1.bf16.msra.mxu0 %v6068
    %6156 = vmatprep.subr.bf16.mxu0 0
    %6157 = vmatpush1.bf16.msra.mxu0 0
    %6158 = vmatprep.subr.bf16.mxu0 0
    %6159 = vmatpush1.bf16.msra.mxu0 0
    %6160 = vmatprep.subr.bf16.mxu0 0
    %6161 = vmatpush1.bf16.msra.mxu0 0
    %6162 = vmatprep.subr.bf16.mxu0 0
    %6163 = vmatpush1.bf16.msra.mxu0 0
    %6164 = vmatprep.subr.bf16.mxu0 0
    %6165 = vmatpush1.bf16.msra.mxu0 0
    %6166 = vmatprep.subr.bf16.mxu0 0
    %6167 = vmatpush1.bf16.msra.mxu0 0
    %6168 = vmatprep.subr.bf16.mxu0 0
    %6169 = vmatpush1.bf16.msra.mxu0 0
    %6170 = vmatprep.subr.bf16.mxu0 0
    %6171 = vmatpush1.bf16.msra.mxu0 0
    %6172 = vmatprep.mubr.bf16.mxu0 0
    %6173 = vmatmul.mubr.bf16.gmra.mrb[0].mxu0 %v5818
    %v6174 = vpop.f32.mrb[0].mxu0
    %v6175 = vadd.f32 0.0, %v6174
    %v6176 = vpop.f32.mrb[0].mxu0
    %v6177 = vadd.f32 0.0, %v6176
    %v6178 = vpop.f32.mrb[0].mxu0
    %v6179 = vpop.f32.mrb[0].mxu0
    %6180 = vdwg.mxu0
    %6181 = vmatprep.subr.bf16.mxu0 %v6015
    %6182 = vmatpush1.bf16.msra.mxu0 %v6014
    %6183 = vmatprep.subr.bf16.mxu0 %v6023
    %6184 = vmatpush1.bf16.msra.mxu0 %v6022
    %6185 = vmatprep.subr.bf16.mxu0 %v6031
    %6186 = vmatpush1.bf16.msra.mxu0 %v6030
    %6187 = vmatprep.subr.bf16.mxu0 %v6039
    %6188 = vmatpush1.bf16.msra.mxu0 %v6038
    %6189 = vmatprep.subr.bf16.mxu0 %v6047
    %6190 = vmatpush1.bf16.msra.mxu0 %v6046
    %6191 = vmatprep.subr.bf16.mxu0 %v6055
    %6192 = vmatpush1.bf16.msra.mxu0 %v6054
    %6193 = vmatprep.subr.bf16.mxu0 %v6063
    %6194 = vmatpush1.bf16.msra.mxu0 %v6062
    %6195 = vmatprep.subr.bf16.mxu0 %v6071
    %6196 = vmatpush1.bf16.msra.mxu0 %v6070
    %6197 = vmatprep.subr.bf16.mxu0 0
    %6198 = vmatpush1.bf16.msra.mxu0 0
    %6199 = vmatprep.subr.bf16.mxu0 0
    %6200 = vmatpush1.bf16.msra.mxu0 0
    %6201 = vmatprep.subr.bf16.mxu0 0
    %6202 = vmatpush1.bf16.msra.mxu0 0
    %6203 = vmatprep.subr.bf16.mxu0 0
    %6204 = vmatpush1.bf16.msra.mxu0 0
    %6205 = vmatprep.subr.bf16.mxu0 0
    %6206 = vmatpush1.bf16.msra.mxu0 0
    %6207 = vmatprep.subr.bf16.mxu0 0
    %6208 = vmatpush1.bf16.msra.mxu0 0
    %6209 = vmatprep.subr.bf16.mxu0 0
    %6210 = vmatpush1.bf16.msra.mxu0 0
    %6211 = vmatprep.subr.bf16.mxu0 0
    %6212 = vmatpush1.bf16.msra.mxu0 0
    %6213 = vmatprep.mubr.bf16.mxu0 0
    %6214 = vmatmul.mubr.bf16.gmra.mrb[0].mxu0 %v5818
    %v6215 = vpop.f32.mrb[0].mxu0
    %v6216 = vadd.f32 0.0, %v6215
    %v6217 = vpop.f32.mrb[0].mxu0
    %v6218 = vadd.f32 0.0, %v6217
    %v6219 = vpop.f32.mrb[0].mxu0
    %v6220 = vpop.f32.mrb[0].mxu0
    %6221 = vdwg.mxu0
    %6222 = vmatprep.subr.bf16.mxu0 %v6017
    %6223 = vmatpush1.bf16.msra.mxu0 %v6016
    %6224 = vmatprep.subr.bf16.mxu0 %v6025
    %6225 = vmatpush1.bf16.msra.mxu0 %v6024
    %6226 = vmatprep.subr.bf16.mxu0 %v6033
    %6227 = vmatpush1.bf16.msra.mxu0 %v6032
    %6228 = vmatprep.subr.bf16.mxu0 %v6041
    %6229 = vmatpush1.bf16.msra.mxu0 %v6040
    %6230 = vmatprep.subr.bf16.mxu0 %v6049
    %6231 = vmatpush1.bf16.msra.mxu0 %v6048
    %6232 = vmatprep.subr.bf16.mxu0 %v6057
    %6233 = vmatpush1.bf16.msra.mxu0 %v6056
    %6234 = vmatprep.subr.bf16.mxu0 %v6065
    %6235 = vmatpush1.bf16.msra.mxu0 %v6064
    %6236 = vmatprep.subr.bf16.mxu0 %v6073
    %6237 = vmatpush1.bf16.msra.mxu0 %v6072
    %6238 = vmatprep.subr.bf16.mxu0 0
    %6239 = vmatpush1.bf16.msra.mxu0 0
    %6240 = vmatprep.subr.bf16.mxu0 0
    %6241 = vmatpush1.bf16.msra.mxu0 0
    %6242 = vmatprep.subr.bf16.mxu0 0
    %6243 = vmatpush1.bf16.msra.mxu0 0
    %6244 = vmatprep.subr.bf16.mxu0 0
    %6245 = vmatpush1.bf16.msra.mxu0 0
    %6246 = vmatprep.subr.bf16.mxu0 0
    %6247 = vmatpush1.bf16.msra.mxu0 0
    %6248 = vmatprep.subr.bf16.mxu0 0
    %6249 = vmatpush1.bf16.msra.mxu0 0
    %6250 = vmatprep.subr.bf16.mxu0 0
    %6251 = vmatpush1.bf16.msra.mxu0 0
    %6252 = vmatprep.subr.bf16.mxu0 0
    %6253 = vmatpush1.bf16.msra.mxu0 0
    %6254 = vmatprep.mubr.bf16.mxu0 0
    %6255 = vmatmul.mubr.bf16.gmra.mrb[0].mxu0 %v5818
    %v6256 = vpop.f32.mrb[0].mxu0
    %v6257 = vadd.f32 0.0, %v6256
    %v6258 = vpop.f32.mrb[0].mxu0
    %v6259 = vadd.f32 0.0, %v6258
    %v6260 = vpop.f32.mrb[0].mxu0
    %v6261 = vpop.f32.mrb[0].mxu0
    %6262 = vdwg.mxu0
    %6263 = vmatprep.subr.bf16.mxu0 %v6019
    %6264 = vmatpush1.bf16.msra.mxu0 %v6018
    %6265 = vmatprep.subr.bf16.mxu0 %v6027
    %6266 = vmatpush1.bf16.msra.mxu0 %v6026
    %6267 = vmatprep.subr.bf16.mxu0 %v6035
    %6268 = vmatpush1.bf16.msra.mxu0 %v6034
    %6269 = vmatprep.subr.bf16.mxu0 %v6043
    %6270 = vmatpush1.bf16.msra.mxu0 %v6042
    %6271 = vmatprep.subr.bf16.mxu0 %v6051
    %6272 = vmatpush1.bf16.msra.mxu0 %v6050
    %6273 = vmatprep.subr.bf16.mxu0 %v6059
    %6274 = vmatpush1.bf16.msra.mxu0 %v6058
    %6275 = vmatprep.subr.bf16.mxu0 %v6067
    %6276 = vmatpush1.bf16.msra.mxu0 %v6066
    %6277 = vmatprep.subr.bf16.mxu0 %v6075
    %6278 = vmatpush1.bf16.msra.mxu0 %v6074
    %6279 = vmatprep.subr.bf16.mxu0 0
    %6280 = vmatpush1.bf16.msra.mxu0 0
    %6281 = vmatprep.subr.bf16.mxu0 0
    %6282 = vmatpush1.bf16.msra.mxu0 0
    %6283 = vmatprep.subr.bf16.mxu0 0
    %6284 = vmatpush1.bf16.msra.mxu0 0
    %6285 = vmatprep.subr.bf16.mxu0 0
    %6286 = vmatpush1.bf16.msra.mxu0 0
    %6287 = vmatprep.subr.bf16.mxu0 0
    %6288 = vmatpush1.bf16.msra.mxu0 0
    %6289 = vmatprep.subr.bf16.mxu0 0
    %6290 = vmatpush1.bf16.msra.mxu0 0
    %6291 = vmatprep.subr.bf16.mxu0 0
    %6292 = vmatpush1.bf16.msra.mxu0 0
    %6293 = vmatprep.subr.bf16.mxu0 0
    %6294 = vmatpush1.bf16.msra.mxu0 0
    %6295 = vmatprep.mubr.bf16.mxu0 0
    %6296 = vmatmul.mubr.bf16.gmra.mrb[0].mxu0 %v5818
    %v6297 = vpop.f32.mrb[0].mxu0
    %v6298 = vadd.f32 0.0, %v6297
    %v6299 = vpop.f32.mrb[0].mxu0
    %v6300 = vadd.f32 0.0, %v6299
    %v6301 = vpop.f32.mrb[0].mxu0
    %v6302 = vpop.f32.mrb[0].mxu0
    %6303 = vdwg.mxu0
    %v6304 = vadd.f32 %v5572, %v6175
    %v6305 = vadd.f32 %v5573, %v6177
    %v6306 = vadd.f32 %v5574, %v6216
    %v6307 = vadd.f32 %v5575, %v6218
    %v6308 = vadd.f32 %v5576, %v6257
    %v6309 = vadd.f32 %v5577, %v6259
    %v6310 = vadd.f32 %v5578, %v6298
    %v6311 = vadd.f32 %v5579, %v6300
    %v6312 = vrot.slane %v1761, 3
    %6314 = vmatprep.subr.bf16.mxu0 %v6013
    %6315 = vmatpush1.bf16.msra.mxu0 %v6012
    %6316 = vmatprep.subr.bf16.mxu0 %v6021
    %6317 = vmatpush1.bf16.msra.mxu0 %v6020
    %6318 = vmatprep.subr.bf16.mxu0 %v6029
    %6319 = vmatpush1.bf16.msra.mxu0 %v6028
    %6320 = vmatprep.subr.bf16.mxu0 %v6037
    %6321 = vmatpush1.bf16.msra.mxu0 %v6036
    %6322 = vmatprep.subr.bf16.mxu0 %v6045
    %6323 = vmatpush1.bf16.msra.mxu0 %v6044
    %6324 = vmatprep.subr.bf16.mxu0 %v6053
    %6325 = vmatpush1.bf16.msra.mxu0 %v6052
    %6326 = vmatprep.subr.bf16.mxu0 %v6061
    %6327 = vmatpush1.bf16.msra.mxu0 %v6060
    %6328 = vmatprep.subr.bf16.mxu0 %v6069
    %6329 = vmatpush1.bf16.msra.mxu0 %v6068
    %6330 = vmatprep.subr.bf16.mxu0 0
    %6331 = vmatpush1.bf16.msra.mxu0 0
    %6332 = vmatprep.subr.bf16.mxu0 0
    %6333 = vmatpush1.bf16.msra.mxu0 0
    %6334 = vmatprep.subr.bf16.mxu0 0
    %6335 = vmatpush1.bf16.msra.mxu0 0
    %6336 = vmatprep.subr.bf16.mxu0 0
    %6337 = vmatpush1.bf16.msra.mxu0 0
    %6338 = vmatprep.subr.bf16.mxu0 0
    %6339 = vmatpush1.bf16.msra.mxu0 0
    %6340 = vmatprep.subr.bf16.mxu0 0
    %6341 = vmatpush1.bf16.msra.mxu0 0
    %6342 = vmatprep.subr.bf16.mxu0 0
    %6343 = vmatpush1.bf16.msra.mxu0 0
    %6344 = vmatprep.subr.bf16.mxu0 0
    %6345 = vmatpush1.bf16.msra.mxu0 0
    %6346 = vmatprep.mubr.bf16.mxu0 0
    %6347 = vmatmul.mubr.bf16.gmra.mrb[0].mxu0 %v6312
    %v6348 = vpop.f32.mrb[0].mxu0
    %v6349 = vadd.f32 0.0, %v6348
    %v6350 = vpop.f32.mrb[0].mxu0
    %v6351 = vadd.f32 0.0, %v6350
    %v6352 = vpop.f32.mrb[0].mxu0
    %v6353 = vpop.f32.mrb[0].mxu0
    %6354 = vdwg.mxu0
    %6355 = vmatprep.subr.bf16.mxu0 %v6015
    %6356 = vmatpush1.bf16.msra.mxu0 %v6014
    %6357 = vmatprep.subr.bf16.mxu0 %v6023
    %6358 = vmatpush1.bf16.msra.mxu0 %v6022
    %6359 = vmatprep.subr.bf16.mxu0 %v6031
    %6360 = vmatpush1.bf16.msra.mxu0 %v6030
    %6361 = vmatprep.subr.bf16.mxu0 %v6039
    %6362 = vmatpush1.bf16.msra.mxu0 %v6038
    %6363 = vmatprep.subr.bf16.mxu0 %v6047
    %6364 = vmatpush1.bf16.msra.mxu0 %v6046
    %6365 = vmatprep.subr.bf16.mxu0 %v6055
    %6366 = vmatpush1.bf16.msra.mxu0 %v6054
    %6367 = vmatprep.subr.bf16.mxu0 %v6063
    %6368 = vmatpush1.bf16.msra.mxu0 %v6062
    %6369 = vmatprep.subr.bf16.mxu0 %v6071
    %6370 = vmatpush1.bf16.msra.mxu0 %v6070
    %6371 = vmatprep.subr.bf16.mxu0 0
    %6372 = vmatpush1.bf16.msra.mxu0 0
    %6373 = vmatprep.subr.bf16.mxu0 0
    %6374 = vmatpush1.bf16.msra.mxu0 0
    %6375 = vmatprep.subr.bf16.mxu0 0
    %6376 = vmatpush1.bf16.msra.mxu0 0
    %6377 = vmatprep.subr.bf16.mxu0 0
    %6378 = vmatpush1.bf16.msra.mxu0 0
    %6379 = vmatprep.subr.bf16.mxu0 0
    %6380 = vmatpush1.bf16.msra.mxu0 0
    %6381 = vmatprep.subr.bf16.mxu0 0
    %6382 = vmatpush1.bf16.msra.mxu0 0
    %6383 = vmatprep.subr.bf16.mxu0 0
    %6384 = vmatpush1.bf16.msra.mxu0 0
    %6385 = vmatprep.subr.bf16.mxu0 0
    %6386 = vmatpush1.bf16.msra.mxu0 0
    %6387 = vmatprep.mubr.bf16.mxu0 0
    %6388 = vmatmul.mubr.bf16.gmra.mrb[0].mxu0 %v6312
    %v6389 = vpop.f32.mrb[0].mxu0
    %v6390 = vadd.f32 0.0, %v6389
    %v6391 = vpop.f32.mrb[0].mxu0
    %v6392 = vadd.f32 0.0, %v6391
    %v6393 = vpop.f32.mrb[0].mxu0
    %v6394 = vpop.f32.mrb[0].mxu0
    %6395 = vdwg.mxu0
    %6396 = vmatprep.subr.bf16.mxu0 %v6017
    %6397 = vmatpush1.bf16.msra.mxu0 %v6016
    %6398 = vmatprep.subr.bf16.mxu0 %v6025
    %6399 = vmatpush1.bf16.msra.mxu0 %v6024
    %6400 = vmatprep.subr.bf16.mxu0 %v6033
    %6401 = vmatpush1.bf16.msra.mxu0 %v6032
    %6402 = vmatprep.subr.bf16.mxu0 %v6041
    %6403 = vmatpush1.bf16.msra.mxu0 %v6040
    %6404 = vmatprep.subr.bf16.mxu0 %v6049
    %6405 = vmatpush1.bf16.msra.mxu0 %v6048
    %6406 = vmatprep.subr.bf16.mxu0 %v6057
    %6407 = vmatpush1.bf16.msra.mxu0 %v6056
    %6408 = vmatprep.subr.bf16.mxu0 %v6065
    %6409 = vmatpush1.bf16.msra.mxu0 %v6064
    %6410 = vmatprep.subr.bf16.mxu0 %v6073
    %6411 = vmatpush1.bf16.msra.mxu0 %v6072
    %6412 = vmatprep.subr.bf16.mxu0 0
    %6413 = vmatpush1.bf16.msra.mxu0 0
    %6414 = vmatprep.subr.bf16.mxu0 0
    %6415 = vmatpush1.bf16.msra.mxu0 0
    %6416 = vmatprep.subr.bf16.mxu0 0
    %6417 = vmatpush1.bf16.msra.mxu0 0
    %6418 = vmatprep.subr.bf16.mxu0 0
    %6419 = vmatpush1.bf16.msra.mxu0 0
    %6420 = vmatprep.subr.bf16.mxu0 0
    %6421 = vmatpush1.bf16.msra.mxu0 0
    %6422 = vmatprep.subr.bf16.mxu0 0
    %6423 = vmatpush1.bf16.msra.mxu0 0
    %6424 = vmatprep.subr.bf16.mxu0 0
    %6425 = vmatpush1.bf16.msra.mxu0 0
    %6426 = vmatprep.subr.bf16.mxu0 0
    %6427 = vmatpush1.bf16.msra.mxu0 0
    %6428 = vmatprep.mubr.bf16.mxu0 0
    %6429 = vmatmul.mubr.bf16.gmra.mrb[0].mxu0 %v6312
    %v6430 = vpop.f32.mrb[0].mxu0
    %v6431 = vadd.f32 0.0, %v6430
    %v6432 = vpop.f32.mrb[0].mxu0
    %v6433 = vadd.f32 0.0, %v6432
    %v6434 = vpop.f32.mrb[0].mxu0
    %v6435 = vpop.f32.mrb[0].mxu0
    %6436 = vdwg.mxu0
    %6437 = vmatprep.subr.bf16.mxu0 %v6019
    %6438 = vmatpush1.bf16.msra.mxu0 %v6018
    %6439 = vmatprep.subr.bf16.mxu0 %v6027
    %6440 = vmatpush1.bf16.msra.mxu0 %v6026
    %6441 = vmatprep.subr.bf16.mxu0 %v6035
    %6442 = vmatpush1.bf16.msra.mxu0 %v6034
    %6443 = vmatprep.subr.bf16.mxu0 %v6043
    %6444 = vmatpush1.bf16.msra.mxu0 %v6042
    %6445 = vmatprep.subr.bf16.mxu0 %v6051
    %6446 = vmatpush1.bf16.msra.mxu0 %v6050
    %6447 = vmatprep.subr.bf16.mxu0 %v6059
    %6448 = vmatpush1.bf16.msra.mxu0 %v6058
    %6449 = vmatprep.subr.bf16.mxu0 %v6067
    %6450 = vmatpush1.bf16.msra.mxu0 %v6066
    %6451 = vmatprep.subr.bf16.mxu0 %v6075
    %6452 = vmatpush1.bf16.msra.mxu0 %v6074
    %6453 = vmatprep.subr.bf16.mxu0 0
    %6454 = vmatpush1.bf16.msra.mxu0 0
    %6455 = vmatprep.subr.bf16.mxu0 0
    %6456 = vmatpush1.bf16.msra.mxu0 0
    %6457 = vmatprep.subr.bf16.mxu0 0
    %6458 = vmatpush1.bf16.msra.mxu0 0
    %6459 = vmatprep.subr.bf16.mxu0 0
    %6460 = vmatpush1.bf16.msra.mxu0 0
    %6461 = vmatprep.subr.bf16.mxu0 0
    %6462 = vmatpush1.bf16.msra.mxu0 0
    %6463 = vmatprep.subr.bf16.mxu0 0
    %6464 = vmatpush1.bf16.msra.mxu0 0
    %6465 = vmatprep.subr.bf16.mxu0 0
    %6466 = vmatpush1.bf16.msra.mxu0 0
    %6467 = vmatprep.subr.bf16.mxu0 0
    %6468 = vmatpush1.bf16.msra.mxu0 0
    %6469 = vmatprep.mubr.bf16.mxu0 0
    %6470 = vmatmul.mubr.bf16.gmra.mrb[0].mxu0 %v6312
    %v6471 = vpop.f32.mrb[0].mxu0
    %v6472 = vadd.f32 0.0, %v6471
    %v6473 = vpop.f32.mrb[0].mxu0
    %v6474 = vadd.f32 0.0, %v6473
    %v6475 = vpop.f32.mrb[0].mxu0
    %v6476 = vpop.f32.mrb[0].mxu0
    %6477 = vdwg.mxu0
    %v6478 = vadd.f32 %v5746, %v6349
    %v6479 = vadd.f32 %v5747, %v6351
    %v6480 = vadd.f32 %v5748, %v6390
    %v6481 = vadd.f32 %v5749, %v6392
    %v6482 = vadd.f32 %v5750, %v6431
    %v6483 = vadd.f32 %v5751, %v6433
    %v6484 = vadd.f32 %v5752, %v6472
    %v6485 = vadd.f32 %v5753, %v6474
    %v6486 = vld [vmem:[#allocation10 + $0x1000] sm:$0xff]
    %v6487 = vld [vmem:[#allocation10 + $0x1008] sm:$0xff]
    %v6488 = vld [vmem:[#allocation10 + $0x1010] sm:$0xff]
    %v6489 = vld [vmem:[#allocation10 + $0x1018] sm:$0xff]
    %v6490 = vld [vmem:[#allocation10 + $0x1020] sm:$0xff]
    %v6491 = vld [vmem:[#allocation10 + $0x1028] sm:$0xff]
    %v6492 = vld [vmem:[#allocation10 + $0x1030] sm:$0xff]
    %v6493 = vld [vmem:[#allocation10 + $0x1038] sm:$0xff]
    %v6494 = vld [vmem:[#allocation10 + $0x1040] sm:$0xff]
    %v6495 = vld [vmem:[#allocation10 + $0x1048] sm:$0xff]
    %v6496 = vld [vmem:[#allocation10 + $0x1050] sm:$0xff]
    %v6497 = vld [vmem:[#allocation10 + $0x1058] sm:$0xff]
    %v6498 = vld [vmem:[#allocation10 + $0x1060] sm:$0xff]
    %v6499 = vld [vmem:[#allocation10 + $0x1068] sm:$0xff]
    %v6500 = vld [vmem:[#allocation10 + $0x1070] sm:$0xff]
    %v6501 = vld [vmem:[#allocation10 + $0x1078] sm:$0xff]
    %v6502 = vld [vmem:[#allocation10 + $0x1080] sm:$0xff]
    %v6503 = vld [vmem:[#allocation10 + $0x1088] sm:$0xff]
    %v6504 = vld [vmem:[#allocation10 + $0x1090] sm:$0xff]
    %v6505 = vld [vmem:[#allocation10 + $0x1098] sm:$0xff]
    %v6506 = vld [vmem:[#allocation10 + $0x10a0] sm:$0xff]
    %v6507 = vld [vmem:[#allocation10 + $0x10a8] sm:$0xff]
    %v6508 = vld [vmem:[#allocation10 + $0x10b0] sm:$0xff]
    %v6509 = vld [vmem:[#allocation10 + $0x10b8] sm:$0xff]
    %v6510 = vld [vmem:[#allocation10 + $0x10c0] sm:$0xff]
    %v6511 = vld [vmem:[#allocation10 + $0x10c8] sm:$0xff]
    %v6512 = vld [vmem:[#allocation10 + $0x10d0] sm:$0xff]
    %v6513 = vld [vmem:[#allocation10 + $0x10d8] sm:$0xff]
    %v6514 = vld [vmem:[#allocation10 + $0x10e0] sm:$0xff]
    %v6515 = vld [vmem:[#allocation10 + $0x10e8] sm:$0xff]
    %v6516 = vld [vmem:[#allocation10 + $0x10f0] sm:$0xff]
    %v6517 = vld [vmem:[#allocation10 + $0x10f8] sm:$0xff]
    %v6518 = vld [vmem:[#allocation10 + $0x1100] sm:$0xff]
    %v6519 = vld [vmem:[#allocation10 + $0x1108] sm:$0xff]
    %v6520 = vld [vmem:[#allocation10 + $0x1110] sm:$0xff]
    %v6521 = vld [vmem:[#allocation10 + $0x1118] sm:$0xff]
    %v6522 = vld [vmem:[#allocation10 + $0x1120] sm:$0xff]
    %v6523 = vld [vmem:[#allocation10 + $0x1128] sm:$0xff]
    %v6524 = vld [vmem:[#allocation10 + $0x1130] sm:$0xff]
    %v6525 = vld [vmem:[#allocation10 + $0x1138] sm:$0xff]
    %v6526 = vld [vmem:[#allocation10 + $0x1140] sm:$0xff]
    %v6527 = vld [vmem:[#allocation10 + $0x1148] sm:$0xff]
    %v6528 = vld [vmem:[#allocation10 + $0x1150] sm:$0xff]
    %v6529 = vld [vmem:[#allocation10 + $0x1158] sm:$0xff]
    %v6530 = vld [vmem:[#allocation10 + $0x1160] sm:$0xff]
    %v6531 = vld [vmem:[#allocation10 + $0x1168] sm:$0xff]
    %v6532 = vld [vmem:[#allocation10 + $0x1170] sm:$0xff]
    %v6533 = vld [vmem:[#allocation10 + $0x1178] sm:$0xff]
    %v6534 = vld [vmem:[#allocation10 + $0x1180] sm:$0xff]
    %v6535 = vld [vmem:[#allocation10 + $0x1188] sm:$0xff]
    %v6536 = vld [vmem:[#allocation10 + $0x1190] sm:$0xff]
    %v6537 = vld [vmem:[#allocation10 + $0x1198] sm:$0xff]
    %v6538 = vld [vmem:[#allocation10 + $0x11a0] sm:$0xff]
    %v6539 = vld [vmem:[#allocation10 + $0x11a8] sm:$0xff]
    %v6540 = vld [vmem:[#allocation10 + $0x11b0] sm:$0xff]
    %v6541 = vld [vmem:[#allocation10 + $0x11b8] sm:$0xff]
    %v6542 = vld [vmem:[#allocation10 + $0x11c0] sm:$0xff]
    %v6543 = vld [vmem:[#allocation10 + $0x11c8] sm:$0xff]
    %v6544 = vld [vmem:[#allocation10 + $0x11d0] sm:$0xff]
    %v6545 = vld [vmem:[#allocation10 + $0x11d8] sm:$0xff]
    %v6546 = vld [vmem:[#allocation10 + $0x11e0] sm:$0xff]
    %v6547 = vld [vmem:[#allocation10 + $0x11e8] sm:$0xff]
    %v6548 = vld [vmem:[#allocation10 + $0x11f0] sm:$0xff]
    %v6549 = vld [vmem:[#allocation10 + $0x11f8] sm:$0xff]
    %v6550 = vpack.c.bf16 %v466, %v466
    %v6615 = vunpack.c.l.b16 %v6486
    %v6616 = vunpack.c.h.b16 %v6486
    %v6617 = vunpack.c.l.b16 %v6487
    %v6618 = vunpack.c.h.b16 %v6487
    %v6619 = vunpack.c.l.b16 %v6488
    %v6620 = vunpack.c.h.b16 %v6488
    %v6621 = vunpack.c.l.b16 %v6489
    %v6622 = vunpack.c.h.b16 %v6489
    %v6623 = vunpack.c.l.b16 %v6490
    %v6624 = vunpack.c.h.b16 %v6490
    %v6625 = vunpack.c.l.b16 %v6491
    %v6626 = vunpack.c.h.b16 %v6491
    %v6627 = vunpack.c.l.b16 %v6492
    %v6628 = vunpack.c.h.b16 %v6492
    %v6629 = vunpack.c.l.b16 %v6493
    %v6630 = vunpack.c.h.b16 %v6493
    %v6631 = vunpack.c.l.b16 %v6494
    %v6632 = vunpack.c.h.b16 %v6494
    %v6633 = vunpack.c.l.b16 %v6495
    %v6634 = vunpack.c.h.b16 %v6495
    %v6635 = vunpack.c.l.b16 %v6496
    %v6636 = vunpack.c.h.b16 %v6496
    %v6637 = vunpack.c.l.b16 %v6497
    %v6638 = vunpack.c.h.b16 %v6497
    %v6639 = vunpack.c.l.b16 %v6498
    %v6640 = vunpack.c.h.b16 %v6498
    %v6641 = vunpack.c.l.b16 %v6499
    %v6642 = vunpack.c.h.b16 %v6499
    %v6643 = vunpack.c.l.b16 %v6500
    %v6644 = vunpack.c.h.b16 %v6500
    %v6645 = vunpack.c.l.b16 %v6501
    %v6646 = vunpack.c.h.b16 %v6501
    %v6647 = vunpack.c.l.b16 %v6502
    %v6648 = vunpack.c.h.b16 %v6502
    %v6649 = vunpack.c.l.b16 %v6503
    %v6650 = vunpack.c.h.b16 %v6503
    %v6651 = vunpack.c.l.b16 %v6504
    %v6652 = vunpack.c.h.b16 %v6504
    %v6653 = vunpack.c.l.b16 %v6505
    %v6654 = vunpack.c.h.b16 %v6505
    %v6655 = vunpack.c.l.b16 %v6506
    %v6656 = vunpack.c.h.b16 %v6506
    %v6657 = vunpack.c.l.b16 %v6507
    %v6658 = vunpack.c.h.b16 %v6507
    %v6659 = vunpack.c.l.b16 %v6508
    %v6660 = vunpack.c.h.b16 %v6508
    %v6661 = vunpack.c.l.b16 %v6509
    %v6662 = vunpack.c.h.b16 %v6509
    %v6663 = vunpack.c.l.b16 %v6510
    %v6664 = vunpack.c.h.b16 %v6510
    %v6665 = vunpack.c.l.b16 %v6511
    %v6666 = vunpack.c.h.b16 %v6511
    %v6667 = vunpack.c.l.b16 %v6512
    %v6668 = vunpack.c.h.b16 %v6512
    %v6669 = vunpack.c.l.b16 %v6513
    %v6670 = vunpack.c.h.b16 %v6513
    %v6671 = vunpack.c.l.b16 %v6514
    %v6672 = vunpack.c.h.b16 %v6514
    %v6673 = vunpack.c.l.b16 %v6515
    %v6674 = vunpack.c.h.b16 %v6515
    %v6675 = vunpack.c.l.b16 %v6516
    %v6676 = vunpack.c.h.b16 %v6516
    %v6677 = vunpack.c.l.b16 %v6517
    %v6678 = vunpack.c.h.b16 %v6517
    %v6679 = vunpack.c.l.b16 %v6518
    %v6680 = vunpack.c.h.b16 %v6518
    %v6681 = vunpack.c.l.b16 %v6519
    %v6682 = vunpack.c.h.b16 %v6519
    %v6683 = vunpack.c.l.b16 %v6520
    %v6684 = vunpack.c.h.b16 %v6520
    %v6685 = vunpack.c.l.b16 %v6521
    %v6686 = vunpack.c.h.b16 %v6521
    %v6687 = vunpack.c.l.b16 %v6522
    %v6688 = vunpack.c.h.b16 %v6522
    %v6689 = vunpack.c.l.b16 %v6523
    %v6690 = vunpack.c.h.b16 %v6523
    %v6691 = vunpack.c.l.b16 %v6524
    %v6692 = vunpack.c.h.b16 %v6524
    %v6693 = vunpack.c.l.b16 %v6525
    %v6694 = vunpack.c.h.b16 %v6525
    %v6695 = vunpack.c.l.b16 %v6526
    %v6696 = vunpack.c.h.b16 %v6526
    %v6697 = vunpack.c.l.b16 %v6527
    %v6698 = vunpack.c.h.b16 %v6527
    %v6699 = vunpack.c.l.b16 %v6528
    %v6700 = vunpack.c.h.b16 %v6528
    %v6701 = vunpack.c.l.b16 %v6529
    %v6702 = vunpack.c.h.b16 %v6529
    %v6703 = vunpack.c.l.b16 %v6530
    %v6704 = vunpack.c.h.b16 %v6530
    %v6705 = vunpack.c.l.b16 %v6531
    %v6706 = vunpack.c.h.b16 %v6531
    %v6707 = vunpack.c.l.b16 %v6532
    %v6708 = vunpack.c.h.b16 %v6532
    %v6709 = vunpack.c.l.b16 %v6533
    %v6710 = vunpack.c.h.b16 %v6533
    %v6711 = vunpack.c.l.b16 %v6534
    %v6712 = vunpack.c.h.b16 %v6534
    %v6713 = vunpack.c.l.b16 %v6535
    %v6714 = vunpack.c.h.b16 %v6535
    %v6715 = vunpack.c.l.b16 %v6536
    %v6716 = vunpack.c.h.b16 %v6536
    %v6717 = vunpack.c.l.b16 %v6537
    %v6718 = vunpack.c.h.b16 %v6537
    %v6719 = vunpack.c.l.b16 %v6538
    %v6720 = vunpack.c.h.b16 %v6538
    %v6721 = vunpack.c.l.b16 %v6539
    %v6722 = vunpack.c.h.b16 %v6539
    %v6723 = vunpack.c.l.b16 %v6540
    %v6724 = vunpack.c.h.b16 %v6540
    %v6725 = vunpack.c.l.b16 %v6541
    %v6726 = vunpack.c.h.b16 %v6541
    %v6727 = vunpack.c.l.b16 %v6542
    %v6728 = vunpack.c.h.b16 %v6542
    %v6729 = vunpack.c.l.b16 %v6543
    %v6730 = vunpack.c.h.b16 %v6543
    %v6731 = vunpack.c.l.b16 %v6544
    %v6732 = vunpack.c.h.b16 %v6544
    %v6733 = vunpack.c.l.b16 %v6545
    %v6734 = vunpack.c.h.b16 %v6545
    %v6735 = vunpack.c.l.b16 %v6546
    %v6736 = vunpack.c.h.b16 %v6546
    %v6737 = vunpack.c.l.b16 %v6547
    %v6738 = vunpack.c.h.b16 %v6547
    %v6739 = vunpack.c.l.b16 %v6548
    %v6740 = vunpack.c.h.b16 %v6548
    %v6741 = vunpack.c.l.b16 %v6549
    %v6742 = vunpack.c.h.b16 %v6549
    %v6743 = vpack.c.b16 %v6623, %v6615
    %v6744 = vpack.c.b16 %v6624, %v6616
    %v6745 = vpack.c.b16 %v6625, %v6617
    %v6746 = vpack.c.b16 %v6626, %v6618
    %v6747 = vpack.c.b16 %v6627, %v6619
    %v6748 = vpack.c.b16 %v6628, %v6620
    %v6749 = vpack.c.b16 %v6629, %v6621
    %v6750 = vpack.c.b16 %v6630, %v6622
    %v6751 = vpack.c.b16 %v6639, %v6631
    %v6752 = vpack.c.b16 %v6640, %v6632
    %v6753 = vpack.c.b16 %v6641, %v6633
    %v6754 = vpack.c.b16 %v6642, %v6634
    %v6755 = vpack.c.b16 %v6643, %v6635
    %v6756 = vpack.c.b16 %v6644, %v6636
    %v6757 = vpack.c.b16 %v6645, %v6637
    %v6758 = vpack.c.b16 %v6646, %v6638
    %v6759 = vpack.c.b16 %v6655, %v6647
    %v6760 = vpack.c.b16 %v6656, %v6648
    %v6761 = vpack.c.b16 %v6657, %v6649
    %v6762 = vpack.c.b16 %v6658, %v6650
    %v6763 = vpack.c.b16 %v6659, %v6651
    %v6764 = vpack.c.b16 %v6660, %v6652
    %v6765 = vpack.c.b16 %v6661, %v6653
    %v6766 = vpack.c.b16 %v6662, %v6654
    %v6767 = vpack.c.b16 %v6671, %v6663
    %v6768 = vpack.c.b16 %v6672, %v6664
    %v6769 = vpack.c.b16 %v6673, %v6665
    %v6770 = vpack.c.b16 %v6674, %v6666
    %v6771 = vpack.c.b16 %v6675, %v6667
    %v6772 = vpack.c.b16 %v6676, %v6668
    %v6773 = vpack.c.b16 %v6677, %v6669
    %v6774 = vpack.c.b16 %v6678, %v6670
    %v6775 = vpack.c.b16 %v6687, %v6679
    %v6776 = vpack.c.b16 %v6688, %v6680
    %v6777 = vpack.c.b16 %v6689, %v6681
    %v6778 = vpack.c.b16 %v6690, %v6682
    %v6779 = vpack.c.b16 %v6691, %v6683
    %v6780 = vpack.c.b16 %v6692, %v6684
    %v6781 = vpack.c.b16 %v6693, %v6685
    %v6782 = vpack.c.b16 %v6694, %v6686
    %v6783 = vpack.c.b16 %v6703, %v6695
    %v6784 = vpack.c.b16 %v6704, %v6696
    %v6785 = vpack.c.b16 %v6705, %v6697
    %v6786 = vpack.c.b16 %v6706, %v6698
    %v6787 = vpack.c.b16 %v6707, %v6699
    %v6788 = vpack.c.b16 %v6708, %v6700
    %v6789 = vpack.c.b16 %v6709, %v6701
    %v6790 = vpack.c.b16 %v6710, %v6702
    %v6791 = vpack.c.b16 %v6719, %v6711
    %v6792 = vpack.c.b16 %v6720, %v6712
    %v6793 = vpack.c.b16 %v6721, %v6713
    %v6794 = vpack.c.b16 %v6722, %v6714
    %v6795 = vpack.c.b16 %v6723, %v6715
    %v6796 = vpack.c.b16 %v6724, %v6716
    %v6797 = vpack.c.b16 %v6725, %v6717
    %v6798 = vpack.c.b16 %v6726, %v6718
    %v6799 = vpack.c.b16 %v6735, %v6727
    %v6800 = vpack.c.b16 %v6736, %v6728
    %v6801 = vpack.c.b16 %v6737, %v6729
    %v6802 = vpack.c.b16 %v6738, %v6730
    %v6803 = vpack.c.b16 %v6739, %v6731
    %v6804 = vpack.c.b16 %v6740, %v6732
    %v6805 = vpack.c.b16 %v6741, %v6733
    %v6806 = vpack.c.b16 %v6742, %v6734
    %6871 = vmatprep.subr.bf16.mxu0 %v6744
    %6872 = vmatpush1.bf16.msra.mxu0 %v6743
    %6873 = vmatprep.subr.bf16.mxu0 %v6752
    %6874 = vmatpush1.bf16.msra.mxu0 %v6751
    %6875 = vmatprep.subr.bf16.mxu0 %v6760
    %6876 = vmatpush1.bf16.msra.mxu0 %v6759
    %6877 = vmatprep.subr.bf16.mxu0 %v6768
    %6878 = vmatpush1.bf16.msra.mxu0 %v6767
    %6879 = vmatprep.subr.bf16.mxu0 %v6776
    %6880 = vmatpush1.bf16.msra.mxu0 %v6775
    %6881 = vmatprep.subr.bf16.mxu0 %v6784
    %6882 = vmatpush1.bf16.msra.mxu0 %v6783
    %6883 = vmatprep.subr.bf16.mxu0 %v6792
    %6884 = vmatpush1.bf16.msra.mxu0 %v6791
    %6885 = vmatprep.subr.bf16.mxu0 %v6800
    %6886 = vmatpush1.bf16.msra.mxu0 %v6799
    %6887 = vmatprep.subr.bf16.mxu0 0
    %6888 = vmatpush1.bf16.msra.mxu0 0
    %6889 = vmatprep.subr.bf16.mxu0 0
    %6890 = vmatpush1.bf16.msra.mxu0 0
    %6891 = vmatprep.subr.bf16.mxu0 0
    %6892 = vmatpush1.bf16.msra.mxu0 0
    %6893 = vmatprep.subr.bf16.mxu0 0
    %6894 = vmatpush1.bf16.msra.mxu0 0
    %6895 = vmatprep.subr.bf16.mxu0 0
    %6896 = vmatpush1.bf16.msra.mxu0 0
    %6897 = vmatprep.subr.bf16.mxu0 0
    %6898 = vmatpush1.bf16.msra.mxu0 0
    %6899 = vmatprep.subr.bf16.mxu0 0
    %6900 = vmatpush1.bf16.msra.mxu0 0
    %6901 = vmatprep.subr.bf16.mxu0 0
    %6902 = vmatpush1.bf16.msra.mxu0 0
    %6903 = vmatprep.mubr.bf16.mxu0 0
    %6904 = vmatmul.mubr.bf16.gmra.mrb[0].mxu0 %v6550
    %v6905 = vpop.f32.mrb[0].mxu0
    %v6906 = vadd.f32 0.0, %v6905
    %v6907 = vpop.f32.mrb[0].mxu0
    %v6908 = vadd.f32 0.0, %v6907
    %v6909 = vpop.f32.mrb[0].mxu0
    %v6910 = vpop.f32.mrb[0].mxu0
    %6911 = vdwg.mxu0
    %6912 = vmatprep.subr.bf16.mxu0 %v6746
    %6913 = vmatpush1.bf16.msra.mxu0 %v6745
    %6914 = vmatprep.subr.bf16.mxu0 %v6754
    %6915 = vmatpush1.bf16.msra.mxu0 %v6753
    %6916 = vmatprep.subr.bf16.mxu0 %v6762
    %6917 = vmatpush1.bf16.msra.mxu0 %v6761
    %6918 = vmatprep.subr.bf16.mxu0 %v6770
    %6919 = vmatpush1.bf16.msra.mxu0 %v6769
    %6920 = vmatprep.subr.bf16.mxu0 %v6778
    %6921 = vmatpush1.bf16.msra.mxu0 %v6777
    %6922 = vmatprep.subr.bf16.mxu0 %v6786
    %6923 = vmatpush1.bf16.msra.mxu0 %v6785
    %6924 = vmatprep.subr.bf16.mxu0 %v6794
    %6925 = vmatpush1.bf16.msra.mxu0 %v6793
    %6926 = vmatprep.subr.bf16.mxu0 %v6802
    %6927 = vmatpush1.bf16.msra.mxu0 %v6801
    %6928 = vmatprep.subr.bf16.mxu0 0
    %6929 = vmatpush1.bf16.msra.mxu0 0
    %6930 = vmatprep.subr.bf16.mxu0 0
    %6931 = vmatpush1.bf16.msra.mxu0 0
    %6932 = vmatprep.subr.bf16.mxu0 0
    %6933 = vmatpush1.bf16.msra.mxu0 0
    %6934 = vmatprep.subr.bf16.mxu0 0
    %6935 = vmatpush1.bf16.msra.mxu0 0
    %6936 = vmatprep.subr.bf16.mxu0 0
    %6937 = vmatpush1.bf16.msra.mxu0 0
    %6938 = vmatprep.subr.bf16.mxu0 0
    %6939 = vmatpush1.bf16.msra.mxu0 0
    %6940 = vmatprep.subr.bf16.mxu0 0
    %6941 = vmatpush1.bf16.msra.mxu0 0
    %6942 = vmatprep.subr.bf16.mxu0 0
    %6943 = vmatpush1.bf16.msra.mxu0 0
    %6944 = vmatprep.mubr.bf16.mxu0 0
    %6945 = vmatmul.mubr.bf16.gmra.mrb[0].mxu0 %v6550
    %v6946 = vpop.f32.mrb[0].mxu0
    %v6947 = vadd.f32 0.0, %v6946
    %v6948 = vpop.f32.mrb[0].mxu0
    %v6949 = vadd.f32 0.0, %v6948
    %v6950 = vpop.f32.mrb[0].mxu0
    %v6951 = vpop.f32.mrb[0].mxu0
    %6952 = vdwg.mxu0
    %6953 = vmatprep.subr.bf16.mxu0 %v6748
    %6954 = vmatpush1.bf16.msra.mxu0 %v6747
    %6955 = vmatprep.subr.bf16.mxu0 %v6756
    %6956 = vmatpush1.bf16.msra.mxu0 %v6755
    %6957 = vmatprep.subr.bf16.mxu0 %v6764
    %6958 = vmatpush1.bf16.msra.mxu0 %v6763
    %6959 = vmatprep.subr.bf16.mxu0 %v6772
    %6960 = vmatpush1.bf16.msra.mxu0 %v6771
    %6961 = vmatprep.subr.bf16.mxu0 %v6780
    %6962 = vmatpush1.bf16.msra.mxu0 %v6779
    %6963 = vmatprep.subr.bf16.mxu0 %v6788
    %6964 = vmatpush1.bf16.msra.mxu0 %v6787
    %6965 = vmatprep.subr.bf16.mxu0 %v6796
    %6966 = vmatpush1.bf16.msra.mxu0 %v6795
    %6967 = vmatprep.subr.bf16.mxu0 %v6804
    %6968 = vmatpush1.bf16.msra.mxu0 %v6803
    %6969 = vmatprep.subr.bf16.mxu0 0
    %6970 = vmatpush1.bf16.msra.mxu0 0
    %6971 = vmatprep.subr.bf16.mxu0 0
    %6972 = vmatpush1.bf16.msra.mxu0 0
    %6973 = vmatprep.subr.bf16.mxu0 0
    %6974 = vmatpush1.bf16.msra.mxu0 0
    %6975 = vmatprep.subr.bf16.mxu0 0
    %6976 = vmatpush1.bf16.msra.mxu0 0
    %6977 = vmatprep.subr.bf16.mxu0 0
    %6978 = vmatpush1.bf16.msra.mxu0 0
    %6979 = vmatprep.subr.bf16.mxu0 0
    %6980 = vmatpush1.bf16.msra.mxu0 0
    %6981 = vmatprep.subr.bf16.mxu0 0
    %6982 = vmatpush1.bf16.msra.mxu0 0
    %6983 = vmatprep.subr.bf16.mxu0 0
    %6984 = vmatpush1.bf16.msra.mxu0 0
    %6985 = vmatprep.mubr.bf16.mxu0 0
    %6986 = vmatmul.mubr.bf16.gmra.mrb[0].mxu0 %v6550
    %v6987 = vpop.f32.mrb[0].mxu0
    %v6988 = vadd.f32 0.0, %v6987
    %v6989 = vpop.f32.mrb[0].mxu0
    %v6990 = vadd.f32 0.0, %v6989
    %v6991 = vpop.f32.mrb[0].mxu0
    %v6992 = vpop.f32.mrb[0].mxu0
    %6993 = vdwg.mxu0
    %6994 = vmatprep.subr.bf16.mxu0 %v6750
    %6995 = vmatpush1.bf16.msra.mxu0 %v6749
    %6996 = vmatprep.subr.bf16.mxu0 %v6758
    %6997 = vmatpush1.bf16.msra.mxu0 %v6757
    %6998 = vmatprep.subr.bf16.mxu0 %v6766
    %6999 = vmatpush1.bf16.msra.mxu0 %v6765
    %7000 = vmatprep.subr.bf16.mxu0 %v6774
    %7001 = vmatpush1.bf16.msra.mxu0 %v6773
    %7002 = vmatprep.subr.bf16.mxu0 %v6782
    %7003 = vmatpush1.bf16.msra.mxu0 %v6781
    %7004 = vmatprep.subr.bf16.mxu0 %v6790
    %7005 = vmatpush1.bf16.msra.mxu0 %v6789
    %7006 = vmatprep.subr.bf16.mxu0 %v6798
    %7007 = vmatpush1.bf16.msra.mxu0 %v6797
    %7008 = vmatprep.subr.bf16.mxu0 %v6806
    %7009 = vmatpush1.bf16.msra.mxu0 %v6805
    %7010 = vmatprep.subr.bf16.mxu0 0
    %7011 = vmatpush1.bf16.msra.mxu0 0
    %7012 = vmatprep.subr.bf16.mxu0 0
    %7013 = vmatpush1.bf16.msra.mxu0 0
    %7014 = vmatprep.subr.bf16.mxu0 0
    %7015 = vmatpush1.bf16.msra.mxu0 0
    %7016 = vmatprep.subr.bf16.mxu0 0
    %7017 = vmatpush1.bf16.msra.mxu0 0
    %7018 = vmatprep.subr.bf16.mxu0 0
    %7019 = vmatpush1.bf16.msra.mxu0 0
    %7020 = vmatprep.subr.bf16.mxu0 0
    %7021 = vmatpush1.bf16.msra.mxu0 0
    %7022 = vmatprep.subr.bf16.mxu0 0
    %7023 = vmatpush1.bf16.msra.mxu0 0
    %7024 = vmatprep.subr.bf16.mxu0 0
    %7025 = vmatpush1.bf16.msra.mxu0 0
    %7026 = vmatprep.mubr.bf16.mxu0 0
    %7027 = vmatmul.mubr.bf16.gmra.mrb[0].mxu0 %v6550
    %v7028 = vpop.f32.mrb[0].mxu0
    %v7029 = vadd.f32 0.0, %v7028
    %v7030 = vpop.f32.mrb[0].mxu0
    %v7031 = vadd.f32 0.0, %v7030
    %v7032 = vpop.f32.mrb[0].mxu0
    %v7033 = vpop.f32.mrb[0].mxu0
    %7034 = vdwg.mxu0
    %v7035 = vadd.f32 %v6304, %v6906
    %v7036 = vadd.f32 %v6305, %v6908
    %v7037 = vadd.f32 %v6306, %v6947
    %v7038 = vadd.f32 %v6307, %v6949
    %v7039 = vadd.f32 %v6308, %v6988
    %v7040 = vadd.f32 %v6309, %v6990
    %v7041 = vadd.f32 %v6310, %v7029
    %v7042 = vadd.f32 %v6311, %v7031
    %v7043 = vpack.c.bf16 %v657, %v657
    %7044 = vmatprep.subr.bf16.mxu0 %v6744
    %7045 = vmatpush1.bf16.msra.mxu0 %v6743
    %7046 = vmatprep.subr.bf16.mxu0 %v6752
    %7047 = vmatpush1.bf16.msra.mxu0 %v6751
    %7048 = vmatprep.subr.bf16.mxu0 %v6760
    %7049 = vmatpush1.bf16.msra.mxu0 %v6759
    %7050 = vmatprep.subr.bf16.mxu0 %v6768
    %7051 = vmatpush1.bf16.msra.mxu0 %v6767
    %7052 = vmatprep.subr.bf16.mxu0 %v6776
    %7053 = vmatpush1.bf16.msra.mxu0 %v6775
    %7054 = vmatprep.subr.bf16.mxu0 %v6784
    %7055 = vmatpush1.bf16.msra.mxu0 %v6783
    %7056 = vmatprep.subr.bf16.mxu0 %v6792
    %7057 = vmatpush1.bf16.msra.mxu0 %v6791
    %7058 = vmatprep.subr.bf16.mxu0 %v6800
    %7059 = vmatpush1.bf16.msra.mxu0 %v6799
    %7060 = vmatprep.subr.bf16.mxu0 0
    %7061 = vmatpush1.bf16.msra.mxu0 0
    %7062 = vmatprep.subr.bf16.mxu0 0
    %7063 = vmatpush1.bf16.msra.mxu0 0
    %7064 = vmatprep.subr.bf16.mxu0 0
    %7065 = vmatpush1.bf16.msra.mxu0 0
    %7066 = vmatprep.subr.bf16.mxu0 0
    %7067 = vmatpush1.bf16.msra.mxu0 0
    %7068 = vmatprep.subr.bf16.mxu0 0
    %7069 = vmatpush1.bf16.msra.mxu0 0
    %7070 = vmatprep.subr.bf16.mxu0 0
    %7071 = vmatpush1.bf16.msra.mxu0 0
    %7072 = vmatprep.subr.bf16.mxu0 0
    %7073 = vmatpush1.bf16.msra.mxu0 0
    %7074 = vmatprep.subr.bf16.mxu0 0
    %7075 = vmatpush1.bf16.msra.mxu0 0
    %7076 = vmatprep.mubr.bf16.mxu0 0
    %7077 = vmatmul.mubr.bf16.gmra.mrb[0].mxu0 %v7043
    %v7078 = vpop.f32.mrb[0].mxu0
    %v7079 = vadd.f32 0.0, %v7078
    %v7080 = vpop.f32.mrb[0].mxu0
    %v7081 = vadd.f32 0.0, %v7080
    %v7082 = vpop.f32.mrb[0].mxu0
    %v7083 = vpop.f32.mrb[0].mxu0
    %7084 = vdwg.mxu0
    %7085 = vmatprep.subr.bf16.mxu0 %v6746
    %7086 = vmatpush1.bf16.msra.mxu0 %v6745
    %7087 = vmatprep.subr.bf16.mxu0 %v6754
    %7088 = vmatpush1.bf16.msra.mxu0 %v6753
    %7089 = vmatprep.subr.bf16.mxu0 %v6762
    %7090 = vmatpush1.bf16.msra.mxu0 %v6761
    %7091 = vmatprep.subr.bf16.mxu0 %v6770
    %7092 = vmatpush1.bf16.msra.mxu0 %v6769
    %7093 = vmatprep.subr.bf16.mxu0 %v6778
    %7094 = vmatpush1.bf16.msra.mxu0 %v6777
    %7095 = vmatprep.subr.bf16.mxu0 %v6786
    %7096 = vmatpush1.bf16.msra.mxu0 %v6785
    %7097 = vmatprep.subr.bf16.mxu0 %v6794
    %7098 = vmatpush1.bf16.msra.mxu0 %v6793
    %7099 = vmatprep.subr.bf16.mxu0 %v6802
    %7100 = vmatpush1.bf16.msra.mxu0 %v6801
    %7101 = vmatprep.subr.bf16.mxu0 0
    %7102 = vmatpush1.bf16.msra.mxu0 0
    %7103 = vmatprep.subr.bf16.mxu0 0
    %7104 = vmatpush1.bf16.msra.mxu0 0
    %7105 = vmatprep.subr.bf16.mxu0 0
    %7106 = vmatpush1.bf16.msra.mxu0 0
    %7107 = vmatprep.subr.bf16.mxu0 0
    %7108 = vmatpush1.bf16.msra.mxu0 0
    %7109 = vmatprep.subr.bf16.mxu0 0
    %7110 = vmatpush1.bf16.msra.mxu0 0
    %7111 = vmatprep.subr.bf16.mxu0 0
    %7112 = vmatpush1.bf16.msra.mxu0 0
    %7113 = vmatprep.subr.bf16.mxu0 0
    %7114 = vmatpush1.bf16.msra.mxu0 0
    %7115 = vmatprep.subr.bf16.mxu0 0
    %7116 = vmatpush1.bf16.msra.mxu0 0
    %7117 = vmatprep.mubr.bf16.mxu0 0
    %7118 = vmatmul.mubr.bf16.gmra.mrb[0].mxu0 %v7043
    %v7119 = vpop.f32.mrb[0].mxu0
    %v7120 = vadd.f32 0.0, %v7119
    %v7121 = vpop.f32.mrb[0].mxu0
    %v7122 = vadd.f32 0.0, %v7121
    %v7123 = vpop.f32.mrb[0].mxu0
    %v7124 = vpop.f32.mrb[0].mxu0
    %7125 = vdwg.mxu0
    %7126 = vmatprep.subr.bf16.mxu0 %v6748
    %7127 = vmatpush1.bf16.msra.mxu0 %v6747
    %7128 = vmatprep.subr.bf16.mxu0 %v6756
    %7129 = vmatpush1.bf16.msra.mxu0 %v6755
    %7130 = vmatprep.subr.bf16.mxu0 %v6764
    %7131 = vmatpush1.bf16.msra.mxu0 %v6763
    %7132 = vmatprep.subr.bf16.mxu0 %v6772
    %7133 = vmatpush1.bf16.msra.mxu0 %v6771
    %7134 = vmatprep.subr.bf16.mxu0 %v6780
    %7135 = vmatpush1.bf16.msra.mxu0 %v6779
    %7136 = vmatprep.subr.bf16.mxu0 %v6788
    %7137 = vmatpush1.bf16.msra.mxu0 %v6787
    %7138 = vmatprep.subr.bf16.mxu0 %v6796
    %7139 = vmatpush1.bf16.msra.mxu0 %v6795
    %7140 = vmatprep.subr.bf16.mxu0 %v6804
    %7141 = vmatpush1.bf16.msra.mxu0 %v6803
    %7142 = vmatprep.subr.bf16.mxu0 0
    %7143 = vmatpush1.bf16.msra.mxu0 0
    %7144 = vmatprep.subr.bf16.mxu0 0
    %7145 = vmatpush1.bf16.msra.mxu0 0
    %7146 = vmatprep.subr.bf16.mxu0 0
    %7147 = vmatpush1.bf16.msra.mxu0 0
    %7148 = vmatprep.subr.bf16.mxu0 0
    %7149 = vmatpush1.bf16.msra.mxu0 0
    %7150 = vmatprep.subr.bf16.mxu0 0
    %7151 = vmatpush1.bf16.msra.mxu0 0
    %7152 = vmatprep.subr.bf16.mxu0 0
    %7153 = vmatpush1.bf16.msra.mxu0 0
    %7154 = vmatprep.subr.bf16.mxu0 0
    %7155 = vmatpush1.bf16.msra.mxu0 0
    %7156 = vmatprep.subr.bf16.mxu0 0
    %7157 = vmatpush1.bf16.msra.mxu0 0
    %7158 = vmatprep.mubr.bf16.mxu0 0
    %7159 = vmatmul.mubr.bf16.gmra.mrb[0].mxu0 %v7043
    %v7160 = vpop.f32.mrb[0].mxu0
    %v7161 = vadd.f32 0.0, %v7160
    %v7162 = vpop.f32.mrb[0].mxu0
    %v7163 = vadd.f32 0.0, %v7162
    %v7164 = vpop.f32.mrb[0].mxu0
    %v7165 = vpop.f32.mrb[0].mxu0
    %7166 = vdwg.mxu0
    %7167 = vmatprep.subr.bf16.mxu0 %v6750
    %7168 = vmatpush1.bf16.msra.mxu0 %v6749
    %7169 = vmatprep.subr.bf16.mxu0 %v6758
    %7170 = vmatpush1.bf16.msra.mxu0 %v6757
    %7171 = vmatprep.subr.bf16.mxu0 %v6766
    %7172 = vmatpush1.bf16.msra.mxu0 %v6765
    %7173 = vmatprep.subr.bf16.mxu0 %v6774
    %7174 = vmatpush1.bf16.msra.mxu0 %v6773
    %7175 = vmatprep.subr.bf16.mxu0 %v6782
    %7176 = vmatpush1.bf16.msra.mxu0 %v6781
    %7177 = vmatprep.subr.bf16.mxu0 %v6790
    %7178 = vmatpush1.bf16.msra.mxu0 %v6789
    %7179 = vmatprep.subr.bf16.mxu0 %v6798
    %7180 = vmatpush1.bf16.msra.mxu0 %v6797
    %7181 = vmatprep.subr.bf16.mxu0 %v6806
    %7182 = vmatpush1.bf16.msra.mxu0 %v6805
    %7183 = vmatprep.subr.bf16.mxu0 0
    %7184 = vmatpush1.bf16.msra.mxu0 0
    %7185 = vmatprep.subr.bf16.mxu0 0
    %7186 = vmatpush1.bf16.msra.mxu0 0
    %7187 = vmatprep.subr.bf16.mxu0 0
    %7188 = vmatpush1.bf16.msra.mxu0 0
    %7189 = vmatprep.subr.bf16.mxu0 0
    %7190 = vmatpush1.bf16.msra.mxu0 0
    %7191 = vmatprep.subr.bf16.mxu0 0
    %7192 = vmatpush1.bf16.msra.mxu0 0
    %7193 = vmatprep.subr.bf16.mxu0 0
    %7194 = vmatpush1.bf16.msra.mxu0 0
    %7195 = vmatprep.subr.bf16.mxu0 0
    %7196 = vmatpush1.bf16.msra.mxu0 0
    %7197 = vmatprep.subr.bf16.mxu0 0
    %7198 = vmatpush1.bf16.msra.mxu0 0
    %7199 = vmatprep.mubr.bf16.mxu0 0
    %7200 = vmatmul.mubr.bf16.gmra.mrb[0].mxu0 %v7043
    %v7201 = vpop.f32.mrb[0].mxu0
    %v7202 = vadd.f32 0.0, %v7201
    %v7203 = vpop.f32.mrb[0].mxu0
    %v7204 = vadd.f32 0.0, %v7203
    %v7205 = vpop.f32.mrb[0].mxu0
    %v7206 = vpop.f32.mrb[0].mxu0
    %7207 = vdwg.mxu0
    %v7208 = vadd.f32 %v6478, %v7079
    %v7209 = vadd.f32 %v6479, %v7081
    %v7210 = vadd.f32 %v6480, %v7120
    %v7211 = vadd.f32 %v6481, %v7122
    %v7212 = vadd.f32 %v6482, %v7161
    %v7213 = vadd.f32 %v6483, %v7163
    %v7214 = vadd.f32 %v6484, %v7202
    %v7215 = vadd.f32 %v6485, %v7204
    %v7216 = vld [vmem:[#allocation10 + $0x1200] sm:$0xff]
    %v7217 = vld [vmem:[#allocation10 + $0x1208] sm:$0xff]
    %v7218 = vld [vmem:[#allocation10 + $0x1210] sm:$0xff]
    %v7219 = vld [vmem:[#allocation10 + $0x1218] sm:$0xff]
    %v7220 = vld [vmem:[#allocation10 + $0x1220] sm:$0xff]
    %v7221 = vld [vmem:[#allocation10 + $0x1228] sm:$0xff]
    %v7222 = vld [vmem:[#allocation10 + $0x1230] sm:$0xff]
    %v7223 = vld [vmem:[#allocation10 + $0x1238] sm:$0xff]
    %v7224 = vld [vmem:[#allocation10 + $0x1240] sm:$0xff]
    %v7225 = vld [vmem:[#allocation10 + $0x1248] sm:$0xff]
    %v7226 = vld [vmem:[#allocation10 + $0x1250] sm:$0xff]
    %v7227 = vld [vmem:[#allocation10 + $0x1258] sm:$0xff]
    %v7228 = vld [vmem:[#allocation10 + $0x1260] sm:$0xff]
    %v7229 = vld [vmem:[#allocation10 + $0x1268] sm:$0xff]
    %v7230 = vld [vmem:[#allocation10 + $0x1270] sm:$0xff]
    %v7231 = vld [vmem:[#allocation10 + $0x1278] sm:$0xff]
    %v7232 = vld [vmem:[#allocation10 + $0x1280] sm:$0xff]
    %v7233 = vld [vmem:[#allocation10 + $0x1288] sm:$0xff]
    %v7234 = vld [vmem:[#allocation10 + $0x1290] sm:$0xff]
    %v7235 = vld [vmem:[#allocation10 + $0x1298] sm:$0xff]
    %v7236 = vld [vmem:[#allocation10 + $0x12a0] sm:$0xff]
    %v7237 = vld [vmem:[#allocation10 + $0x12a8] sm:$0xff]
    %v7238 = vld [vmem:[#allocation10 + $0x12b0] sm:$0xff]
    %v7239 = vld [vmem:[#allocation10 + $0x12b8] sm:$0xff]
    %v7240 = vld [vmem:[#allocation10 + $0x12c0] sm:$0xff]
    %v7241 = vld [vmem:[#allocation10 + $0x12c8] sm:$0xff]
    %v7242 = vld [vmem:[#allocation10 + $0x12d0] sm:$0xff]
    %v7243 = vld [vmem:[#allocation10 + $0x12d8] sm:$0xff]
    %v7244 = vld [vmem:[#allocation10 + $0x12e0] sm:$0xff]
    %v7245 = vld [vmem:[#allocation10 + $0x12e8] sm:$0xff]
    %v7246 = vld [vmem:[#allocation10 + $0x12f0] sm:$0xff]
    %v7247 = vld [vmem:[#allocation10 + $0x12f8] sm:$0xff]
    %v7248 = vld [vmem:[#allocation10 + $0x1300] sm:$0xff]
    %v7249 = vld [vmem:[#allocation10 + $0x1308] sm:$0xff]
    %v7250 = vld [vmem:[#allocation10 + $0x1310] sm:$0xff]
    %v7251 = vld [vmem:[#allocation10 + $0x1318] sm:$0xff]
    %v7252 = vld [vmem:[#allocation10 + $0x1320] sm:$0xff]
    %v7253 = vld [vmem:[#allocation10 + $0x1328] sm:$0xff]
    %v7254 = vld [vmem:[#allocation10 + $0x1330] sm:$0xff]
    %v7255 = vld [vmem:[#allocation10 + $0x1338] sm:$0xff]
    %v7256 = vld [vmem:[#allocation10 + $0x1340] sm:$0xff]
    %v7257 = vld [vmem:[#allocation10 + $0x1348] sm:$0xff]
    %v7258 = vld [vmem:[#allocation10 + $0x1350] sm:$0xff]
    %v7259 = vld [vmem:[#allocation10 + $0x1358] sm:$0xff]
    %v7260 = vld [vmem:[#allocation10 + $0x1360] sm:$0xff]
    %v7261 = vld [vmem:[#allocation10 + $0x1368] sm:$0xff]
    %v7262 = vld [vmem:[#allocation10 + $0x1370] sm:$0xff]
    %v7263 = vld [vmem:[#allocation10 + $0x1378] sm:$0xff]
    %v7264 = vld [vmem:[#allocation10 + $0x1380] sm:$0xff]
    %v7265 = vld [vmem:[#allocation10 + $0x1388] sm:$0xff]
    %v7266 = vld [vmem:[#allocation10 + $0x1390] sm:$0xff]
    %v7267 = vld [vmem:[#allocation10 + $0x1398] sm:$0xff]
    %v7268 = vld [vmem:[#allocation10 + $0x13a0] sm:$0xff]
    %v7269 = vld [vmem:[#allocation10 + $0x13a8] sm:$0xff]
    %v7270 = vld [vmem:[#allocation10 + $0x13b0] sm:$0xff]
    %v7271 = vld [vmem:[#allocation10 + $0x13b8] sm:$0xff]
    %v7272 = vld [vmem:[#allocation10 + $0x13c0] sm:$0xff]
    %v7273 = vld [vmem:[#allocation10 + $0x13c8] sm:$0xff]
    %v7274 = vld [vmem:[#allocation10 + $0x13d0] sm:$0xff]
    %v7275 = vld [vmem:[#allocation10 + $0x13d8] sm:$0xff]
    %v7276 = vld [vmem:[#allocation10 + $0x13e0] sm:$0xff]
    %v7277 = vld [vmem:[#allocation10 + $0x13e8] sm:$0xff]
    %v7278 = vld [vmem:[#allocation10 + $0x13f0] sm:$0xff]
    %v7279 = vld [vmem:[#allocation10 + $0x13f8] sm:$0xff]
    %v7281 = vshrl.u32 %v6550, 16
    %v7348 = vunpack.c.l.b16 %v7216
    %v7349 = vunpack.c.h.b16 %v7216
    %v7350 = vunpack.c.l.b16 %v7217
    %v7351 = vunpack.c.h.b16 %v7217
    %v7352 = vunpack.c.l.b16 %v7218
    %v7353 = vunpack.c.h.b16 %v7218
    %v7354 = vunpack.c.l.b16 %v7219
    %v7355 = vunpack.c.h.b16 %v7219
    %v7356 = vunpack.c.l.b16 %v7220
    %v7357 = vunpack.c.h.b16 %v7220
    %v7358 = vunpack.c.l.b16 %v7221
    %v7359 = vunpack.c.h.b16 %v7221
    %v7360 = vunpack.c.l.b16 %v7222
    %v7361 = vunpack.c.h.b16 %v7222
    %v7362 = vunpack.c.l.b16 %v7223
    %v7363 = vunpack.c.h.b16 %v7223
    %v7364 = vunpack.c.l.b16 %v7224
    %v7365 = vunpack.c.h.b16 %v7224
    %v7366 = vunpack.c.l.b16 %v7225
    %v7367 = vunpack.c.h.b16 %v7225
    %v7368 = vunpack.c.l.b16 %v7226
    %v7369 = vunpack.c.h.b16 %v7226
    %v7370 = vunpack.c.l.b16 %v7227
    %v7371 = vunpack.c.h.b16 %v7227
    %v7372 = vunpack.c.l.b16 %v7228
    %v7373 = vunpack.c.h.b16 %v7228
    %v7374 = vunpack.c.l.b16 %v7229
    %v7375 = vunpack.c.h.b16 %v7229
    %v7376 = vunpack.c.l.b16 %v7230
    %v7377 = vunpack.c.h.b16 %v7230
    %v7378 = vunpack.c.l.b16 %v7231
    %v7379 = vunpack.c.h.b16 %v7231
    %v7380 = vunpack.c.l.b16 %v7232
    %v7381 = vunpack.c.h.b16 %v7232
    %v7382 = vunpack.c.l.b16 %v7233
    %v7383 = vunpack.c.h.b16 %v7233
    %v7384 = vunpack.c.l.b16 %v7234
    %v7385 = vunpack.c.h.b16 %v7234
    %v7386 = vunpack.c.l.b16 %v7235
    %v7387 = vunpack.c.h.b16 %v7235
    %v7388 = vunpack.c.l.b16 %v7236
    %v7389 = vunpack.c.h.b16 %v7236
    %v7390 = vunpack.c.l.b16 %v7237
    %v7391 = vunpack.c.h.b16 %v7237
    %v7392 = vunpack.c.l.b16 %v7238
    %v7393 = vunpack.c.h.b16 %v7238
    %v7394 = vunpack.c.l.b16 %v7239
    %v7395 = vunpack.c.h.b16 %v7239
    %v7396 = vunpack.c.l.b16 %v7240
    %v7397 = vunpack.c.h.b16 %v7240
    %v7398 = vunpack.c.l.b16 %v7241
    %v7399 = vunpack.c.h.b16 %v7241
    %v7400 = vunpack.c.l.b16 %v7242
    %v7401 = vunpack.c.h.b16 %v7242
    %v7402 = vunpack.c.l.b16 %v7243
    %v7403 = vunpack.c.h.b16 %v7243
    %v7404 = vunpack.c.l.b16 %v7244
    %v7405 = vunpack.c.h.b16 %v7244
    %v7406 = vunpack.c.l.b16 %v7245
    %v7407 = vunpack.c.h.b16 %v7245
    %v7408 = vunpack.c.l.b16 %v7246
    %v7409 = vunpack.c.h.b16 %v7246
    %v7410 = vunpack.c.l.b16 %v7247
    %v7411 = vunpack.c.h.b16 %v7247
    %v7412 = vunpack.c.l.b16 %v7248
    %v7413 = vunpack.c.h.b16 %v7248
    %v7414 = vunpack.c.l.b16 %v7249
    %v7415 = vunpack.c.h.b16 %v7249
    %v7416 = vunpack.c.l.b16 %v7250
    %v7417 = vunpack.c.h.b16 %v7250
    %v7418 = vunpack.c.l.b16 %v7251
    %v7419 = vunpack.c.h.b16 %v7251
    %v7420 = vunpack.c.l.b16 %v7252
    %v7421 = vunpack.c.h.b16 %v7252
    %v7422 = vunpack.c.l.b16 %v7253
    %v7423 = vunpack.c.h.b16 %v7253
    %v7424 = vunpack.c.l.b16 %v7254
    %v7425 = vunpack.c.h.b16 %v7254
    %v7426 = vunpack.c.l.b16 %v7255
    %v7427 = vunpack.c.h.b16 %v7255
    %v7428 = vunpack.c.l.b16 %v7256
    %v7429 = vunpack.c.h.b16 %v7256
    %v7430 = vunpack.c.l.b16 %v7257
    %v7431 = vunpack.c.h.b16 %v7257
    %v7432 = vunpack.c.l.b16 %v7258
    %v7433 = vunpack.c.h.b16 %v7258
    %v7434 = vunpack.c.l.b16 %v7259
    %v7435 = vunpack.c.h.b16 %v7259
    %v7436 = vunpack.c.l.b16 %v7260
    %v7437 = vunpack.c.h.b16 %v7260
    %v7438 = vunpack.c.l.b16 %v7261
    %v7439 = vunpack.c.h.b16 %v7261
    %v7440 = vunpack.c.l.b16 %v7262
    %v7441 = vunpack.c.h.b16 %v7262
    %v7442 = vunpack.c.l.b16 %v7263
    %v7443 = vunpack.c.h.b16 %v7263
    %v7444 = vunpack.c.l.b16 %v7264
    %v7445 = vunpack.c.h.b16 %v7264
    %v7446 = vunpack.c.l.b16 %v7265
    %v7447 = vunpack.c.h.b16 %v7265
    %v7448 = vunpack.c.l.b16 %v7266
    %v7449 = vunpack.c.h.b16 %v7266
    %v7450 = vunpack.c.l.b16 %v7267
    %v7451 = vunpack.c.h.b16 %v7267
    %v7452 = vunpack.c.l.b16 %v7268
    %v7453 = vunpack.c.h.b16 %v7268
    %v7454 = vunpack.c.l.b16 %v7269
    %v7455 = vunpack.c.h.b16 %v7269
    %v7456 = vunpack.c.l.b16 %v7270
    %v7457 = vunpack.c.h.b16 %v7270
    %v7458 = vunpack.c.l.b16 %v7271
    %v7459 = vunpack.c.h.b16 %v7271
    %v7460 = vunpack.c.l.b16 %v7272
    %v7461 = vunpack.c.h.b16 %v7272
    %v7462 = vunpack.c.l.b16 %v7273
    %v7463 = vunpack.c.h.b16 %v7273
    %v7464 = vunpack.c.l.b16 %v7274
    %v7465 = vunpack.c.h.b16 %v7274
    %v7466 = vunpack.c.l.b16 %v7275
    %v7467 = vunpack.c.h.b16 %v7275
    %v7468 = vunpack.c.l.b16 %v7276
    %v7469 = vunpack.c.h.b16 %v7276
    %v7470 = vunpack.c.l.b16 %v7277
    %v7471 = vunpack.c.h.b16 %v7277
    %v7472 = vunpack.c.l.b16 %v7278
    %v7473 = vunpack.c.h.b16 %v7278
    %v7474 = vunpack.c.l.b16 %v7279
    %v7475 = vunpack.c.h.b16 %v7279
    %v7476 = vpack.c.b16 %v7356, %v7348
    %v7477 = vpack.c.b16 %v7357, %v7349
    %v7478 = vpack.c.b16 %v7358, %v7350
    %v7479 = vpack.c.b16 %v7359, %v7351
    %v7480 = vpack.c.b16 %v7360, %v7352
    %v7481 = vpack.c.b16 %v7361, %v7353
    %v7482 = vpack.c.b16 %v7362, %v7354
    %v7483 = vpack.c.b16 %v7363, %v7355
    %v7484 = vpack.c.b16 %v7372, %v7364
    %v7485 = vpack.c.b16 %v7373, %v7365
    %v7486 = vpack.c.b16 %v7374, %v7366
    %v7487 = vpack.c.b16 %v7375, %v7367
    %v7488 = vpack.c.b16 %v7376, %v7368
    %v7489 = vpack.c.b16 %v7377, %v7369
    %v7490 = vpack.c.b16 %v7378, %v7370
    %v7491 = vpack.c.b16 %v7379, %v7371
    %v7492 = vpack.c.b16 %v7388, %v7380
    %v7493 = vpack.c.b16 %v7389, %v7381
    %v7494 = vpack.c.b16 %v7390, %v7382
    %v7495 = vpack.c.b16 %v7391, %v7383
    %v7496 = vpack.c.b16 %v7392, %v7384
    %v7497 = vpack.c.b16 %v7393, %v7385
    %v7498 = vpack.c.b16 %v7394, %v7386
    %v7499 = vpack.c.b16 %v7395, %v7387
    %v7500 = vpack.c.b16 %v7404, %v7396
    %v7501 = vpack.c.b16 %v7405, %v7397
    %v7502 = vpack.c.b16 %v7406, %v7398
    %v7503 = vpack.c.b16 %v7407, %v7399
    %v7504 = vpack.c.b16 %v7408, %v7400
    %v7505 = vpack.c.b16 %v7409, %v7401
    %v7506 = vpack.c.b16 %v7410, %v7402
    %v7507 = vpack.c.b16 %v7411, %v7403
    %v7508 = vpack.c.b16 %v7420, %v7412
    %v7509 = vpack.c.b16 %v7421, %v7413
    %v7510 = vpack.c.b16 %v7422, %v7414
    %v7511 = vpack.c.b16 %v7423, %v7415
    %v7512 = vpack.c.b16 %v7424, %v7416
    %v7513 = vpack.c.b16 %v7425, %v7417
    %v7514 = vpack.c.b16 %v7426, %v7418
    %v7515 = vpack.c.b16 %v7427, %v7419
    %v7516 = vpack.c.b16 %v7436, %v7428
    %v7517 = vpack.c.b16 %v7437, %v7429
    %v7518 = vpack.c.b16 %v7438, %v7430
    %v7519 = vpack.c.b16 %v7439, %v7431
    %v7520 = vpack.c.b16 %v7440, %v7432
    %v7521 = vpack.c.b16 %v7441, %v7433
    %v7522 = vpack.c.b16 %v7442, %v7434
    %v7523 = vpack.c.b16 %v7443, %v7435
    %v7524 = vpack.c.b16 %v7452, %v7444
    %v7525 = vpack.c.b16 %v7453, %v7445
    %v7526 = vpack.c.b16 %v7454, %v7446
    %v7527 = vpack.c.b16 %v7455, %v7447
    %v7528 = vpack.c.b16 %v7456, %v7448
    %v7529 = vpack.c.b16 %v7457, %v7449
    %v7530 = vpack.c.b16 %v7458, %v7450
    %v7531 = vpack.c.b16 %v7459, %v7451
    %v7532 = vpack.c.b16 %v7468, %v7460
    %v7533 = vpack.c.b16 %v7469, %v7461
    %v7534 = vpack.c.b16 %v7470, %v7462
    %v7535 = vpack.c.b16 %v7471, %v7463
    %v7536 = vpack.c.b16 %v7472, %v7464
    %v7537 = vpack.c.b16 %v7473, %v7465
    %v7538 = vpack.c.b16 %v7474, %v7466
    %v7539 = vpack.c.b16 %v7475, %v7467
    %7604 = vmatprep.subr.bf16.mxu0 %v7477
    %7605 = vmatpush1.bf16.msra.mxu0 %v7476
    %7606 = vmatprep.subr.bf16.mxu0 %v7485
    %7607 = vmatpush1.bf16.msra.mxu0 %v7484
    %7608 = vmatprep.subr.bf16.mxu0 %v7493
    %7609 = vmatpush1.bf16.msra.mxu0 %v7492
    %7610 = vmatprep.subr.bf16.mxu0 %v7501
    %7611 = vmatpush1.bf16.msra.mxu0 %v7500
    %7612 = vmatprep.subr.bf16.mxu0 %v7509
    %7613 = vmatpush1.bf16.msra.mxu0 %v7508
    %7614 = vmatprep.subr.bf16.mxu0 %v7517
    %7615 = vmatpush1.bf16.msra.mxu0 %v7516
    %7616 = vmatprep.subr.bf16.mxu0 %v7525
    %7617 = vmatpush1.bf16.msra.mxu0 %v7524
    %7618 = vmatprep.subr.bf16.mxu0 %v7533
    %7619 = vmatpush1.bf16.msra.mxu0 %v7532
    %7620 = vmatprep.subr.bf16.mxu0 0
    %7621 = vmatpush1.bf16.msra.mxu0 0
    %7622 = vmatprep.subr.bf16.mxu0 0
    %7623 = vmatpush1.bf16.msra.mxu0 0
    %7624 = vmatprep.subr.bf16.mxu0 0
    %7625 = vmatpush1.bf16.msra.mxu0 0
    %7626 = vmatprep.subr.bf16.mxu0 0
    %7627 = vmatpush1.bf16.msra.mxu0 0
    %7628 = vmatprep.subr.bf16.mxu0 0
    %7629 = vmatpush1.bf16.msra.mxu0 0
    %7630 = vmatprep.subr.bf16.mxu0 0
    %7631 = vmatpush1.bf16.msra.mxu0 0
    %7632 = vmatprep.subr.bf16.mxu0 0
    %7633 = vmatpush1.bf16.msra.mxu0 0
    %7634 = vmatprep.subr.bf16.mxu0 0
    %7635 = vmatpush1.bf16.msra.mxu0 0
    %7636 = vmatprep.mubr.bf16.mxu0 0
    %7637 = vmatmul.mubr.bf16.gmra.mrb[0].mxu0 %v7281
    %v7638 = vpop.f32.mrb[0].mxu0
    %v7639 = vadd.f32 0.0, %v7638
    %v7640 = vpop.f32.mrb[0].mxu0
    %v7641 = vadd.f32 0.0, %v7640
    %v7642 = vpop.f32.mrb[0].mxu0
    %v7643 = vpop.f32.mrb[0].mxu0
    %7644 = vdwg.mxu0
    %7645 = vmatprep.subr.bf16.mxu0 %v7479
    %7646 = vmatpush1.bf16.msra.mxu0 %v7478
    %7647 = vmatprep.subr.bf16.mxu0 %v7487
    %7648 = vmatpush1.bf16.msra.mxu0 %v7486
    %7649 = vmatprep.subr.bf16.mxu0 %v7495
    %7650 = vmatpush1.bf16.msra.mxu0 %v7494
    %7651 = vmatprep.subr.bf16.mxu0 %v7503
    %7652 = vmatpush1.bf16.msra.mxu0 %v7502
    %7653 = vmatprep.subr.bf16.mxu0 %v7511
    %7654 = vmatpush1.bf16.msra.mxu0 %v7510
    %7655 = vmatprep.subr.bf16.mxu0 %v7519
    %7656 = vmatpush1.bf16.msra.mxu0 %v7518
    %7657 = vmatprep.subr.bf16.mxu0 %v7527
    %7658 = vmatpush1.bf16.msra.mxu0 %v7526
    %7659 = vmatprep.subr.bf16.mxu0 %v7535
    %7660 = vmatpush1.bf16.msra.mxu0 %v7534
    %7661 = vmatprep.subr.bf16.mxu0 0
    %7662 = vmatpush1.bf16.msra.mxu0 0
    %7663 = vmatprep.subr.bf16.mxu0 0
    %7664 = vmatpush1.bf16.msra.mxu0 0
    %7665 = vmatprep.subr.bf16.mxu0 0
    %7666 = vmatpush1.bf16.msra.mxu0 0
    %7667 = vmatprep.subr.bf16.mxu0 0
    %7668 = vmatpush1.bf16.msra.mxu0 0
    %7669 = vmatprep.subr.bf16.mxu0 0
    %7670 = vmatpush1.bf16.msra.mxu0 0
    %7671 = vmatprep.subr.bf16.mxu0 0
    %7672 = vmatpush1.bf16.msra.mxu0 0
    %7673 = vmatprep.subr.bf16.mxu0 0
    %7674 = vmatpush1.bf16.msra.mxu0 0
    %7675 = vmatprep.subr.bf16.mxu0 0
    %7676 = vmatpush1.bf16.msra.mxu0 0
    %7677 = vmatprep.mubr.bf16.mxu0 0
    %7678 = vmatmul.mubr.bf16.gmra.mrb[0].mxu0 %v7281
    %v7679 = vpop.f32.mrb[0].mxu0
    %v7680 = vadd.f32 0.0, %v7679
    %v7681 = vpop.f32.mrb[0].mxu0
    %v7682 = vadd.f32 0.0, %v7681
    %v7683 = vpop.f32.mrb[0].mxu0
    %v7684 = vpop.f32.mrb[0].mxu0
    %7685 = vdwg.mxu0
    %7686 = vmatprep.subr.bf16.mxu0 %v7481
    %7687 = vmatpush1.bf16.msra.mxu0 %v7480
    %7688 = vmatprep.subr.bf16.mxu0 %v7489
    %7689 = vmatpush1.bf16.msra.mxu0 %v7488
    %7690 = vmatprep.subr.bf16.mxu0 %v7497
    %7691 = vmatpush1.bf16.msra.mxu0 %v7496
    %7692 = vmatprep.subr.bf16.mxu0 %v7505
    %7693 = vmatpush1.bf16.msra.mxu0 %v7504
    %7694 = vmatprep.subr.bf16.mxu0 %v7513
    %7695 = vmatpush1.bf16.msra.mxu0 %v7512
    %7696 = vmatprep.subr.bf16.mxu0 %v7521
    %7697 = vmatpush1.bf16.msra.mxu0 %v7520
    %7698 = vmatprep.subr.bf16.mxu0 %v7529
    %7699 = vmatpush1.bf16.msra.mxu0 %v7528
    %7700 = vmatprep.subr.bf16.mxu0 %v7537
    %7701 = vmatpush1.bf16.msra.mxu0 %v7536
    %7702 = vmatprep.subr.bf16.mxu0 0
    %7703 = vmatpush1.bf16.msra.mxu0 0
    %7704 = vmatprep.subr.bf16.mxu0 0
    %7705 = vmatpush1.bf16.msra.mxu0 0
    %7706 = vmatprep.subr.bf16.mxu0 0
    %7707 = vmatpush1.bf16.msra.mxu0 0
    %7708 = vmatprep.subr.bf16.mxu0 0
    %7709 = vmatpush1.bf16.msra.mxu0 0
    %7710 = vmatprep.subr.bf16.mxu0 0
    %7711 = vmatpush1.bf16.msra.mxu0 0
    %7712 = vmatprep.subr.bf16.mxu0 0
    %7713 = vmatpush1.bf16.msra.mxu0 0
    %7714 = vmatprep.subr.bf16.mxu0 0
    %7715 = vmatpush1.bf16.msra.mxu0 0
    %7716 = vmatprep.subr.bf16.mxu0 0
    %7717 = vmatpush1.bf16.msra.mxu0 0
    %7718 = vmatprep.mubr.bf16.mxu0 0
    %7719 = vmatmul.mubr.bf16.gmra.mrb[0].mxu0 %v7281
    %v7720 = vpop.f32.mrb[0].mxu0
    %v7721 = vadd.f32 0.0, %v7720
    %v7722 = vpop.f32.mrb[0].mxu0
    %v7723 = vadd.f32 0.0, %v7722
    %v7724 = vpop.f32.mrb[0].mxu0
    %v7725 = vpop.f32.mrb[0].mxu0
    %7726 = vdwg.mxu0
    %7727 = vmatprep.subr.bf16.mxu0 %v7483
    %7728 = vmatpush1.bf16.msra.mxu0 %v7482
    %7729 = vmatprep.subr.bf16.mxu0 %v7491
    %7730 = vmatpush1.bf16.msra.mxu0 %v7490
    %7731 = vmatprep.subr.bf16.mxu0 %v7499
    %7732 = vmatpush1.bf16.msra.mxu0 %v7498
    %7733 = vmatprep.subr.bf16.mxu0 %v7507
    %7734 = vmatpush1.bf16.msra.mxu0 %v7506
    %7735 = vmatprep.subr.bf16.mxu0 %v7515
    %7736 = vmatpush1.bf16.msra.mxu0 %v7514
    %7737 = vmatprep.subr.bf16.mxu0 %v7523
    %7738 = vmatpush1.bf16.msra.mxu0 %v7522
    %7739 = vmatprep.subr.bf16.mxu0 %v7531
    %7740 = vmatpush1.bf16.msra.mxu0 %v7530
    %7741 = vmatprep.subr.bf16.mxu0 %v7539
    %7742 = vmatpush1.bf16.msra.mxu0 %v7538
    %7743 = vmatprep.subr.bf16.mxu0 0
    %7744 = vmatpush1.bf16.msra.mxu0 0
    %7745 = vmatprep.subr.bf16.mxu0 0
    %7746 = vmatpush1.bf16.msra.mxu0 0
    %7747 = vmatprep.subr.bf16.mxu0 0
    %7748 = vmatpush1.bf16.msra.mxu0 0
    %7749 = vmatprep.subr.bf16.mxu0 0
    %7750 = vmatpush1.bf16.msra.mxu0 0
    %7751 = vmatprep.subr.bf16.mxu0 0
    %7752 = vmatpush1.bf16.msra.mxu0 0
    %7753 = vmatprep.subr.bf16.mxu0 0
    %7754 = vmatpush1.bf16.msra.mxu0 0
    %7755 = vmatprep.subr.bf16.mxu0 0
    %7756 = vmatpush1.bf16.msra.mxu0 0
    %7757 = vmatprep.subr.bf16.mxu0 0
    %7758 = vmatpush1.bf16.msra.mxu0 0
    %7759 = vmatprep.mubr.bf16.mxu0 0
    %7760 = vmatmul.mubr.bf16.gmra.mrb[0].mxu0 %v7281
    %v7761 = vpop.f32.mrb[0].mxu0
    %v7762 = vadd.f32 0.0, %v7761
    %v7763 = vpop.f32.mrb[0].mxu0
    %v7764 = vadd.f32 0.0, %v7763
    %v7765 = vpop.f32.mrb[0].mxu0
    %v7766 = vpop.f32.mrb[0].mxu0
    %7767 = vdwg.mxu0
    %v7768 = vadd.f32 %v7035, %v7639
    %v7769 = vadd.f32 %v7036, %v7641
    %v7770 = vadd.f32 %v7037, %v7680
    %v7771 = vadd.f32 %v7038, %v7682
    %v7772 = vadd.f32 %v7039, %v7721
    %v7773 = vadd.f32 %v7040, %v7723
    %v7774 = vadd.f32 %v7041, %v7762
    %v7775 = vadd.f32 %v7042, %v7764
    %v7777 = vshrl.u32 %v7043, 16
    %7780 = vmatprep.subr.bf16.mxu0 %v7477
    %7781 = vmatpush1.bf16.msra.mxu0 %v7476
    %7782 = vmatprep.subr.bf16.mxu0 %v7485
    %7783 = vmatpush1.bf16.msra.mxu0 %v7484
    %7784 = vmatprep.subr.bf16.mxu0 %v7493
    %7785 = vmatpush1.bf16.msra.mxu0 %v7492
    %7786 = vmatprep.subr.bf16.mxu0 %v7501
    %7787 = vmatpush1.bf16.msra.mxu0 %v7500
    %7788 = vmatprep.subr.bf16.mxu0 %v7509
    %7789 = vmatpush1.bf16.msra.mxu0 %v7508
    %7790 = vmatprep.subr.bf16.mxu0 %v7517
    %7791 = vmatpush1.bf16.msra.mxu0 %v7516
    %7792 = vmatprep.subr.bf16.mxu0 %v7525
    %7793 = vmatpush1.bf16.msra.mxu0 %v7524
    %7794 = vmatprep.subr.bf16.mxu0 %v7533
    %7795 = vmatpush1.bf16.msra.mxu0 %v7532
    %7796 = vmatprep.subr.bf16.mxu0 0
    %7797 = vmatpush1.bf16.msra.mxu0 0
    %7798 = vmatprep.subr.bf16.mxu0 0
    %7799 = vmatpush1.bf16.msra.mxu0 0
    %7800 = vmatprep.subr.bf16.mxu0 0
    %7801 = vmatpush1.bf16.msra.mxu0 0
    %7802 = vmatprep.subr.bf16.mxu0 0
    %7803 = vmatpush1.bf16.msra.mxu0 0
    %7804 = vmatprep.subr.bf16.mxu0 0
    %7805 = vmatpush1.bf16.msra.mxu0 0
    %7806 = vmatprep.subr.bf16.mxu0 0
    %7807 = vmatpush1.bf16.msra.mxu0 0
    %7808 = vmatprep.subr.bf16.mxu0 0
    %7809 = vmatpush1.bf16.msra.mxu0 0
    %7810 = vmatprep.subr.bf16.mxu0 0
    %7811 = vmatpush1.bf16.msra.mxu0 0
    %7812 = vmatprep.mubr.bf16.mxu0 0
    %7813 = vmatmul.mubr.bf16.gmra.mrb[0].mxu0 %v7777
    %v7814 = vpop.f32.mrb[0].mxu0
    %v7815 = vadd.f32 0.0, %v7814
    %v7816 = vpop.f32.mrb[0].mxu0
    %v7817 = vadd.f32 0.0, %v7816
    %v7818 = vpop.f32.mrb[0].mxu0
    %v7819 = vpop.f32.mrb[0].mxu0
    %7820 = vdwg.mxu0
    %7821 = vmatprep.subr.bf16.mxu0 %v7479
    %7822 = vmatpush1.bf16.msra.mxu0 %v7478
    %7823 = vmatprep.subr.bf16.mxu0 %v7487
    %7824 = vmatpush1.bf16.msra.mxu0 %v7486
    %7825 = vmatprep.subr.bf16.mxu0 %v7495
    %7826 = vmatpush1.bf16.msra.mxu0 %v7494
    %7827 = vmatprep.subr.bf16.mxu0 %v7503
    %7828 = vmatpush1.bf16.msra.mxu0 %v7502
    %7829 = vmatprep.subr.bf16.mxu0 %v7511
    %7830 = vmatpush1.bf16.msra.mxu0 %v7510
    %7831 = vmatprep.subr.bf16.mxu0 %v7519
    %7832 = vmatpush1.bf16.msra.mxu0 %v7518
    %7833 = vmatprep.subr.bf16.mxu0 %v7527
    %7834 = vmatpush1.bf16.msra.mxu0 %v7526
    %7835 = vmatprep.subr.bf16.mxu0 %v7535
    %7836 = vmatpush1.bf16.msra.mxu0 %v7534
    %7837 = vmatprep.subr.bf16.mxu0 0
    %7838 = vmatpush1.bf16.msra.mxu0 0
    %7839 = vmatprep.subr.bf16.mxu0 0
    %7840 = vmatpush1.bf16.msra.mxu0 0
    %7841 = vmatprep.subr.bf16.mxu0 0
    %7842 = vmatpush1.bf16.msra.mxu0 0
    %7843 = vmatprep.subr.bf16.mxu0 0
    %7844 = vmatpush1.bf16.msra.mxu0 0
    %7845 = vmatprep.subr.bf16.mxu0 0
    %7846 = vmatpush1.bf16.msra.mxu0 0
    %7847 = vmatprep.subr.bf16.mxu0 0
    %7848 = vmatpush1.bf16.msra.mxu0 0
    %7849 = vmatprep.subr.bf16.mxu0 0
    %7850 = vmatpush1.bf16.msra.mxu0 0
    %7851 = vmatprep.subr.bf16.mxu0 0
    %7852 = vmatpush1.bf16.msra.mxu0 0
    %7853 = vmatprep.mubr.bf16.mxu0 0
    %7854 = vmatmul.mubr.bf16.gmra.mrb[0].mxu0 %v7777
    %v7855 = vpop.f32.mrb[0].mxu0
    %v7856 = vadd.f32 0.0, %v7855
    %v7857 = vpop.f32.mrb[0].mxu0
    %v7858 = vadd.f32 0.0, %v7857
    %v7859 = vpop.f32.mrb[0].mxu0
    %v7860 = vpop.f32.mrb[0].mxu0
    %7861 = vdwg.mxu0
    %7862 = vmatprep.subr.bf16.mxu0 %v7481
    %7863 = vmatpush1.bf16.msra.mxu0 %v7480
    %7864 = vmatprep.subr.bf16.mxu0 %v7489
    %7865 = vmatpush1.bf16.msra.mxu0 %v7488
    %7866 = vmatprep.subr.bf16.mxu0 %v7497
    %7867 = vmatpush1.bf16.msra.mxu0 %v7496
    %7868 = vmatprep.subr.bf16.mxu0 %v7505
    %7869 = vmatpush1.bf16.msra.mxu0 %v7504
    %7870 = vmatprep.subr.bf16.mxu0 %v7513
    %7871 = vmatpush1.bf16.msra.mxu0 %v7512
    %7872 = vmatprep.subr.bf16.mxu0 %v7521
    %7873 = vmatpush1.bf16.msra.mxu0 %v7520
    %7874 = vmatprep.subr.bf16.mxu0 %v7529
    %7875 = vmatpush1.bf16.msra.mxu0 %v7528
    %7876 = vmatprep.subr.bf16.mxu0 %v7537
    %7877 = vmatpush1.bf16.msra.mxu0 %v7536
    %7878 = vmatprep.subr.bf16.mxu0 0
    %7879 = vmatpush1.bf16.msra.mxu0 0
    %7880 = vmatprep.subr.bf16.mxu0 0
    %7881 = vmatpush1.bf16.msra.mxu0 0
    %7882 = vmatprep.subr.bf16.mxu0 0
    %7883 = vmatpush1.bf16.msra.mxu0 0
    %7884 = vmatprep.subr.bf16.mxu0 0
    %7885 = vmatpush1.bf16.msra.mxu0 0
    %7886 = vmatprep.subr.bf16.mxu0 0
    %7887 = vmatpush1.bf16.msra.mxu0 0
    %7888 = vmatprep.subr.bf16.mxu0 0
    %7889 = vmatpush1.bf16.msra.mxu0 0
    %7890 = vmatprep.subr.bf16.mxu0 0
    %7891 = vmatpush1.bf16.msra.mxu0 0
    %7892 = vmatprep.subr.bf16.mxu0 0
    %7893 = vmatpush1.bf16.msra.mxu0 0
    %7894 = vmatprep.mubr.bf16.mxu0 0
    %7895 = vmatmul.mubr.bf16.gmra.mrb[0].mxu0 %v7777
    %v7896 = vpop.f32.mrb[0].mxu0
    %v7897 = vadd.f32 0.0, %v7896
    %v7898 = vpop.f32.mrb[0].mxu0
    %v7899 = vadd.f32 0.0, %v7898
    %v7900 = vpop.f32.mrb[0].mxu0
    %v7901 = vpop.f32.mrb[0].mxu0
    %7902 = vdwg.mxu0
    %7903 = vmatprep.subr.bf16.mxu0 %v7483
    %7904 = vmatpush1.bf16.msra.mxu0 %v7482
    %7905 = vmatprep.subr.bf16.mxu0 %v7491
    %7906 = vmatpush1.bf16.msra.mxu0 %v7490
    %7907 = vmatprep.subr.bf16.mxu0 %v7499
    %7908 = vmatpush1.bf16.msra.mxu0 %v7498
    %7909 = vmatprep.subr.bf16.mxu0 %v7507
    %7910 = vmatpush1.bf16.msra.mxu0 %v7506
    %7911 = vmatprep.subr.bf16.mxu0 %v7515
    %7912 = vmatpush1.bf16.msra.mxu0 %v7514
    %7913 = vmatprep.subr.bf16.mxu0 %v7523
    %7914 = vmatpush1.bf16.msra.mxu0 %v7522
    %7915 = vmatprep.subr.bf16.mxu0 %v7531
    %7916 = vmatpush1.bf16.msra.mxu0 %v7530
    %7917 = vmatprep.subr.bf16.mxu0 %v7539
    %7918 = vmatpush1.bf16.msra.mxu0 %v7538
    %7919 = vmatprep.subr.bf16.mxu0 0
    %7920 = vmatpush1.bf16.msra.mxu0 0
    %7921 = vmatprep.subr.bf16.mxu0 0
    %7922 = vmatpush1.bf16.msra.mxu0 0
    %7923 = vmatprep.subr.bf16.mxu0 0
    %7924 = vmatpush1.bf16.msra.mxu0 0
    %7925 = vmatprep.subr.bf16.mxu0 0
    %7926 = vmatpush1.bf16.msra.mxu0 0
    %7927 = vmatprep.subr.bf16.mxu0 0
    %7928 = vmatpush1.bf16.msra.mxu0 0
    %7929 = vmatprep.subr.bf16.mxu0 0
    %7930 = vmatpush1.bf16.msra.mxu0 0
    %7931 = vmatprep.subr.bf16.mxu0 0
    %7932 = vmatpush1.bf16.msra.mxu0 0
    %7933 = vmatprep.subr.bf16.mxu0 0
    %7934 = vmatpush1.bf16.msra.mxu0 0
    %7935 = vmatprep.mubr.bf16.mxu0 0
    %7936 = vmatmul.mubr.bf16.gmra.mrb[0].mxu0 %v7777
    %v7937 = vpop.f32.mrb[0].mxu0
    %v7938 = vadd.f32 0.0, %v7937
    %v7939 = vpop.f32.mrb[0].mxu0
    %v7940 = vadd.f32 0.0, %v7939
    %v7941 = vpop.f32.mrb[0].mxu0
    %v7942 = vpop.f32.mrb[0].mxu0
    %7943 = vdwg.mxu0
    %v7944 = vadd.f32 %v7208, %v7815
    %v7945 = vadd.f32 %v7209, %v7817
    %v7946 = vadd.f32 %v7210, %v7856
    %v7947 = vadd.f32 %v7211, %v7858
    %v7948 = vadd.f32 %v7212, %v7897
    %v7949 = vadd.f32 %v7213, %v7899
    %v7950 = vadd.f32 %v7214, %v7938
    %v7951 = vadd.f32 %v7215, %v7940
    %v7952 = vld [vmem:[#allocation10 + $0x1400] sm:$0xff]
    %v7953 = vld [vmem:[#allocation10 + $0x1408] sm:$0xff]
    %v7954 = vld [vmem:[#allocation10 + $0x1410] sm:$0xff]
    %v7955 = vld [vmem:[#allocation10 + $0x1418] sm:$0xff]
    %v7956 = vld [vmem:[#allocation10 + $0x1420] sm:$0xff]
    %v7957 = vld [vmem:[#allocation10 + $0x1428] sm:$0xff]
    %v7958 = vld [vmem:[#allocation10 + $0x1430] sm:$0xff]
    %v7959 = vld [vmem:[#allocation10 + $0x1438] sm:$0xff]
    %v7960 = vld [vmem:[#allocation10 + $0x1440] sm:$0xff]
    %v7961 = vld [vmem:[#allocation10 + $0x1448] sm:$0xff]
    %v7962 = vld [vmem:[#allocation10 + $0x1450] sm:$0xff]
    %v7963 = vld [vmem:[#allocation10 + $0x1458] sm:$0xff]
    %v7964 = vld [vmem:[#allocation10 + $0x1460] sm:$0xff]
    %v7965 = vld [vmem:[#allocation10 + $0x1468] sm:$0xff]
    %v7966 = vld [vmem:[#allocation10 + $0x1470] sm:$0xff]
    %v7967 = vld [vmem:[#allocation10 + $0x1478] sm:$0xff]
    %v7968 = vld [vmem:[#allocation10 + $0x1480] sm:$0xff]
    %v7969 = vld [vmem:[#allocation10 + $0x1488] sm:$0xff]
    %v7970 = vld [vmem:[#allocation10 + $0x1490] sm:$0xff]
    %v7971 = vld [vmem:[#allocation10 + $0x1498] sm:$0xff]
    %v7972 = vld [vmem:[#allocation10 + $0x14a0] sm:$0xff]
    %v7973 = vld [vmem:[#allocation10 + $0x14a8] sm:$0xff]
    %v7974 = vld [vmem:[#allocation10 + $0x14b0] sm:$0xff]
    %v7975 = vld [vmem:[#allocation10 + $0x14b8] sm:$0xff]
    %v7976 = vld [vmem:[#allocation10 + $0x14c0] sm:$0xff]
    %v7977 = vld [vmem:[#allocation10 + $0x14c8] sm:$0xff]
    %v7978 = vld [vmem:[#allocation10 + $0x14d0] sm:$0xff]
    %v7979 = vld [vmem:[#allocation10 + $0x14d8] sm:$0xff]
    %v7980 = vld [vmem:[#allocation10 + $0x14e0] sm:$0xff]
    %v7981 = vld [vmem:[#allocation10 + $0x14e8] sm:$0xff]
    %v7982 = vld [vmem:[#allocation10 + $0x14f0] sm:$0xff]
    %v7983 = vld [vmem:[#allocation10 + $0x14f8] sm:$0xff]
    %v7984 = vld [vmem:[#allocation10 + $0x1500] sm:$0xff]
    %v7985 = vld [vmem:[#allocation10 + $0x1508] sm:$0xff]
    %v7986 = vld [vmem:[#allocation10 + $0x1510] sm:$0xff]
    %v7987 = vld [vmem:[#allocation10 + $0x1518] sm:$0xff]
    %v7988 = vld [vmem:[#allocation10 + $0x1520] sm:$0xff]
    %v7989 = vld [vmem:[#allocation10 + $0x1528] sm:$0xff]
    %v7990 = vld [vmem:[#allocation10 + $0x1530] sm:$0xff]
    %v7991 = vld [vmem:[#allocation10 + $0x1538] sm:$0xff]
    %v7992 = vld [vmem:[#allocation10 + $0x1540] sm:$0xff]
    %v7993 = vld [vmem:[#allocation10 + $0x1548] sm:$0xff]
    %v7994 = vld [vmem:[#allocation10 + $0x1550] sm:$0xff]
    %v7995 = vld [vmem:[#allocation10 + $0x1558] sm:$0xff]
    %v7996 = vld [vmem:[#allocation10 + $0x1560] sm:$0xff]
    %v7997 = vld [vmem:[#allocation10 + $0x1568] sm:$0xff]
    %v7998 = vld [vmem:[#allocation10 + $0x1570] sm:$0xff]
    %v7999 = vld [vmem:[#allocation10 + $0x1578] sm:$0xff]
    %v8000 = vld [vmem:[#allocation10 + $0x1580] sm:$0xff]
    %v8001 = vld [vmem:[#allocation10 + $0x1588] sm:$0xff]
    %v8002 = vld [vmem:[#allocation10 + $0x1590] sm:$0xff]
    %v8003 = vld [vmem:[#allocation10 + $0x1598] sm:$0xff]
    %v8004 = vld [vmem:[#allocation10 + $0x15a0] sm:$0xff]
    %v8005 = vld [vmem:[#allocation10 + $0x15a8] sm:$0xff]
    %v8006 = vld [vmem:[#allocation10 + $0x15b0] sm:$0xff]
    %v8007 = vld [vmem:[#allocation10 + $0x15b8] sm:$0xff]
    %v8008 = vld [vmem:[#allocation10 + $0x15c0] sm:$0xff]
    %v8009 = vld [vmem:[#allocation10 + $0x15c8] sm:$0xff]
    %v8010 = vld [vmem:[#allocation10 + $0x15d0] sm:$0xff]
    %v8011 = vld [vmem:[#allocation10 + $0x15d8] sm:$0xff]
    %v8012 = vld [vmem:[#allocation10 + $0x15e0] sm:$0xff]
    %v8013 = vld [vmem:[#allocation10 + $0x15e8] sm:$0xff]
    %v8014 = vld [vmem:[#allocation10 + $0x15f0] sm:$0xff]
    %v8015 = vld [vmem:[#allocation10 + $0x15f8] sm:$0xff]
    %v8017 = vrot.slane %v6550, 1
    %v8083 = vunpack.c.l.b16 %v7952
    %v8084 = vunpack.c.h.b16 %v7952
    %v8085 = vunpack.c.l.b16 %v7953
    %v8086 = vunpack.c.h.b16 %v7953
    %v8087 = vunpack.c.l.b16 %v7954
    %v8088 = vunpack.c.h.b16 %v7954
    %v8089 = vunpack.c.l.b16 %v7955
    %v8090 = vunpack.c.h.b16 %v7955
    %v8091 = vunpack.c.l.b16 %v7956
    %v8092 = vunpack.c.h.b16 %v7956
    %v8093 = vunpack.c.l.b16 %v7957
    %v8094 = vunpack.c.h.b16 %v7957
    %v8095 = vunpack.c.l.b16 %v7958
    %v8096 = vunpack.c.h.b16 %v7958
    %v8097 = vunpack.c.l.b16 %v7959
    %v8098 = vunpack.c.h.b16 %v7959
    %v8099 = vunpack.c.l.b16 %v7960
    %v8100 = vunpack.c.h.b16 %v7960
    %v8101 = vunpack.c.l.b16 %v7961
    %v8102 = vunpack.c.h.b16 %v7961
    %v8103 = vunpack.c.l.b16 %v7962
    %v8104 = vunpack.c.h.b16 %v7962
    %v8105 = vunpack.c.l.b16 %v7963
    %v8106 = vunpack.c.h.b16 %v7963
    %v8107 = vunpack.c.l.b16 %v7964
    %v8108 = vunpack.c.h.b16 %v7964
    %v8109 = vunpack.c.l.b16 %v7965
    %v8110 = vunpack.c.h.b16 %v7965
    %v8111 = vunpack.c.l.b16 %v7966
    %v8112 = vunpack.c.h.b16 %v7966
    %v8113 = vunpack.c.l.b16 %v7967
    %v8114 = vunpack.c.h.b16 %v7967
    %v8115 = vunpack.c.l.b16 %v7968
    %v8116 = vunpack.c.h.b16 %v7968
    %v8117 = vunpack.c.l.b16 %v7969
    %v8118 = vunpack.c.h.b16 %v7969
    %v8119 = vunpack.c.l.b16 %v7970
    %v8120 = vunpack.c.h.b16 %v7970
    %v8121 = vunpack.c.l.b16 %v7971
    %v8122 = vunpack.c.h.b16 %v7971
    %v8123 = vunpack.c.l.b16 %v7972
    %v8124 = vunpack.c.h.b16 %v7972
    %v8125 = vunpack.c.l.b16 %v7973
    %v8126 = vunpack.c.h.b16 %v7973
    %v8127 = vunpack.c.l.b16 %v7974
    %v8128 = vunpack.c.h.b16 %v7974
    %v8129 = vunpack.c.l.b16 %v7975
    %v8130 = vunpack.c.h.b16 %v7975
    %v8131 = vunpack.c.l.b16 %v7976
    %v8132 = vunpack.c.h.b16 %v7976
    %v8133 = vunpack.c.l.b16 %v7977
    %v8134 = vunpack.c.h.b16 %v7977
    %v8135 = vunpack.c.l.b16 %v7978
    %v8136 = vunpack.c.h.b16 %v7978
    %v8137 = vunpack.c.l.b16 %v7979
    %v8138 = vunpack.c.h.b16 %v7979
    %v8139 = vunpack.c.l.b16 %v7980
    %v8140 = vunpack.c.h.b16 %v7980
    %v8141 = vunpack.c.l.b16 %v7981
    %v8142 = vunpack.c.h.b16 %v7981
    %v8143 = vunpack.c.l.b16 %v7982
    %v8144 = vunpack.c.h.b16 %v7982
    %v8145 = vunpack.c.l.b16 %v7983
    %v8146 = vunpack.c.h.b16 %v7983
    %v8147 = vunpack.c.l.b16 %v7984
    %v8148 = vunpack.c.h.b16 %v7984
    %v8149 = vunpack.c.l.b16 %v7985
    %v8150 = vunpack.c.h.b16 %v7985
    %v8151 = vunpack.c.l.b16 %v7986
    %v8152 = vunpack.c.h.b16 %v7986
    %v8153 = vunpack.c.l.b16 %v7987
    %v8154 = vunpack.c.h.b16 %v7987
    %v8155 = vunpack.c.l.b16 %v7988
    %v8156 = vunpack.c.h.b16 %v7988
    %v8157 = vunpack.c.l.b16 %v7989
    %v8158 = vunpack.c.h.b16 %v7989
    %v8159 = vunpack.c.l.b16 %v7990
    %v8160 = vunpack.c.h.b16 %v7990
    %v8161 = vunpack.c.l.b16 %v7991
    %v8162 = vunpack.c.h.b16 %v7991
    %v8163 = vunpack.c.l.b16 %v7992
    %v8164 = vunpack.c.h.b16 %v7992
    %v8165 = vunpack.c.l.b16 %v7993
    %v8166 = vunpack.c.h.b16 %v7993
    %v8167 = vunpack.c.l.b16 %v7994
    %v8168 = vunpack.c.h.b16 %v7994
    %v8169 = vunpack.c.l.b16 %v7995
    %v8170 = vunpack.c.h.b16 %v7995
    %v8171 = vunpack.c.l.b16 %v7996
    %v8172 = vunpack.c.h.b16 %v7996
    %v8173 = vunpack.c.l.b16 %v7997
    %v8174 = vunpack.c.h.b16 %v7997
    %v8175 = vunpack.c.l.b16 %v7998
    %v8176 = vunpack.c.h.b16 %v7998
    %v8177 = vunpack.c.l.b16 %v7999
    %v8178 = vunpack.c.h.b16 %v7999
    %v8179 = vunpack.c.l.b16 %v8000
    %v8180 = vunpack.c.h.b16 %v8000
    %v8181 = vunpack.c.l.b16 %v8001
    %v8182 = vunpack.c.h.b16 %v8001
    %v8183 = vunpack.c.l.b16 %v8002
    %v8184 = vunpack.c.h.b16 %v8002
    %v8185 = vunpack.c.l.b16 %v8003
    %v8186 = vunpack.c.h.b16 %v8003
    %v8187 = vunpack.c.l.b16 %v8004
    %v8188 = vunpack.c.h.b16 %v8004
    %v8189 = vunpack.c.l.b16 %v8005
    %v8190 = vunpack.c.h.b16 %v8005
    %v8191 = vunpack.c.l.b16 %v8006
    %v8192 = vunpack.c.h.b16 %v8006
    %v8193 = vunpack.c.l.b16 %v8007
    %v8194 = vunpack.c.h.b16 %v8007
    %v8195 = vunpack.c.l.b16 %v8008
    %v8196 = vunpack.c.h.b16 %v8008
    %v8197 = vunpack.c.l.b16 %v8009
    %v8198 = vunpack.c.h.b16 %v8009
    %v8199 = vunpack.c.l.b16 %v8010
    %v8200 = vunpack.c.h.b16 %v8010
    %v8201 = vunpack.c.l.b16 %v8011
    %v8202 = vunpack.c.h.b16 %v8011
    %v8203 = vunpack.c.l.b16 %v8012
    %v8204 = vunpack.c.h.b16 %v8012
    %v8205 = vunpack.c.l.b16 %v8013
    %v8206 = vunpack.c.h.b16 %v8013
    %v8207 = vunpack.c.l.b16 %v8014
    %v8208 = vunpack.c.h.b16 %v8014
    %v8209 = vunpack.c.l.b16 %v8015
    %v8210 = vunpack.c.h.b16 %v8015
    %v8211 = vpack.c.b16 %v8091, %v8083
    %v8212 = vpack.c.b16 %v8092, %v8084
    %v8213 = vpack.c.b16 %v8093, %v8085
    %v8214 = vpack.c.b16 %v8094, %v8086
    %v8215 = vpack.c.b16 %v8095, %v8087
    %v8216 = vpack.c.b16 %v8096, %v8088
    %v8217 = vpack.c.b16 %v8097, %v8089
    %v8218 = vpack.c.b16 %v8098, %v8090
    %v8219 = vpack.c.b16 %v8107, %v8099
    %v8220 = vpack.c.b16 %v8108, %v8100
    %v8221 = vpack.c.b16 %v8109, %v8101
    %v8222 = vpack.c.b16 %v8110, %v8102
    %v8223 = vpack.c.b16 %v8111, %v8103
    %v8224 = vpack.c.b16 %v8112, %v8104
    %v8225 = vpack.c.b16 %v8113, %v8105
    %v8226 = vpack.c.b16 %v8114, %v8106
    %v8227 = vpack.c.b16 %v8123, %v8115
    %v8228 = vpack.c.b16 %v8124, %v8116
    %v8229 = vpack.c.b16 %v8125, %v8117
    %v8230 = vpack.c.b16 %v8126, %v8118
    %v8231 = vpack.c.b16 %v8127, %v8119
    %v8232 = vpack.c.b16 %v8128, %v8120
    %v8233 = vpack.c.b16 %v8129, %v8121
    %v8234 = vpack.c.b16 %v8130, %v8122
    %v8235 = vpack.c.b16 %v8139, %v8131
    %v8236 = vpack.c.b16 %v8140, %v8132
    %v8237 = vpack.c.b16 %v8141, %v8133
    %v8238 = vpack.c.b16 %v8142, %v8134
    %v8239 = vpack.c.b16 %v8143, %v8135
    %v8240 = vpack.c.b16 %v8144, %v8136
    %v8241 = vpack.c.b16 %v8145, %v8137
    %v8242 = vpack.c.b16 %v8146, %v8138
    %v8243 = vpack.c.b16 %v8155, %v8147
    %v8244 = vpack.c.b16 %v8156, %v8148
    %v8245 = vpack.c.b16 %v8157, %v8149
    %v8246 = vpack.c.b16 %v8158, %v8150
    %v8247 = vpack.c.b16 %v8159, %v8151
    %v8248 = vpack.c.b16 %v8160, %v8152
    %v8249 = vpack.c.b16 %v8161, %v8153
    %v8250 = vpack.c.b16 %v8162, %v8154
    %v8251 = vpack.c.b16 %v8171, %v8163
    %v8252 = vpack.c.b16 %v8172, %v8164
    %v8253 = vpack.c.b16 %v8173, %v8165
    %v8254 = vpack.c.b16 %v8174, %v8166
    %v8255 = vpack.c.b16 %v8175, %v8167
    %v8256 = vpack.c.b16 %v8176, %v8168
    %v8257 = vpack.c.b16 %v8177, %v8169
    %v8258 = vpack.c.b16 %v8178, %v8170
    %v8259 = vpack.c.b16 %v8187, %v8179
    %v8260 = vpack.c.b16 %v8188, %v8180
    %v8261 = vpack.c.b16 %v8189, %v8181
    %v8262 = vpack.c.b16 %v8190, %v8182
    %v8263 = vpack.c.b16 %v8191, %v8183
    %v8264 = vpack.c.b16 %v8192, %v8184
    %v8265 = vpack.c.b16 %v8193, %v8185
    %v8266 = vpack.c.b16 %v8194, %v8186
    %v8267 = vpack.c.b16 %v8203, %v8195
    %v8268 = vpack.c.b16 %v8204, %v8196
    %v8269 = vpack.c.b16 %v8205, %v8197
    %v8270 = vpack.c.b16 %v8206, %v8198
    %v8271 = vpack.c.b16 %v8207, %v8199
    %v8272 = vpack.c.b16 %v8208, %v8200
    %v8273 = vpack.c.b16 %v8209, %v8201
    %v8274 = vpack.c.b16 %v8210, %v8202
    %8339 = vmatprep.subr.bf16.mxu0 %v8212
    %8340 = vmatpush1.bf16.msra.mxu0 %v8211
    %8341 = vmatprep.subr.bf16.mxu0 %v8220
    %8342 = vmatpush1.bf16.msra.mxu0 %v8219
    %8343 = vmatprep.subr.bf16.mxu0 %v8228
    %8344 = vmatpush1.bf16.msra.mxu0 %v8227
    %8345 = vmatprep.subr.bf16.mxu0 %v8236
    %8346 = vmatpush1.bf16.msra.mxu0 %v8235
    %8347 = vmatprep.subr.bf16.mxu0 %v8244
    %8348 = vmatpush1.bf16.msra.mxu0 %v8243
    %8349 = vmatprep.subr.bf16.mxu0 %v8252
    %8350 = vmatpush1.bf16.msra.mxu0 %v8251
    %8351 = vmatprep.subr.bf16.mxu0 %v8260
    %8352 = vmatpush1.bf16.msra.mxu0 %v8259
    %8353 = vmatprep.subr.bf16.mxu0 %v8268
    %8354 = vmatpush1.bf16.msra.mxu0 %v8267
    %8355 = vmatprep.subr.bf16.mxu0 0
    %8356 = vmatpush1.bf16.msra.mxu0 0
    %8357 = vmatprep.subr.bf16.mxu0 0
    %8358 = vmatpush1.bf16.msra.mxu0 0
    %8359 = vmatprep.subr.bf16.mxu0 0
    %8360 = vmatpush1.bf16.msra.mxu0 0
    %8361 = vmatprep.subr.bf16.mxu0 0
    %8362 = vmatpush1.bf16.msra.mxu0 0
    %8363 = vmatprep.subr.bf16.mxu0 0
    %8364 = vmatpush1.bf16.msra.mxu0 0
    %8365 = vmatprep.subr.bf16.mxu0 0
    %8366 = vmatpush1.bf16.msra.mxu0 0
    %8367 = vmatprep.subr.bf16.mxu0 0
    %8368 = vmatpush1.bf16.msra.mxu0 0
    %8369 = vmatprep.subr.bf16.mxu0 0
    %8370 = vmatpush1.bf16.msra.mxu0 0
    %8371 = vmatprep.mubr.bf16.mxu0 0
    %8372 = vmatmul.mubr.bf16.gmra.mrb[0].mxu0 %v8017
    %v8373 = vpop.f32.mrb[0].mxu0
    %v8374 = vadd.f32 0.0, %v8373
    %v8375 = vpop.f32.mrb[0].mxu0
    %v8376 = vadd.f32 0.0, %v8375
    %v8377 = vpop.f32.mrb[0].mxu0
    %v8378 = vpop.f32.mrb[0].mxu0
    %8379 = vdwg.mxu0
    %8380 = vmatprep.subr.bf16.mxu0 %v8214
    %8381 = vmatpush1.bf16.msra.mxu0 %v8213
    %8382 = vmatprep.subr.bf16.mxu0 %v8222
    %8383 = vmatpush1.bf16.msra.mxu0 %v8221
    %8384 = vmatprep.subr.bf16.mxu0 %v8230
    %8385 = vmatpush1.bf16.msra.mxu0 %v8229
    %8386 = vmatprep.subr.bf16.mxu0 %v8238
    %8387 = vmatpush1.bf16.msra.mxu0 %v8237
    %8388 = vmatprep.subr.bf16.mxu0 %v8246
    %8389 = vmatpush1.bf16.msra.mxu0 %v8245
    %8390 = vmatprep.subr.bf16.mxu0 %v8254
    %8391 = vmatpush1.bf16.msra.mxu0 %v8253
    %8392 = vmatprep.subr.bf16.mxu0 %v8262
    %8393 = vmatpush1.bf16.msra.mxu0 %v8261
    %8394 = vmatprep.subr.bf16.mxu0 %v8270
    %8395 = vmatpush1.bf16.msra.mxu0 %v8269
    %8396 = vmatprep.subr.bf16.mxu0 0
    %8397 = vmatpush1.bf16.msra.mxu0 0
    %8398 = vmatprep.subr.bf16.mxu0 0
    %8399 = vmatpush1.bf16.msra.mxu0 0
    %8400 = vmatprep.subr.bf16.mxu0 0
    %8401 = vmatpush1.bf16.msra.mxu0 0
    %8402 = vmatprep.subr.bf16.mxu0 0
    %8403 = vmatpush1.bf16.msra.mxu0 0
    %8404 = vmatprep.subr.bf16.mxu0 0
    %8405 = vmatpush1.bf16.msra.mxu0 0
    %8406 = vmatprep.subr.bf16.mxu0 0
    %8407 = vmatpush1.bf16.msra.mxu0 0
    %8408 = vmatprep.subr.bf16.mxu0 0
    %8409 = vmatpush1.bf16.msra.mxu0 0
    %8410 = vmatprep.subr.bf16.mxu0 0
    %8411 = vmatpush1.bf16.msra.mxu0 0
    %8412 = vmatprep.mubr.bf16.mxu0 0
    %8413 = vmatmul.mubr.bf16.gmra.mrb[0].mxu0 %v8017
    %v8414 = vpop.f32.mrb[0].mxu0
    %v8415 = vadd.f32 0.0, %v8414
    %v8416 = vpop.f32.mrb[0].mxu0
    %v8417 = vadd.f32 0.0, %v8416
    %v8418 = vpop.f32.mrb[0].mxu0
    %v8419 = vpop.f32.mrb[0].mxu0
    %8420 = vdwg.mxu0
    %8421 = vmatprep.subr.bf16.mxu0 %v8216
    %8422 = vmatpush1.bf16.msra.mxu0 %v8215
    %8423 = vmatprep.subr.bf16.mxu0 %v8224
    %8424 = vmatpush1.bf16.msra.mxu0 %v8223
    %8425 = vmatprep.subr.bf16.mxu0 %v8232
    %8426 = vmatpush1.bf16.msra.mxu0 %v8231
    %8427 = vmatprep.subr.bf16.mxu0 %v8240
    %8428 = vmatpush1.bf16.msra.mxu0 %v8239
    %8429 = vmatprep.subr.bf16.mxu0 %v8248
    %8430 = vmatpush1.bf16.msra.mxu0 %v8247
    %8431 = vmatprep.subr.bf16.mxu0 %v8256
    %8432 = vmatpush1.bf16.msra.mxu0 %v8255
    %8433 = vmatprep.subr.bf16.mxu0 %v8264
    %8434 = vmatpush1.bf16.msra.mxu0 %v8263
    %8435 = vmatprep.subr.bf16.mxu0 %v8272
    %8436 = vmatpush1.bf16.msra.mxu0 %v8271
    %8437 = vmatprep.subr.bf16.mxu0 0
    %8438 = vmatpush1.bf16.msra.mxu0 0
    %8439 = vmatprep.subr.bf16.mxu0 0
    %8440 = vmatpush1.bf16.msra.mxu0 0
    %8441 = vmatprep.subr.bf16.mxu0 0
    %8442 = vmatpush1.bf16.msra.mxu0 0
    %8443 = vmatprep.subr.bf16.mxu0 0
    %8444 = vmatpush1.bf16.msra.mxu0 0
    %8445 = vmatprep.subr.bf16.mxu0 0
    %8446 = vmatpush1.bf16.msra.mxu0 0
    %8447 = vmatprep.subr.bf16.mxu0 0
    %8448 = vmatpush1.bf16.msra.mxu0 0
    %8449 = vmatprep.subr.bf16.mxu0 0
    %8450 = vmatpush1.bf16.msra.mxu0 0
    %8451 = vmatprep.subr.bf16.mxu0 0
    %8452 = vmatpush1.bf16.msra.mxu0 0
    %8453 = vmatprep.mubr.bf16.mxu0 0
    %8454 = vmatmul.mubr.bf16.gmra.mrb[0].mxu0 %v8017
    %v8455 = vpop.f32.mrb[0].mxu0
    %v8456 = vadd.f32 0.0, %v8455
    %v8457 = vpop.f32.mrb[0].mxu0
    %v8458 = vadd.f32 0.0, %v8457
    %v8459 = vpop.f32.mrb[0].mxu0
    %v8460 = vpop.f32.mrb[0].mxu0
    %8461 = vdwg.mxu0
    %8462 = vmatprep.subr.bf16.mxu0 %v8218
    %8463 = vmatpush1.bf16.msra.mxu0 %v8217
    %8464 = vmatprep.subr.bf16.mxu0 %v8226
    %8465 = vmatpush1.bf16.msra.mxu0 %v8225
    %8466 = vmatprep.subr.bf16.mxu0 %v8234
    %8467 = vmatpush1.bf16.msra.mxu0 %v8233
    %8468 = vmatprep.subr.bf16.mxu0 %v8242
    %8469 = vmatpush1.bf16.msra.mxu0 %v8241
    %8470 = vmatprep.subr.bf16.mxu0 %v8250
    %8471 = vmatpush1.bf16.msra.mxu0 %v8249
    %8472 = vmatprep.subr.bf16.mxu0 %v8258
    %8473 = vmatpush1.bf16.msra.mxu0 %v8257
    %8474 = vmatprep.subr.bf16.mxu0 %v8266
    %8475 = vmatpush1.bf16.msra.mxu0 %v8265
    %8476 = vmatprep.subr.bf16.mxu0 %v8274
    %8477 = vmatpush1.bf16.msra.mxu0 %v8273
    %8478 = vmatprep.subr.bf16.mxu0 0
    %8479 = vmatpush1.bf16.msra.mxu0 0
    %8480 = vmatprep.subr.bf16.mxu0 0
    %8481 = vmatpush1.bf16.msra.mxu0 0
    %8482 = vmatprep.subr.bf16.mxu0 0
    %8483 = vmatpush1.bf16.msra.mxu0 0
    %8484 = vmatprep.subr.bf16.mxu0 0
    %8485 = vmatpush1.bf16.msra.mxu0 0
    %8486 = vmatprep.subr.bf16.mxu0 0
    %8487 = vmatpush1.bf16.msra.mxu0 0
    %8488 = vmatprep.subr.bf16.mxu0 0
    %8489 = vmatpush1.bf16.msra.mxu0 0
    %8490 = vmatprep.subr.bf16.mxu0 0
    %8491 = vmatpush1.bf16.msra.mxu0 0
    %8492 = vmatprep.subr.bf16.mxu0 0
    %8493 = vmatpush1.bf16.msra.mxu0 0
    %8494 = vmatprep.mubr.bf16.mxu0 0
    %8495 = vmatmul.mubr.bf16.gmra.mrb[0].mxu0 %v8017
    %v8496 = vpop.f32.mrb[0].mxu0
    %v8497 = vadd.f32 0.0, %v8496
    %v8498 = vpop.f32.mrb[0].mxu0
    %v8499 = vadd.f32 0.0, %v8498
    %v8500 = vpop.f32.mrb[0].mxu0
    %v8501 = vpop.f32.mrb[0].mxu0
    %8502 = vdwg.mxu0
    %v8503 = vadd.f32 %v7768, %v8374
    %v8504 = vadd.f32 %v7769, %v8376
    %v8505 = vadd.f32 %v7770, %v8415
    %v8506 = vadd.f32 %v7771, %v8417
    %v8507 = vadd.f32 %v7772, %v8456
    %v8508 = vadd.f32 %v7773, %v8458
    %v8509 = vadd.f32 %v7774, %v8497
    %v8510 = vadd.f32 %v7775, %v8499
    %v8512 = vrot.slane %v7043, 1
    %8514 = vmatprep.subr.bf16.mxu0 %v8212
    %8515 = vmatpush1.bf16.msra.mxu0 %v8211
    %8516 = vmatprep.subr.bf16.mxu0 %v8220
    %8517 = vmatpush1.bf16.msra.mxu0 %v8219
    %8518 = vmatprep.subr.bf16.mxu0 %v8228
    %8519 = vmatpush1.bf16.msra.mxu0 %v8227
    %8520 = vmatprep.subr.bf16.mxu0 %v8236
    %8521 = vmatpush1.bf16.msra.mxu0 %v8235
    %8522 = vmatprep.subr.bf16.mxu0 %v8244
    %8523 = vmatpush1.bf16.msra.mxu0 %v8243
    %8524 = vmatprep.subr.bf16.mxu0 %v8252
    %8525 = vmatpush1.bf16.msra.mxu0 %v8251
    %8526 = vmatprep.subr.bf16.mxu0 %v8260
    %8527 = vmatpush1.bf16.msra.mxu0 %v8259
    %8528 = vmatprep.subr.bf16.mxu0 %v8268
    %8529 = vmatpush1.bf16.msra.mxu0 %v8267
    %8530 = vmatprep.subr.bf16.mxu0 0
    %8531 = vmatpush1.bf16.msra.mxu0 0
    %8532 = vmatprep.subr.bf16.mxu0 0
    %8533 = vmatpush1.bf16.msra.mxu0 0
    %8534 = vmatprep.subr.bf16.mxu0 0
    %8535 = vmatpush1.bf16.msra.mxu0 0
    %8536 = vmatprep.subr.bf16.mxu0 0
    %8537 = vmatpush1.bf16.msra.mxu0 0
    %8538 = vmatprep.subr.bf16.mxu0 0
    %8539 = vmatpush1.bf16.msra.mxu0 0
    %8540 = vmatprep.subr.bf16.mxu0 0
    %8541 = vmatpush1.bf16.msra.mxu0 0
    %8542 = vmatprep.subr.bf16.mxu0 0
    %8543 = vmatpush1.bf16.msra.mxu0 0
    %8544 = vmatprep.subr.bf16.mxu0 0
    %8545 = vmatpush1.bf16.msra.mxu0 0
    %8546 = vmatprep.mubr.bf16.mxu0 0
    %8547 = vmatmul.mubr.bf16.gmra.mrb[0].mxu0 %v8512
    %v8548 = vpop.f32.mrb[0].mxu0
    %v8549 = vadd.f32 0.0, %v8548
    %v8550 = vpop.f32.mrb[0].mxu0
    %v8551 = vadd.f32 0.0, %v8550
    %v8552 = vpop.f32.mrb[0].mxu0
    %v8553 = vpop.f32.mrb[0].mxu0
    %8554 = vdwg.mxu0
    %8555 = vmatprep.subr.bf16.mxu0 %v8214
    %8556 = vmatpush1.bf16.msra.mxu0 %v8213
    %8557 = vmatprep.subr.bf16.mxu0 %v8222
    %8558 = vmatpush1.bf16.msra.mxu0 %v8221
    %8559 = vmatprep.subr.bf16.mxu0 %v8230
    %8560 = vmatpush1.bf16.msra.mxu0 %v8229
    %8561 = vmatprep.subr.bf16.mxu0 %v8238
    %8562 = vmatpush1.bf16.msra.mxu0 %v8237
    %8563 = vmatprep.subr.bf16.mxu0 %v8246
    %8564 = vmatpush1.bf16.msra.mxu0 %v8245
    %8565 = vmatprep.subr.bf16.mxu0 %v8254
    %8566 = vmatpush1.bf16.msra.mxu0 %v8253
    %8567 = vmatprep.subr.bf16.mxu0 %v8262
    %8568 = vmatpush1.bf16.msra.mxu0 %v8261
    %8569 = vmatprep.subr.bf16.mxu0 %v8270
    %8570 = vmatpush1.bf16.msra.mxu0 %v8269
    %8571 = vmatprep.subr.bf16.mxu0 0
    %8572 = vmatpush1.bf16.msra.mxu0 0
    %8573 = vmatprep.subr.bf16.mxu0 0
    %8574 = vmatpush1.bf16.msra.mxu0 0
    %8575 = vmatprep.subr.bf16.mxu0 0
    %8576 = vmatpush1.bf16.msra.mxu0 0
    %8577 = vmatprep.subr.bf16.mxu0 0
    %8578 = vmatpush1.bf16.msra.mxu0 0
    %8579 = vmatprep.subr.bf16.mxu0 0
    %8580 = vmatpush1.bf16.msra.mxu0 0
    %8581 = vmatprep.subr.bf16.mxu0 0
    %8582 = vmatpush1.bf16.msra.mxu0 0
    %8583 = vmatprep.subr.bf16.mxu0 0
    %8584 = vmatpush1.bf16.msra.mxu0 0
    %8585 = vmatprep.subr.bf16.mxu0 0
    %8586 = vmatpush1.bf16.msra.mxu0 0
    %8587 = vmatprep.mubr.bf16.mxu0 0
    %8588 = vmatmul.mubr.bf16.gmra.mrb[0].mxu0 %v8512
    %v8589 = vpop.f32.mrb[0].mxu0
    %v8590 = vadd.f32 0.0, %v8589
    %v8591 = vpop.f32.mrb[0].mxu0
    %v8592 = vadd.f32 0.0, %v8591
    %v8593 = vpop.f32.mrb[0].mxu0
    %v8594 = vpop.f32.mrb[0].mxu0
    %8595 = vdwg.mxu0
    %8596 = vmatprep.subr.bf16.mxu0 %v8216
    %8597 = vmatpush1.bf16.msra.mxu0 %v8215
    %8598 = vmatprep.subr.bf16.mxu0 %v8224
    %8599 = vmatpush1.bf16.msra.mxu0 %v8223
    %8600 = vmatprep.subr.bf16.mxu0 %v8232
    %8601 = vmatpush1.bf16.msra.mxu0 %v8231
    %8602 = vmatprep.subr.bf16.mxu0 %v8240
    %8603 = vmatpush1.bf16.msra.mxu0 %v8239
    %8604 = vmatprep.subr.bf16.mxu0 %v8248
    %8605 = vmatpush1.bf16.msra.mxu0 %v8247
    %8606 = vmatprep.subr.bf16.mxu0 %v8256
    %8607 = vmatpush1.bf16.msra.mxu0 %v8255
    %8608 = vmatprep.subr.bf16.mxu0 %v8264
    %8609 = vmatpush1.bf16.msra.mxu0 %v8263
    %8610 = vmatprep.subr.bf16.mxu0 %v8272
    %8611 = vmatpush1.bf16.msra.mxu0 %v8271
    %8612 = vmatprep.subr.bf16.mxu0 0
    %8613 = vmatpush1.bf16.msra.mxu0 0
    %8614 = vmatprep.subr.bf16.mxu0 0
    %8615 = vmatpush1.bf16.msra.mxu0 0
    %8616 = vmatprep.subr.bf16.mxu0 0
    %8617 = vmatpush1.bf16.msra.mxu0 0
    %8618 = vmatprep.subr.bf16.mxu0 0
    %8619 = vmatpush1.bf16.msra.mxu0 0
    %8620 = vmatprep.subr.bf16.mxu0 0
    %8621 = vmatpush1.bf16.msra.mxu0 0
    %8622 = vmatprep.subr.bf16.mxu0 0
    %8623 = vmatpush1.bf16.msra.mxu0 0
    %8624 = vmatprep.subr.bf16.mxu0 0
    %8625 = vmatpush1.bf16.msra.mxu0 0
    %8626 = vmatprep.subr.bf16.mxu0 0
    %8627 = vmatpush1.bf16.msra.mxu0 0
    %8628 = vmatprep.mubr.bf16.mxu0 0
    %8629 = vmatmul.mubr.bf16.gmra.mrb[0].mxu0 %v8512
    %v8630 = vpop.f32.mrb[0].mxu0
    %v8631 = vadd.f32 0.0, %v8630
    %v8632 = vpop.f32.mrb[0].mxu0
    %v8633 = vadd.f32 0.0, %v8632
    %v8634 = vpop.f32.mrb[0].mxu0
    %v8635 = vpop.f32.mrb[0].mxu0
    %8636 = vdwg.mxu0
    %8637 = vmatprep.subr.bf16.mxu0 %v8218
    %8638 = vmatpush1.bf16.msra.mxu0 %v8217
    %8639 = vmatprep.subr.bf16.mxu0 %v8226
    %8640 = vmatpush1.bf16.msra.mxu0 %v8225
    %8641 = vmatprep.subr.bf16.mxu0 %v8234
    %8642 = vmatpush1.bf16.msra.mxu0 %v8233
    %8643 = vmatprep.subr.bf16.mxu0 %v8242
    %8644 = vmatpush1.bf16.msra.mxu0 %v8241
    %8645 = vmatprep.subr.bf16.mxu0 %v8250
    %8646 = vmatpush1.bf16.msra.mxu0 %v8249
    %8647 = vmatprep.subr.bf16.mxu0 %v8258
    %8648 = vmatpush1.bf16.msra.mxu0 %v8257
    %8649 = vmatprep.subr.bf16.mxu0 %v8266
    %8650 = vmatpush1.bf16.msra.mxu0 %v8265
    %8651 = vmatprep.subr.bf16.mxu0 %v8274
    %8652 = vmatpush1.bf16.msra.mxu0 %v8273
    %8653 = vmatprep.subr.bf16.mxu0 0
    %8654 = vmatpush1.bf16.msra.mxu0 0
    %8655 = vmatprep.subr.bf16.mxu0 0
    %8656 = vmatpush1.bf16.msra.mxu0 0
    %8657 = vmatprep.subr.bf16.mxu0 0
    %8658 = vmatpush1.bf16.msra.mxu0 0
    %8659 = vmatprep.subr.bf16.mxu0 0
    %8660 = vmatpush1.bf16.msra.mxu0 0
    %8661 = vmatprep.subr.bf16.mxu0 0
    %8662 = vmatpush1.bf16.msra.mxu0 0
    %8663 = vmatprep.subr.bf16.mxu0 0
    %8664 = vmatpush1.bf16.msra.mxu0 0
    %8665 = vmatprep.subr.bf16.mxu0 0
    %8666 = vmatpush1.bf16.msra.mxu0 0
    %8667 = vmatprep.subr.bf16.mxu0 0
    %8668 = vmatpush1.bf16.msra.mxu0 0
    %8669 = vmatprep.mubr.bf16.mxu0 0
    %8670 = vmatmul.mubr.bf16.gmra.mrb[0].mxu0 %v8512
    %v8671 = vpop.f32.mrb[0].mxu0
    %v8672 = vadd.f32 0.0, %v8671
    %v8673 = vpop.f32.mrb[0].mxu0
    %v8674 = vadd.f32 0.0, %v8673
    %v8675 = vpop.f32.mrb[0].mxu0
    %v8676 = vpop.f32.mrb[0].mxu0
    %8677 = vdwg.mxu0
    %v8678 = vadd.f32 %v7944, %v8549
    %v8679 = vadd.f32 %v7945, %v8551
    %v8680 = vadd.f32 %v7946, %v8590
    %v8681 = vadd.f32 %v7947, %v8592
    %v8682 = vadd.f32 %v7948, %v8631
    %v8683 = vadd.f32 %v7949, %v8633
    %v8684 = vadd.f32 %v7950, %v8672
    %v8685 = vadd.f32 %v7951, %v8674
    %v8686 = vld [vmem:[#allocation10 + $0x1600] sm:$0xff]
    %v8687 = vld [vmem:[#allocation10 + $0x1608] sm:$0xff]
    %v8688 = vld [vmem:[#allocation10 + $0x1610] sm:$0xff]
    %v8689 = vld [vmem:[#allocation10 + $0x1618] sm:$0xff]
    %v8690 = vld [vmem:[#allocation10 + $0x1620] sm:$0xff]
    %v8691 = vld [vmem:[#allocation10 + $0x1628] sm:$0xff]
    %v8692 = vld [vmem:[#allocation10 + $0x1630] sm:$0xff]
    %v8693 = vld [vmem:[#allocation10 + $0x1638] sm:$0xff]
    %v8694 = vld [vmem:[#allocation10 + $0x1640] sm:$0xff]
    %v8695 = vld [vmem:[#allocation10 + $0x1648] sm:$0xff]
    %v8696 = vld [vmem:[#allocation10 + $0x1650] sm:$0xff]
    %v8697 = vld [vmem:[#allocation10 + $0x1658] sm:$0xff]
    %v8698 = vld [vmem:[#allocation10 + $0x1660] sm:$0xff]
    %v8699 = vld [vmem:[#allocation10 + $0x1668] sm:$0xff]
    %v8700 = vld [vmem:[#allocation10 + $0x1670] sm:$0xff]
    %v8701 = vld [vmem:[#allocation10 + $0x1678] sm:$0xff]
    %v8702 = vld [vmem:[#allocation10 + $0x1680] sm:$0xff]
    %v8703 = vld [vmem:[#allocation10 + $0x1688] sm:$0xff]
    %v8704 = vld [vmem:[#allocation10 + $0x1690] sm:$0xff]
    %v8705 = vld [vmem:[#allocation10 + $0x1698] sm:$0xff]
    %v8706 = vld [vmem:[#allocation10 + $0x16a0] sm:$0xff]
    %v8707 = vld [vmem:[#allocation10 + $0x16a8] sm:$0xff]
    %v8708 = vld [vmem:[#allocation10 + $0x16b0] sm:$0xff]
    %v8709 = vld [vmem:[#allocation10 + $0x16b8] sm:$0xff]
    %v8710 = vld [vmem:[#allocation10 + $0x16c0] sm:$0xff]
    %v8711 = vld [vmem:[#allocation10 + $0x16c8] sm:$0xff]
    %v8712 = vld [vmem:[#allocation10 + $0x16d0] sm:$0xff]
    %v8713 = vld [vmem:[#allocation10 + $0x16d8] sm:$0xff]
    %v8714 = vld [vmem:[#allocation10 + $0x16e0] sm:$0xff]
    %v8715 = vld [vmem:[#allocation10 + $0x16e8] sm:$0xff]
    %v8716 = vld [vmem:[#allocation10 + $0x16f0] sm:$0xff]
    %v8717 = vld [vmem:[#allocation10 + $0x16f8] sm:$0xff]
    %v8718 = vld [vmem:[#allocation10 + $0x1700] sm:$0xff]
    %v8719 = vld [vmem:[#allocation10 + $0x1708] sm:$0xff]
    %v8720 = vld [vmem:[#allocation10 + $0x1710] sm:$0xff]
    %v8721 = vld [vmem:[#allocation10 + $0x1718] sm:$0xff]
    %v8722 = vld [vmem:[#allocation10 + $0x1720] sm:$0xff]
    %v8723 = vld [vmem:[#allocation10 + $0x1728] sm:$0xff]
    %v8724 = vld [vmem:[#allocation10 + $0x1730] sm:$0xff]
    %v8725 = vld [vmem:[#allocation10 + $0x1738] sm:$0xff]
    %v8726 = vld [vmem:[#allocation10 + $0x1740] sm:$0xff]
    %v8727 = vld [vmem:[#allocation10 + $0x1748] sm:$0xff]
    %v8728 = vld [vmem:[#allocation10 + $0x1750] sm:$0xff]
    %v8729 = vld [vmem:[#allocation10 + $0x1758] sm:$0xff]
    %v8730 = vld [vmem:[#allocation10 + $0x1760] sm:$0xff]
    %v8731 = vld [vmem:[#allocation10 + $0x1768] sm:$0xff]
    %v8732 = vld [vmem:[#allocation10 + $0x1770] sm:$0xff]
    %v8733 = vld [vmem:[#allocation10 + $0x1778] sm:$0xff]
    %v8734 = vld [vmem:[#allocation10 + $0x1780] sm:$0xff]
    %v8735 = vld [vmem:[#allocation10 + $0x1788] sm:$0xff]
    %v8736 = vld [vmem:[#allocation10 + $0x1790] sm:$0xff]
    %v8737 = vld [vmem:[#allocation10 + $0x1798] sm:$0xff]
    %v8738 = vld [vmem:[#allocation10 + $0x17a0] sm:$0xff]
    %v8739 = vld [vmem:[#allocation10 + $0x17a8] sm:$0xff]
    %v8740 = vld [vmem:[#allocation10 + $0x17b0] sm:$0xff]
    %v8741 = vld [vmem:[#allocation10 + $0x17b8] sm:$0xff]
    %v8742 = vld [vmem:[#allocation10 + $0x17c0] sm:$0xff]
    %v8743 = vld [vmem:[#allocation10 + $0x17c8] sm:$0xff]
    %v8744 = vld [vmem:[#allocation10 + $0x17d0] sm:$0xff]
    %v8745 = vld [vmem:[#allocation10 + $0x17d8] sm:$0xff]
    %v8746 = vld [vmem:[#allocation10 + $0x17e0] sm:$0xff]
    %v8747 = vld [vmem:[#allocation10 + $0x17e8] sm:$0xff]
    %v8748 = vld [vmem:[#allocation10 + $0x17f0] sm:$0xff]
    %v8749 = vld [vmem:[#allocation10 + $0x17f8] sm:$0xff]
    %v8750 = vrot.slane %v7281, 1
    %v8816 = vunpack.c.l.b16 %v8686
    %v8817 = vunpack.c.h.b16 %v8686
    %v8818 = vunpack.c.l.b16 %v8687
    %v8819 = vunpack.c.h.b16 %v8687
    %v8820 = vunpack.c.l.b16 %v8688
    %v8821 = vunpack.c.h.b16 %v8688
    %v8822 = vunpack.c.l.b16 %v8689
    %v8823 = vunpack.c.h.b16 %v8689
    %v8824 = vunpack.c.l.b16 %v8690
    %v8825 = vunpack.c.h.b16 %v8690
    %v8826 = vunpack.c.l.b16 %v8691
    %v8827 = vunpack.c.h.b16 %v8691
    %v8828 = vunpack.c.l.b16 %v8692
    %v8829 = vunpack.c.h.b16 %v8692
    %v8830 = vunpack.c.l.b16 %v8693
    %v8831 = vunpack.c.h.b16 %v8693
    %v8832 = vunpack.c.l.b16 %v8694
    %v8833 = vunpack.c.h.b16 %v8694
    %v8834 = vunpack.c.l.b16 %v8695
    %v8835 = vunpack.c.h.b16 %v8695
    %v8836 = vunpack.c.l.b16 %v8696
    %v8837 = vunpack.c.h.b16 %v8696
    %v8838 = vunpack.c.l.b16 %v8697
    %v8839 = vunpack.c.h.b16 %v8697
    %v8840 = vunpack.c.l.b16 %v8698
    %v8841 = vunpack.c.h.b16 %v8698
    %v8842 = vunpack.c.l.b16 %v8699
    %v8843 = vunpack.c.h.b16 %v8699
    %v8844 = vunpack.c.l.b16 %v8700
    %v8845 = vunpack.c.h.b16 %v8700
    %v8846 = vunpack.c.l.b16 %v8701
    %v8847 = vunpack.c.h.b16 %v8701
    %v8848 = vunpack.c.l.b16 %v8702
    %v8849 = vunpack.c.h.b16 %v8702
    %v8850 = vunpack.c.l.b16 %v8703
    %v8851 = vunpack.c.h.b16 %v8703
    %v8852 = vunpack.c.l.b16 %v8704
    %v8853 = vunpack.c.h.b16 %v8704
    %v8854 = vunpack.c.l.b16 %v8705
    %v8855 = vunpack.c.h.b16 %v8705
    %v8856 = vunpack.c.l.b16 %v8706
    %v8857 = vunpack.c.h.b16 %v8706
    %v8858 = vunpack.c.l.b16 %v8707
    %v8859 = vunpack.c.h.b16 %v8707
    %v8860 = vunpack.c.l.b16 %v8708
    %v8861 = vunpack.c.h.b16 %v8708
    %v8862 = vunpack.c.l.b16 %v8709
    %v8863 = vunpack.c.h.b16 %v8709
    %v8864 = vunpack.c.l.b16 %v8710
    %v8865 = vunpack.c.h.b16 %v8710
    %v8866 = vunpack.c.l.b16 %v8711
    %v8867 = vunpack.c.h.b16 %v8711
    %v8868 = vunpack.c.l.b16 %v8712
    %v8869 = vunpack.c.h.b16 %v8712
    %v8870 = vunpack.c.l.b16 %v8713
    %v8871 = vunpack.c.h.b16 %v8713
    %v8872 = vunpack.c.l.b16 %v8714
    %v8873 = vunpack.c.h.b16 %v8714
    %v8874 = vunpack.c.l.b16 %v8715
    %v8875 = vunpack.c.h.b16 %v8715
    %v8876 = vunpack.c.l.b16 %v8716
    %v8877 = vunpack.c.h.b16 %v8716
    %v8878 = vunpack.c.l.b16 %v8717
    %v8879 = vunpack.c.h.b16 %v8717
    %v8880 = vunpack.c.l.b16 %v8718
    %v8881 = vunpack.c.h.b16 %v8718
    %v8882 = vunpack.c.l.b16 %v8719
    %v8883 = vunpack.c.h.b16 %v8719
    %v8884 = vunpack.c.l.b16 %v8720
    %v8885 = vunpack.c.h.b16 %v8720
    %v8886 = vunpack.c.l.b16 %v8721
    %v8887 = vunpack.c.h.b16 %v8721
    %v8888 = vunpack.c.l.b16 %v8722
    %v8889 = vunpack.c.h.b16 %v8722
    %v8890 = vunpack.c.l.b16 %v8723
    %v8891 = vunpack.c.h.b16 %v8723
    %v8892 = vunpack.c.l.b16 %v8724
    %v8893 = vunpack.c.h.b16 %v8724
    %v8894 = vunpack.c.l.b16 %v8725
    %v8895 = vunpack.c.h.b16 %v8725
    %v8896 = vunpack.c.l.b16 %v8726
    %v8897 = vunpack.c.h.b16 %v8726
    %v8898 = vunpack.c.l.b16 %v8727
    %v8899 = vunpack.c.h.b16 %v8727
    %v8900 = vunpack.c.l.b16 %v8728
    %v8901 = vunpack.c.h.b16 %v8728
    %v8902 = vunpack.c.l.b16 %v8729
    %v8903 = vunpack.c.h.b16 %v8729
    %v8904 = vunpack.c.l.b16 %v8730
    %v8905 = vunpack.c.h.b16 %v8730
    %v8906 = vunpack.c.l.b16 %v8731
    %v8907 = vunpack.c.h.b16 %v8731
    %v8908 = vunpack.c.l.b16 %v8732
    %v8909 = vunpack.c.h.b16 %v8732
    %v8910 = vunpack.c.l.b16 %v8733
    %v8911 = vunpack.c.h.b16 %v8733
    %v8912 = vunpack.c.l.b16 %v8734
    %v8913 = vunpack.c.h.b16 %v8734
    %v8914 = vunpack.c.l.b16 %v8735
    %v8915 = vunpack.c.h.b16 %v8735
    %v8916 = vunpack.c.l.b16 %v8736
    %v8917 = vunpack.c.h.b16 %v8736
    %v8918 = vunpack.c.l.b16 %v8737
    %v8919 = vunpack.c.h.b16 %v8737
    %v8920 = vunpack.c.l.b16 %v8738
    %v8921 = vunpack.c.h.b16 %v8738
    %v8922 = vunpack.c.l.b16 %v8739
    %v8923 = vunpack.c.h.b16 %v8739
    %v8924 = vunpack.c.l.b16 %v8740
    %v8925 = vunpack.c.h.b16 %v8740
    %v8926 = vunpack.c.l.b16 %v8741
    %v8927 = vunpack.c.h.b16 %v8741
    %v8928 = vunpack.c.l.b16 %v8742
    %v8929 = vunpack.c.h.b16 %v8742
    %v8930 = vunpack.c.l.b16 %v8743
    %v8931 = vunpack.c.h.b16 %v8743
    %v8932 = vunpack.c.l.b16 %v8744
    %v8933 = vunpack.c.h.b16 %v8744
    %v8934 = vunpack.c.l.b16 %v8745
    %v8935 = vunpack.c.h.b16 %v8745
    %v8936 = vunpack.c.l.b16 %v8746
    %v8937 = vunpack.c.h.b16 %v8746
    %v8938 = vunpack.c.l.b16 %v8747
    %v8939 = vunpack.c.h.b16 %v8747
    %v8940 = vunpack.c.l.b16 %v8748
    %v8941 = vunpack.c.h.b16 %v8748
    %v8942 = vunpack.c.l.b16 %v8749
    %v8943 = vunpack.c.h.b16 %v8749
    %v8944 = vpack.c.b16 %v8824, %v8816
    %v8945 = vpack.c.b16 %v8825, %v8817
    %v8946 = vpack.c.b16 %v8826, %v8818
    %v8947 = vpack.c.b16 %v8827, %v8819
    %v8948 = vpack.c.b16 %v8828, %v8820
    %v8949 = vpack.c.b16 %v8829, %v8821
    %v8950 = vpack.c.b16 %v8830, %v8822
    %v8951 = vpack.c.b16 %v8831, %v8823
    %v8952 = vpack.c.b16 %v8840, %v8832
    %v8953 = vpack.c.b16 %v8841, %v8833
    %v8954 = vpack.c.b16 %v8842, %v8834
    %v8955 = vpack.c.b16 %v8843, %v8835
    %v8956 = vpack.c.b16 %v8844, %v8836
    %v8957 = vpack.c.b16 %v8845, %v8837
    %v8958 = vpack.c.b16 %v8846, %v8838
    %v8959 = vpack.c.b16 %v8847, %v8839
    %v8960 = vpack.c.b16 %v8856, %v8848
    %v8961 = vpack.c.b16 %v8857, %v8849
    %v8962 = vpack.c.b16 %v8858, %v8850
    %v8963 = vpack.c.b16 %v8859, %v8851
    %v8964 = vpack.c.b16 %v8860, %v8852
    %v8965 = vpack.c.b16 %v8861, %v8853
    %v8966 = vpack.c.b16 %v8862, %v8854
    %v8967 = vpack.c.b16 %v8863, %v8855
    %v8968 = vpack.c.b16 %v8872, %v8864
    %v8969 = vpack.c.b16 %v8873, %v8865
    %v8970 = vpack.c.b16 %v8874, %v8866
    %v8971 = vpack.c.b16 %v8875, %v8867
    %v8972 = vpack.c.b16 %v8876, %v8868
    %v8973 = vpack.c.b16 %v8877, %v8869
    %v8974 = vpack.c.b16 %v8878, %v8870
    %v8975 = vpack.c.b16 %v8879, %v8871
    %v8976 = vpack.c.b16 %v8888, %v8880
    %v8977 = vpack.c.b16 %v8889, %v8881
    %v8978 = vpack.c.b16 %v8890, %v8882
    %v8979 = vpack.c.b16 %v8891, %v8883
    %v8980 = vpack.c.b16 %v8892, %v8884
    %v8981 = vpack.c.b16 %v8893, %v8885
    %v8982 = vpack.c.b16 %v8894, %v8886
    %v8983 = vpack.c.b16 %v8895, %v8887
    %v8984 = vpack.c.b16 %v8904, %v8896
    %v8985 = vpack.c.b16 %v8905, %v8897
    %v8986 = vpack.c.b16 %v8906, %v8898
    %v8987 = vpack.c.b16 %v8907, %v8899
    %v8988 = vpack.c.b16 %v8908, %v8900
    %v8989 = vpack.c.b16 %v8909, %v8901
    %v8990 = vpack.c.b16 %v8910, %v8902
    %v8991 = vpack.c.b16 %v8911, %v8903
    %v8992 = vpack.c.b16 %v8920, %v8912
    %v8993 = vpack.c.b16 %v8921, %v8913
    %v8994 = vpack.c.b16 %v8922, %v8914
    %v8995 = vpack.c.b16 %v8923, %v8915
    %v8996 = vpack.c.b16 %v8924, %v8916
    %v8997 = vpack.c.b16 %v8925, %v8917
    %v8998 = vpack.c.b16 %v8926, %v8918
    %v8999 = vpack.c.b16 %v8927, %v8919
    %v9000 = vpack.c.b16 %v8936, %v8928
    %v9001 = vpack.c.b16 %v8937, %v8929
    %v9002 = vpack.c.b16 %v8938, %v8930
    %v9003 = vpack.c.b16 %v8939, %v8931
    %v9004 = vpack.c.b16 %v8940, %v8932
    %v9005 = vpack.c.b16 %v8941, %v8933
    %v9006 = vpack.c.b16 %v8942, %v8934
    %v9007 = vpack.c.b16 %v8943, %v8935
    %9072 = vmatprep.subr.bf16.mxu0 %v8945
    %9073 = vmatpush1.bf16.msra.mxu0 %v8944
    %9074 = vmatprep.subr.bf16.mxu0 %v8953
    %9075 = vmatpush1.bf16.msra.mxu0 %v8952
    %9076 = vmatprep.subr.bf16.mxu0 %v8961
    %9077 = vmatpush1.bf16.msra.mxu0 %v8960
    %9078 = vmatprep.subr.bf16.mxu0 %v8969
    %9079 = vmatpush1.bf16.msra.mxu0 %v8968
    %9080 = vmatprep.subr.bf16.mxu0 %v8977
    %9081 = vmatpush1.bf16.msra.mxu0 %v8976
    %9082 = vmatprep.subr.bf16.mxu0 %v8985
    %9083 = vmatpush1.bf16.msra.mxu0 %v8984
    %9084 = vmatprep.subr.bf16.mxu0 %v8993
    %9085 = vmatpush1.bf16.msra.mxu0 %v8992
    %9086 = vmatprep.subr.bf16.mxu0 %v9001
    %9087 = vmatpush1.bf16.msra.mxu0 %v9000
    %9088 = vmatprep.subr.bf16.mxu0 0
    %9089 = vmatpush1.bf16.msra.mxu0 0
    %9090 = vmatprep.subr.bf16.mxu0 0
    %9091 = vmatpush1.bf16.msra.mxu0 0
    %9092 = vmatprep.subr.bf16.mxu0 0
    %9093 = vmatpush1.bf16.msra.mxu0 0
    %9094 = vmatprep.subr.bf16.mxu0 0
    %9095 = vmatpush1.bf16.msra.mxu0 0
    %9096 = vmatprep.subr.bf16.mxu0 0
    %9097 = vmatpush1.bf16.msra.mxu0 0
    %9098 = vmatprep.subr.bf16.mxu0 0
    %9099 = vmatpush1.bf16.msra.mxu0 0
    %9100 = vmatprep.subr.bf16.mxu0 0
    %9101 = vmatpush1.bf16.msra.mxu0 0
    %9102 = vmatprep.subr.bf16.mxu0 0
    %9103 = vmatpush1.bf16.msra.mxu0 0
    %9104 = vmatprep.mubr.bf16.mxu0 0
    %9105 = vmatmul.mubr.bf16.gmra.mrb[0].mxu0 %v8750
    %v9106 = vpop.f32.mrb[0].mxu0
    %v9107 = vadd.f32 0.0, %v9106
    %v9108 = vpop.f32.mrb[0].mxu0
    %v9109 = vadd.f32 0.0, %v9108
    %v9110 = vpop.f32.mrb[0].mxu0
    %v9111 = vpop.f32.mrb[0].mxu0
    %9112 = vdwg.mxu0
    %9113 = vmatprep.subr.bf16.mxu0 %v8947
    %9114 = vmatpush1.bf16.msra.mxu0 %v8946
    %9115 = vmatprep.subr.bf16.mxu0 %v8955
    %9116 = vmatpush1.bf16.msra.mxu0 %v8954
    %9117 = vmatprep.subr.bf16.mxu0 %v8963
    %9118 = vmatpush1.bf16.msra.mxu0 %v8962
    %9119 = vmatprep.subr.bf16.mxu0 %v8971
    %9120 = vmatpush1.bf16.msra.mxu0 %v8970
    %9121 = vmatprep.subr.bf16.mxu0 %v8979
    %9122 = vmatpush1.bf16.msra.mxu0 %v8978
    %9123 = vmatprep.subr.bf16.mxu0 %v8987
    %9124 = vmatpush1.bf16.msra.mxu0 %v8986
    %9125 = vmatprep.subr.bf16.mxu0 %v8995
    %9126 = vmatpush1.bf16.msra.mxu0 %v8994
    %9127 = vmatprep.subr.bf16.mxu0 %v9003
    %9128 = vmatpush1.bf16.msra.mxu0 %v9002
    %9129 = vmatprep.subr.bf16.mxu0 0
    %9130 = vmatpush1.bf16.msra.mxu0 0
    %9131 = vmatprep.subr.bf16.mxu0 0
    %9132 = vmatpush1.bf16.msra.mxu0 0
    %9133 = vmatprep.subr.bf16.mxu0 0
    %9134 = vmatpush1.bf16.msra.mxu0 0
    %9135 = vmatprep.subr.bf16.mxu0 0
    %9136 = vmatpush1.bf16.msra.mxu0 0
    %9137 = vmatprep.subr.bf16.mxu0 0
    %9138 = vmatpush1.bf16.msra.mxu0 0
    %9139 = vmatprep.subr.bf16.mxu0 0
    %9140 = vmatpush1.bf16.msra.mxu0 0
    %9141 = vmatprep.subr.bf16.mxu0 0
    %9142 = vmatpush1.bf16.msra.mxu0 0
    %9143 = vmatprep.subr.bf16.mxu0 0
    %9144 = vmatpush1.bf16.msra.mxu0 0
    %9145 = vmatprep.mubr.bf16.mxu0 0
    %9146 = vmatmul.mubr.bf16.gmra.mrb[0].mxu0 %v8750
    %v9147 = vpop.f32.mrb[0].mxu0
    %v9148 = vadd.f32 0.0, %v9147
    %v9149 = vpop.f32.mrb[0].mxu0
    %v9150 = vadd.f32 0.0, %v9149
    %v9151 = vpop.f32.mrb[0].mxu0
    %v9152 = vpop.f32.mrb[0].mxu0
    %9153 = vdwg.mxu0
    %9154 = vmatprep.subr.bf16.mxu0 %v8949
    %9155 = vmatpush1.bf16.msra.mxu0 %v8948
    %9156 = vmatprep.subr.bf16.mxu0 %v8957
    %9157 = vmatpush1.bf16.msra.mxu0 %v8956
    %9158 = vmatprep.subr.bf16.mxu0 %v8965
    %9159 = vmatpush1.bf16.msra.mxu0 %v8964
    %9160 = vmatprep.subr.bf16.mxu0 %v8973
    %9161 = vmatpush1.bf16.msra.mxu0 %v8972
    %9162 = vmatprep.subr.bf16.mxu0 %v8981
    %9163 = vmatpush1.bf16.msra.mxu0 %v8980
    %9164 = vmatprep.subr.bf16.mxu0 %v8989
    %9165 = vmatpush1.bf16.msra.mxu0 %v8988
    %9166 = vmatprep.subr.bf16.mxu0 %v8997
    %9167 = vmatpush1.bf16.msra.mxu0 %v8996
    %9168 = vmatprep.subr.bf16.mxu0 %v9005
    %9169 = vmatpush1.bf16.msra.mxu0 %v9004
    %9170 = vmatprep.subr.bf16.mxu0 0
    %9171 = vmatpush1.bf16.msra.mxu0 0
    %9172 = vmatprep.subr.bf16.mxu0 0
    %9173 = vmatpush1.bf16.msra.mxu0 0
    %9174 = vmatprep.subr.bf16.mxu0 0
    %9175 = vmatpush1.bf16.msra.mxu0 0
    %9176 = vmatprep.subr.bf16.mxu0 0
    %9177 = vmatpush1.bf16.msra.mxu0 0
    %9178 = vmatprep.subr.bf16.mxu0 0
    %9179 = vmatpush1.bf16.msra.mxu0 0
    %9180 = vmatprep.subr.bf16.mxu0 0
    %9181 = vmatpush1.bf16.msra.mxu0 0
    %9182 = vmatprep.subr.bf16.mxu0 0
    %9183 = vmatpush1.bf16.msra.mxu0 0
    %9184 = vmatprep.subr.bf16.mxu0 0
    %9185 = vmatpush1.bf16.msra.mxu0 0
    %9186 = vmatprep.mubr.bf16.mxu0 0
    %9187 = vmatmul.mubr.bf16.gmra.mrb[0].mxu0 %v8750
    %v9188 = vpop.f32.mrb[0].mxu0
    %v9189 = vadd.f32 0.0, %v9188
    %v9190 = vpop.f32.mrb[0].mxu0
    %v9191 = vadd.f32 0.0, %v9190
    %v9192 = vpop.f32.mrb[0].mxu0
    %v9193 = vpop.f32.mrb[0].mxu0
    %9194 = vdwg.mxu0
    %9195 = vmatprep.subr.bf16.mxu0 %v8951
    %9196 = vmatpush1.bf16.msra.mxu0 %v8950
    %9197 = vmatprep.subr.bf16.mxu0 %v8959
    %9198 = vmatpush1.bf16.msra.mxu0 %v8958
    %9199 = vmatprep.subr.bf16.mxu0 %v8967
    %9200 = vmatpush1.bf16.msra.mxu0 %v8966
    %9201 = vmatprep.subr.bf16.mxu0 %v8975
    %9202 = vmatpush1.bf16.msra.mxu0 %v8974
    %9203 = vmatprep.subr.bf16.mxu0 %v8983
    %9204 = vmatpush1.bf16.msra.mxu0 %v8982
    %9205 = vmatprep.subr.bf16.mxu0 %v8991
    %9206 = vmatpush1.bf16.msra.mxu0 %v8990
    %9207 = vmatprep.subr.bf16.mxu0 %v8999
    %9208 = vmatpush1.bf16.msra.mxu0 %v8998
    %9209 = vmatprep.subr.bf16.mxu0 %v9007
    %9210 = vmatpush1.bf16.msra.mxu0 %v9006
    %9211 = vmatprep.subr.bf16.mxu0 0
    %9212 = vmatpush1.bf16.msra.mxu0 0
    %9213 = vmatprep.subr.bf16.mxu0 0
    %9214 = vmatpush1.bf16.msra.mxu0 0
    %9215 = vmatprep.subr.bf16.mxu0 0
    %9216 = vmatpush1.bf16.msra.mxu0 0
    %9217 = vmatprep.subr.bf16.mxu0 0
    %9218 = vmatpush1.bf16.msra.mxu0 0
    %9219 = vmatprep.subr.bf16.mxu0 0
    %9220 = vmatpush1.bf16.msra.mxu0 0
    %9221 = vmatprep.subr.bf16.mxu0 0
    %9222 = vmatpush1.bf16.msra.mxu0 0
    %9223 = vmatprep.subr.bf16.mxu0 0
    %9224 = vmatpush1.bf16.msra.mxu0 0
    %9225 = vmatprep.subr.bf16.mxu0 0
    %9226 = vmatpush1.bf16.msra.mxu0 0
    %9227 = vmatprep.mubr.bf16.mxu0 0
    %9228 = vmatmul.mubr.bf16.gmra.mrb[0].mxu0 %v8750
    %v9229 = vpop.f32.mrb[0].mxu0
    %v9230 = vadd.f32 0.0, %v9229
    %v9231 = vpop.f32.mrb[0].mxu0
    %v9232 = vadd.f32 0.0, %v9231
    %v9233 = vpop.f32.mrb[0].mxu0
    %v9234 = vpop.f32.mrb[0].mxu0
    %9235 = vdwg.mxu0
    %v9236 = vadd.f32 %v8503, %v9107
    %v9237 = vadd.f32 %v8504, %v9109
    %v9238 = vadd.f32 %v8505, %v9148
    %v9239 = vadd.f32 %v8506, %v9150
    %v9240 = vadd.f32 %v8507, %v9189
    %v9241 = vadd.f32 %v8508, %v9191
    %v9242 = vadd.f32 %v8509, %v9230
    %v9243 = vadd.f32 %v8510, %v9232
    %v9244 = vrot.slane %v7777, 1
    %9246 = vmatprep.subr.bf16.mxu0 %v8945
    %9247 = vmatpush1.bf16.msra.mxu0 %v8944
    %9248 = vmatprep.subr.bf16.mxu0 %v8953
    %9249 = vmatpush1.bf16.msra.mxu0 %v8952
    %9250 = vmatprep.subr.bf16.mxu0 %v8961
    %9251 = vmatpush1.bf16.msra.mxu0 %v8960
    %9252 = vmatprep.subr.bf16.mxu0 %v8969
    %9253 = vmatpush1.bf16.msra.mxu0 %v8968
    %9254 = vmatprep.subr.bf16.mxu0 %v8977
    %9255 = vmatpush1.bf16.msra.mxu0 %v8976
    %9256 = vmatprep.subr.bf16.mxu0 %v8985
    %9257 = vmatpush1.bf16.msra.mxu0 %v8984
    %9258 = vmatprep.subr.bf16.mxu0 %v8993
    %9259 = vmatpush1.bf16.msra.mxu0 %v8992
    %9260 = vmatprep.subr.bf16.mxu0 %v9001
    %9261 = vmatpush1.bf16.msra.mxu0 %v9000
    %9262 = vmatprep.subr.bf16.mxu0 0
    %9263 = vmatpush1.bf16.msra.mxu0 0
    %9264 = vmatprep.subr.bf16.mxu0 0
    %9265 = vmatpush1.bf16.msra.mxu0 0
    %9266 = vmatprep.subr.bf16.mxu0 0
    %9267 = vmatpush1.bf16.msra.mxu0 0
    %9268 = vmatprep.subr.bf16.mxu0 0
    %9269 = vmatpush1.bf16.msra.mxu0 0
    %9270 = vmatprep.subr.bf16.mxu0 0
    %9271 = vmatpush1.bf16.msra.mxu0 0
    %9272 = vmatprep.subr.bf16.mxu0 0
    %9273 = vmatpush1.bf16.msra.mxu0 0
    %9274 = vmatprep.subr.bf16.mxu0 0
    %9275 = vmatpush1.bf16.msra.mxu0 0
    %9276 = vmatprep.subr.bf16.mxu0 0
    %9277 = vmatpush1.bf16.msra.mxu0 0
    %9278 = vmatprep.mubr.bf16.mxu0 0
    %9279 = vmatmul.mubr.bf16.gmra.mrb[0].mxu0 %v9244
    %v9280 = vpop.f32.mrb[0].mxu0
    %v9281 = vadd.f32 0.0, %v9280
    %v9282 = vpop.f32.mrb[0].mxu0
    %v9283 = vadd.f32 0.0, %v9282
    %v9284 = vpop.f32.mrb[0].mxu0
    %v9285 = vpop.f32.mrb[0].mxu0
    %9286 = vdwg.mxu0
    %9287 = vmatprep.subr.bf16.mxu0 %v8947
    %9288 = vmatpush1.bf16.msra.mxu0 %v8946
    %9289 = vmatprep.subr.bf16.mxu0 %v8955
    %9290 = vmatpush1.bf16.msra.mxu0 %v8954
    %9291 = vmatprep.subr.bf16.mxu0 %v8963
    %9292 = vmatpush1.bf16.msra.mxu0 %v8962
    %9293 = vmatprep.subr.bf16.mxu0 %v8971
    %9294 = vmatpush1.bf16.msra.mxu0 %v8970
    %9295 = vmatprep.subr.bf16.mxu0 %v8979
    %9296 = vmatpush1.bf16.msra.mxu0 %v8978
    %9297 = vmatprep.subr.bf16.mxu0 %v8987
    %9298 = vmatpush1.bf16.msra.mxu0 %v8986
    %9299 = vmatprep.subr.bf16.mxu0 %v8995
    %9300 = vmatpush1.bf16.msra.mxu0 %v8994
    %9301 = vmatprep.subr.bf16.mxu0 %v9003
    %9302 = vmatpush1.bf16.msra.mxu0 %v9002
    %9303 = vmatprep.subr.bf16.mxu0 0
    %9304 = vmatpush1.bf16.msra.mxu0 0
    %9305 = vmatprep.subr.bf16.mxu0 0
    %9306 = vmatpush1.bf16.msra.mxu0 0
    %9307 = vmatprep.subr.bf16.mxu0 0
    %9308 = vmatpush1.bf16.msra.mxu0 0
    %9309 = vmatprep.subr.bf16.mxu0 0
    %9310 = vmatpush1.bf16.msra.mxu0 0
    %9311 = vmatprep.subr.bf16.mxu0 0
    %9312 = vmatpush1.bf16.msra.mxu0 0
    %9313 = vmatprep.subr.bf16.mxu0 0
    %9314 = vmatpush1.bf16.msra.mxu0 0
    %9315 = vmatprep.subr.bf16.mxu0 0
    %9316 = vmatpush1.bf16.msra.mxu0 0
    %9317 = vmatprep.subr.bf16.mxu0 0
    %9318 = vmatpush1.bf16.msra.mxu0 0
    %9319 = vmatprep.mubr.bf16.mxu0 0
    %9320 = vmatmul.mubr.bf16.gmra.mrb[0].mxu0 %v9244
    %v9321 = vpop.f32.mrb[0].mxu0
    %v9322 = vadd.f32 0.0, %v9321
    %v9323 = vpop.f32.mrb[0].mxu0
    %v9324 = vadd.f32 0.0, %v9323
    %v9325 = vpop.f32.mrb[0].mxu0
    %v9326 = vpop.f32.mrb[0].mxu0
    %9327 = vdwg.mxu0
    %9328 = vmatprep.subr.bf16.mxu0 %v8949
    %9329 = vmatpush1.bf16.msra.mxu0 %v8948
    %9330 = vmatprep.subr.bf16.mxu0 %v8957
    %9331 = vmatpush1.bf16.msra.mxu0 %v8956
    %9332 = vmatprep.subr.bf16.mxu0 %v8965
    %9333 = vmatpush1.bf16.msra.mxu0 %v8964
    %9334 = vmatprep.subr.bf16.mxu0 %v8973
    %9335 = vmatpush1.bf16.msra.mxu0 %v8972
    %9336 = vmatprep.subr.bf16.mxu0 %v8981
    %9337 = vmatpush1.bf16.msra.mxu0 %v8980
    %9338 = vmatprep.subr.bf16.mxu0 %v8989
    %9339 = vmatpush1.bf16.msra.mxu0 %v8988
    %9340 = vmatprep.subr.bf16.mxu0 %v8997
    %9341 = vmatpush1.bf16.msra.mxu0 %v8996
    %9342 = vmatprep.subr.bf16.mxu0 %v9005
    %9343 = vmatpush1.bf16.msra.mxu0 %v9004
    %9344 = vmatprep.subr.bf16.mxu0 0
    %9345 = vmatpush1.bf16.msra.mxu0 0
    %9346 = vmatprep.subr.bf16.mxu0 0
    %9347 = vmatpush1.bf16.msra.mxu0 0
    %9348 = vmatprep.subr.bf16.mxu0 0
    %9349 = vmatpush1.bf16.msra.mxu0 0
    %9350 = vmatprep.subr.bf16.mxu0 0
    %9351 = vmatpush1.bf16.msra.mxu0 0
    %9352 = vmatprep.subr.bf16.mxu0 0
    %9353 = vmatpush1.bf16.msra.mxu0 0
    %9354 = vmatprep.subr.bf16.mxu0 0
    %9355 = vmatpush1.bf16.msra.mxu0 0
    %9356 = vmatprep.subr.bf16.mxu0 0
    %9357 = vmatpush1.bf16.msra.mxu0 0
    %9358 = vmatprep.subr.bf16.mxu0 0
    %9359 = vmatpush1.bf16.msra.mxu0 0
    %9360 = vmatprep.mubr.bf16.mxu0 0
    %9361 = vmatmul.mubr.bf16.gmra.mrb[0].mxu0 %v9244
    %v9362 = vpop.f32.mrb[0].mxu0
    %v9363 = vadd.f32 0.0, %v9362
    %v9364 = vpop.f32.mrb[0].mxu0
    %v9365 = vadd.f32 0.0, %v9364
    %v9366 = vpop.f32.mrb[0].mxu0
    %v9367 = vpop.f32.mrb[0].mxu0
    %9368 = vdwg.mxu0
    %9369 = vmatprep.subr.bf16.mxu0 %v8951
    %9370 = vmatpush1.bf16.msra.mxu0 %v8950
    %9371 = vmatprep.subr.bf16.mxu0 %v8959
    %9372 = vmatpush1.bf16.msra.mxu0 %v8958
    %9373 = vmatprep.subr.bf16.mxu0 %v8967
    %9374 = vmatpush1.bf16.msra.mxu0 %v8966
    %9375 = vmatprep.subr.bf16.mxu0 %v8975
    %9376 = vmatpush1.bf16.msra.mxu0 %v8974
    %9377 = vmatprep.subr.bf16.mxu0 %v8983
    %9378 = vmatpush1.bf16.msra.mxu0 %v8982
    %9379 = vmatprep.subr.bf16.mxu0 %v8991
    %9380 = vmatpush1.bf16.msra.mxu0 %v8990
    %9381 = vmatprep.subr.bf16.mxu0 %v8999
    %9382 = vmatpush1.bf16.msra.mxu0 %v8998
    %9383 = vmatprep.subr.bf16.mxu0 %v9007
    %9384 = vmatpush1.bf16.msra.mxu0 %v9006
    %9385 = vmatprep.subr.bf16.mxu0 0
    %9386 = vmatpush1.bf16.msra.mxu0 0
    %9387 = vmatprep.subr.bf16.mxu0 0
    %9388 = vmatpush1.bf16.msra.mxu0 0
    %9389 = vmatprep.subr.bf16.mxu0 0
    %9390 = vmatpush1.bf16.msra.mxu0 0
    %9391 = vmatprep.subr.bf16.mxu0 0
    %9392 = vmatpush1.bf16.msra.mxu0 0
    %9393 = vmatprep.subr.bf16.mxu0 0
    %9394 = vmatpush1.bf16.msra.mxu0 0
    %9395 = vmatprep.subr.bf16.mxu0 0
    %9396 = vmatpush1.bf16.msra.mxu0 0
    %9397 = vmatprep.subr.bf16.mxu0 0
    %9398 = vmatpush1.bf16.msra.mxu0 0
    %9399 = vmatprep.subr.bf16.mxu0 0
    %9400 = vmatpush1.bf16.msra.mxu0 0
    %9401 = vmatprep.mubr.bf16.mxu0 0
    %9402 = vmatmul.mubr.bf16.gmra.mrb[0].mxu0 %v9244
    %v9403 = vpop.f32.mrb[0].mxu0
    %v9404 = vadd.f32 0.0, %v9403
    %v9405 = vpop.f32.mrb[0].mxu0
    %v9406 = vadd.f32 0.0, %v9405
    %v9407 = vpop.f32.mrb[0].mxu0
    %v9408 = vpop.f32.mrb[0].mxu0
    %9409 = vdwg.mxu0
    %v9410 = vadd.f32 %v8678, %v9281
    %v9411 = vadd.f32 %v8679, %v9283
    %v9412 = vadd.f32 %v8680, %v9322
    %v9413 = vadd.f32 %v8681, %v9324
    %v9414 = vadd.f32 %v8682, %v9363
    %v9415 = vadd.f32 %v8683, %v9365
    %v9416 = vadd.f32 %v8684, %v9404
    %v9417 = vadd.f32 %v8685, %v9406
    %v9418 = vld [vmem:[#allocation10 + $0x1800] sm:$0xff]
    %v9419 = vld [vmem:[#allocation10 + $0x1808] sm:$0xff]
    %v9420 = vld [vmem:[#allocation10 + $0x1810] sm:$0xff]
    %v9421 = vld [vmem:[#allocation10 + $0x1818] sm:$0xff]
    %v9422 = vld [vmem:[#allocation10 + $0x1820] sm:$0xff]
    %v9423 = vld [vmem:[#allocation10 + $0x1828] sm:$0xff]
    %v9424 = vld [vmem:[#allocation10 + $0x1830] sm:$0xff]
    %v9425 = vld [vmem:[#allocation10 + $0x1838] sm:$0xff]
    %v9426 = vld [vmem:[#allocation10 + $0x1840] sm:$0xff]
    %v9427 = vld [vmem:[#allocation10 + $0x1848] sm:$0xff]
    %v9428 = vld [vmem:[#allocation10 + $0x1850] sm:$0xff]
    %v9429 = vld [vmem:[#allocation10 + $0x1858] sm:$0xff]
    %v9430 = vld [vmem:[#allocation10 + $0x1860] sm:$0xff]
    %v9431 = vld [vmem:[#allocation10 + $0x1868] sm:$0xff]
    %v9432 = vld [vmem:[#allocation10 + $0x1870] sm:$0xff]
    %v9433 = vld [vmem:[#allocation10 + $0x1878] sm:$0xff]
    %v9434 = vld [vmem:[#allocation10 + $0x1880] sm:$0xff]
    %v9435 = vld [vmem:[#allocation10 + $0x1888] sm:$0xff]
    %v9436 = vld [vmem:[#allocation10 + $0x1890] sm:$0xff]
    %v9437 = vld [vmem:[#allocation10 + $0x1898] sm:$0xff]
    %v9438 = vld [vmem:[#allocation10 + $0x18a0] sm:$0xff]
    %v9439 = vld [vmem:[#allocation10 + $0x18a8] sm:$0xff]
    %v9440 = vld [vmem:[#allocation10 + $0x18b0] sm:$0xff]
    %v9441 = vld [vmem:[#allocation10 + $0x18b8] sm:$0xff]
    %v9442 = vld [vmem:[#allocation10 + $0x18c0] sm:$0xff]
    %v9443 = vld [vmem:[#allocation10 + $0x18c8] sm:$0xff]
    %v9444 = vld [vmem:[#allocation10 + $0x18d0] sm:$0xff]
    %v9445 = vld [vmem:[#allocation10 + $0x18d8] sm:$0xff]
    %v9446 = vld [vmem:[#allocation10 + $0x18e0] sm:$0xff]
    %v9447 = vld [vmem:[#allocation10 + $0x18e8] sm:$0xff]
    %v9448 = vld [vmem:[#allocation10 + $0x18f0] sm:$0xff]
    %v9449 = vld [vmem:[#allocation10 + $0x18f8] sm:$0xff]
    %v9450 = vld [vmem:[#allocation10 + $0x1900] sm:$0xff]
    %v9451 = vld [vmem:[#allocation10 + $0x1908] sm:$0xff]
    %v9452 = vld [vmem:[#allocation10 + $0x1910] sm:$0xff]
    %v9453 = vld [vmem:[#allocation10 + $0x1918] sm:$0xff]
    %v9454 = vld [vmem:[#allocation10 + $0x1920] sm:$0xff]
    %v9455 = vld [vmem:[#allocation10 + $0x1928] sm:$0xff]
    %v9456 = vld [vmem:[#allocation10 + $0x1930] sm:$0xff]
    %v9457 = vld [vmem:[#allocation10 + $0x1938] sm:$0xff]
    %v9458 = vld [vmem:[#allocation10 + $0x1940] sm:$0xff]
    %v9459 = vld [vmem:[#allocation10 + $0x1948] sm:$0xff]
    %v9460 = vld [vmem:[#allocation10 + $0x1950] sm:$0xff]
    %v9461 = vld [vmem:[#allocation10 + $0x1958] sm:$0xff]
    %v9462 = vld [vmem:[#allocation10 + $0x1960] sm:$0xff]
    %v9463 = vld [vmem:[#allocation10 + $0x1968] sm:$0xff]
    %v9464 = vld [vmem:[#allocation10 + $0x1970] sm:$0xff]
    %v9465 = vld [vmem:[#allocation10 + $0x1978] sm:$0xff]
    %v9466 = vld [vmem:[#allocation10 + $0x1980] sm:$0xff]
    %v9467 = vld [vmem:[#allocation10 + $0x1988] sm:$0xff]
    %v9468 = vld [vmem:[#allocation10 + $0x1990] sm:$0xff]
    %v9469 = vld [vmem:[#allocation10 + $0x1998] sm:$0xff]
    %v9470 = vld [vmem:[#allocation10 + $0x19a0] sm:$0xff]
    %v9471 = vld [vmem:[#allocation10 + $0x19a8] sm:$0xff]
    %v9472 = vld [vmem:[#allocation10 + $0x19b0] sm:$0xff]
    %v9473 = vld [vmem:[#allocation10 + $0x19b8] sm:$0xff]
    %v9474 = vld [vmem:[#allocation10 + $0x19c0] sm:$0xff]
    %v9475 = vld [vmem:[#allocation10 + $0x19c8] sm:$0xff]
    %v9476 = vld [vmem:[#allocation10 + $0x19d0] sm:$0xff]
    %v9477 = vld [vmem:[#allocation10 + $0x19d8] sm:$0xff]
    %v9478 = vld [vmem:[#allocation10 + $0x19e0] sm:$0xff]
    %v9479 = vld [vmem:[#allocation10 + $0x19e8] sm:$0xff]
    %v9480 = vld [vmem:[#allocation10 + $0x19f0] sm:$0xff]
    %v9481 = vld [vmem:[#allocation10 + $0x19f8] sm:$0xff]
    %v9482 = vrot.slane %v6550, 2
    %v9548 = vunpack.c.l.b16 %v9418
    %v9549 = vunpack.c.h.b16 %v9418
    %v9550 = vunpack.c.l.b16 %v9419
    %v9551 = vunpack.c.h.b16 %v9419
    %v9552 = vunpack.c.l.b16 %v9420
    %v9553 = vunpack.c.h.b16 %v9420
    %v9554 = vunpack.c.l.b16 %v9421
    %v9555 = vunpack.c.h.b16 %v9421
    %v9556 = vunpack.c.l.b16 %v9422
    %v9557 = vunpack.c.h.b16 %v9422
    %v9558 = vunpack.c.l.b16 %v9423
    %v9559 = vunpack.c.h.b16 %v9423
    %v9560 = vunpack.c.l.b16 %v9424
    %v9561 = vunpack.c.h.b16 %v9424
    %v9562 = vunpack.c.l.b16 %v9425
    %v9563 = vunpack.c.h.b16 %v9425
    %v9564 = vunpack.c.l.b16 %v9426
    %v9565 = vunpack.c.h.b16 %v9426
    %v9566 = vunpack.c.l.b16 %v9427
    %v9567 = vunpack.c.h.b16 %v9427
    %v9568 = vunpack.c.l.b16 %v9428
    %v9569 = vunpack.c.h.b16 %v9428
    %v9570 = vunpack.c.l.b16 %v9429
    %v9571 = vunpack.c.h.b16 %v9429
    %v9572 = vunpack.c.l.b16 %v9430
    %v9573 = vunpack.c.h.b16 %v9430
    %v9574 = vunpack.c.l.b16 %v9431
    %v9575 = vunpack.c.h.b16 %v9431
    %v9576 = vunpack.c.l.b16 %v9432
    %v9577 = vunpack.c.h.b16 %v9432
    %v9578 = vunpack.c.l.b16 %v9433
    %v9579 = vunpack.c.h.b16 %v9433
    %v9580 = vunpack.c.l.b16 %v9434
    %v9581 = vunpack.c.h.b16 %v9434
    %v9582 = vunpack.c.l.b16 %v9435
    %v9583 = vunpack.c.h.b16 %v9435
    %v9584 = vunpack.c.l.b16 %v9436
    %v9585 = vunpack.c.h.b16 %v9436
    %v9586 = vunpack.c.l.b16 %v9437
    %v9587 = vunpack.c.h.b16 %v9437
    %v9588 = vunpack.c.l.b16 %v9438
    %v9589 = vunpack.c.h.b16 %v9438
    %v9590 = vunpack.c.l.b16 %v9439
    %v9591 = vunpack.c.h.b16 %v9439
    %v9592 = vunpack.c.l.b16 %v9440
    %v9593 = vunpack.c.h.b16 %v9440
    %v9594 = vunpack.c.l.b16 %v9441
    %v9595 = vunpack.c.h.b16 %v9441
    %v9596 = vunpack.c.l.b16 %v9442
    %v9597 = vunpack.c.h.b16 %v9442
    %v9598 = vunpack.c.l.b16 %v9443
    %v9599 = vunpack.c.h.b16 %v9443
    %v9600 = vunpack.c.l.b16 %v9444
    %v9601 = vunpack.c.h.b16 %v9444
    %v9602 = vunpack.c.l.b16 %v9445
    %v9603 = vunpack.c.h.b16 %v9445
    %v9604 = vunpack.c.l.b16 %v9446
    %v9605 = vunpack.c.h.b16 %v9446
    %v9606 = vunpack.c.l.b16 %v9447
    %v9607 = vunpack.c.h.b16 %v9447
    %v9608 = vunpack.c.l.b16 %v9448
    %v9609 = vunpack.c.h.b16 %v9448
    %v9610 = vunpack.c.l.b16 %v9449
    %v9611 = vunpack.c.h.b16 %v9449
    %v9612 = vunpack.c.l.b16 %v9450
    %v9613 = vunpack.c.h.b16 %v9450
    %v9614 = vunpack.c.l.b16 %v9451
    %v9615 = vunpack.c.h.b16 %v9451
    %v9616 = vunpack.c.l.b16 %v9452
    %v9617 = vunpack.c.h.b16 %v9452
    %v9618 = vunpack.c.l.b16 %v9453
    %v9619 = vunpack.c.h.b16 %v9453
    %v9620 = vunpack.c.l.b16 %v9454
    %v9621 = vunpack.c.h.b16 %v9454
    %v9622 = vunpack.c.l.b16 %v9455
    %v9623 = vunpack.c.h.b16 %v9455
    %v9624 = vunpack.c.l.b16 %v9456
    %v9625 = vunpack.c.h.b16 %v9456
    %v9626 = vunpack.c.l.b16 %v9457
    %v9627 = vunpack.c.h.b16 %v9457
    %v9628 = vunpack.c.l.b16 %v9458
    %v9629 = vunpack.c.h.b16 %v9458
    %v9630 = vunpack.c.l.b16 %v9459
    %v9631 = vunpack.c.h.b16 %v9459
    %v9632 = vunpack.c.l.b16 %v9460
    %v9633 = vunpack.c.h.b16 %v9460
    %v9634 = vunpack.c.l.b16 %v9461
    %v9635 = vunpack.c.h.b16 %v9461
    %v9636 = vunpack.c.l.b16 %v9462
    %v9637 = vunpack.c.h.b16 %v9462
    %v9638 = vunpack.c.l.b16 %v9463
    %v9639 = vunpack.c.h.b16 %v9463
    %v9640 = vunpack.c.l.b16 %v9464
    %v9641 = vunpack.c.h.b16 %v9464
    %v9642 = vunpack.c.l.b16 %v9465
    %v9643 = vunpack.c.h.b16 %v9465
    %v9644 = vunpack.c.l.b16 %v9466
    %v9645 = vunpack.c.h.b16 %v9466
    %v9646 = vunpack.c.l.b16 %v9467
    %v9647 = vunpack.c.h.b16 %v9467
    %v9648 = vunpack.c.l.b16 %v9468
    %v9649 = vunpack.c.h.b16 %v9468
    %v9650 = vunpack.c.l.b16 %v9469
    %v9651 = vunpack.c.h.b16 %v9469
    %v9652 = vunpack.c.l.b16 %v9470
    %v9653 = vunpack.c.h.b16 %v9470
    %v9654 = vunpack.c.l.b16 %v9471
    %v9655 = vunpack.c.h.b16 %v9471
    %v9656 = vunpack.c.l.b16 %v9472
    %v9657 = vunpack.c.h.b16 %v9472
    %v9658 = vunpack.c.l.b16 %v9473
    %v9659 = vunpack.c.h.b16 %v9473
    %v9660 = vunpack.c.l.b16 %v9474
    %v9661 = vunpack.c.h.b16 %v9474
    %v9662 = vunpack.c.l.b16 %v9475
    %v9663 = vunpack.c.h.b16 %v9475
    %v9664 = vunpack.c.l.b16 %v9476
    %v9665 = vunpack.c.h.b16 %v9476
    %v9666 = vunpack.c.l.b16 %v9477
    %v9667 = vunpack.c.h.b16 %v9477
    %v9668 = vunpack.c.l.b16 %v9478
    %v9669 = vunpack.c.h.b16 %v9478
    %v9670 = vunpack.c.l.b16 %v9479
    %v9671 = vunpack.c.h.b16 %v9479
    %v9672 = vunpack.c.l.b16 %v9480
    %v9673 = vunpack.c.h.b16 %v9480
    %v9674 = vunpack.c.l.b16 %v9481
    %v9675 = vunpack.c.h.b16 %v9481
    %v9676 = vpack.c.b16 %v9556, %v9548
    %v9677 = vpack.c.b16 %v9557, %v9549
    %v9678 = vpack.c.b16 %v9558, %v9550
    %v9679 = vpack.c.b16 %v9559, %v9551
    %v9680 = vpack.c.b16 %v9560, %v9552
    %v9681 = vpack.c.b16 %v9561, %v9553
    %v9682 = vpack.c.b16 %v9562, %v9554
    %v9683 = vpack.c.b16 %v9563, %v9555
    %v9684 = vpack.c.b16 %v9572, %v9564
    %v9685 = vpack.c.b16 %v9573, %v9565
    %v9686 = vpack.c.b16 %v9574, %v9566
    %v9687 = vpack.c.b16 %v9575, %v9567
    %v9688 = vpack.c.b16 %v9576, %v9568
    %v9689 = vpack.c.b16 %v9577, %v9569
    %v9690 = vpack.c.b16 %v9578, %v9570
    %v9691 = vpack.c.b16 %v9579, %v9571
    %v9692 = vpack.c.b16 %v9588, %v9580
    %v9693 = vpack.c.b16 %v9589, %v9581
    %v9694 = vpack.c.b16 %v9590, %v9582
    %v9695 = vpack.c.b16 %v9591, %v9583
    %v9696 = vpack.c.b16 %v9592, %v9584
    %v9697 = vpack.c.b16 %v9593, %v9585
    %v9698 = vpack.c.b16 %v9594, %v9586
    %v9699 = vpack.c.b16 %v9595, %v9587
    %v9700 = vpack.c.b16 %v9604, %v9596
    %v9701 = vpack.c.b16 %v9605, %v9597
    %v9702 = vpack.c.b16 %v9606, %v9598
    %v9703 = vpack.c.b16 %v9607, %v9599
    %v9704 = vpack.c.b16 %v9608, %v9600
    %v9705 = vpack.c.b16 %v9609, %v9601
    %v9706 = vpack.c.b16 %v9610, %v9602
    %v9707 = vpack.c.b16 %v9611, %v9603
    %v9708 = vpack.c.b16 %v9620, %v9612
    %v9709 = vpack.c.b16 %v9621, %v9613
    %v9710 = vpack.c.b16 %v9622, %v9614
    %v9711 = vpack.c.b16 %v9623, %v9615
    %v9712 = vpack.c.b16 %v9624, %v9616
    %v9713 = vpack.c.b16 %v9625, %v9617
    %v9714 = vpack.c.b16 %v9626, %v9618
    %v9715 = vpack.c.b16 %v9627, %v9619
    %v9716 = vpack.c.b16 %v9636, %v9628
    %v9717 = vpack.c.b16 %v9637, %v9629
    %v9718 = vpack.c.b16 %v9638, %v9630
    %v9719 = vpack.c.b16 %v9639, %v9631
    %v9720 = vpack.c.b16 %v9640, %v9632
    %v9721 = vpack.c.b16 %v9641, %v9633
    %v9722 = vpack.c.b16 %v9642, %v9634
    %v9723 = vpack.c.b16 %v9643, %v9635
    %v9724 = vpack.c.b16 %v9652, %v9644
    %v9725 = vpack.c.b16 %v9653, %v9645
    %v9726 = vpack.c.b16 %v9654, %v9646
    %v9727 = vpack.c.b16 %v9655, %v9647
    %v9728 = vpack.c.b16 %v9656, %v9648
    %v9729 = vpack.c.b16 %v9657, %v9649
    %v9730 = vpack.c.b16 %v9658, %v9650
    %v9731 = vpack.c.b16 %v9659, %v9651
    %v9732 = vpack.c.b16 %v9668, %v9660
    %v9733 = vpack.c.b16 %v9669, %v9661
    %v9734 = vpack.c.b16 %v9670, %v9662
    %v9735 = vpack.c.b16 %v9671, %v9663
    %v9736 = vpack.c.b16 %v9672, %v9664
    %v9737 = vpack.c.b16 %v9673, %v9665
    %v9738 = vpack.c.b16 %v9674, %v9666
    %v9739 = vpack.c.b16 %v9675, %v9667
    %9804 = vmatprep.subr.bf16.mxu0 %v9677
    %9805 = vmatpush1.bf16.msra.mxu0 %v9676
    %9806 = vmatprep.subr.bf16.mxu0 %v9685
    %9807 = vmatpush1.bf16.msra.mxu0 %v9684
    %9808 = vmatprep.subr.bf16.mxu0 %v9693
    %9809 = vmatpush1.bf16.msra.mxu0 %v9692
    %9810 = vmatprep.subr.bf16.mxu0 %v9701
    %9811 = vmatpush1.bf16.msra.mxu0 %v9700
    %9812 = vmatprep.subr.bf16.mxu0 %v9709
    %9813 = vmatpush1.bf16.msra.mxu0 %v9708
    %9814 = vmatprep.subr.bf16.mxu0 %v9717
    %9815 = vmatpush1.bf16.msra.mxu0 %v9716
    %9816 = vmatprep.subr.bf16.mxu0 %v9725
    %9817 = vmatpush1.bf16.msra.mxu0 %v9724
    %9818 = vmatprep.subr.bf16.mxu0 %v9733
    %9819 = vmatpush1.bf16.msra.mxu0 %v9732
    %9820 = vmatprep.subr.bf16.mxu0 0
    %9821 = vmatpush1.bf16.msra.mxu0 0
    %9822 = vmatprep.subr.bf16.mxu0 0
    %9823 = vmatpush1.bf16.msra.mxu0 0
    %9824 = vmatprep.subr.bf16.mxu0 0
    %9825 = vmatpush1.bf16.msra.mxu0 0
    %9826 = vmatprep.subr.bf16.mxu0 0
    %9827 = vmatpush1.bf16.msra.mxu0 0
    %9828 = vmatprep.subr.bf16.mxu0 0
    %9829 = vmatpush1.bf16.msra.mxu0 0
    %9830 = vmatprep.subr.bf16.mxu0 0
    %9831 = vmatpush1.bf16.msra.mxu0 0
    %9832 = vmatprep.subr.bf16.mxu0 0
    %9833 = vmatpush1.bf16.msra.mxu0 0
    %9834 = vmatprep.subr.bf16.mxu0 0
    %9835 = vmatpush1.bf16.msra.mxu0 0
    %9836 = vmatprep.mubr.bf16.mxu0 0
    %9837 = vmatmul.mubr.bf16.gmra.mrb[0].mxu0 %v9482
    %v9838 = vpop.f32.mrb[0].mxu0
    %v9839 = vadd.f32 0.0, %v9838
    %v9840 = vpop.f32.mrb[0].mxu0
    %v9841 = vadd.f32 0.0, %v9840
    %v9842 = vpop.f32.mrb[0].mxu0
    %v9843 = vpop.f32.mrb[0].mxu0
    %9844 = vdwg.mxu0
    %9845 = vmatprep.subr.bf16.mxu0 %v9679
    %9846 = vmatpush1.bf16.msra.mxu0 %v9678
    %9847 = vmatprep.subr.bf16.mxu0 %v9687
    %9848 = vmatpush1.bf16.msra.mxu0 %v9686
    %9849 = vmatprep.subr.bf16.mxu0 %v9695
    %9850 = vmatpush1.bf16.msra.mxu0 %v9694
    %9851 = vmatprep.subr.bf16.mxu0 %v9703
    %9852 = vmatpush1.bf16.msra.mxu0 %v9702
    %9853 = vmatprep.subr.bf16.mxu0 %v9711
    %9854 = vmatpush1.bf16.msra.mxu0 %v9710
    %9855 = vmatprep.subr.bf16.mxu0 %v9719
    %9856 = vmatpush1.bf16.msra.mxu0 %v9718
    %9857 = vmatprep.subr.bf16.mxu0 %v9727
    %9858 = vmatpush1.bf16.msra.mxu0 %v9726
    %9859 = vmatprep.subr.bf16.mxu0 %v9735
    %9860 = vmatpush1.bf16.msra.mxu0 %v9734
    %9861 = vmatprep.subr.bf16.mxu0 0
    %9862 = vmatpush1.bf16.msra.mxu0 0
    %9863 = vmatprep.subr.bf16.mxu0 0
    %9864 = vmatpush1.bf16.msra.mxu0 0
    %9865 = vmatprep.subr.bf16.mxu0 0
    %9866 = vmatpush1.bf16.msra.mxu0 0
    %9867 = vmatprep.subr.bf16.mxu0 0
    %9868 = vmatpush1.bf16.msra.mxu0 0
    %9869 = vmatprep.subr.bf16.mxu0 0
    %9870 = vmatpush1.bf16.msra.mxu0 0
    %9871 = vmatprep.subr.bf16.mxu0 0
    %9872 = vmatpush1.bf16.msra.mxu0 0
    %9873 = vmatprep.subr.bf16.mxu0 0
    %9874 = vmatpush1.bf16.msra.mxu0 0
    %9875 = vmatprep.subr.bf16.mxu0 0
    %9876 = vmatpush1.bf16.msra.mxu0 0
    %9877 = vmatprep.mubr.bf16.mxu0 0
    %9878 = vmatmul.mubr.bf16.gmra.mrb[0].mxu0 %v9482
    %v9879 = vpop.f32.mrb[0].mxu0
    %v9880 = vadd.f32 0.0, %v9879
    %v9881 = vpop.f32.mrb[0].mxu0
    %v9882 = vadd.f32 0.0, %v9881
    %v9883 = vpop.f32.mrb[0].mxu0
    %v9884 = vpop.f32.mrb[0].mxu0
    %9885 = vdwg.mxu0
    %9886 = vmatprep.subr.bf16.mxu0 %v9681
    %9887 = vmatpush1.bf16.msra.mxu0 %v9680
    %9888 = vmatprep.subr.bf16.mxu0 %v9689
    %9889 = vmatpush1.bf16.msra.mxu0 %v9688
    %9890 = vmatprep.subr.bf16.mxu0 %v9697
    %9891 = vmatpush1.bf16.msra.mxu0 %v9696
    %9892 = vmatprep.subr.bf16.mxu0 %v9705
    %9893 = vmatpush1.bf16.msra.mxu0 %v9704
    %9894 = vmatprep.subr.bf16.mxu0 %v9713
    %9895 = vmatpush1.bf16.msra.mxu0 %v9712
    %9896 = vmatprep.subr.bf16.mxu0 %v9721
    %9897 = vmatpush1.bf16.msra.mxu0 %v9720
    %9898 = vmatprep.subr.bf16.mxu0 %v9729
    %9899 = vmatpush1.bf16.msra.mxu0 %v9728
    %9900 = vmatprep.subr.bf16.mxu0 %v9737
    %9901 = vmatpush1.bf16.msra.mxu0 %v9736
    %9902 = vmatprep.subr.bf16.mxu0 0
    %9903 = vmatpush1.bf16.msra.mxu0 0
    %9904 = vmatprep.subr.bf16.mxu0 0
    %9905 = vmatpush1.bf16.msra.mxu0 0
    %9906 = vmatprep.subr.bf16.mxu0 0
    %9907 = vmatpush1.bf16.msra.mxu0 0
    %9908 = vmatprep.subr.bf16.mxu0 0
    %9909 = vmatpush1.bf16.msra.mxu0 0
    %9910 = vmatprep.subr.bf16.mxu0 0
    %9911 = vmatpush1.bf16.msra.mxu0 0
    %9912 = vmatprep.subr.bf16.mxu0 0
    %9913 = vmatpush1.bf16.msra.mxu0 0
    %9914 = vmatprep.subr.bf16.mxu0 0
    %9915 = vmatpush1.bf16.msra.mxu0 0
    %9916 = vmatprep.subr.bf16.mxu0 0
    %9917 = vmatpush1.bf16.msra.mxu0 0
    %9918 = vmatprep.mubr.bf16.mxu0 0
    %9919 = vmatmul.mubr.bf16.gmra.mrb[0].mxu0 %v9482
    %v9920 = vpop.f32.mrb[0].mxu0
    %v9921 = vadd.f32 0.0, %v9920
    %v9922 = vpop.f32.mrb[0].mxu0
    %v9923 = vadd.f32 0.0, %v9922
    %v9924 = vpop.f32.mrb[0].mxu0
    %v9925 = vpop.f32.mrb[0].mxu0
    %9926 = vdwg.mxu0
    %9927 = vmatprep.subr.bf16.mxu0 %v9683
    %9928 = vmatpush1.bf16.msra.mxu0 %v9682
    %9929 = vmatprep.subr.bf16.mxu0 %v9691
    %9930 = vmatpush1.bf16.msra.mxu0 %v9690
    %9931 = vmatprep.subr.bf16.mxu0 %v9699
    %9932 = vmatpush1.bf16.msra.mxu0 %v9698
    %9933 = vmatprep.subr.bf16.mxu0 %v9707
    %9934 = vmatpush1.bf16.msra.mxu0 %v9706
    %9935 = vmatprep.subr.bf16.mxu0 %v9715
    %9936 = vmatpush1.bf16.msra.mxu0 %v9714
    %9937 = vmatprep.subr.bf16.mxu0 %v9723
    %9938 = vmatpush1.bf16.msra.mxu0 %v9722
    %9939 = vmatprep.subr.bf16.mxu0 %v9731
    %9940 = vmatpush1.bf16.msra.mxu0 %v9730
    %9941 = vmatprep.subr.bf16.mxu0 %v9739
    %9942 = vmatpush1.bf16.msra.mxu0 %v9738
    %9943 = vmatprep.subr.bf16.mxu0 0
    %9944 = vmatpush1.bf16.msra.mxu0 0
    %9945 = vmatprep.subr.bf16.mxu0 0
    %9946 = vmatpush1.bf16.msra.mxu0 0
    %9947 = vmatprep.subr.bf16.mxu0 0
    %9948 = vmatpush1.bf16.msra.mxu0 0
    %9949 = vmatprep.subr.bf16.mxu0 0
    %9950 = vmatpush1.bf16.msra.mxu0 0
    %9951 = vmatprep.subr.bf16.mxu0 0
    %9952 = vmatpush1.bf16.msra.mxu0 0
    %9953 = vmatprep.subr.bf16.mxu0 0
    %9954 = vmatpush1.bf16.msra.mxu0 0
    %9955 = vmatprep.subr.bf16.mxu0 0
    %9956 = vmatpush1.bf16.msra.mxu0 0
    %9957 = vmatprep.subr.bf16.mxu0 0
    %9958 = vmatpush1.bf16.msra.mxu0 0
    %9959 = vmatprep.mubr.bf16.mxu0 0
    %9960 = vmatmul.mubr.bf16.gmra.mrb[0].mxu0 %v9482
    %v9961 = vpop.f32.mrb[0].mxu0
    %v9962 = vadd.f32 0.0, %v9961
    %v9963 = vpop.f32.mrb[0].mxu0
    %v9964 = vadd.f32 0.0, %v9963
    %v9965 = vpop.f32.mrb[0].mxu0
    %v9966 = vpop.f32.mrb[0].mxu0
    %9967 = vdwg.mxu0
    %v9968 = vadd.f32 %v9236, %v9839
    %v9969 = vadd.f32 %v9237, %v9841
    %v9970 = vadd.f32 %v9238, %v9880
    %v9971 = vadd.f32 %v9239, %v9882
    %v9972 = vadd.f32 %v9240, %v9921
    %v9973 = vadd.f32 %v9241, %v9923
    %v9974 = vadd.f32 %v9242, %v9962
    %v9975 = vadd.f32 %v9243, %v9964
    %v9976 = vrot.slane %v7043, 2
    %9978 = vmatprep.subr.bf16.mxu0 %v9677
    %9979 = vmatpush1.bf16.msra.mxu0 %v9676
    %9980 = vmatprep.subr.bf16.mxu0 %v9685
    %9981 = vmatpush1.bf16.msra.mxu0 %v9684
    %9982 = vmatprep.subr.bf16.mxu0 %v9693
    %9983 = vmatpush1.bf16.msra.mxu0 %v9692
    %9984 = vmatprep.subr.bf16.mxu0 %v9701
    %9985 = vmatpush1.bf16.msra.mxu0 %v9700
    %9986 = vmatprep.subr.bf16.mxu0 %v9709
    %9987 = vmatpush1.bf16.msra.mxu0 %v9708
    %9988 = vmatprep.subr.bf16.mxu0 %v9717
    %9989 = vmatpush1.bf16.msra.mxu0 %v9716
    %9990 = vmatprep.subr.bf16.mxu0 %v9725
    %9991 = vmatpush1.bf16.msra.mxu0 %v9724
    %9992 = vmatprep.subr.bf16.mxu0 %v9733
    %9993 = vmatpush1.bf16.msra.mxu0 %v9732
    %9994 = vmatprep.subr.bf16.mxu0 0
    %9995 = vmatpush1.bf16.msra.mxu0 0
    %9996 = vmatprep.subr.bf16.mxu0 0
    %9997 = vmatpush1.bf16.msra.mxu0 0
    %9998 = vmatprep.subr.bf16.mxu0 0
    %9999 = vmatpush1.bf16.msra.mxu0 0
    %10000 = vmatprep.subr.bf16.mxu0 0
    %10001 = vmatpush1.bf16.msra.mxu0 0
    %10002 = vmatprep.subr.bf16.mxu0 0
    %10003 = vmatpush1.bf16.msra.mxu0 0
    %10004 = vmatprep.subr.bf16.mxu0 0
    %10005 = vmatpush1.bf16.msra.mxu0 0
    %10006 = vmatprep.subr.bf16.mxu0 0
    %10007 = vmatpush1.bf16.msra.mxu0 0
    %10008 = vmatprep.subr.bf16.mxu0 0
    %10009 = vmatpush1.bf16.msra.mxu0 0
    %10010 = vmatprep.mubr.bf16.mxu0 0
    %10011 = vmatmul.mubr.bf16.gmra.mrb[0].mxu0 %v9976
    %v10012 = vpop.f32.mrb[0].mxu0
    %v10013 = vadd.f32 0.0, %v10012
    %v10014 = vpop.f32.mrb[0].mxu0
    %v10015 = vadd.f32 0.0, %v10014
    %v10016 = vpop.f32.mrb[0].mxu0
    %v10017 = vpop.f32.mrb[0].mxu0
    %10018 = vdwg.mxu0
    %10019 = vmatprep.subr.bf16.mxu0 %v9679
    %10020 = vmatpush1.bf16.msra.mxu0 %v9678
    %10021 = vmatprep.subr.bf16.mxu0 %v9687
    %10022 = vmatpush1.bf16.msra.mxu0 %v9686
    %10023 = vmatprep.subr.bf16.mxu0 %v9695
    %10024 = vmatpush1.bf16.msra.mxu0 %v9694
    %10025 = vmatprep.subr.bf16.mxu0 %v9703
    %10026 = vmatpush1.bf16.msra.mxu0 %v9702
    %10027 = vmatprep.subr.bf16.mxu0 %v9711
    %10028 = vmatpush1.bf16.msra.mxu0 %v9710
    %10029 = vmatprep.subr.bf16.mxu0 %v9719
    %10030 = vmatpush1.bf16.msra.mxu0 %v9718
    %10031 = vmatprep.subr.bf16.mxu0 %v9727
    %10032 = vmatpush1.bf16.msra.mxu0 %v9726
    %10033 = vmatprep.subr.bf16.mxu0 %v9735
    %10034 = vmatpush1.bf16.msra.mxu0 %v9734
    %10035 = vmatprep.subr.bf16.mxu0 0
    %10036 = vmatpush1.bf16.msra.mxu0 0
    %10037 = vmatprep.subr.bf16.mxu0 0
    %10038 = vmatpush1.bf16.msra.mxu0 0
    %10039 = vmatprep.subr.bf16.mxu0 0
    %10040 = vmatpush1.bf16.msra.mxu0 0
    %10041 = vmatprep.subr.bf16.mxu0 0
    %10042 = vmatpush1.bf16.msra.mxu0 0
    %10043 = vmatprep.subr.bf16.mxu0 0
    %10044 = vmatpush1.bf16.msra.mxu0 0
    %10045 = vmatprep.subr.bf16.mxu0 0
    %10046 = vmatpush1.bf16.msra.mxu0 0
    %10047 = vmatprep.subr.bf16.mxu0 0
    %10048 = vmatpush1.bf16.msra.mxu0 0
    %10049 = vmatprep.subr.bf16.mxu0 0
    %10050 = vmatpush1.bf16.msra.mxu0 0
    %10051 = vmatprep.mubr.bf16.mxu0 0
    %10052 = vmatmul.mubr.bf16.gmra.mrb[0].mxu0 %v9976
    %v10053 = vpop.f32.mrb[0].mxu0
    %v10054 = vadd.f32 0.0, %v10053
    %v10055 = vpop.f32.mrb[0].mxu0
    %v10056 = vadd.f32 0.0, %v10055
    %v10057 = vpop.f32.mrb[0].mxu0
    %v10058 = vpop.f32.mrb[0].mxu0
    %10059 = vdwg.mxu0
    %10060 = vmatprep.subr.bf16.mxu0 %v9681
    %10061 = vmatpush1.bf16.msra.mxu0 %v9680
    %10062 = vmatprep.subr.bf16.mxu0 %v9689
    %10063 = vmatpush1.bf16.msra.mxu0 %v9688
    %10064 = vmatprep.subr.bf16.mxu0 %v9697
    %10065 = vmatpush1.bf16.msra.mxu0 %v9696
    %10066 = vmatprep.subr.bf16.mxu0 %v9705
    %10067 = vmatpush1.bf16.msra.mxu0 %v9704
    %10068 = vmatprep.subr.bf16.mxu0 %v9713
    %10069 = vmatpush1.bf16.msra.mxu0 %v9712
    %10070 = vmatprep.subr.bf16.mxu0 %v9721
    %10071 = vmatpush1.bf16.msra.mxu0 %v9720
    %10072 = vmatprep.subr.bf16.mxu0 %v9729
    %10073 = vmatpush1.bf16.msra.mxu0 %v9728
    %10074 = vmatprep.subr.bf16.mxu0 %v9737
    %10075 = vmatpush1.bf16.msra.mxu0 %v9736
    %10076 = vmatprep.subr.bf16.mxu0 0
    %10077 = vmatpush1.bf16.msra.mxu0 0
    %10078 = vmatprep.subr.bf16.mxu0 0
    %10079 = vmatpush1.bf16.msra.mxu0 0
    %10080 = vmatprep.subr.bf16.mxu0 0
    %10081 = vmatpush1.bf16.msra.mxu0 0
    %10082 = vmatprep.subr.bf16.mxu0 0
    %10083 = vmatpush1.bf16.msra.mxu0 0
    %10084 = vmatprep.subr.bf16.mxu0 0
    %10085 = vmatpush1.bf16.msra.mxu0 0
    %10086 = vmatprep.subr.bf16.mxu0 0
    %10087 = vmatpush1.bf16.msra.mxu0 0
    %10088 = vmatprep.subr.bf16.mxu0 0
    %10089 = vmatpush1.bf16.msra.mxu0 0
    %10090 = vmatprep.subr.bf16.mxu0 0
    %10091 = vmatpush1.bf16.msra.mxu0 0
    %10092 = vmatprep.mubr.bf16.mxu0 0
    %10093 = vmatmul.mubr.bf16.gmra.mrb[0].mxu0 %v9976
    %v10094 = vpop.f32.mrb[0].mxu0
    %v10095 = vadd.f32 0.0, %v10094
    %v10096 = vpop.f32.mrb[0].mxu0
    %v10097 = vadd.f32 0.0, %v10096
    %v10098 = vpop.f32.mrb[0].mxu0
    %v10099 = vpop.f32.mrb[0].mxu0
    %10100 = vdwg.mxu0
    %10101 = vmatprep.subr.bf16.mxu0 %v9683
    %10102 = vmatpush1.bf16.msra.mxu0 %v9682
    %10103 = vmatprep.subr.bf16.mxu0 %v9691
    %10104 = vmatpush1.bf16.msra.mxu0 %v9690
    %10105 = vmatprep.subr.bf16.mxu0 %v9699
    %10106 = vmatpush1.bf16.msra.mxu0 %v9698
    %10107 = vmatprep.subr.bf16.mxu0 %v9707
    %10108 = vmatpush1.bf16.msra.mxu0 %v9706
    %10109 = vmatprep.subr.bf16.mxu0 %v9715
    %10110 = vmatpush1.bf16.msra.mxu0 %v9714
    %10111 = vmatprep.subr.bf16.mxu0 %v9723
    %10112 = vmatpush1.bf16.msra.mxu0 %v9722
    %10113 = vmatprep.subr.bf16.mxu0 %v9731
    %10114 = vmatpush1.bf16.msra.mxu0 %v9730
    %10115 = vmatprep.subr.bf16.mxu0 %v9739
    %10116 = vmatpush1.bf16.msra.mxu0 %v9738
    %10117 = vmatprep.subr.bf16.mxu0 0
    %10118 = vmatpush1.bf16.msra.mxu0 0
    %10119 = vmatprep.subr.bf16.mxu0 0
    %10120 = vmatpush1.bf16.msra.mxu0 0
    %10121 = vmatprep.subr.bf16.mxu0 0
    %10122 = vmatpush1.bf16.msra.mxu0 0
    %10123 = vmatprep.subr.bf16.mxu0 0
    %10124 = vmatpush1.bf16.msra.mxu0 0
    %10125 = vmatprep.subr.bf16.mxu0 0
    %10126 = vmatpush1.bf16.msra.mxu0 0
    %10127 = vmatprep.subr.bf16.mxu0 0
    %10128 = vmatpush1.bf16.msra.mxu0 0
    %10129 = vmatprep.subr.bf16.mxu0 0
    %10130 = vmatpush1.bf16.msra.mxu0 0
    %10131 = vmatprep.subr.bf16.mxu0 0
    %10132 = vmatpush1.bf16.msra.mxu0 0
    %10133 = vmatprep.mubr.bf16.mxu0 0
    %10134 = vmatmul.mubr.bf16.gmra.mrb[0].mxu0 %v9976
    %v10135 = vpop.f32.mrb[0].mxu0
    %v10136 = vadd.f32 0.0, %v10135
    %v10137 = vpop.f32.mrb[0].mxu0
    %v10138 = vadd.f32 0.0, %v10137
    %v10139 = vpop.f32.mrb[0].mxu0
    %v10140 = vpop.f32.mrb[0].mxu0
    %10141 = vdwg.mxu0
    %v10142 = vadd.f32 %v9410, %v10013
    %v10143 = vadd.f32 %v9411, %v10015
    %v10144 = vadd.f32 %v9412, %v10054
    %v10145 = vadd.f32 %v9413, %v10056
    %v10146 = vadd.f32 %v9414, %v10095
    %v10147 = vadd.f32 %v9415, %v10097
    %v10148 = vadd.f32 %v9416, %v10136
    %v10149 = vadd.f32 %v9417, %v10138
    %v10150 = vld [vmem:[#allocation10 + $0x1a00] sm:$0xff]
    %v10151 = vld [vmem:[#allocation10 + $0x1a08] sm:$0xff]
    %v10152 = vld [vmem:[#allocation10 + $0x1a10] sm:$0xff]
    %v10153 = vld [vmem:[#allocation10 + $0x1a18] sm:$0xff]
    %v10154 = vld [vmem:[#allocation10 + $0x1a20] sm:$0xff]
    %v10155 = vld [vmem:[#allocation10 + $0x1a28] sm:$0xff]
    %v10156 = vld [vmem:[#allocation10 + $0x1a30] sm:$0xff]
    %v10157 = vld [vmem:[#allocation10 + $0x1a38] sm:$0xff]
    %v10158 = vld [vmem:[#allocation10 + $0x1a40] sm:$0xff]
    %v10159 = vld [vmem:[#allocation10 + $0x1a48] sm:$0xff]
    %v10160 = vld [vmem:[#allocation10 + $0x1a50] sm:$0xff]
    %v10161 = vld [vmem:[#allocation10 + $0x1a58] sm:$0xff]
    %v10162 = vld [vmem:[#allocation10 + $0x1a60] sm:$0xff]
    %v10163 = vld [vmem:[#allocation10 + $0x1a68] sm:$0xff]
    %v10164 = vld [vmem:[#allocation10 + $0x1a70] sm:$0xff]
    %v10165 = vld [vmem:[#allocation10 + $0x1a78] sm:$0xff]
    %v10166 = vld [vmem:[#allocation10 + $0x1a80] sm:$0xff]
    %v10167 = vld [vmem:[#allocation10 + $0x1a88] sm:$0xff]
    %v10168 = vld [vmem:[#allocation10 + $0x1a90] sm:$0xff]
    %v10169 = vld [vmem:[#allocation10 + $0x1a98] sm:$0xff]
    %v10170 = vld [vmem:[#allocation10 + $0x1aa0] sm:$0xff]
    %v10171 = vld [vmem:[#allocation10 + $0x1aa8] sm:$0xff]
    %v10172 = vld [vmem:[#allocation10 + $0x1ab0] sm:$0xff]
    %v10173 = vld [vmem:[#allocation10 + $0x1ab8] sm:$0xff]
    %v10174 = vld [vmem:[#allocation10 + $0x1ac0] sm:$0xff]
    %v10175 = vld [vmem:[#allocation10 + $0x1ac8] sm:$0xff]
    %v10176 = vld [vmem:[#allocation10 + $0x1ad0] sm:$0xff]
    %v10177 = vld [vmem:[#allocation10 + $0x1ad8] sm:$0xff]
    %v10178 = vld [vmem:[#allocation10 + $0x1ae0] sm:$0xff]
    %v10179 = vld [vmem:[#allocation10 + $0x1ae8] sm:$0xff]
    %v10180 = vld [vmem:[#allocation10 + $0x1af0] sm:$0xff]
    %v10181 = vld [vmem:[#allocation10 + $0x1af8] sm:$0xff]
    %v10182 = vld [vmem:[#allocation10 + $0x1b00] sm:$0xff]
    %v10183 = vld [vmem:[#allocation10 + $0x1b08] sm:$0xff]
    %v10184 = vld [vmem:[#allocation10 + $0x1b10] sm:$0xff]
    %v10185 = vld [vmem:[#allocation10 + $0x1b18] sm:$0xff]
    %v10186 = vld [vmem:[#allocation10 + $0x1b20] sm:$0xff]
    %v10187 = vld [vmem:[#allocation10 + $0x1b28] sm:$0xff]
    %v10188 = vld [vmem:[#allocation10 + $0x1b30] sm:$0xff]
    %v10189 = vld [vmem:[#allocation10 + $0x1b38] sm:$0xff]
    %v10190 = vld [vmem:[#allocation10 + $0x1b40] sm:$0xff]
    %v10191 = vld [vmem:[#allocation10 + $0x1b48] sm:$0xff]
    %v10192 = vld [vmem:[#allocation10 + $0x1b50] sm:$0xff]
    %v10193 = vld [vmem:[#allocation10 + $0x1b58] sm:$0xff]
    %v10194 = vld [vmem:[#allocation10 + $0x1b60] sm:$0xff]
    %v10195 = vld [vmem:[#allocation10 + $0x1b68] sm:$0xff]
    %v10196 = vld [vmem:[#allocation10 + $0x1b70] sm:$0xff]
    %v10197 = vld [vmem:[#allocation10 + $0x1b78] sm:$0xff]
    %v10198 = vld [vmem:[#allocation10 + $0x1b80] sm:$0xff]
    %v10199 = vld [vmem:[#allocation10 + $0x1b88] sm:$0xff]
    %v10200 = vld [vmem:[#allocation10 + $0x1b90] sm:$0xff]
    %v10201 = vld [vmem:[#allocation10 + $0x1b98] sm:$0xff]
    %v10202 = vld [vmem:[#allocation10 + $0x1ba0] sm:$0xff]
    %v10203 = vld [vmem:[#allocation10 + $0x1ba8] sm:$0xff]
    %v10204 = vld [vmem:[#allocation10 + $0x1bb0] sm:$0xff]
    %v10205 = vld [vmem:[#allocation10 + $0x1bb8] sm:$0xff]
    %v10206 = vld [vmem:[#allocation10 + $0x1bc0] sm:$0xff]
    %v10207 = vld [vmem:[#allocation10 + $0x1bc8] sm:$0xff]
    %v10208 = vld [vmem:[#allocation10 + $0x1bd0] sm:$0xff]
    %v10209 = vld [vmem:[#allocation10 + $0x1bd8] sm:$0xff]
    %v10210 = vld [vmem:[#allocation10 + $0x1be0] sm:$0xff]
    %v10211 = vld [vmem:[#allocation10 + $0x1be8] sm:$0xff]
    %v10212 = vld [vmem:[#allocation10 + $0x1bf0] sm:$0xff]
    %v10213 = vld [vmem:[#allocation10 + $0x1bf8] sm:$0xff]
    %v10214 = vrot.slane %v7281, 2
    %v10280 = vunpack.c.l.b16 %v10150
    %v10281 = vunpack.c.h.b16 %v10150
    %v10282 = vunpack.c.l.b16 %v10151
    %v10283 = vunpack.c.h.b16 %v10151
    %v10284 = vunpack.c.l.b16 %v10152
    %v10285 = vunpack.c.h.b16 %v10152
    %v10286 = vunpack.c.l.b16 %v10153
    %v10287 = vunpack.c.h.b16 %v10153
    %v10288 = vunpack.c.l.b16 %v10154
    %v10289 = vunpack.c.h.b16 %v10154
    %v10290 = vunpack.c.l.b16 %v10155
    %v10291 = vunpack.c.h.b16 %v10155
    %v10292 = vunpack.c.l.b16 %v10156
    %v10293 = vunpack.c.h.b16 %v10156
    %v10294 = vunpack.c.l.b16 %v10157
    %v10295 = vunpack.c.h.b16 %v10157
    %v10296 = vunpack.c.l.b16 %v10158
    %v10297 = vunpack.c.h.b16 %v10158
    %v10298 = vunpack.c.l.b16 %v10159
    %v10299 = vunpack.c.h.b16 %v10159
    %v10300 = vunpack.c.l.b16 %v10160
    %v10301 = vunpack.c.h.b16 %v10160
    %v10302 = vunpack.c.l.b16 %v10161
    %v10303 = vunpack.c.h.b16 %v10161
    %v10304 = vunpack.c.l.b16 %v10162
    %v10305 = vunpack.c.h.b16 %v10162
    %v10306 = vunpack.c.l.b16 %v10163
    %v10307 = vunpack.c.h.b16 %v10163
    %v10308 = vunpack.c.l.b16 %v10164
    %v10309 = vunpack.c.h.b16 %v10164
    %v10310 = vunpack.c.l.b16 %v10165
    %v10311 = vunpack.c.h.b16 %v10165
    %v10312 = vunpack.c.l.b16 %v10166
    %v10313 = vunpack.c.h.b16 %v10166
    %v10314 = vunpack.c.l.b16 %v10167
    %v10315 = vunpack.c.h.b16 %v10167
    %v10316 = vunpack.c.l.b16 %v10168
    %v10317 = vunpack.c.h.b16 %v10168
    %v10318 = vunpack.c.l.b16 %v10169
    %v10319 = vunpack.c.h.b16 %v10169
    %v10320 = vunpack.c.l.b16 %v10170
    %v10321 = vunpack.c.h.b16 %v10170
    %v10322 = vunpack.c.l.b16 %v10171
    %v10323 = vunpack.c.h.b16 %v10171
    %v10324 = vunpack.c.l.b16 %v10172
    %v10325 = vunpack.c.h.b16 %v10172
    %v10326 = vunpack.c.l.b16 %v10173
    %v10327 = vunpack.c.h.b16 %v10173
    %v10328 = vunpack.c.l.b16 %v10174
    %v10329 = vunpack.c.h.b16 %v10174
    %v10330 = vunpack.c.l.b16 %v10175
    %v10331 = vunpack.c.h.b16 %v10175
    %v10332 = vunpack.c.l.b16 %v10176
    %v10333 = vunpack.c.h.b16 %v10176
    %v10334 = vunpack.c.l.b16 %v10177
    %v10335 = vunpack.c.h.b16 %v10177
    %v10336 = vunpack.c.l.b16 %v10178
    %v10337 = vunpack.c.h.b16 %v10178
    %v10338 = vunpack.c.l.b16 %v10179
    %v10339 = vunpack.c.h.b16 %v10179
    %v10340 = vunpack.c.l.b16 %v10180
    %v10341 = vunpack.c.h.b16 %v10180
    %v10342 = vunpack.c.l.b16 %v10181
    %v10343 = vunpack.c.h.b16 %v10181
    %v10344 = vunpack.c.l.b16 %v10182
    %v10345 = vunpack.c.h.b16 %v10182
    %v10346 = vunpack.c.l.b16 %v10183
    %v10347 = vunpack.c.h.b16 %v10183
    %v10348 = vunpack.c.l.b16 %v10184
    %v10349 = vunpack.c.h.b16 %v10184
    %v10350 = vunpack.c.l.b16 %v10185
    %v10351 = vunpack.c.h.b16 %v10185
    %v10352 = vunpack.c.l.b16 %v10186
    %v10353 = vunpack.c.h.b16 %v10186
    %v10354 = vunpack.c.l.b16 %v10187
    %v10355 = vunpack.c.h.b16 %v10187
    %v10356 = vunpack.c.l.b16 %v10188
    %v10357 = vunpack.c.h.b16 %v10188
    %v10358 = vunpack.c.l.b16 %v10189
    %v10359 = vunpack.c.h.b16 %v10189
    %v10360 = vunpack.c.l.b16 %v10190
    %v10361 = vunpack.c.h.b16 %v10190
    %v10362 = vunpack.c.l.b16 %v10191
    %v10363 = vunpack.c.h.b16 %v10191
    %v10364 = vunpack.c.l.b16 %v10192
    %v10365 = vunpack.c.h.b16 %v10192
    %v10366 = vunpack.c.l.b16 %v10193
    %v10367 = vunpack.c.h.b16 %v10193
    %v10368 = vunpack.c.l.b16 %v10194
    %v10369 = vunpack.c.h.b16 %v10194
    %v10370 = vunpack.c.l.b16 %v10195
    %v10371 = vunpack.c.h.b16 %v10195
    %v10372 = vunpack.c.l.b16 %v10196
    %v10373 = vunpack.c.h.b16 %v10196
    %v10374 = vunpack.c.l.b16 %v10197
    %v10375 = vunpack.c.h.b16 %v10197
    %v10376 = vunpack.c.l.b16 %v10198
    %v10377 = vunpack.c.h.b16 %v10198
    %v10378 = vunpack.c.l.b16 %v10199
    %v10379 = vunpack.c.h.b16 %v10199
    %v10380 = vunpack.c.l.b16 %v10200
    %v10381 = vunpack.c.h.b16 %v10200
    %v10382 = vunpack.c.l.b16 %v10201
    %v10383 = vunpack.c.h.b16 %v10201
    %v10384 = vunpack.c.l.b16 %v10202
    %v10385 = vunpack.c.h.b16 %v10202
    %v10386 = vunpack.c.l.b16 %v10203
    %v10387 = vunpack.c.h.b16 %v10203
    %v10388 = vunpack.c.l.b16 %v10204
    %v10389 = vunpack.c.h.b16 %v10204
    %v10390 = vunpack.c.l.b16 %v10205
    %v10391 = vunpack.c.h.b16 %v10205
    %v10392 = vunpack.c.l.b16 %v10206
    %v10393 = vunpack.c.h.b16 %v10206
    %v10394 = vunpack.c.l.b16 %v10207
    %v10395 = vunpack.c.h.b16 %v10207
    %v10396 = vunpack.c.l.b16 %v10208
    %v10397 = vunpack.c.h.b16 %v10208
    %v10398 = vunpack.c.l.b16 %v10209
    %v10399 = vunpack.c.h.b16 %v10209
    %v10400 = vunpack.c.l.b16 %v10210
    %v10401 = vunpack.c.h.b16 %v10210
    %v10402 = vunpack.c.l.b16 %v10211
    %v10403 = vunpack.c.h.b16 %v10211
    %v10404 = vunpack.c.l.b16 %v10212
    %v10405 = vunpack.c.h.b16 %v10212
    %v10406 = vunpack.c.l.b16 %v10213
    %v10407 = vunpack.c.h.b16 %v10213
    %v10408 = vpack.c.b16 %v10288, %v10280
    %v10409 = vpack.c.b16 %v10289, %v10281
    %v10410 = vpack.c.b16 %v10290, %v10282
    %v10411 = vpack.c.b16 %v10291, %v10283
    %v10412 = vpack.c.b16 %v10292, %v10284
    %v10413 = vpack.c.b16 %v10293, %v10285
    %v10414 = vpack.c.b16 %v10294, %v10286
    %v10415 = vpack.c.b16 %v10295, %v10287
    %v10416 = vpack.c.b16 %v10304, %v10296
    %v10417 = vpack.c.b16 %v10305, %v10297
    %v10418 = vpack.c.b16 %v10306, %v10298
    %v10419 = vpack.c.b16 %v10307, %v10299
    %v10420 = vpack.c.b16 %v10308, %v10300
    %v10421 = vpack.c.b16 %v10309, %v10301
    %v10422 = vpack.c.b16 %v10310, %v10302
    %v10423 = vpack.c.b16 %v10311, %v10303
    %v10424 = vpack.c.b16 %v10320, %v10312
    %v10425 = vpack.c.b16 %v10321, %v10313
    %v10426 = vpack.c.b16 %v10322, %v10314
    %v10427 = vpack.c.b16 %v10323, %v10315
    %v10428 = vpack.c.b16 %v10324, %v10316
    %v10429 = vpack.c.b16 %v10325, %v10317
    %v10430 = vpack.c.b16 %v10326, %v10318
    %v10431 = vpack.c.b16 %v10327, %v10319
    %v10432 = vpack.c.b16 %v10336, %v10328
    %v10433 = vpack.c.b16 %v10337, %v10329
    %v10434 = vpack.c.b16 %v10338, %v10330
    %v10435 = vpack.c.b16 %v10339, %v10331
    %v10436 = vpack.c.b16 %v10340, %v10332
    %v10437 = vpack.c.b16 %v10341, %v10333
    %v10438 = vpack.c.b16 %v10342, %v10334
    %v10439 = vpack.c.b16 %v10343, %v10335
    %v10440 = vpack.c.b16 %v10352, %v10344
    %v10441 = vpack.c.b16 %v10353, %v10345
    %v10442 = vpack.c.b16 %v10354, %v10346
    %v10443 = vpack.c.b16 %v10355, %v10347
    %v10444 = vpack.c.b16 %v10356, %v10348
    %v10445 = vpack.c.b16 %v10357, %v10349
    %v10446 = vpack.c.b16 %v10358, %v10350
    %v10447 = vpack.c.b16 %v10359, %v10351
    %v10448 = vpack.c.b16 %v10368, %v10360
    %v10449 = vpack.c.b16 %v10369, %v10361
    %v10450 = vpack.c.b16 %v10370, %v10362
    %v10451 = vpack.c.b16 %v10371, %v10363
    %v10452 = vpack.c.b16 %v10372, %v10364
    %v10453 = vpack.c.b16 %v10373, %v10365
    %v10454 = vpack.c.b16 %v10374, %v10366
    %v10455 = vpack.c.b16 %v10375, %v10367
    %v10456 = vpack.c.b16 %v10384, %v10376
    %v10457 = vpack.c.b16 %v10385, %v10377
    %v10458 = vpack.c.b16 %v10386, %v10378
    %v10459 = vpack.c.b16 %v10387, %v10379
    %v10460 = vpack.c.b16 %v10388, %v10380
    %v10461 = vpack.c.b16 %v10389, %v10381
    %v10462 = vpack.c.b16 %v10390, %v10382
    %v10463 = vpack.c.b16 %v10391, %v10383
    %v10464 = vpack.c.b16 %v10400, %v10392
    %v10465 = vpack.c.b16 %v10401, %v10393
    %v10466 = vpack.c.b16 %v10402, %v10394
    %v10467 = vpack.c.b16 %v10403, %v10395
    %v10468 = vpack.c.b16 %v10404, %v10396
    %v10469 = vpack.c.b16 %v10405, %v10397
    %v10470 = vpack.c.b16 %v10406, %v10398
    %v10471 = vpack.c.b16 %v10407, %v10399
    %10536 = vmatprep.subr.bf16.mxu0 %v10409
    %10537 = vmatpush1.bf16.msra.mxu0 %v10408
    %10538 = vmatprep.subr.bf16.mxu0 %v10417
    %10539 = vmatpush1.bf16.msra.mxu0 %v10416
    %10540 = vmatprep.subr.bf16.mxu0 %v10425
    %10541 = vmatpush1.bf16.msra.mxu0 %v10424
    %10542 = vmatprep.subr.bf16.mxu0 %v10433
    %10543 = vmatpush1.bf16.msra.mxu0 %v10432
    %10544 = vmatprep.subr.bf16.mxu0 %v10441
    %10545 = vmatpush1.bf16.msra.mxu0 %v10440
    %10546 = vmatprep.subr.bf16.mxu0 %v10449
    %10547 = vmatpush1.bf16.msra.mxu0 %v10448
    %10548 = vmatprep.subr.bf16.mxu0 %v10457
    %10549 = vmatpush1.bf16.msra.mxu0 %v10456
    %10550 = vmatprep.subr.bf16.mxu0 %v10465
    %10551 = vmatpush1.bf16.msra.mxu0 %v10464
    %10552 = vmatprep.subr.bf16.mxu0 0
    %10553 = vmatpush1.bf16.msra.mxu0 0
    %10554 = vmatprep.subr.bf16.mxu0 0
    %10555 = vmatpush1.bf16.msra.mxu0 0
    %10556 = vmatprep.subr.bf16.mxu0 0
    %10557 = vmatpush1.bf16.msra.mxu0 0
    %10558 = vmatprep.subr.bf16.mxu0 0
    %10559 = vmatpush1.bf16.msra.mxu0 0
    %10560 = vmatprep.subr.bf16.mxu0 0
    %10561 = vmatpush1.bf16.msra.mxu0 0
    %10562 = vmatprep.subr.bf16.mxu0 0
    %10563 = vmatpush1.bf16.msra.mxu0 0
    %10564 = vmatprep.subr.bf16.mxu0 0
    %10565 = vmatpush1.bf16.msra.mxu0 0
    %10566 = vmatprep.subr.bf16.mxu0 0
    %10567 = vmatpush1.bf16.msra.mxu0 0
    %10568 = vmatprep.mubr.bf16.mxu0 0
    %10569 = vmatmul.mubr.bf16.gmra.mrb[0].mxu0 %v10214
    %v10570 = vpop.f32.mrb[0].mxu0
    %v10571 = vadd.f32 0.0, %v10570
    %v10572 = vpop.f32.mrb[0].mxu0
    %v10573 = vadd.f32 0.0, %v10572
    %v10574 = vpop.f32.mrb[0].mxu0
    %v10575 = vpop.f32.mrb[0].mxu0
    %10576 = vdwg.mxu0
    %10577 = vmatprep.subr.bf16.mxu0 %v10411
    %10578 = vmatpush1.bf16.msra.mxu0 %v10410
    %10579 = vmatprep.subr.bf16.mxu0 %v10419
    %10580 = vmatpush1.bf16.msra.mxu0 %v10418
    %10581 = vmatprep.subr.bf16.mxu0 %v10427
    %10582 = vmatpush1.bf16.msra.mxu0 %v10426
    %10583 = vmatprep.subr.bf16.mxu0 %v10435
    %10584 = vmatpush1.bf16.msra.mxu0 %v10434
    %10585 = vmatprep.subr.bf16.mxu0 %v10443
    %10586 = vmatpush1.bf16.msra.mxu0 %v10442
    %10587 = vmatprep.subr.bf16.mxu0 %v10451
    %10588 = vmatpush1.bf16.msra.mxu0 %v10450
    %10589 = vmatprep.subr.bf16.mxu0 %v10459
    %10590 = vmatpush1.bf16.msra.mxu0 %v10458
    %10591 = vmatprep.subr.bf16.mxu0 %v10467
    %10592 = vmatpush1.bf16.msra.mxu0 %v10466
    %10593 = vmatprep.subr.bf16.mxu0 0
    %10594 = vmatpush1.bf16.msra.mxu0 0
    %10595 = vmatprep.subr.bf16.mxu0 0
    %10596 = vmatpush1.bf16.msra.mxu0 0
    %10597 = vmatprep.subr.bf16.mxu0 0
    %10598 = vmatpush1.bf16.msra.mxu0 0
    %10599 = vmatprep.subr.bf16.mxu0 0
    %10600 = vmatpush1.bf16.msra.mxu0 0
    %10601 = vmatprep.subr.bf16.mxu0 0
    %10602 = vmatpush1.bf16.msra.mxu0 0
    %10603 = vmatprep.subr.bf16.mxu0 0
    %10604 = vmatpush1.bf16.msra.mxu0 0
    %10605 = vmatprep.subr.bf16.mxu0 0
    %10606 = vmatpush1.bf16.msra.mxu0 0
    %10607 = vmatprep.subr.bf16.mxu0 0
    %10608 = vmatpush1.bf16.msra.mxu0 0
    %10609 = vmatprep.mubr.bf16.mxu0 0
    %10610 = vmatmul.mubr.bf16.gmra.mrb[0].mxu0 %v10214
    %v10611 = vpop.f32.mrb[0].mxu0
    %v10612 = vadd.f32 0.0, %v10611
    %v10613 = vpop.f32.mrb[0].mxu0
    %v10614 = vadd.f32 0.0, %v10613
    %v10615 = vpop.f32.mrb[0].mxu0
    %v10616 = vpop.f32.mrb[0].mxu0
    %10617 = vdwg.mxu0
    %10618 = vmatprep.subr.bf16.mxu0 %v10413
    %10619 = vmatpush1.bf16.msra.mxu0 %v10412
    %10620 = vmatprep.subr.bf16.mxu0 %v10421
    %10621 = vmatpush1.bf16.msra.mxu0 %v10420
    %10622 = vmatprep.subr.bf16.mxu0 %v10429
    %10623 = vmatpush1.bf16.msra.mxu0 %v10428
    %10624 = vmatprep.subr.bf16.mxu0 %v10437
    %10625 = vmatpush1.bf16.msra.mxu0 %v10436
    %10626 = vmatprep.subr.bf16.mxu0 %v10445
    %10627 = vmatpush1.bf16.msra.mxu0 %v10444
    %10628 = vmatprep.subr.bf16.mxu0 %v10453
    %10629 = vmatpush1.bf16.msra.mxu0 %v10452
    %10630 = vmatprep.subr.bf16.mxu0 %v10461
    %10631 = vmatpush1.bf16.msra.mxu0 %v10460
    %10632 = vmatprep.subr.bf16.mxu0 %v10469
    %10633 = vmatpush1.bf16.msra.mxu0 %v10468
    %10634 = vmatprep.subr.bf16.mxu0 0
    %10635 = vmatpush1.bf16.msra.mxu0 0
    %10636 = vmatprep.subr.bf16.mxu0 0
    %10637 = vmatpush1.bf16.msra.mxu0 0
    %10638 = vmatprep.subr.bf16.mxu0 0
    %10639 = vmatpush1.bf16.msra.mxu0 0
    %10640 = vmatprep.subr.bf16.mxu0 0
    %10641 = vmatpush1.bf16.msra.mxu0 0
    %10642 = vmatprep.subr.bf16.mxu0 0
    %10643 = vmatpush1.bf16.msra.mxu0 0
    %10644 = vmatprep.subr.bf16.mxu0 0
    %10645 = vmatpush1.bf16.msra.mxu0 0
    %10646 = vmatprep.subr.bf16.mxu0 0
    %10647 = vmatpush1.bf16.msra.mxu0 0
    %10648 = vmatprep.subr.bf16.mxu0 0
    %10649 = vmatpush1.bf16.msra.mxu0 0
    %10650 = vmatprep.mubr.bf16.mxu0 0
    %10651 = vmatmul.mubr.bf16.gmra.mrb[0].mxu0 %v10214
    %v10652 = vpop.f32.mrb[0].mxu0
    %v10653 = vadd.f32 0.0, %v10652
    %v10654 = vpop.f32.mrb[0].mxu0
    %v10655 = vadd.f32 0.0, %v10654
    %v10656 = vpop.f32.mrb[0].mxu0
    %v10657 = vpop.f32.mrb[0].mxu0
    %10658 = vdwg.mxu0
    %10659 = vmatprep.subr.bf16.mxu0 %v10415
    %10660 = vmatpush1.bf16.msra.mxu0 %v10414
    %10661 = vmatprep.subr.bf16.mxu0 %v10423
    %10662 = vmatpush1.bf16.msra.mxu0 %v10422
    %10663 = vmatprep.subr.bf16.mxu0 %v10431
    %10664 = vmatpush1.bf16.msra.mxu0 %v10430
    %10665 = vmatprep.subr.bf16.mxu0 %v10439
    %10666 = vmatpush1.bf16.msra.mxu0 %v10438
    %10667 = vmatprep.subr.bf16.mxu0 %v10447
    %10668 = vmatpush1.bf16.msra.mxu0 %v10446
    %10669 = vmatprep.subr.bf16.mxu0 %v10455
    %10670 = vmatpush1.bf16.msra.mxu0 %v10454
    %10671 = vmatprep.subr.bf16.mxu0 %v10463
    %10672 = vmatpush1.bf16.msra.mxu0 %v10462
    %10673 = vmatprep.subr.bf16.mxu0 %v10471
    %10674 = vmatpush1.bf16.msra.mxu0 %v10470
    %10675 = vmatprep.subr.bf16.mxu0 0
    %10676 = vmatpush1.bf16.msra.mxu0 0
    %10677 = vmatprep.subr.bf16.mxu0 0
    %10678 = vmatpush1.bf16.msra.mxu0 0
    %10679 = vmatprep.subr.bf16.mxu0 0
    %10680 = vmatpush1.bf16.msra.mxu0 0
    %10681 = vmatprep.subr.bf16.mxu0 0
    %10682 = vmatpush1.bf16.msra.mxu0 0
    %10683 = vmatprep.subr.bf16.mxu0 0
    %10684 = vmatpush1.bf16.msra.mxu0 0
    %10685 = vmatprep.subr.bf16.mxu0 0
    %10686 = vmatpush1.bf16.msra.mxu0 0
    %10687 = vmatprep.subr.bf16.mxu0 0
    %10688 = vmatpush1.bf16.msra.mxu0 0
    %10689 = vmatprep.subr.bf16.mxu0 0
    %10690 = vmatpush1.bf16.msra.mxu0 0
    %10691 = vmatprep.mubr.bf16.mxu0 0
    %10692 = vmatmul.mubr.bf16.gmra.mrb[0].mxu0 %v10214
    %v10693 = vpop.f32.mrb[0].mxu0
    %v10694 = vadd.f32 0.0, %v10693
    %v10695 = vpop.f32.mrb[0].mxu0
    %v10696 = vadd.f32 0.0, %v10695
    %v10697 = vpop.f32.mrb[0].mxu0
    %v10698 = vpop.f32.mrb[0].mxu0
    %10699 = vdwg.mxu0
    %v10700 = vadd.f32 %v9968, %v10571
    %v10701 = vadd.f32 %v9969, %v10573
    %v10702 = vadd.f32 %v9970, %v10612
    %v10703 = vadd.f32 %v9971, %v10614
    %v10704 = vadd.f32 %v9972, %v10653
    %v10705 = vadd.f32 %v9973, %v10655
    %v10706 = vadd.f32 %v9974, %v10694
    %v10707 = vadd.f32 %v9975, %v10696
    %v10708 = vrot.slane %v7777, 2
    %10710 = vmatprep.subr.bf16.mxu0 %v10409
    %10711 = vmatpush1.bf16.msra.mxu0 %v10408
    %10712 = vmatprep.subr.bf16.mxu0 %v10417
    %10713 = vmatpush1.bf16.msra.mxu0 %v10416
    %10714 = vmatprep.subr.bf16.mxu0 %v10425
    %10715 = vmatpush1.bf16.msra.mxu0 %v10424
    %10716 = vmatprep.subr.bf16.mxu0 %v10433
    %10717 = vmatpush1.bf16.msra.mxu0 %v10432
    %10718 = vmatprep.subr.bf16.mxu0 %v10441
    %10719 = vmatpush1.bf16.msra.mxu0 %v10440
    %10720 = vmatprep.subr.bf16.mxu0 %v10449
    %10721 = vmatpush1.bf16.msra.mxu0 %v10448
    %10722 = vmatprep.subr.bf16.mxu0 %v10457
    %10723 = vmatpush1.bf16.msra.mxu0 %v10456
    %10724 = vmatprep.subr.bf16.mxu0 %v10465
    %10725 = vmatpush1.bf16.msra.mxu0 %v10464
    %10726 = vmatprep.subr.bf16.mxu0 0
    %10727 = vmatpush1.bf16.msra.mxu0 0
    %10728 = vmatprep.subr.bf16.mxu0 0
    %10729 = vmatpush1.bf16.msra.mxu0 0
    %10730 = vmatprep.subr.bf16.mxu0 0
    %10731 = vmatpush1.bf16.msra.mxu0 0
    %10732 = vmatprep.subr.bf16.mxu0 0
    %10733 = vmatpush1.bf16.msra.mxu0 0
    %10734 = vmatprep.subr.bf16.mxu0 0
    %10735 = vmatpush1.bf16.msra.mxu0 0
    %10736 = vmatprep.subr.bf16.mxu0 0
    %10737 = vmatpush1.bf16.msra.mxu0 0
    %10738 = vmatprep.subr.bf16.mxu0 0
    %10739 = vmatpush1.bf16.msra.mxu0 0
    %10740 = vmatprep.subr.bf16.mxu0 0
    %10741 = vmatpush1.bf16.msra.mxu0 0
    %10742 = vmatprep.mubr.bf16.mxu0 0
    %10743 = vmatmul.mubr.bf16.gmra.mrb[0].mxu0 %v10708
    %v10744 = vpop.f32.mrb[0].mxu0
    %v10745 = vadd.f32 0.0, %v10744
    %v10746 = vpop.f32.mrb[0].mxu0
    %v10747 = vadd.f32 0.0, %v10746
    %v10748 = vpop.f32.mrb[0].mxu0
    %v10749 = vpop.f32.mrb[0].mxu0
    %10750 = vdwg.mxu0
    %10751 = vmatprep.subr.bf16.mxu0 %v10411
    %10752 = vmatpush1.bf16.msra.mxu0 %v10410
    %10753 = vmatprep.subr.bf16.mxu0 %v10419
    %10754 = vmatpush1.bf16.msra.mxu0 %v10418
    %10755 = vmatprep.subr.bf16.mxu0 %v10427
    %10756 = vmatpush1.bf16.msra.mxu0 %v10426
    %10757 = vmatprep.subr.bf16.mxu0 %v10435
    %10758 = vmatpush1.bf16.msra.mxu0 %v10434
    %10759 = vmatprep.subr.bf16.mxu0 %v10443
    %10760 = vmatpush1.bf16.msra.mxu0 %v10442
    %10761 = vmatprep.subr.bf16.mxu0 %v10451
    %10762 = vmatpush1.bf16.msra.mxu0 %v10450
    %10763 = vmatprep.subr.bf16.mxu0 %v10459
    %10764 = vmatpush1.bf16.msra.mxu0 %v10458
    %10765 = vmatprep.subr.bf16.mxu0 %v10467
    %10766 = vmatpush1.bf16.msra.mxu0 %v10466
    %10767 = vmatprep.subr.bf16.mxu0 0
    %10768 = vmatpush1.bf16.msra.mxu0 0
    %10769 = vmatprep.subr.bf16.mxu0 0
    %10770 = vmatpush1.bf16.msra.mxu0 0
    %10771 = vmatprep.subr.bf16.mxu0 0
    %10772 = vmatpush1.bf16.msra.mxu0 0
    %10773 = vmatprep.subr.bf16.mxu0 0
    %10774 = vmatpush1.bf16.msra.mxu0 0
    %10775 = vmatprep.subr.bf16.mxu0 0
    %10776 = vmatpush1.bf16.msra.mxu0 0
    %10777 = vmatprep.subr.bf16.mxu0 0
    %10778 = vmatpush1.bf16.msra.mxu0 0
    %10779 = vmatprep.subr.bf16.mxu0 0
    %10780 = vmatpush1.bf16.msra.mxu0 0
    %10781 = vmatprep.subr.bf16.mxu0 0
    %10782 = vmatpush1.bf16.msra.mxu0 0
    %10783 = vmatprep.mubr.bf16.mxu0 0
    %10784 = vmatmul.mubr.bf16.gmra.mrb[0].mxu0 %v10708
    %v10785 = vpop.f32.mrb[0].mxu0
    %v10786 = vadd.f32 0.0, %v10785
    %v10787 = vpop.f32.mrb[0].mxu0
    %v10788 = vadd.f32 0.0, %v10787
    %v10789 = vpop.f32.mrb[0].mxu0
    %v10790 = vpop.f32.mrb[0].mxu0
    %10791 = vdwg.mxu0
    %10792 = vmatprep.subr.bf16.mxu0 %v10413
    %10793 = vmatpush1.bf16.msra.mxu0 %v10412
    %10794 = vmatprep.subr.bf16.mxu0 %v10421
    %10795 = vmatpush1.bf16.msra.mxu0 %v10420
    %10796 = vmatprep.subr.bf16.mxu0 %v10429
    %10797 = vmatpush1.bf16.msra.mxu0 %v10428
    %10798 = vmatprep.subr.bf16.mxu0 %v10437
    %10799 = vmatpush1.bf16.msra.mxu0 %v10436
    %10800 = vmatprep.subr.bf16.mxu0 %v10445
    %10801 = vmatpush1.bf16.msra.mxu0 %v10444
    %10802 = vmatprep.subr.bf16.mxu0 %v10453
    %10803 = vmatpush1.bf16.msra.mxu0 %v10452
    %10804 = vmatprep.subr.bf16.mxu0 %v10461
    %10805 = vmatpush1.bf16.msra.mxu0 %v10460
    %10806 = vmatprep.subr.bf16.mxu0 %v10469
    %10807 = vmatpush1.bf16.msra.mxu0 %v10468
    %10808 = vmatprep.subr.bf16.mxu0 0
    %10809 = vmatpush1.bf16.msra.mxu0 0
    %10810 = vmatprep.subr.bf16.mxu0 0
    %10811 = vmatpush1.bf16.msra.mxu0 0
    %10812 = vmatprep.subr.bf16.mxu0 0
    %10813 = vmatpush1.bf16.msra.mxu0 0
    %10814 = vmatprep.subr.bf16.mxu0 0
    %10815 = vmatpush1.bf16.msra.mxu0 0
    %10816 = vmatprep.subr.bf16.mxu0 0
    %10817 = vmatpush1.bf16.msra.mxu0 0
    %10818 = vmatprep.subr.bf16.mxu0 0
    %10819 = vmatpush1.bf16.msra.mxu0 0
    %10820 = vmatprep.subr.bf16.mxu0 0
    %10821 = vmatpush1.bf16.msra.mxu0 0
    %10822 = vmatprep.subr.bf16.mxu0 0
    %10823 = vmatpush1.bf16.msra.mxu0 0
    %10824 = vmatprep.mubr.bf16.mxu0 0
    %10825 = vmatmul.mubr.bf16.gmra.mrb[0].mxu0 %v10708
    %v10826 = vpop.f32.mrb[0].mxu0
    %v10827 = vadd.f32 0.0, %v10826
    %v10828 = vpop.f32.mrb[0].mxu0
    %v10829 = vadd.f32 0.0, %v10828
    %v10830 = vpop.f32.mrb[0].mxu0
    %v10831 = vpop.f32.mrb[0].mxu0
    %10832 = vdwg.mxu0
    %10833 = vmatprep.subr.bf16.mxu0 %v10415
    %10834 = vmatpush1.bf16.msra.mxu0 %v10414
    %10835 = vmatprep.subr.bf16.mxu0 %v10423
    %10836 = vmatpush1.bf16.msra.mxu0 %v10422
    %10837 = vmatprep.subr.bf16.mxu0 %v10431
    %10838 = vmatpush1.bf16.msra.mxu0 %v10430
    %10839 = vmatprep.subr.bf16.mxu0 %v10439
    %10840 = vmatpush1.bf16.msra.mxu0 %v10438
    %10841 = vmatprep.subr.bf16.mxu0 %v10447
    %10842 = vmatpush1.bf16.msra.mxu0 %v10446
    %10843 = vmatprep.subr.bf16.mxu0 %v10455
    %10844 = vmatpush1.bf16.msra.mxu0 %v10454
    %10845 = vmatprep.subr.bf16.mxu0 %v10463
    %10846 = vmatpush1.bf16.msra.mxu0 %v10462
    %10847 = vmatprep.subr.bf16.mxu0 %v10471
    %10848 = vmatpush1.bf16.msra.mxu0 %v10470
    %10849 = vmatprep.subr.bf16.mxu0 0
    %10850 = vmatpush1.bf16.msra.mxu0 0
    %10851 = vmatprep.subr.bf16.mxu0 0
    %10852 = vmatpush1.bf16.msra.mxu0 0
    %10853 = vmatprep.subr.bf16.mxu0 0
    %10854 = vmatpush1.bf16.msra.mxu0 0
    %10855 = vmatprep.subr.bf16.mxu0 0
    %10856 = vmatpush1.bf16.msra.mxu0 0
    %10857 = vmatprep.subr.bf16.mxu0 0
    %10858 = vmatpush1.bf16.msra.mxu0 0
    %10859 = vmatprep.subr.bf16.mxu0 0
    %10860 = vmatpush1.bf16.msra.mxu0 0
    %10861 = vmatprep.subr.bf16.mxu0 0
    %10862 = vmatpush1.bf16.msra.mxu0 0
    %10863 = vmatprep.subr.bf16.mxu0 0
    %10864 = vmatpush1.bf16.msra.mxu0 0
    %10865 = vmatprep.mubr.bf16.mxu0 0
    %10866 = vmatmul.mubr.bf16.gmra.mrb[0].mxu0 %v10708
    %v10867 = vpop.f32.mrb[0].mxu0
    %v10868 = vadd.f32 0.0, %v10867
    %v10869 = vpop.f32.mrb[0].mxu0
    %v10870 = vadd.f32 0.0, %v10869
    %v10871 = vpop.f32.mrb[0].mxu0
    %v10872 = vpop.f32.mrb[0].mxu0
    %10873 = vdwg.mxu0
    %v10874 = vadd.f32 %v10142, %v10745
    %v10875 = vadd.f32 %v10143, %v10747
    %v10876 = vadd.f32 %v10144, %v10786
    %v10877 = vadd.f32 %v10145, %v10788
    %v10878 = vadd.f32 %v10146, %v10827
    %v10879 = vadd.f32 %v10147, %v10829
    %v10880 = vadd.f32 %v10148, %v10868
    %v10881 = vadd.f32 %v10149, %v10870
    %v10882 = vld [vmem:[#allocation10 + $0x1c00] sm:$0xff]
    %v10883 = vld [vmem:[#allocation10 + $0x1c08] sm:$0xff]
    %v10884 = vld [vmem:[#allocation10 + $0x1c10] sm:$0xff]
    %v10885 = vld [vmem:[#allocation10 + $0x1c18] sm:$0xff]
    %v10886 = vld [vmem:[#allocation10 + $0x1c20] sm:$0xff]
    %v10887 = vld [vmem:[#allocation10 + $0x1c28] sm:$0xff]
    %v10888 = vld [vmem:[#allocation10 + $0x1c30] sm:$0xff]
    %v10889 = vld [vmem:[#allocation10 + $0x1c38] sm:$0xff]
    %v10890 = vld [vmem:[#allocation10 + $0x1c40] sm:$0xff]
    %v10891 = vld [vmem:[#allocation10 + $0x1c48] sm:$0xff]
    %v10892 = vld [vmem:[#allocation10 + $0x1c50] sm:$0xff]
    %v10893 = vld [vmem:[#allocation10 + $0x1c58] sm:$0xff]
    %v10894 = vld [vmem:[#allocation10 + $0x1c60] sm:$0xff]
    %v10895 = vld [vmem:[#allocation10 + $0x1c68] sm:$0xff]
    %v10896 = vld [vmem:[#allocation10 + $0x1c70] sm:$0xff]
    %v10897 = vld [vmem:[#allocation10 + $0x1c78] sm:$0xff]
    %v10898 = vld [vmem:[#allocation10 + $0x1c80] sm:$0xff]
    %v10899 = vld [vmem:[#allocation10 + $0x1c88] sm:$0xff]
    %v10900 = vld [vmem:[#allocation10 + $0x1c90] sm:$0xff]
    %v10901 = vld [vmem:[#allocation10 + $0x1c98] sm:$0xff]
    %v10902 = vld [vmem:[#allocation10 + $0x1ca0] sm:$0xff]
    %v10903 = vld [vmem:[#allocation10 + $0x1ca8] sm:$0xff]
    %v10904 = vld [vmem:[#allocation10 + $0x1cb0] sm:$0xff]
    %v10905 = vld [vmem:[#allocation10 + $0x1cb8] sm:$0xff]
    %v10906 = vld [vmem:[#allocation10 + $0x1cc0] sm:$0xff]
    %v10907 = vld [vmem:[#allocation10 + $0x1cc8] sm:$0xff]
    %v10908 = vld [vmem:[#allocation10 + $0x1cd0] sm:$0xff]
    %v10909 = vld [vmem:[#allocation10 + $0x1cd8] sm:$0xff]
    %v10910 = vld [vmem:[#allocation10 + $0x1ce0] sm:$0xff]
    %v10911 = vld [vmem:[#allocation10 + $0x1ce8] sm:$0xff]
    %v10912 = vld [vmem:[#allocation10 + $0x1cf0] sm:$0xff]
    %v10913 = vld [vmem:[#allocation10 + $0x1cf8] sm:$0xff]
    %v10914 = vld [vmem:[#allocation10 + $0x1d00] sm:$0xff]
    %v10915 = vld [vmem:[#allocation10 + $0x1d08] sm:$0xff]
    %v10916 = vld [vmem:[#allocation10 + $0x1d10] sm:$0xff]
    %v10917 = vld [vmem:[#allocation10 + $0x1d18] sm:$0xff]
    %v10918 = vld [vmem:[#allocation10 + $0x1d20] sm:$0xff]
    %v10919 = vld [vmem:[#allocation10 + $0x1d28] sm:$0xff]
    %v10920 = vld [vmem:[#allocation10 + $0x1d30] sm:$0xff]
    %v10921 = vld [vmem:[#allocation10 + $0x1d38] sm:$0xff]
    %v10922 = vld [vmem:[#allocation10 + $0x1d40] sm:$0xff]
    %v10923 = vld [vmem:[#allocation10 + $0x1d48] sm:$0xff]
    %v10924 = vld [vmem:[#allocation10 + $0x1d50] sm:$0xff]
    %v10925 = vld [vmem:[#allocation10 + $0x1d58] sm:$0xff]
    %v10926 = vld [vmem:[#allocation10 + $0x1d60] sm:$0xff]
    %v10927 = vld [vmem:[#allocation10 + $0x1d68] sm:$0xff]
    %v10928 = vld [vmem:[#allocation10 + $0x1d70] sm:$0xff]
    %v10929 = vld [vmem:[#allocation10 + $0x1d78] sm:$0xff]
    %v10930 = vld [vmem:[#allocation10 + $0x1d80] sm:$0xff]
    %v10931 = vld [vmem:[#allocation10 + $0x1d88] sm:$0xff]
    %v10932 = vld [vmem:[#allocation10 + $0x1d90] sm:$0xff]
    %v10933 = vld [vmem:[#allocation10 + $0x1d98] sm:$0xff]
    %v10934 = vld [vmem:[#allocation10 + $0x1da0] sm:$0xff]
    %v10935 = vld [vmem:[#allocation10 + $0x1da8] sm:$0xff]
    %v10936 = vld [vmem:[#allocation10 + $0x1db0] sm:$0xff]
    %v10937 = vld [vmem:[#allocation10 + $0x1db8] sm:$0xff]
    %v10938 = vld [vmem:[#allocation10 + $0x1dc0] sm:$0xff]
    %v10939 = vld [vmem:[#allocation10 + $0x1dc8] sm:$0xff]
    %v10940 = vld [vmem:[#allocation10 + $0x1dd0] sm:$0xff]
    %v10941 = vld [vmem:[#allocation10 + $0x1dd8] sm:$0xff]
    %v10942 = vld [vmem:[#allocation10 + $0x1de0] sm:$0xff]
    %v10943 = vld [vmem:[#allocation10 + $0x1de8] sm:$0xff]
    %v10944 = vld [vmem:[#allocation10 + $0x1df0] sm:$0xff]
    %v10945 = vld [vmem:[#allocation10 + $0x1df8] sm:$0xff]
    %v10946 = vrot.slane %v6550, 3
    %v11012 = vunpack.c.l.b16 %v10882
    %v11013 = vunpack.c.h.b16 %v10882
    %v11014 = vunpack.c.l.b16 %v10883
    %v11015 = vunpack.c.h.b16 %v10883
    %v11016 = vunpack.c.l.b16 %v10884
    %v11017 = vunpack.c.h.b16 %v10884
    %v11018 = vunpack.c.l.b16 %v10885
    %v11019 = vunpack.c.h.b16 %v10885
    %v11020 = vunpack.c.l.b16 %v10886
    %v11021 = vunpack.c.h.b16 %v10886
    %v11022 = vunpack.c.l.b16 %v10887
    %v11023 = vunpack.c.h.b16 %v10887
    %v11024 = vunpack.c.l.b16 %v10888
    %v11025 = vunpack.c.h.b16 %v10888
    %v11026 = vunpack.c.l.b16 %v10889
    %v11027 = vunpack.c.h.b16 %v10889
    %v11028 = vunpack.c.l.b16 %v10890
    %v11029 = vunpack.c.h.b16 %v10890
    %v11030 = vunpack.c.l.b16 %v10891
    %v11031 = vunpack.c.h.b16 %v10891
    %v11032 = vunpack.c.l.b16 %v10892
    %v11033 = vunpack.c.h.b16 %v10892
    %v11034 = vunpack.c.l.b16 %v10893
    %v11035 = vunpack.c.h.b16 %v10893
    %v11036 = vunpack.c.l.b16 %v10894
    %v11037 = vunpack.c.h.b16 %v10894
    %v11038 = vunpack.c.l.b16 %v10895
    %v11039 = vunpack.c.h.b16 %v10895
    %v11040 = vunpack.c.l.b16 %v10896
    %v11041 = vunpack.c.h.b16 %v10896
    %v11042 = vunpack.c.l.b16 %v10897
    %v11043 = vunpack.c.h.b16 %v10897
    %v11044 = vunpack.c.l.b16 %v10898
    %v11045 = vunpack.c.h.b16 %v10898
    %v11046 = vunpack.c.l.b16 %v10899
    %v11047 = vunpack.c.h.b16 %v10899
    %v11048 = vunpack.c.l.b16 %v10900
    %v11049 = vunpack.c.h.b16 %v10900
    %v11050 = vunpack.c.l.b16 %v10901
    %v11051 = vunpack.c.h.b16 %v10901
    %v11052 = vunpack.c.l.b16 %v10902
    %v11053 = vunpack.c.h.b16 %v10902
    %v11054 = vunpack.c.l.b16 %v10903
    %v11055 = vunpack.c.h.b16 %v10903
    %v11056 = vunpack.c.l.b16 %v10904
    %v11057 = vunpack.c.h.b16 %v10904
    %v11058 = vunpack.c.l.b16 %v10905
    %v11059 = vunpack.c.h.b16 %v10905
    %v11060 = vunpack.c.l.b16 %v10906
    %v11061 = vunpack.c.h.b16 %v10906
    %v11062 = vunpack.c.l.b16 %v10907
    %v11063 = vunpack.c.h.b16 %v10907
    %v11064 = vunpack.c.l.b16 %v10908
    %v11065 = vunpack.c.h.b16 %v10908
    %v11066 = vunpack.c.l.b16 %v10909
    %v11067 = vunpack.c.h.b16 %v10909
    %v11068 = vunpack.c.l.b16 %v10910
    %v11069 = vunpack.c.h.b16 %v10910
    %v11070 = vunpack.c.l.b16 %v10911
    %v11071 = vunpack.c.h.b16 %v10911
    %v11072 = vunpack.c.l.b16 %v10912
    %v11073 = vunpack.c.h.b16 %v10912
    %v11074 = vunpack.c.l.b16 %v10913
    %v11075 = vunpack.c.h.b16 %v10913
    %v11076 = vunpack.c.l.b16 %v10914
    %v11077 = vunpack.c.h.b16 %v10914
    %v11078 = vunpack.c.l.b16 %v10915
    %v11079 = vunpack.c.h.b16 %v10915
    %v11080 = vunpack.c.l.b16 %v10916
    %v11081 = vunpack.c.h.b16 %v10916
    %v11082 = vunpack.c.l.b16 %v10917
    %v11083 = vunpack.c.h.b16 %v10917
    %v11084 = vunpack.c.l.b16 %v10918
    %v11085 = vunpack.c.h.b16 %v10918
    %v11086 = vunpack.c.l.b16 %v10919
    %v11087 = vunpack.c.h.b16 %v10919
    %v11088 = vunpack.c.l.b16 %v10920
    %v11089 = vunpack.c.h.b16 %v10920
    %v11090 = vunpack.c.l.b16 %v10921
    %v11091 = vunpack.c.h.b16 %v10921
    %v11092 = vunpack.c.l.b16 %v10922
    %v11093 = vunpack.c.h.b16 %v10922
    %v11094 = vunpack.c.l.b16 %v10923
    %v11095 = vunpack.c.h.b16 %v10923
    %v11096 = vunpack.c.l.b16 %v10924
    %v11097 = vunpack.c.h.b16 %v10924
    %v11098 = vunpack.c.l.b16 %v10925
    %v11099 = vunpack.c.h.b16 %v10925
    %v11100 = vunpack.c.l.b16 %v10926
    %v11101 = vunpack.c.h.b16 %v10926
    %v11102 = vunpack.c.l.b16 %v10927
    %v11103 = vunpack.c.h.b16 %v10927
    %v11104 = vunpack.c.l.b16 %v10928
    %v11105 = vunpack.c.h.b16 %v10928
    %v11106 = vunpack.c.l.b16 %v10929
    %v11107 = vunpack.c.h.b16 %v10929
    %v11108 = vunpack.c.l.b16 %v10930
    %v11109 = vunpack.c.h.b16 %v10930
    %v11110 = vunpack.c.l.b16 %v10931
    %v11111 = vunpack.c.h.b16 %v10931
    %v11112 = vunpack.c.l.b16 %v10932
    %v11113 = vunpack.c.h.b16 %v10932
    %v11114 = vunpack.c.l.b16 %v10933
    %v11115 = vunpack.c.h.b16 %v10933
    %v11116 = vunpack.c.l.b16 %v10934
    %v11117 = vunpack.c.h.b16 %v10934
    %v11118 = vunpack.c.l.b16 %v10935
    %v11119 = vunpack.c.h.b16 %v10935
    %v11120 = vunpack.c.l.b16 %v10936
    %v11121 = vunpack.c.h.b16 %v10936
    %v11122 = vunpack.c.l.b16 %v10937
    %v11123 = vunpack.c.h.b16 %v10937
    %v11124 = vunpack.c.l.b16 %v10938
    %v11125 = vunpack.c.h.b16 %v10938
    %v11126 = vunpack.c.l.b16 %v10939
    %v11127 = vunpack.c.h.b16 %v10939
    %v11128 = vunpack.c.l.b16 %v10940
    %v11129 = vunpack.c.h.b16 %v10940
    %v11130 = vunpack.c.l.b16 %v10941
    %v11131 = vunpack.c.h.b16 %v10941
    %v11132 = vunpack.c.l.b16 %v10942
    %v11133 = vunpack.c.h.b16 %v10942
    %v11134 = vunpack.c.l.b16 %v10943
    %v11135 = vunpack.c.h.b16 %v10943
    %v11136 = vunpack.c.l.b16 %v10944
    %v11137 = vunpack.c.h.b16 %v10944
    %v11138 = vunpack.c.l.b16 %v10945
    %v11139 = vunpack.c.h.b16 %v10945
    %v11140 = vpack.c.b16 %v11020, %v11012
    %v11141 = vpack.c.b16 %v11021, %v11013
    %v11142 = vpack.c.b16 %v11022, %v11014
    %v11143 = vpack.c.b16 %v11023, %v11015
    %v11144 = vpack.c.b16 %v11024, %v11016
    %v11145 = vpack.c.b16 %v11025, %v11017
    %v11146 = vpack.c.b16 %v11026, %v11018
    %v11147 = vpack.c.b16 %v11027, %v11019
    %v11148 = vpack.c.b16 %v11036, %v11028
    %v11149 = vpack.c.b16 %v11037, %v11029
    %v11150 = vpack.c.b16 %v11038, %v11030
    %v11151 = vpack.c.b16 %v11039, %v11031
    %v11152 = vpack.c.b16 %v11040, %v11032
    %v11153 = vpack.c.b16 %v11041, %v11033
    %v11154 = vpack.c.b16 %v11042, %v11034
    %v11155 = vpack.c.b16 %v11043, %v11035
    %v11156 = vpack.c.b16 %v11052, %v11044
    %v11157 = vpack.c.b16 %v11053, %v11045
    %v11158 = vpack.c.b16 %v11054, %v11046
    %v11159 = vpack.c.b16 %v11055, %v11047
    %v11160 = vpack.c.b16 %v11056, %v11048
    %v11161 = vpack.c.b16 %v11057, %v11049
    %v11162 = vpack.c.b16 %v11058, %v11050
    %v11163 = vpack.c.b16 %v11059, %v11051
    %v11164 = vpack.c.b16 %v11068, %v11060
    %v11165 = vpack.c.b16 %v11069, %v11061
    %v11166 = vpack.c.b16 %v11070, %v11062
    %v11167 = vpack.c.b16 %v11071, %v11063
    %v11168 = vpack.c.b16 %v11072, %v11064
    %v11169 = vpack.c.b16 %v11073, %v11065
    %v11170 = vpack.c.b16 %v11074, %v11066
    %v11171 = vpack.c.b16 %v11075, %v11067
    %v11172 = vpack.c.b16 %v11084, %v11076
    %v11173 = vpack.c.b16 %v11085, %v11077
    %v11174 = vpack.c.b16 %v11086, %v11078
    %v11175 = vpack.c.b16 %v11087, %v11079
    %v11176 = vpack.c.b16 %v11088, %v11080
    %v11177 = vpack.c.b16 %v11089, %v11081
    %v11178 = vpack.c.b16 %v11090, %v11082
    %v11179 = vpack.c.b16 %v11091, %v11083
    %v11180 = vpack.c.b16 %v11100, %v11092
    %v11181 = vpack.c.b16 %v11101, %v11093
    %v11182 = vpack.c.b16 %v11102, %v11094
    %v11183 = vpack.c.b16 %v11103, %v11095
    %v11184 = vpack.c.b16 %v11104, %v11096
    %v11185 = vpack.c.b16 %v11105, %v11097
    %v11186 = vpack.c.b16 %v11106, %v11098
    %v11187 = vpack.c.b16 %v11107, %v11099
    %v11188 = vpack.c.b16 %v11116, %v11108
    %v11189 = vpack.c.b16 %v11117, %v11109
    %v11190 = vpack.c.b16 %v11118, %v11110
    %v11191 = vpack.c.b16 %v11119, %v11111
    %v11192 = vpack.c.b16 %v11120, %v11112
    %v11193 = vpack.c.b16 %v11121, %v11113
    %v11194 = vpack.c.b16 %v11122, %v11114
    %v11195 = vpack.c.b16 %v11123, %v11115
    %v11196 = vpack.c.b16 %v11132, %v11124
    %v11197 = vpack.c.b16 %v11133, %v11125
    %v11198 = vpack.c.b16 %v11134, %v11126
    %v11199 = vpack.c.b16 %v11135, %v11127
    %v11200 = vpack.c.b16 %v11136, %v11128
    %v11201 = vpack.c.b16 %v11137, %v11129
    %v11202 = vpack.c.b16 %v11138, %v11130
    %v11203 = vpack.c.b16 %v11139, %v11131
    %11268 = vmatprep.subr.bf16.mxu0 %v11141
    %11269 = vmatpush1.bf16.msra.mxu0 %v11140
    %11270 = vmatprep.subr.bf16.mxu0 %v11149
    %11271 = vmatpush1.bf16.msra.mxu0 %v11148
    %11272 = vmatprep.subr.bf16.mxu0 %v11157
    %11273 = vmatpush1.bf16.msra.mxu0 %v11156
    %11274 = vmatprep.subr.bf16.mxu0 %v11165
    %11275 = vmatpush1.bf16.msra.mxu0 %v11164
    %11276 = vmatprep.subr.bf16.mxu0 %v11173
    %11277 = vmatpush1.bf16.msra.mxu0 %v11172
    %11278 = vmatprep.subr.bf16.mxu0 %v11181
    %11279 = vmatpush1.bf16.msra.mxu0 %v11180
    %11280 = vmatprep.subr.bf16.mxu0 %v11189
    %11281 = vmatpush1.bf16.msra.mxu0 %v11188
    %11282 = vmatprep.subr.bf16.mxu0 %v11197
    %11283 = vmatpush1.bf16.msra.mxu0 %v11196
    %11284 = vmatprep.subr.bf16.mxu0 0
    %11285 = vmatpush1.bf16.msra.mxu0 0
    %11286 = vmatprep.subr.bf16.mxu0 0
    %11287 = vmatpush1.bf16.msra.mxu0 0
    %11288 = vmatprep.subr.bf16.mxu0 0
    %11289 = vmatpush1.bf16.msra.mxu0 0
    %11290 = vmatprep.subr.bf16.mxu0 0
    %11291 = vmatpush1.bf16.msra.mxu0 0
    %11292 = vmatprep.subr.bf16.mxu0 0
    %11293 = vmatpush1.bf16.msra.mxu0 0
    %11294 = vmatprep.subr.bf16.mxu0 0
    %11295 = vmatpush1.bf16.msra.mxu0 0
    %11296 = vmatprep.subr.bf16.mxu0 0
    %11297 = vmatpush1.bf16.msra.mxu0 0
    %11298 = vmatprep.subr.bf16.mxu0 0
    %11299 = vmatpush1.bf16.msra.mxu0 0
    %11300 = vmatprep.mubr.bf16.mxu0 0
    %11301 = vmatmul.mubr.bf16.gmra.mrb[0].mxu0 %v10946
    %v11302 = vpop.f32.mrb[0].mxu0
    %v11303 = vadd.f32 0.0, %v11302
    %v11304 = vpop.f32.mrb[0].mxu0
    %v11305 = vadd.f32 0.0, %v11304
    %v11306 = vpop.f32.mrb[0].mxu0
    %v11307 = vpop.f32.mrb[0].mxu0
    %11308 = vdwg.mxu0
    %11309 = vmatprep.subr.bf16.mxu0 %v11143
    %11310 = vmatpush1.bf16.msra.mxu0 %v11142
    %11311 = vmatprep.subr.bf16.mxu0 %v11151
    %11312 = vmatpush1.bf16.msra.mxu0 %v11150
    %11313 = vmatprep.subr.bf16.mxu0 %v11159
    %11314 = vmatpush1.bf16.msra.mxu0 %v11158
    %11315 = vmatprep.subr.bf16.mxu0 %v11167
    %11316 = vmatpush1.bf16.msra.mxu0 %v11166
    %11317 = vmatprep.subr.bf16.mxu0 %v11175
    %11318 = vmatpush1.bf16.msra.mxu0 %v11174
    %11319 = vmatprep.subr.bf16.mxu0 %v11183
    %11320 = vmatpush1.bf16.msra.mxu0 %v11182
    %11321 = vmatprep.subr.bf16.mxu0 %v11191
    %11322 = vmatpush1.bf16.msra.mxu0 %v11190
    %11323 = vmatprep.subr.bf16.mxu0 %v11199
    %11324 = vmatpush1.bf16.msra.mxu0 %v11198
    %11325 = vmatprep.subr.bf16.mxu0 0
    %11326 = vmatpush1.bf16.msra.mxu0 0
    %11327 = vmatprep.subr.bf16.mxu0 0
    %11328 = vmatpush1.bf16.msra.mxu0 0
    %11329 = vmatprep.subr.bf16.mxu0 0
    %11330 = vmatpush1.bf16.msra.mxu0 0
    %11331 = vmatprep.subr.bf16.mxu0 0
    %11332 = vmatpush1.bf16.msra.mxu0 0
    %11333 = vmatprep.subr.bf16.mxu0 0
    %11334 = vmatpush1.bf16.msra.mxu0 0
    %11335 = vmatprep.subr.bf16.mxu0 0
    %11336 = vmatpush1.bf16.msra.mxu0 0
    %11337 = vmatprep.subr.bf16.mxu0 0
    %11338 = vmatpush1.bf16.msra.mxu0 0
    %11339 = vmatprep.subr.bf16.mxu0 0
    %11340 = vmatpush1.bf16.msra.mxu0 0
    %11341 = vmatprep.mubr.bf16.mxu0 0
    %11342 = vmatmul.mubr.bf16.gmra.mrb[0].mxu0 %v10946
    %v11343 = vpop.f32.mrb[0].mxu0
    %v11344 = vadd.f32 0.0, %v11343
    %v11345 = vpop.f32.mrb[0].mxu0
    %v11346 = vadd.f32 0.0, %v11345
    %v11347 = vpop.f32.mrb[0].mxu0
    %v11348 = vpop.f32.mrb[0].mxu0
    %11349 = vdwg.mxu0
    %11350 = vmatprep.subr.bf16.mxu0 %v11145
    %11351 = vmatpush1.bf16.msra.mxu0 %v11144
    %11352 = vmatprep.subr.bf16.mxu0 %v11153
    %11353 = vmatpush1.bf16.msra.mxu0 %v11152
    %11354 = vmatprep.subr.bf16.mxu0 %v11161
    %11355 = vmatpush1.bf16.msra.mxu0 %v11160
    %11356 = vmatprep.subr.bf16.mxu0 %v11169
    %11357 = vmatpush1.bf16.msra.mxu0 %v11168
    %11358 = vmatprep.subr.bf16.mxu0 %v11177
    %11359 = vmatpush1.bf16.msra.mxu0 %v11176
    %11360 = vmatprep.subr.bf16.mxu0 %v11185
    %11361 = vmatpush1.bf16.msra.mxu0 %v11184
    %11362 = vmatprep.subr.bf16.mxu0 %v11193
    %11363 = vmatpush1.bf16.msra.mxu0 %v11192
    %11364 = vmatprep.subr.bf16.mxu0 %v11201
    %11365 = vmatpush1.bf16.msra.mxu0 %v11200
    %11366 = vmatprep.subr.bf16.mxu0 0
    %11367 = vmatpush1.bf16.msra.mxu0 0
    %11368 = vmatprep.subr.bf16.mxu0 0
    %11369 = vmatpush1.bf16.msra.mxu0 0
    %11370 = vmatprep.subr.bf16.mxu0 0
    %11371 = vmatpush1.bf16.msra.mxu0 0
    %11372 = vmatprep.subr.bf16.mxu0 0
    %11373 = vmatpush1.bf16.msra.mxu0 0
    %11374 = vmatprep.subr.bf16.mxu0 0
    %11375 = vmatpush1.bf16.msra.mxu0 0
    %11376 = vmatprep.subr.bf16.mxu0 0
    %11377 = vmatpush1.bf16.msra.mxu0 0
    %11378 = vmatprep.subr.bf16.mxu0 0
    %11379 = vmatpush1.bf16.msra.mxu0 0
    %11380 = vmatprep.subr.bf16.mxu0 0
    %11381 = vmatpush1.bf16.msra.mxu0 0
    %11382 = vmatprep.mubr.bf16.mxu0 0
    %11383 = vmatmul.mubr.bf16.gmra.mrb[0].mxu0 %v10946
    %v11384 = vpop.f32.mrb[0].mxu0
    %v11385 = vadd.f32 0.0, %v11384
    %v11386 = vpop.f32.mrb[0].mxu0
    %v11387 = vadd.f32 0.0, %v11386
    %v11388 = vpop.f32.mrb[0].mxu0
    %v11389 = vpop.f32.mrb[0].mxu0
    %11390 = vdwg.mxu0
    %11391 = vmatprep.subr.bf16.mxu0 %v11147
    %11392 = vmatpush1.bf16.msra.mxu0 %v11146
    %11393 = vmatprep.subr.bf16.mxu0 %v11155
    %11394 = vmatpush1.bf16.msra.mxu0 %v11154
    %11395 = vmatprep.subr.bf16.mxu0 %v11163
    %11396 = vmatpush1.bf16.msra.mxu0 %v11162
    %11397 = vmatprep.subr.bf16.mxu0 %v11171
    %11398 = vmatpush1.bf16.msra.mxu0 %v11170
    %11399 = vmatprep.subr.bf16.mxu0 %v11179
    %11400 = vmatpush1.bf16.msra.mxu0 %v11178
    %11401 = vmatprep.subr.bf16.mxu0 %v11187
    %11402 = vmatpush1.bf16.msra.mxu0 %v11186
    %11403 = vmatprep.subr.bf16.mxu0 %v11195
    %11404 = vmatpush1.bf16.msra.mxu0 %v11194
    %11405 = vmatprep.subr.bf16.mxu0 %v11203
    %11406 = vmatpush1.bf16.msra.mxu0 %v11202
    %11407 = vmatprep.subr.bf16.mxu0 0
    %11408 = vmatpush1.bf16.msra.mxu0 0
    %11409 = vmatprep.subr.bf16.mxu0 0
    %11410 = vmatpush1.bf16.msra.mxu0 0
    %11411 = vmatprep.subr.bf16.mxu0 0
    %11412 = vmatpush1.bf16.msra.mxu0 0
    %11413 = vmatprep.subr.bf16.mxu0 0
    %11414 = vmatpush1.bf16.msra.mxu0 0
    %11415 = vmatprep.subr.bf16.mxu0 0
    %11416 = vmatpush1.bf16.msra.mxu0 0
    %11417 = vmatprep.subr.bf16.mxu0 0
    %11418 = vmatpush1.bf16.msra.mxu0 0
    %11419 = vmatprep.subr.bf16.mxu0 0
    %11420 = vmatpush1.bf16.msra.mxu0 0
    %11421 = vmatprep.subr.bf16.mxu0 0
    %11422 = vmatpush1.bf16.msra.mxu0 0
    %11423 = vmatprep.mubr.bf16.mxu0 0
    %11424 = vmatmul.mubr.bf16.gmra.mrb[0].mxu0 %v10946
    %v11425 = vpop.f32.mrb[0].mxu0
    %v11426 = vadd.f32 0.0, %v11425
    %v11427 = vpop.f32.mrb[0].mxu0
    %v11428 = vadd.f32 0.0, %v11427
    %v11429 = vpop.f32.mrb[0].mxu0
    %v11430 = vpop.f32.mrb[0].mxu0
    %11431 = vdwg.mxu0
    %v11432 = vadd.f32 %v10700, %v11303
    %v11433 = vadd.f32 %v10701, %v11305
    %v11434 = vadd.f32 %v10702, %v11344
    %v11435 = vadd.f32 %v10703, %v11346
    %v11436 = vadd.f32 %v10704, %v11385
    %v11437 = vadd.f32 %v10705, %v11387
    %v11438 = vadd.f32 %v10706, %v11426
    %v11439 = vadd.f32 %v10707, %v11428
    %v11440 = vrot.slane %v7043, 3
    %11442 = vmatprep.subr.bf16.mxu0 %v11141
    %11443 = vmatpush1.bf16.msra.mxu0 %v11140
    %11444 = vmatprep.subr.bf16.mxu0 %v11149
    %11445 = vmatpush1.bf16.msra.mxu0 %v11148
    %11446 = vmatprep.subr.bf16.mxu0 %v11157
    %11447 = vmatpush1.bf16.msra.mxu0 %v11156
    %11448 = vmatprep.subr.bf16.mxu0 %v11165
    %11449 = vmatpush1.bf16.msra.mxu0 %v11164
    %11450 = vmatprep.subr.bf16.mxu0 %v11173
    %11451 = vmatpush1.bf16.msra.mxu0 %v11172
    %11452 = vmatprep.subr.bf16.mxu0 %v11181
    %11453 = vmatpush1.bf16.msra.mxu0 %v11180
    %11454 = vmatprep.subr.bf16.mxu0 %v11189
    %11455 = vmatpush1.bf16.msra.mxu0 %v11188
    %11456 = vmatprep.subr.bf16.mxu0 %v11197
    %11457 = vmatpush1.bf16.msra.mxu0 %v11196
    %11458 = vmatprep.subr.bf16.mxu0 0
    %11459 = vmatpush1.bf16.msra.mxu0 0
    %11460 = vmatprep.subr.bf16.mxu0 0
    %11461 = vmatpush1.bf16.msra.mxu0 0
    %11462 = vmatprep.subr.bf16.mxu0 0
    %11463 = vmatpush1.bf16.msra.mxu0 0
    %11464 = vmatprep.subr.bf16.mxu0 0
    %11465 = vmatpush1.bf16.msra.mxu0 0
    %11466 = vmatprep.subr.bf16.mxu0 0
    %11467 = vmatpush1.bf16.msra.mxu0 0
    %11468 = vmatprep.subr.bf16.mxu0 0
    %11469 = vmatpush1.bf16.msra.mxu0 0
    %11470 = vmatprep.subr.bf16.mxu0 0
    %11471 = vmatpush1.bf16.msra.mxu0 0
    %11472 = vmatprep.subr.bf16.mxu0 0
    %11473 = vmatpush1.bf16.msra.mxu0 0
    %11474 = vmatprep.mubr.bf16.mxu0 0
    %11475 = vmatmul.mubr.bf16.gmra.mrb[0].mxu0 %v11440
    %v11476 = vpop.f32.mrb[0].mxu0
    %v11477 = vadd.f32 0.0, %v11476
    %v11478 = vpop.f32.mrb[0].mxu0
    %v11479 = vadd.f32 0.0, %v11478
    %v11480 = vpop.f32.mrb[0].mxu0
    %v11481 = vpop.f32.mrb[0].mxu0
    %11482 = vdwg.mxu0
    %11483 = vmatprep.subr.bf16.mxu0 %v11143
    %11484 = vmatpush1.bf16.msra.mxu0 %v11142
    %11485 = vmatprep.subr.bf16.mxu0 %v11151
    %11486 = vmatpush1.bf16.msra.mxu0 %v11150
    %11487 = vmatprep.subr.bf16.mxu0 %v11159
    %11488 = vmatpush1.bf16.msra.mxu0 %v11158
    %11489 = vmatprep.subr.bf16.mxu0 %v11167
    %11490 = vmatpush1.bf16.msra.mxu0 %v11166
    %11491 = vmatprep.subr.bf16.mxu0 %v11175
    %11492 = vmatpush1.bf16.msra.mxu0 %v11174
    %11493 = vmatprep.subr.bf16.mxu0 %v11183
    %11494 = vmatpush1.bf16.msra.mxu0 %v11182
    %11495 = vmatprep.subr.bf16.mxu0 %v11191
    %11496 = vmatpush1.bf16.msra.mxu0 %v11190
    %11497 = vmatprep.subr.bf16.mxu0 %v11199
    %11498 = vmatpush1.bf16.msra.mxu0 %v11198
    %11499 = vmatprep.subr.bf16.mxu0 0
    %11500 = vmatpush1.bf16.msra.mxu0 0
    %11501 = vmatprep.subr.bf16.mxu0 0
    %11502 = vmatpush1.bf16.msra.mxu0 0
    %11503 = vmatprep.subr.bf16.mxu0 0
    %11504 = vmatpush1.bf16.msra.mxu0 0
    %11505 = vmatprep.subr.bf16.mxu0 0
    %11506 = vmatpush1.bf16.msra.mxu0 0
    %11507 = vmatprep.subr.bf16.mxu0 0
    %11508 = vmatpush1.bf16.msra.mxu0 0
    %11509 = vmatprep.subr.bf16.mxu0 0
    %11510 = vmatpush1.bf16.msra.mxu0 0
    %11511 = vmatprep.subr.bf16.mxu0 0
    %11512 = vmatpush1.bf16.msra.mxu0 0
    %11513 = vmatprep.subr.bf16.mxu0 0
    %11514 = vmatpush1.bf16.msra.mxu0 0
    %11515 = vmatprep.mubr.bf16.mxu0 0
    %11516 = vmatmul.mubr.bf16.gmra.mrb[0].mxu0 %v11440
    %v11517 = vpop.f32.mrb[0].mxu0
    %v11518 = vadd.f32 0.0, %v11517
    %v11519 = vpop.f32.mrb[0].mxu0
    %v11520 = vadd.f32 0.0, %v11519
    %v11521 = vpop.f32.mrb[0].mxu0
    %v11522 = vpop.f32.mrb[0].mxu0
    %11523 = vdwg.mxu0
    %11524 = vmatprep.subr.bf16.mxu0 %v11145
    %11525 = vmatpush1.bf16.msra.mxu0 %v11144
    %11526 = vmatprep.subr.bf16.mxu0 %v11153
    %11527 = vmatpush1.bf16.msra.mxu0 %v11152
    %11528 = vmatprep.subr.bf16.mxu0 %v11161
    %11529 = vmatpush1.bf16.msra.mxu0 %v11160
    %11530 = vmatprep.subr.bf16.mxu0 %v11169
    %11531 = vmatpush1.bf16.msra.mxu0 %v11168
    %11532 = vmatprep.subr.bf16.mxu0 %v11177
    %11533 = vmatpush1.bf16.msra.mxu0 %v11176
    %11534 = vmatprep.subr.bf16.mxu0 %v11185
    %11535 = vmatpush1.bf16.msra.mxu0 %v11184
    %11536 = vmatprep.subr.bf16.mxu0 %v11193
    %11537 = vmatpush1.bf16.msra.mxu0 %v11192
    %11538 = vmatprep.subr.bf16.mxu0 %v11201
    %11539 = vmatpush1.bf16.msra.mxu0 %v11200
    %11540 = vmatprep.subr.bf16.mxu0 0
    %11541 = vmatpush1.bf16.msra.mxu0 0
    %11542 = vmatprep.subr.bf16.mxu0 0
    %11543 = vmatpush1.bf16.msra.mxu0 0
    %11544 = vmatprep.subr.bf16.mxu0 0
    %11545 = vmatpush1.bf16.msra.mxu0 0
    %11546 = vmatprep.subr.bf16.mxu0 0
    %11547 = vmatpush1.bf16.msra.mxu0 0
    %11548 = vmatprep.subr.bf16.mxu0 0
    %11549 = vmatpush1.bf16.msra.mxu0 0
    %11550 = vmatprep.subr.bf16.mxu0 0
    %11551 = vmatpush1.bf16.msra.mxu0 0
    %11552 = vmatprep.subr.bf16.mxu0 0
    %11553 = vmatpush1.bf16.msra.mxu0 0
    %11554 = vmatprep.subr.bf16.mxu0 0
    %11555 = vmatpush1.bf16.msra.mxu0 0
    %11556 = vmatprep.mubr.bf16.mxu0 0
    %11557 = vmatmul.mubr.bf16.gmra.mrb[0].mxu0 %v11440
    %v11558 = vpop.f32.mrb[0].mxu0
    %v11559 = vadd.f32 0.0, %v11558
    %v11560 = vpop.f32.mrb[0].mxu0
    %v11561 = vadd.f32 0.0, %v11560
    %v11562 = vpop.f32.mrb[0].mxu0
    %v11563 = vpop.f32.mrb[0].mxu0
    %11564 = vdwg.mxu0
    %11565 = vmatprep.subr.bf16.mxu0 %v11147
    %11566 = vmatpush1.bf16.msra.mxu0 %v11146
    %11567 = vmatprep.subr.bf16.mxu0 %v11155
    %11568 = vmatpush1.bf16.msra.mxu0 %v11154
    %11569 = vmatprep.subr.bf16.mxu0 %v11163
    %11570 = vmatpush1.bf16.msra.mxu0 %v11162
    %11571 = vmatprep.subr.bf16.mxu0 %v11171
    %11572 = vmatpush1.bf16.msra.mxu0 %v11170
    %11573 = vmatprep.subr.bf16.mxu0 %v11179
    %11574 = vmatpush1.bf16.msra.mxu0 %v11178
    %11575 = vmatprep.subr.bf16.mxu0 %v11187
    %11576 = vmatpush1.bf16.msra.mxu0 %v11186
    %11577 = vmatprep.subr.bf16.mxu0 %v11195
    %11578 = vmatpush1.bf16.msra.mxu0 %v11194
    %11579 = vmatprep.subr.bf16.mxu0 %v11203
    %11580 = vmatpush1.bf16.msra.mxu0 %v11202
    %11581 = vmatprep.subr.bf16.mxu0 0
    %11582 = vmatpush1.bf16.msra.mxu0 0
    %11583 = vmatprep.subr.bf16.mxu0 0
    %11584 = vmatpush1.bf16.msra.mxu0 0
    %11585 = vmatprep.subr.bf16.mxu0 0
    %11586 = vmatpush1.bf16.msra.mxu0 0
    %11587 = vmatprep.subr.bf16.mxu0 0
    %11588 = vmatpush1.bf16.msra.mxu0 0
    %11589 = vmatprep.subr.bf16.mxu0 0
    %11590 = vmatpush1.bf16.msra.mxu0 0
    %11591 = vmatprep.subr.bf16.mxu0 0
    %11592 = vmatpush1.bf16.msra.mxu0 0
    %11593 = vmatprep.subr.bf16.mxu0 0
    %11594 = vmatpush1.bf16.msra.mxu0 0
    %11595 = vmatprep.subr.bf16.mxu0 0
    %11596 = vmatpush1.bf16.msra.mxu0 0
    %11597 = vmatprep.mubr.bf16.mxu0 0
    %11598 = vmatmul.mubr.bf16.gmra.mrb[0].mxu0 %v11440
    %v11599 = vpop.f32.mrb[0].mxu0
    %v11600 = vadd.f32 0.0, %v11599
    %v11601 = vpop.f32.mrb[0].mxu0
    %v11602 = vadd.f32 0.0, %v11601
    %v11603 = vpop.f32.mrb[0].mxu0
    %v11604 = vpop.f32.mrb[0].mxu0
    %11605 = vdwg.mxu0
    %v11606 = vadd.f32 %v10874, %v11477
    %v11607 = vadd.f32 %v10875, %v11479
    %v11608 = vadd.f32 %v10876, %v11518
    %v11609 = vadd.f32 %v10877, %v11520
    %v11610 = vadd.f32 %v10878, %v11559
    %v11611 = vadd.f32 %v10879, %v11561
    %v11612 = vadd.f32 %v10880, %v11600
    %v11613 = vadd.f32 %v10881, %v11602
    %v11614 = vld [vmem:[#allocation10 + $0x1e00] sm:$0xff]
    %v11615 = vld [vmem:[#allocation10 + $0x1e08] sm:$0xff]
    %v11616 = vld [vmem:[#allocation10 + $0x1e10] sm:$0xff]
    %v11617 = vld [vmem:[#allocation10 + $0x1e18] sm:$0xff]
    %v11618 = vld [vmem:[#allocation10 + $0x1e20] sm:$0xff]
    %v11619 = vld [vmem:[#allocation10 + $0x1e28] sm:$0xff]
    %v11620 = vld [vmem:[#allocation10 + $0x1e30] sm:$0xff]
    %v11621 = vld [vmem:[#allocation10 + $0x1e38] sm:$0xff]
    %v11622 = vld [vmem:[#allocation10 + $0x1e40] sm:$0xff]
    %v11623 = vld [vmem:[#allocation10 + $0x1e48] sm:$0xff]
    %v11624 = vld [vmem:[#allocation10 + $0x1e50] sm:$0xff]
    %v11625 = vld [vmem:[#allocation10 + $0x1e58] sm:$0xff]
    %v11626 = vld [vmem:[#allocation10 + $0x1e60] sm:$0xff]
    %v11627 = vld [vmem:[#allocation10 + $0x1e68] sm:$0xff]
    %v11628 = vld [vmem:[#allocation10 + $0x1e70] sm:$0xff]
    %v11629 = vld [vmem:[#allocation10 + $0x1e78] sm:$0xff]
    %v11630 = vld [vmem:[#allocation10 + $0x1e80] sm:$0xff]
    %v11631 = vld [vmem:[#allocation10 + $0x1e88] sm:$0xff]
    %v11632 = vld [vmem:[#allocation10 + $0x1e90] sm:$0xff]
    %v11633 = vld [vmem:[#allocation10 + $0x1e98] sm:$0xff]
    %v11634 = vld [vmem:[#allocation10 + $0x1ea0] sm:$0xff]
    %v11635 = vld [vmem:[#allocation10 + $0x1ea8] sm:$0xff]
    %v11636 = vld [vmem:[#allocation10 + $0x1eb0] sm:$0xff]
    %v11637 = vld [vmem:[#allocation10 + $0x1eb8] sm:$0xff]
    %v11638 = vld [vmem:[#allocation10 + $0x1ec0] sm:$0xff]
    %v11639 = vld [vmem:[#allocation10 + $0x1ec8] sm:$0xff]
    %v11640 = vld [vmem:[#allocation10 + $0x1ed0] sm:$0xff]
    %v11641 = vld [vmem:[#allocation10 + $0x1ed8] sm:$0xff]
    %v11642 = vld [vmem:[#allocation10 + $0x1ee0] sm:$0xff]
    %v11643 = vld [vmem:[#allocation10 + $0x1ee8] sm:$0xff]
    %v11644 = vld [vmem:[#allocation10 + $0x1ef0] sm:$0xff]
    %v11645 = vld [vmem:[#allocation10 + $0x1ef8] sm:$0xff]
    %v11646 = vld [vmem:[#allocation10 + $0x1f00] sm:$0xff]
    %v11647 = vld [vmem:[#allocation10 + $0x1f08] sm:$0xff]
    %v11648 = vld [vmem:[#allocation10 + $0x1f10] sm:$0xff]
    %v11649 = vld [vmem:[#allocation10 + $0x1f18] sm:$0xff]
    %v11650 = vld [vmem:[#allocation10 + $0x1f20] sm:$0xff]
    %v11651 = vld [vmem:[#allocation10 + $0x1f28] sm:$0xff]
    %v11652 = vld [vmem:[#allocation10 + $0x1f30] sm:$0xff]
    %v11653 = vld [vmem:[#allocation10 + $0x1f38] sm:$0xff]
    %v11654 = vld [vmem:[#allocation10 + $0x1f40] sm:$0xff]
    %v11655 = vld [vmem:[#allocation10 + $0x1f48] sm:$0xff]
    %v11656 = vld [vmem:[#allocation10 + $0x1f50] sm:$0xff]
    %v11657 = vld [vmem:[#allocation10 + $0x1f58] sm:$0xff]
    %v11658 = vld [vmem:[#allocation10 + $0x1f60] sm:$0xff]
    %v11659 = vld [vmem:[#allocation10 + $0x1f68] sm:$0xff]
    %v11660 = vld [vmem:[#allocation10 + $0x1f70] sm:$0xff]
    %v11661 = vld [vmem:[#allocation10 + $0x1f78] sm:$0xff]
    %v11662 = vld [vmem:[#allocation10 + $0x1f80] sm:$0xff]
    %v11663 = vld [vmem:[#allocation10 + $0x1f88] sm:$0xff]
    %v11664 = vld [vmem:[#allocation10 + $0x1f90] sm:$0xff]
    %v11665 = vld [vmem:[#allocation10 + $0x1f98] sm:$0xff]
    %v11666 = vld [vmem:[#allocation10 + $0x1fa0] sm:$0xff]
    %v11667 = vld [vmem:[#allocation10 + $0x1fa8] sm:$0xff]
    %v11668 = vld [vmem:[#allocation10 + $0x1fb0] sm:$0xff]
    %v11669 = vld [vmem:[#allocation10 + $0x1fb8] sm:$0xff]
    %v11670 = vld [vmem:[#allocation10 + $0x1fc0] sm:$0xff]
    %v11671 = vld [vmem:[#allocation10 + $0x1fc8] sm:$0xff]
    %v11672 = vld [vmem:[#allocation10 + $0x1fd0] sm:$0xff]
    %v11673 = vld [vmem:[#allocation10 + $0x1fd8] sm:$0xff]
    %v11674 = vld [vmem:[#allocation10 + $0x1fe0] sm:$0xff]
    %v11675 = vld [vmem:[#allocation10 + $0x1fe8] sm:$0xff]
    %v11676 = vld [vmem:[#allocation10 + $0x1ff0] sm:$0xff]
    %v11677 = vld [vmem:[#allocation10 + $0x1ff8] sm:$0xff]
    %v11678 = vrot.slane %v7281, 3
    %v11744 = vunpack.c.l.b16 %v11614
    %v11745 = vunpack.c.h.b16 %v11614
    %v11746 = vunpack.c.l.b16 %v11615
    %v11747 = vunpack.c.h.b16 %v11615
    %v11748 = vunpack.c.l.b16 %v11616
    %v11749 = vunpack.c.h.b16 %v11616
    %v11750 = vunpack.c.l.b16 %v11617
    %v11751 = vunpack.c.h.b16 %v11617
    %v11752 = vunpack.c.l.b16 %v11618
    %v11753 = vunpack.c.h.b16 %v11618
    %v11754 = vunpack.c.l.b16 %v11619
    %v11755 = vunpack.c.h.b16 %v11619
    %v11756 = vunpack.c.l.b16 %v11620
    %v11757 = vunpack.c.h.b16 %v11620
    %v11758 = vunpack.c.l.b16 %v11621
    %v11759 = vunpack.c.h.b16 %v11621
    %v11760 = vunpack.c.l.b16 %v11622
    %v11761 = vunpack.c.h.b16 %v11622
    %v11762 = vunpack.c.l.b16 %v11623
    %v11763 = vunpack.c.h.b16 %v11623
    %v11764 = vunpack.c.l.b16 %v11624
    %v11765 = vunpack.c.h.b16 %v11624
    %v11766 = vunpack.c.l.b16 %v11625
    %v11767 = vunpack.c.h.b16 %v11625
    %v11768 = vunpack.c.l.b16 %v11626
    %v11769 = vunpack.c.h.b16 %v11626
    %v11770 = vunpack.c.l.b16 %v11627
    %v11771 = vunpack.c.h.b16 %v11627
    %v11772 = vunpack.c.l.b16 %v11628
    %v11773 = vunpack.c.h.b16 %v11628
    %v11774 = vunpack.c.l.b16 %v11629
    %v11775 = vunpack.c.h.b16 %v11629
    %v11776 = vunpack.c.l.b16 %v11630
    %v11777 = vunpack.c.h.b16 %v11630
    %v11778 = vunpack.c.l.b16 %v11631
    %v11779 = vunpack.c.h.b16 %v11631
    %v11780 = vunpack.c.l.b16 %v11632
    %v11781 = vunpack.c.h.b16 %v11632
    %v11782 = vunpack.c.l.b16 %v11633
    %v11783 = vunpack.c.h.b16 %v11633
    %v11784 = vunpack.c.l.b16 %v11634
    %v11785 = vunpack.c.h.b16 %v11634
    %v11786 = vunpack.c.l.b16 %v11635
    %v11787 = vunpack.c.h.b16 %v11635
    %v11788 = vunpack.c.l.b16 %v11636
    %v11789 = vunpack.c.h.b16 %v11636
    %v11790 = vunpack.c.l.b16 %v11637
    %v11791 = vunpack.c.h.b16 %v11637
    %v11792 = vunpack.c.l.b16 %v11638
    %v11793 = vunpack.c.h.b16 %v11638
    %v11794 = vunpack.c.l.b16 %v11639
    %v11795 = vunpack.c.h.b16 %v11639
    %v11796 = vunpack.c.l.b16 %v11640
    %v11797 = vunpack.c.h.b16 %v11640
    %v11798 = vunpack.c.l.b16 %v11641
    %v11799 = vunpack.c.h.b16 %v11641
    %v11800 = vunpack.c.l.b16 %v11642
    %v11801 = vunpack.c.h.b16 %v11642
    %v11802 = vunpack.c.l.b16 %v11643
    %v11803 = vunpack.c.h.b16 %v11643
    %v11804 = vunpack.c.l.b16 %v11644
    %v11805 = vunpack.c.h.b16 %v11644
    %v11806 = vunpack.c.l.b16 %v11645
    %v11807 = vunpack.c.h.b16 %v11645
    %v11808 = vunpack.c.l.b16 %v11646
    %v11809 = vunpack.c.h.b16 %v11646
    %v11810 = vunpack.c.l.b16 %v11647
    %v11811 = vunpack.c.h.b16 %v11647
    %v11812 = vunpack.c.l.b16 %v11648
    %v11813 = vunpack.c.h.b16 %v11648
    %v11814 = vunpack.c.l.b16 %v11649
    %v11815 = vunpack.c.h.b16 %v11649
    %v11816 = vunpack.c.l.b16 %v11650
    %v11817 = vunpack.c.h.b16 %v11650
    %v11818 = vunpack.c.l.b16 %v11651
    %v11819 = vunpack.c.h.b16 %v11651
    %v11820 = vunpack.c.l.b16 %v11652
    %v11821 = vunpack.c.h.b16 %v11652
    %v11822 = vunpack.c.l.b16 %v11653
    %v11823 = vunpack.c.h.b16 %v11653
    %v11824 = vunpack.c.l.b16 %v11654
    %v11825 = vunpack.c.h.b16 %v11654
    %v11826 = vunpack.c.l.b16 %v11655
    %v11827 = vunpack.c.h.b16 %v11655
    %v11828 = vunpack.c.l.b16 %v11656
    %v11829 = vunpack.c.h.b16 %v11656
    %v11830 = vunpack.c.l.b16 %v11657
    %v11831 = vunpack.c.h.b16 %v11657
    %v11832 = vunpack.c.l.b16 %v11658
    %v11833 = vunpack.c.h.b16 %v11658
    %v11834 = vunpack.c.l.b16 %v11659
    %v11835 = vunpack.c.h.b16 %v11659
    %v11836 = vunpack.c.l.b16 %v11660
    %v11837 = vunpack.c.h.b16 %v11660
    %v11838 = vunpack.c.l.b16 %v11661
    %v11839 = vunpack.c.h.b16 %v11661
    %v11840 = vunpack.c.l.b16 %v11662
    %v11841 = vunpack.c.h.b16 %v11662
    %v11842 = vunpack.c.l.b16 %v11663
    %v11843 = vunpack.c.h.b16 %v11663
    %v11844 = vunpack.c.l.b16 %v11664
    %v11845 = vunpack.c.h.b16 %v11664
    %v11846 = vunpack.c.l.b16 %v11665
    %v11847 = vunpack.c.h.b16 %v11665
    %v11848 = vunpack.c.l.b16 %v11666
    %v11849 = vunpack.c.h.b16 %v11666
    %v11850 = vunpack.c.l.b16 %v11667
    %v11851 = vunpack.c.h.b16 %v11667
    %v11852 = vunpack.c.l.b16 %v11668
    %v11853 = vunpack.c.h.b16 %v11668
    %v11854 = vunpack.c.l.b16 %v11669
    %v11855 = vunpack.c.h.b16 %v11669
    %v11856 = vunpack.c.l.b16 %v11670
    %v11857 = vunpack.c.h.b16 %v11670
    %v11858 = vunpack.c.l.b16 %v11671
    %v11859 = vunpack.c.h.b16 %v11671
    %v11860 = vunpack.c.l.b16 %v11672
    %v11861 = vunpack.c.h.b16 %v11672
    %v11862 = vunpack.c.l.b16 %v11673
    %v11863 = vunpack.c.h.b16 %v11673
    %v11864 = vunpack.c.l.b16 %v11674
    %v11865 = vunpack.c.h.b16 %v11674
    %v11866 = vunpack.c.l.b16 %v11675
    %v11867 = vunpack.c.h.b16 %v11675
    %v11868 = vunpack.c.l.b16 %v11676
    %v11869 = vunpack.c.h.b16 %v11676
    %v11870 = vunpack.c.l.b16 %v11677
    %v11871 = vunpack.c.h.b16 %v11677
    %v11872 = vpack.c.b16 %v11752, %v11744
    %v11873 = vpack.c.b16 %v11753, %v11745
    %v11874 = vpack.c.b16 %v11754, %v11746
    %v11875 = vpack.c.b16 %v11755, %v11747
    %v11876 = vpack.c.b16 %v11756, %v11748
    %v11877 = vpack.c.b16 %v11757, %v11749
    %v11878 = vpack.c.b16 %v11758, %v11750
    %v11879 = vpack.c.b16 %v11759, %v11751
    %v11880 = vpack.c.b16 %v11768, %v11760
    %v11881 = vpack.c.b16 %v11769, %v11761
    %v11882 = vpack.c.b16 %v11770, %v11762
    %v11883 = vpack.c.b16 %v11771, %v11763
    %v11884 = vpack.c.b16 %v11772, %v11764
    %v11885 = vpack.c.b16 %v11773, %v11765
    %v11886 = vpack.c.b16 %v11774, %v11766
    %v11887 = vpack.c.b16 %v11775, %v11767
    %v11888 = vpack.c.b16 %v11784, %v11776
    %v11889 = vpack.c.b16 %v11785, %v11777
    %v11890 = vpack.c.b16 %v11786, %v11778
    %v11891 = vpack.c.b16 %v11787, %v11779
    %v11892 = vpack.c.b16 %v11788, %v11780
    %v11893 = vpack.c.b16 %v11789, %v11781
    %v11894 = vpack.c.b16 %v11790, %v11782
    %v11895 = vpack.c.b16 %v11791, %v11783
    %v11896 = vpack.c.b16 %v11800, %v11792
    %v11897 = vpack.c.b16 %v11801, %v11793
    %v11898 = vpack.c.b16 %v11802, %v11794
    %v11899 = vpack.c.b16 %v11803, %v11795
    %v11900 = vpack.c.b16 %v11804, %v11796
    %v11901 = vpack.c.b16 %v11805, %v11797
    %v11902 = vpack.c.b16 %v11806, %v11798
    %v11903 = vpack.c.b16 %v11807, %v11799
    %v11904 = vpack.c.b16 %v11816, %v11808
    %v11905 = vpack.c.b16 %v11817, %v11809
    %v11906 = vpack.c.b16 %v11818, %v11810
    %v11907 = vpack.c.b16 %v11819, %v11811
    %v11908 = vpack.c.b16 %v11820, %v11812
    %v11909 = vpack.c.b16 %v11821, %v11813
    %v11910 = vpack.c.b16 %v11822, %v11814
    %v11911 = vpack.c.b16 %v11823, %v11815
    %v11912 = vpack.c.b16 %v11832, %v11824
    %v11913 = vpack.c.b16 %v11833, %v11825
    %v11914 = vpack.c.b16 %v11834, %v11826
    %v11915 = vpack.c.b16 %v11835, %v11827
    %v11916 = vpack.c.b16 %v11836, %v11828
    %v11917 = vpack.c.b16 %v11837, %v11829
    %v11918 = vpack.c.b16 %v11838, %v11830
    %v11919 = vpack.c.b16 %v11839, %v11831
    %v11920 = vpack.c.b16 %v11848, %v11840
    %v11921 = vpack.c.b16 %v11849, %v11841
    %v11922 = vpack.c.b16 %v11850, %v11842
    %v11923 = vpack.c.b16 %v11851, %v11843
    %v11924 = vpack.c.b16 %v11852, %v11844
    %v11925 = vpack.c.b16 %v11853, %v11845
    %v11926 = vpack.c.b16 %v11854, %v11846
    %v11927 = vpack.c.b16 %v11855, %v11847
    %v11928 = vpack.c.b16 %v11864, %v11856
    %v11929 = vpack.c.b16 %v11865, %v11857
    %v11930 = vpack.c.b16 %v11866, %v11858
    %v11931 = vpack.c.b16 %v11867, %v11859
    %v11932 = vpack.c.b16 %v11868, %v11860
    %v11933 = vpack.c.b16 %v11869, %v11861
    %v11934 = vpack.c.b16 %v11870, %v11862
    %v11935 = vpack.c.b16 %v11871, %v11863
    %12000 = vmatprep.subr.bf16.mxu0 %v11873
    %12001 = vmatpush1.bf16.msra.mxu0 %v11872
    %12002 = vmatprep.subr.bf16.mxu0 %v11881
    %12003 = vmatpush1.bf16.msra.mxu0 %v11880
    %12004 = vmatprep.subr.bf16.mxu0 %v11889
    %12005 = vmatpush1.bf16.msra.mxu0 %v11888
    %12006 = vmatprep.subr.bf16.mxu0 %v11897
    %12007 = vmatpush1.bf16.msra.mxu0 %v11896
    %12008 = vmatprep.subr.bf16.mxu0 %v11905
    %12009 = vmatpush1.bf16.msra.mxu0 %v11904
    %12010 = vmatprep.subr.bf16.mxu0 %v11913
    %12011 = vmatpush1.bf16.msra.mxu0 %v11912
    %12012 = vmatprep.subr.bf16.mxu0 %v11921
    %12013 = vmatpush1.bf16.msra.mxu0 %v11920
    %12014 = vmatprep.subr.bf16.mxu0 %v11929
    %12015 = vmatpush1.bf16.msra.mxu0 %v11928
    %12016 = vmatprep.subr.bf16.mxu0 0
    %12017 = vmatpush1.bf16.msra.mxu0 0
    %12018 = vmatprep.subr.bf16.mxu0 0
    %12019 = vmatpush1.bf16.msra.mxu0 0
    %12020 = vmatprep.subr.bf16.mxu0 0
    %12021 = vmatpush1.bf16.msra.mxu0 0
    %12022 = vmatprep.subr.bf16.mxu0 0
    %12023 = vmatpush1.bf16.msra.mxu0 0
    %12024 = vmatprep.subr.bf16.mxu0 0
    %12025 = vmatpush1.bf16.msra.mxu0 0
    %12026 = vmatprep.subr.bf16.mxu0 0
    %12027 = vmatpush1.bf16.msra.mxu0 0
    %12028 = vmatprep.subr.bf16.mxu0 0
    %12029 = vmatpush1.bf16.msra.mxu0 0
    %12030 = vmatprep.subr.bf16.mxu0 0
    %12031 = vmatpush1.bf16.msra.mxu0 0
    %12032 = vmatprep.mubr.bf16.mxu0 0
    %12033 = vmatmul.mubr.bf16.gmra.mrb[0].mxu0 %v11678
    %v12034 = vpop.f32.mrb[0].mxu0
    %v12035 = vadd.f32 0.0, %v12034
    %v12036 = vpop.f32.mrb[0].mxu0
    %v12037 = vadd.f32 0.0, %v12036
    %v12038 = vpop.f32.mrb[0].mxu0
    %v12039 = vpop.f32.mrb[0].mxu0
    %12040 = vdwg.mxu0
    %12041 = vmatprep.subr.bf16.mxu0 %v11875
    %12042 = vmatpush1.bf16.msra.mxu0 %v11874
    %12043 = vmatprep.subr.bf16.mxu0 %v11883
    %12044 = vmatpush1.bf16.msra.mxu0 %v11882
    %12045 = vmatprep.subr.bf16.mxu0 %v11891
    %12046 = vmatpush1.bf16.msra.mxu0 %v11890
    %12047 = vmatprep.subr.bf16.mxu0 %v11899
    %12048 = vmatpush1.bf16.msra.mxu0 %v11898
    %12049 = vmatprep.subr.bf16.mxu0 %v11907
    %12050 = vmatpush1.bf16.msra.mxu0 %v11906
    %12051 = vmatprep.subr.bf16.mxu0 %v11915
    %12052 = vmatpush1.bf16.msra.mxu0 %v11914
    %12053 = vmatprep.subr.bf16.mxu0 %v11923
    %12054 = vmatpush1.bf16.msra.mxu0 %v11922
    %12055 = vmatprep.subr.bf16.mxu0 %v11931
    %12056 = vmatpush1.bf16.msra.mxu0 %v11930
    %12057 = vmatprep.subr.bf16.mxu0 0
    %12058 = vmatpush1.bf16.msra.mxu0 0
    %12059 = vmatprep.subr.bf16.mxu0 0
    %12060 = vmatpush1.bf16.msra.mxu0 0
    %12061 = vmatprep.subr.bf16.mxu0 0
    %12062 = vmatpush1.bf16.msra.mxu0 0
    %12063 = vmatprep.subr.bf16.mxu0 0
    %12064 = vmatpush1.bf16.msra.mxu0 0
    %12065 = vmatprep.subr.bf16.mxu0 0
    %12066 = vmatpush1.bf16.msra.mxu0 0
    %12067 = vmatprep.subr.bf16.mxu0 0
    %12068 = vmatpush1.bf16.msra.mxu0 0
    %12069 = vmatprep.subr.bf16.mxu0 0
    %12070 = vmatpush1.bf16.msra.mxu0 0
    %12071 = vmatprep.subr.bf16.mxu0 0
    %12072 = vmatpush1.bf16.msra.mxu0 0
    %12073 = vmatprep.mubr.bf16.mxu0 0
    %12074 = vmatmul.mubr.bf16.gmra.mrb[0].mxu0 %v11678
    %v12075 = vpop.f32.mrb[0].mxu0
    %v12076 = vadd.f32 0.0, %v12075
    %v12077 = vpop.f32.mrb[0].mxu0
    %v12078 = vadd.f32 0.0, %v12077
    %v12079 = vpop.f32.mrb[0].mxu0
    %v12080 = vpop.f32.mrb[0].mxu0
    %12081 = vdwg.mxu0
    %12082 = vmatprep.subr.bf16.mxu0 %v11877
    %12083 = vmatpush1.bf16.msra.mxu0 %v11876
    %12084 = vmatprep.subr.bf16.mxu0 %v11885
    %12085 = vmatpush1.bf16.msra.mxu0 %v11884
    %12086 = vmatprep.subr.bf16.mxu0 %v11893
    %12087 = vmatpush1.bf16.msra.mxu0 %v11892
    %12088 = vmatprep.subr.bf16.mxu0 %v11901
    %12089 = vmatpush1.bf16.msra.mxu0 %v11900
    %12090 = vmatprep.subr.bf16.mxu0 %v11909
    %12091 = vmatpush1.bf16.msra.mxu0 %v11908
    %12092 = vmatprep.subr.bf16.mxu0 %v11917
    %12093 = vmatpush1.bf16.msra.mxu0 %v11916
    %12094 = vmatprep.subr.bf16.mxu0 %v11925
    %12095 = vmatpush1.bf16.msra.mxu0 %v11924
    %12096 = vmatprep.subr.bf16.mxu0 %v11933
    %12097 = vmatpush1.bf16.msra.mxu0 %v11932
    %12098 = vmatprep.subr.bf16.mxu0 0
    %12099 = vmatpush1.bf16.msra.mxu0 0
    %12100 = vmatprep.subr.bf16.mxu0 0
    %12101 = vmatpush1.bf16.msra.mxu0 0
    %12102 = vmatprep.subr.bf16.mxu0 0
    %12103 = vmatpush1.bf16.msra.mxu0 0
    %12104 = vmatprep.subr.bf16.mxu0 0
    %12105 = vmatpush1.bf16.msra.mxu0 0
    %12106 = vmatprep.subr.bf16.mxu0 0
    %12107 = vmatpush1.bf16.msra.mxu0 0
    %12108 = vmatprep.subr.bf16.mxu0 0
    %12109 = vmatpush1.bf16.msra.mxu0 0
    %12110 = vmatprep.subr.bf16.mxu0 0
    %12111 = vmatpush1.bf16.msra.mxu0 0
    %12112 = vmatprep.subr.bf16.mxu0 0
    %12113 = vmatpush1.bf16.msra.mxu0 0
    %12114 = vmatprep.mubr.bf16.mxu0 0
    %12115 = vmatmul.mubr.bf16.gmra.mrb[0].mxu0 %v11678
    %v12116 = vpop.f32.mrb[0].mxu0
    %v12117 = vadd.f32 0.0, %v12116
    %v12118 = vpop.f32.mrb[0].mxu0
    %v12119 = vadd.f32 0.0, %v12118
    %v12120 = vpop.f32.mrb[0].mxu0
    %v12121 = vpop.f32.mrb[0].mxu0
    %12122 = vdwg.mxu0
    %12123 = vmatprep.subr.bf16.mxu0 %v11879
    %12124 = vmatpush1.bf16.msra.mxu0 %v11878
    %12125 = vmatprep.subr.bf16.mxu0 %v11887
    %12126 = vmatpush1.bf16.msra.mxu0 %v11886
    %12127 = vmatprep.subr.bf16.mxu0 %v11895
    %12128 = vmatpush1.bf16.msra.mxu0 %v11894
    %12129 = vmatprep.subr.bf16.mxu0 %v11903
    %12130 = vmatpush1.bf16.msra.mxu0 %v11902
    %12131 = vmatprep.subr.bf16.mxu0 %v11911
    %12132 = vmatpush1.bf16.msra.mxu0 %v11910
    %12133 = vmatprep.subr.bf16.mxu0 %v11919
    %12134 = vmatpush1.bf16.msra.mxu0 %v11918
    %12135 = vmatprep.subr.bf16.mxu0 %v11927
    %12136 = vmatpush1.bf16.msra.mxu0 %v11926
    %12137 = vmatprep.subr.bf16.mxu0 %v11935
    %12138 = vmatpush1.bf16.msra.mxu0 %v11934
    %12139 = vmatprep.subr.bf16.mxu0 0
    %12140 = vmatpush1.bf16.msra.mxu0 0
    %12141 = vmatprep.subr.bf16.mxu0 0
    %12142 = vmatpush1.bf16.msra.mxu0 0
    %12143 = vmatprep.subr.bf16.mxu0 0
    %12144 = vmatpush1.bf16.msra.mxu0 0
    %12145 = vmatprep.subr.bf16.mxu0 0
    %12146 = vmatpush1.bf16.msra.mxu0 0
    %12147 = vmatprep.subr.bf16.mxu0 0
    %12148 = vmatpush1.bf16.msra.mxu0 0
    %12149 = vmatprep.subr.bf16.mxu0 0
    %12150 = vmatpush1.bf16.msra.mxu0 0
    %12151 = vmatprep.subr.bf16.mxu0 0
    %12152 = vmatpush1.bf16.msra.mxu0 0
    %12153 = vmatprep.subr.bf16.mxu0 0
    %12154 = vmatpush1.bf16.msra.mxu0 0
    %12155 = vmatprep.mubr.bf16.mxu0 0
    %12156 = vmatmul.mubr.bf16.gmra.mrb[0].mxu0 %v11678
    %v12157 = vpop.f32.mrb[0].mxu0
    %v12158 = vadd.f32 0.0, %v12157
    %v12159 = vpop.f32.mrb[0].mxu0
    %v12160 = vadd.f32 0.0, %v12159
    %v12161 = vpop.f32.mrb[0].mxu0
    %v12162 = vpop.f32.mrb[0].mxu0
    %12163 = vdwg.mxu0
    %v12164 = vadd.f32 %v11432, %v12035
    %v12165 = vadd.f32 %v11433, %v12037
    %v12166 = vadd.f32 %v11434, %v12076
    %v12167 = vadd.f32 %v11435, %v12078
    %v12168 = vadd.f32 %v11436, %v12117
    %v12169 = vadd.f32 %v11437, %v12119
    %v12170 = vadd.f32 %v11438, %v12158
    %v12171 = vadd.f32 %v11439, %v12160
    %v12172 = vrot.slane %v7777, 3
    %12174 = vmatprep.subr.bf16.mxu0 %v11873
    %12175 = vmatpush1.bf16.msra.mxu0 %v11872
    %12176 = vmatprep.subr.bf16.mxu0 %v11881
    %12177 = vmatpush1.bf16.msra.mxu0 %v11880
    %12178 = vmatprep.subr.bf16.mxu0 %v11889
    %12179 = vmatpush1.bf16.msra.mxu0 %v11888
    %12180 = vmatprep.subr.bf16.mxu0 %v11897
    %12181 = vmatpush1.bf16.msra.mxu0 %v11896
    %12182 = vmatprep.subr.bf16.mxu0 %v11905
    %12183 = vmatpush1.bf16.msra.mxu0 %v11904
    %12184 = vmatprep.subr.bf16.mxu0 %v11913
    %12185 = vmatpush1.bf16.msra.mxu0 %v11912
    %12186 = vmatprep.subr.bf16.mxu0 %v11921
    %12187 = vmatpush1.bf16.msra.mxu0 %v11920
    %12188 = vmatprep.subr.bf16.mxu0 %v11929
    %12189 = vmatpush1.bf16.msra.mxu0 %v11928
    %12190 = vmatprep.subr.bf16.mxu0 0
    %12191 = vmatpush1.bf16.msra.mxu0 0
    %12192 = vmatprep.subr.bf16.mxu0 0
    %12193 = vmatpush1.bf16.msra.mxu0 0
    %12194 = vmatprep.subr.bf16.mxu0 0
    %12195 = vmatpush1.bf16.msra.mxu0 0
    %12196 = vmatprep.subr.bf16.mxu0 0
    %12197 = vmatpush1.bf16.msra.mxu0 0
    %12198 = vmatprep.subr.bf16.mxu0 0
    %12199 = vmatpush1.bf16.msra.mxu0 0
    %12200 = vmatprep.subr.bf16.mxu0 0
    %12201 = vmatpush1.bf16.msra.mxu0 0
    %12202 = vmatprep.subr.bf16.mxu0 0
    %12203 = vmatpush1.bf16.msra.mxu0 0
    %12204 = vmatprep.subr.bf16.mxu0 0
    %12205 = vmatpush1.bf16.msra.mxu0 0
    %12206 = vmatprep.mubr.bf16.mxu0 0
    %12207 = vmatmul.mubr.bf16.gmra.mrb[0].mxu0 %v12172
    %v12208 = vpop.f32.mrb[0].mxu0
    %v12209 = vadd.f32 0.0, %v12208
    %v12210 = vpop.f32.mrb[0].mxu0
    %v12211 = vadd.f32 0.0, %v12210
    %v12212 = vpop.f32.mrb[0].mxu0
    %v12213 = vpop.f32.mrb[0].mxu0
    %12214 = vdwg.mxu0
    %12215 = vmatprep.subr.bf16.mxu0 %v11875
    %12216 = vmatpush1.bf16.msra.mxu0 %v11874
    %12217 = vmatprep.subr.bf16.mxu0 %v11883
    %12218 = vmatpush1.bf16.msra.mxu0 %v11882
    %12219 = vmatprep.subr.bf16.mxu0 %v11891
    %12220 = vmatpush1.bf16.msra.mxu0 %v11890
    %12221 = vmatprep.subr.bf16.mxu0 %v11899
    %12222 = vmatpush1.bf16.msra.mxu0 %v11898
    %12223 = vmatprep.subr.bf16.mxu0 %v11907
    %12224 = vmatpush1.bf16.msra.mxu0 %v11906
    %12225 = vmatprep.subr.bf16.mxu0 %v11915
    %12226 = vmatpush1.bf16.msra.mxu0 %v11914
    %12227 = vmatprep.subr.bf16.mxu0 %v11923
    %12228 = vmatpush1.bf16.msra.mxu0 %v11922
    %12229 = vmatprep.subr.bf16.mxu0 %v11931
    %12230 = vmatpush1.bf16.msra.mxu0 %v11930
    %12231 = vmatprep.subr.bf16.mxu0 0
    %12232 = vmatpush1.bf16.msra.mxu0 0
    %12233 = vmatprep.subr.bf16.mxu0 0
    %12234 = vmatpush1.bf16.msra.mxu0 0
    %12235 = vmatprep.subr.bf16.mxu0 0
    %12236 = vmatpush1.bf16.msra.mxu0 0
    %12237 = vmatprep.subr.bf16.mxu0 0
    %12238 = vmatpush1.bf16.msra.mxu0 0
    %12239 = vmatprep.subr.bf16.mxu0 0
    %12240 = vmatpush1.bf16.msra.mxu0 0
    %12241 = vmatprep.subr.bf16.mxu0 0
    %12242 = vmatpush1.bf16.msra.mxu0 0
    %12243 = vmatprep.subr.bf16.mxu0 0
    %12244 = vmatpush1.bf16.msra.mxu0 0
    %12245 = vmatprep.subr.bf16.mxu0 0
    %12246 = vmatpush1.bf16.msra.mxu0 0
    %12247 = vmatprep.mubr.bf16.mxu0 0
    %12248 = vmatmul.mubr.bf16.gmra.mrb[0].mxu0 %v12172
    %v12249 = vpop.f32.mrb[0].mxu0
    %v12250 = vadd.f32 0.0, %v12249
    %v12251 = vpop.f32.mrb[0].mxu0
    %v12252 = vadd.f32 0.0, %v12251
    %v12253 = vpop.f32.mrb[0].mxu0
    %v12254 = vpop.f32.mrb[0].mxu0
    %12255 = vdwg.mxu0
    %12256 = vmatprep.subr.bf16.mxu0 %v11877
    %12257 = vmatpush1.bf16.msra.mxu0 %v11876
    %12258 = vmatprep.subr.bf16.mxu0 %v11885
    %12259 = vmatpush1.bf16.msra.mxu0 %v11884
    %12260 = vmatprep.subr.bf16.mxu0 %v11893
    %12261 = vmatpush1.bf16.msra.mxu0 %v11892
    %12262 = vmatprep.subr.bf16.mxu0 %v11901
    %12263 = vmatpush1.bf16.msra.mxu0 %v11900
    %12264 = vmatprep.subr.bf16.mxu0 %v11909
    %12265 = vmatpush1.bf16.msra.mxu0 %v11908
    %12266 = vmatprep.subr.bf16.mxu0 %v11917
    %12267 = vmatpush1.bf16.msra.mxu0 %v11916
    %12268 = vmatprep.subr.bf16.mxu0 %v11925
    %12269 = vmatpush1.bf16.msra.mxu0 %v11924
    %12270 = vmatprep.subr.bf16.mxu0 %v11933
    %12271 = vmatpush1.bf16.msra.mxu0 %v11932
    %12272 = vmatprep.subr.bf16.mxu0 0
    %12273 = vmatpush1.bf16.msra.mxu0 0
    %12274 = vmatprep.subr.bf16.mxu0 0
    %12275 = vmatpush1.bf16.msra.mxu0 0
    %12276 = vmatprep.subr.bf16.mxu0 0
    %12277 = vmatpush1.bf16.msra.mxu0 0
    %12278 = vmatprep.subr.bf16.mxu0 0
    %12279 = vmatpush1.bf16.msra.mxu0 0
    %12280 = vmatprep.subr.bf16.mxu0 0
    %12281 = vmatpush1.bf16.msra.mxu0 0
    %12282 = vmatprep.subr.bf16.mxu0 0
    %12283 = vmatpush1.bf16.msra.mxu0 0
    %12284 = vmatprep.subr.bf16.mxu0 0
    %12285 = vmatpush1.bf16.msra.mxu0 0
    %12286 = vmatprep.subr.bf16.mxu0 0
    %12287 = vmatpush1.bf16.msra.mxu0 0
    %12288 = vmatprep.mubr.bf16.mxu0 0
    %12289 = vmatmul.mubr.bf16.gmra.mrb[0].mxu0 %v12172
    %v12290 = vpop.f32.mrb[0].mxu0
    %v12291 = vadd.f32 0.0, %v12290
    %v12292 = vpop.f32.mrb[0].mxu0
    %v12293 = vadd.f32 0.0, %v12292
    %v12294 = vpop.f32.mrb[0].mxu0
    %v12295 = vpop.f32.mrb[0].mxu0
    %12296 = vdwg.mxu0
    %12297 = vmatprep.subr.bf16.mxu0 %v11879
    %12298 = vmatpush1.bf16.msra.mxu0 %v11878
    %12299 = vmatprep.subr.bf16.mxu0 %v11887
    %12300 = vmatpush1.bf16.msra.mxu0 %v11886
    %12301 = vmatprep.subr.bf16.mxu0 %v11895
    %12302 = vmatpush1.bf16.msra.mxu0 %v11894
    %12303 = vmatprep.subr.bf16.mxu0 %v11903
    %12304 = vmatpush1.bf16.msra.mxu0 %v11902
    %12305 = vmatprep.subr.bf16.mxu0 %v11911
    %12306 = vmatpush1.bf16.msra.mxu0 %v11910
    %12307 = vmatprep.subr.bf16.mxu0 %v11919
    %12308 = vmatpush1.bf16.msra.mxu0 %v11918
    %12309 = vmatprep.subr.bf16.mxu0 %v11927
    %12310 = vmatpush1.bf16.msra.mxu0 %v11926
    %12311 = vmatprep.subr.bf16.mxu0 %v11935
    %12312 = vmatpush1.bf16.msra.mxu0 %v11934
    %12313 = vmatprep.subr.bf16.mxu0 0
    %12314 = vmatpush1.bf16.msra.mxu0 0
    %12315 = vmatprep.subr.bf16.mxu0 0
    %12316 = vmatpush1.bf16.msra.mxu0 0
    %12317 = vmatprep.subr.bf16.mxu0 0
    %12318 = vmatpush1.bf16.msra.mxu0 0
    %12319 = vmatprep.subr.bf16.mxu0 0
    %12320 = vmatpush1.bf16.msra.mxu0 0
    %12321 = vmatprep.subr.bf16.mxu0 0
    %12322 = vmatpush1.bf16.msra.mxu0 0
    %12323 = vmatprep.subr.bf16.mxu0 0
    %12324 = vmatpush1.bf16.msra.mxu0 0
    %12325 = vmatprep.subr.bf16.mxu0 0
    %12326 = vmatpush1.bf16.msra.mxu0 0
    %12327 = vmatprep.subr.bf16.mxu0 0
    %12328 = vmatpush1.bf16.msra.mxu0 0
    %12329 = vmatprep.mubr.bf16.mxu0 0
    %12330 = vmatmul.mubr.bf16.gmra.mrb[0].mxu0 %v12172
    %v12331 = vpop.f32.mrb[0].mxu0
    %v12332 = vadd.f32 0.0, %v12331
    %v12333 = vpop.f32.mrb[0].mxu0
    %v12334 = vadd.f32 0.0, %v12333
    %v12335 = vpop.f32.mrb[0].mxu0
    %v12336 = vpop.f32.mrb[0].mxu0
    %12337 = vdwg.mxu0
    %v12338 = vadd.f32 %v11606, %v12209
    %v12339 = vadd.f32 %v11607, %v12211
    %v12340 = vadd.f32 %v11608, %v12250
    %v12341 = vadd.f32 %v11609, %v12252
    %v12342 = vadd.f32 %v11610, %v12291
    %v12343 = vadd.f32 %v11611, %v12293
    %v12344 = vadd.f32 %v11612, %v12332
    %v12345 = vadd.f32 %v11613, %v12334
    %v12347 = vlaneseq
    %v12348 = vshrl.u32 %v12347, 7
    %v12349 = vsub.s32 0, %v12348
    %v12350 = vrot.slane %v126, %v12349
    %v12351 = vlaneseq
    %v12352 = vshrl.u32 %v12351, 7
    %v12353 = vsub.s32 1, %v12352
    %v12354 = vrot.slane %v126, %v12353
    %v12355 = vlaneseq
    %v12356 = vshrl.u32 %v12355, 7
    %v12357 = vsub.s32 2, %v12356
    %v12358 = vrot.slane %v126, %v12357
    %v12359 = vlaneseq
    %v12360 = vshrl.u32 %v12359, 7
    %v12361 = vsub.s32 3, %v12360
    %v12362 = vrot.slane %v126, %v12361
    %v12363 = vlaneseq
    %v12364 = vshrl.u32 %v12363, 7
    %v12365 = vsub.s32 4, %v12364
    %v12366 = vrot.slane %v126, %v12365
    %v12367 = vlaneseq
    %v12368 = vshrl.u32 %v12367, 7
    %v12369 = vsub.s32 5, %v12368
    %v12370 = vrot.slane %v126, %v12369
    %v12371 = vlaneseq
    %v12372 = vshrl.u32 %v12371, 7
    %v12373 = vsub.s32 6, %v12372
    %v12374 = vrot.slane %v126, %v12373
    %v12375 = vlaneseq
    %v12376 = vshrl.u32 %v12375, 7
    %v12377 = vsub.s32 7, %v12376
    %v12378 = vrot.slane %v126, %v12377
    %v12387 = vadd.f32 %v12164, %v12350
    %v12388 = vadd.f32 %v12165, %v12354
    %v12389 = vadd.f32 %v12166, %v12358
    %v12390 = vadd.f32 %v12167, %v12362
    %v12391 = vadd.f32 %v12168, %v12366
    %v12392 = vadd.f32 %v12169, %v12370
    %v12393 = vadd.f32 %v12170, %v12374
    %v12394 = vadd.f32 %v12171, %v12378
    %v12395 = vmax.f32 %v12387, 0.0
    %v12396 = vmax.f32 %v12388, 0.0
    %v12397 = vmax.f32 %v12389, 0.0
    %v12398 = vmax.f32 %v12390, 0.0
    %v12399 = vmax.f32 %v12391, 0.0
    %v12400 = vmax.f32 %v12392, 0.0
    %v12401 = vmax.f32 %v12393, 0.0
    %v12402 = vmax.f32 %v12394, 0.0
    %12403 = vmatprep.subr.mxu0 0.0
    %12404 = vmatpush1.msra.mxu0 %v127
    %12405 = vmatprep.subr.mxu0 0.0
    %12406 = vmatpush1.msra.mxu0 %v128
    %12407 = vmatprep.subr.mxu0 0.0
    %12408 = vmatpush1.msra.mxu0 %v129
    %12409 = vmatprep.subr.mxu0 0.0
    %12410 = vmatpush1.msra.mxu0 %v130
    %12411 = vmatprep.subr.mxu0 0.0
    %12412 = vmatpush1.msra.mxu0 %v131
    %12413 = vmatprep.subr.mxu0 0.0
    %12414 = vmatpush1.msra.mxu0 %v132
    %12415 = vmatprep.subr.mxu0 0.0
    %12416 = vmatpush1.msra.mxu0 %v133
    %12417 = vmatprep.subr.mxu0 0.0
    %12418 = vmatpush1.msra.mxu0 %v134
    %12419 = vmatprep.subr.mxu0 0.0
    %12420 = vmatpush1.msra.mxu0 %v135
    %12421 = vmatprep.subr.mxu0 0.0
    %12422 = vmatpush1.msra.mxu0 %v136
    %12423 = vmatprep.subr.mxu0 0.0
    %12424 = vmatpush1.msra.mxu0 %v137
    %12425 = vmatprep.subr.mxu0 0.0
    %12426 = vmatpush1.msra.mxu0 %v138
    %12427 = vmatprep.subr.mxu0 0.0
    %12428 = vmatpush1.msra.mxu0 %v139
    %12429 = vmatprep.subr.mxu0 0.0
    %12430 = vmatpush1.msra.mxu0 %v140
    %12431 = vmatprep.subr.mxu0 0.0
    %12432 = vmatpush1.msra.mxu0 %v141
    %12433 = vmatprep.subr.mxu0 0.0
    %12434 = vmatpush1.msra.mxu0 %v142
    %12435 = vmatprep.subr.mxu0 0.0
    %12436 = vmatpush1.msra.mxu0 %v143
    %12437 = vmatprep.subr.mxu0 0.0
    %12438 = vmatpush1.msra.mxu0 %v144
    %12439 = vmatprep.subr.mxu0 0.0
    %12440 = vmatpush1.msra.mxu0 %v145
    %12441 = vmatprep.subr.mxu0 0.0
    %12442 = vmatpush1.msra.mxu0 %v146
    %12443 = vmatprep.subr.mxu0 0.0
    %12444 = vmatpush1.msra.mxu0 %v147
    %12445 = vmatprep.subr.mxu0 0.0
    %12446 = vmatpush1.msra.mxu0 %v148
    %12447 = vmatprep.subr.mxu0 0.0
    %12448 = vmatpush1.msra.mxu0 %v149
    %12449 = vmatprep.subr.mxu0 0.0
    %12450 = vmatpush1.msra.mxu0 %v150
    %12451 = vmatprep.subr.mxu0 0.0
    %12452 = vmatpush1.msra.mxu0 %v151
    %12453 = vmatprep.subr.mxu0 0.0
    %12454 = vmatpush1.msra.mxu0 %v152
    %12455 = vmatprep.subr.mxu0 0.0
    %12456 = vmatpush1.msra.mxu0 %v153
    %12457 = vmatprep.subr.mxu0 0.0
    %12458 = vmatpush1.msra.mxu0 %v154
    %12459 = vmatprep.subr.mxu0 0.0
    %12460 = vmatpush1.msra.mxu0 %v155
    %12461 = vmatprep.subr.mxu0 0.0
    %12462 = vmatpush1.msra.mxu0 %v156
    %12463 = vmatprep.subr.mxu0 0.0
    %12464 = vmatpush1.msra.mxu0 %v157
    %12465 = vmatprep.subr.mxu0 0.0
    %12466 = vmatpush1.msra.mxu0 %v158
    %12467 = vmatprep.mubr.f32.mxu0 %v12396
    %12468 = vmatmul.mubr.f32.gmra.mrb[0].mxu0 %v12395
    %v12469 = vpop.f32.mrb[0].mxu0
    %v12470 = vadd.f32 %v255, %v12469
    %v12471 = vpop.f32.mrb[0].mxu0
    %12472 = vdwg.mxu0
    %12473 = vmatprep.subr.mxu0 0.0
    %12474 = vmatpush1.msra.mxu0 %v159
    %12475 = vmatprep.subr.mxu0 0.0
    %12476 = vmatpush1.msra.mxu0 %v160
    %12477 = vmatprep.subr.mxu0 0.0
    %12478 = vmatpush1.msra.mxu0 %v161
    %12479 = vmatprep.subr.mxu0 0.0
    %12480 = vmatpush1.msra.mxu0 %v162
    %12481 = vmatprep.subr.mxu0 0.0
    %12482 = vmatpush1.msra.mxu0 %v163
    %12483 = vmatprep.subr.mxu0 0.0
    %12484 = vmatpush1.msra.mxu0 %v164
    %12485 = vmatprep.subr.mxu0 0.0
    %12486 = vmatpush1.msra.mxu0 %v165
    %12487 = vmatprep.subr.mxu0 0.0
    %12488 = vmatpush1.msra.mxu0 %v166
    %12489 = vmatprep.subr.mxu0 0.0
    %12490 = vmatpush1.msra.mxu0 %v167
    %12491 = vmatprep.subr.mxu0 0.0
    %12492 = vmatpush1.msra.mxu0 %v168
    %12493 = vmatprep.subr.mxu0 0.0
    %12494 = vmatpush1.msra.mxu0 %v169
    %12495 = vmatprep.subr.mxu0 0.0
    %12496 = vmatpush1.msra.mxu0 %v170
    %12497 = vmatprep.subr.mxu0 0.0
    %12498 = vmatpush1.msra.mxu0 %v171
    %12499 = vmatprep.subr.mxu0 0.0
    %12500 = vmatpush1.msra.mxu0 %v172
    %12501 = vmatprep.subr.mxu0 0.0
    %12502 = vmatpush1.msra.mxu0 %v173
    %12503 = vmatprep.subr.mxu0 0.0
    %12504 = vmatpush1.msra.mxu0 %v174
    %12505 = vmatprep.subr.mxu0 0.0
    %12506 = vmatpush1.msra.mxu0 %v175
    %12507 = vmatprep.subr.mxu0 0.0
    %12508 = vmatpush1.msra.mxu0 %v176
    %12509 = vmatprep.subr.mxu0 0.0
    %12510 = vmatpush1.msra.mxu0 %v177
    %12511 = vmatprep.subr.mxu0 0.0
    %12512 = vmatpush1.msra.mxu0 %v178
    %12513 = vmatprep.subr.mxu0 0.0
    %12514 = vmatpush1.msra.mxu0 %v179
    %12515 = vmatprep.subr.mxu0 0.0
    %12516 = vmatpush1.msra.mxu0 %v180
    %12517 = vmatprep.subr.mxu0 0.0
    %12518 = vmatpush1.msra.mxu0 %v181
    %12519 = vmatprep.subr.mxu0 0.0
    %12520 = vmatpush1.msra.mxu0 %v182
    %12521 = vmatprep.subr.mxu0 0.0
    %12522 = vmatpush1.msra.mxu0 %v183
    %12523 = vmatprep.subr.mxu0 0.0
    %12524 = vmatpush1.msra.mxu0 %v184
    %12525 = vmatprep.subr.mxu0 0.0
    %12526 = vmatpush1.msra.mxu0 %v185
    %12527 = vmatprep.subr.mxu0 0.0
    %12528 = vmatpush1.msra.mxu0 %v186
    %12529 = vmatprep.subr.mxu0 0.0
    %12530 = vmatpush1.msra.mxu0 %v187
    %12531 = vmatprep.subr.mxu0 0.0
    %12532 = vmatpush1.msra.mxu0 %v188
    %12533 = vmatprep.subr.mxu0 0.0
    %12534 = vmatpush1.msra.mxu0 %v189
    %12535 = vmatprep.subr.mxu0 0.0
    %12536 = vmatpush1.msra.mxu0 %v190
    %12537 = vmatprep.mubr.f32.mxu0 %v12398
    %12538 = vmatmul.mubr.f32.gmra.mrb[0].mxu0 %v12397
    %v12539 = vpop.f32.mrb[0].mxu0
    %v12540 = vadd.f32 %v12470, %v12539
    %v12541 = vpop.f32.mrb[0].mxu0
    %12542 = vdwg.mxu0
    %12543 = vmatprep.subr.mxu0 0.0
    %12544 = vmatpush1.msra.mxu0 %v191
    %12545 = vmatprep.subr.mxu0 0.0
    %12546 = vmatpush1.msra.mxu0 %v192
    %12547 = vmatprep.subr.mxu0 0.0
    %12548 = vmatpush1.msra.mxu0 %v193
    %12549 = vmatprep.subr.mxu0 0.0
    %12550 = vmatpush1.msra.mxu0 %v194
    %12551 = vmatprep.subr.mxu0 0.0
    %12552 = vmatpush1.msra.mxu0 %v195
    %12553 = vmatprep.subr.mxu0 0.0
    %12554 = vmatpush1.msra.mxu0 %v196
    %12555 = vmatprep.subr.mxu0 0.0
    %12556 = vmatpush1.msra.mxu0 %v197
    %12557 = vmatprep.subr.mxu0 0.0
    %12558 = vmatpush1.msra.mxu0 %v198
    %12559 = vmatprep.subr.mxu0 0.0
    %12560 = vmatpush1.msra.mxu0 %v199
    %12561 = vmatprep.subr.mxu0 0.0
    %12562 = vmatpush1.msra.mxu0 %v200
    %12563 = vmatprep.subr.mxu0 0.0
    %12564 = vmatpush1.msra.mxu0 %v201
    %12565 = vmatprep.subr.mxu0 0.0
    %12566 = vmatpush1.msra.mxu0 %v202
    %12567 = vmatprep.subr.mxu0 0.0
    %12568 = vmatpush1.msra.mxu0 %v203
    %12569 = vmatprep.subr.mxu0 0.0
    %12570 = vmatpush1.msra.mxu0 %v204
    %12571 = vmatprep.subr.mxu0 0.0
    %12572 = vmatpush1.msra.mxu0 %v205
    %12573 = vmatprep.subr.mxu0 0.0
    %12574 = vmatpush1.msra.mxu0 %v206
    %12575 = vmatprep.subr.mxu0 0.0
    %12576 = vmatpush1.msra.mxu0 %v207
    %12577 = vmatprep.subr.mxu0 0.0
    %12578 = vmatpush1.msra.mxu0 %v208
    %12579 = vmatprep.subr.mxu0 0.0
    %12580 = vmatpush1.msra.mxu0 %v209
    %12581 = vmatprep.subr.mxu0 0.0
    %12582 = vmatpush1.msra.mxu0 %v210
    %12583 = vmatprep.subr.mxu0 0.0
    %12584 = vmatpush1.msra.mxu0 %v211
    %12585 = vmatprep.subr.mxu0 0.0
    %12586 = vmatpush1.msra.mxu0 %v212
    %12587 = vmatprep.subr.mxu0 0.0
    %12588 = vmatpush1.msra.mxu0 %v213
    %12589 = vmatprep.subr.mxu0 0.0
    %12590 = vmatpush1.msra.mxu0 %v214
    %12591 = vmatprep.subr.mxu0 0.0
    %12592 = vmatpush1.msra.mxu0 %v215
    %12593 = vmatprep.subr.mxu0 0.0
    %12594 = vmatpush1.msra.mxu0 %v216
    %12595 = vmatprep.subr.mxu0 0.0
    %12596 = vmatpush1.msra.mxu0 %v217
    %12597 = vmatprep.subr.mxu0 0.0
    %12598 = vmatpush1.msra.mxu0 %v218
    %12599 = vmatprep.subr.mxu0 0.0
    %12600 = vmatpush1.msra.mxu0 %v219
    %12601 = vmatprep.subr.mxu0 0.0
    %12602 = vmatpush1.msra.mxu0 %v220
    %12603 = vmatprep.subr.mxu0 0.0
    %12604 = vmatpush1.msra.mxu0 %v221
    %12605 = vmatprep.subr.mxu0 0.0
    %12606 = vmatpush1.msra.mxu0 %v222
    %12607 = vmatprep.mubr.f32.mxu0 %v12400
    %12608 = vmatmul.mubr.f32.gmra.mrb[0].mxu0 %v12399
    %v12609 = vpop.f32.mrb[0].mxu0
    %v12610 = vadd.f32 %v12540, %v12609
    %v12611 = vpop.f32.mrb[0].mxu0
    %12612 = vdwg.mxu0
    %12613 = vmatprep.subr.mxu0 0.0
    %12614 = vmatpush1.msra.mxu0 %v223
    %12615 = vmatprep.subr.mxu0 0.0
    %12616 = vmatpush1.msra.mxu0 %v224
    %12617 = vmatprep.subr.mxu0 0.0
    %12618 = vmatpush1.msra.mxu0 %v225
    %12619 = vmatprep.subr.mxu0 0.0
    %12620 = vmatpush1.msra.mxu0 %v226
    %12621 = vmatprep.subr.mxu0 0.0
    %12622 = vmatpush1.msra.mxu0 %v227
    %12623 = vmatprep.subr.mxu0 0.0
    %12624 = vmatpush1.msra.mxu0 %v228
    %12625 = vmatprep.subr.mxu0 0.0
    %12626 = vmatpush1.msra.mxu0 %v229
    %12627 = vmatprep.subr.mxu0 0.0
    %12628 = vmatpush1.msra.mxu0 %v230
    %12629 = vmatprep.subr.mxu0 0.0
    %12630 = vmatpush1.msra.mxu0 %v231
    %12631 = vmatprep.subr.mxu0 0.0
    %12632 = vmatpush1.msra.mxu0 %v232
    %12633 = vmatprep.subr.mxu0 0.0
    %12634 = vmatpush1.msra.mxu0 %v233
    %12635 = vmatprep.subr.mxu0 0.0
    %12636 = vmatpush1.msra.mxu0 %v234
    %12637 = vmatprep.subr.mxu0 0.0
    %12638 = vmatpush1.msra.mxu0 %v235
    %12639 = vmatprep.subr.mxu0 0.0
    %12640 = vmatpush1.msra.mxu0 %v236
    %12641 = vmatprep.subr.mxu0 0.0
    %12642 = vmatpush1.msra.mxu0 %v237
    %12643 = vmatprep.subr.mxu0 0.0
    %12644 = vmatpush1.msra.mxu0 %v238
    %12645 = vmatprep.subr.mxu0 0.0
    %12646 = vmatpush1.msra.mxu0 %v239
    %12647 = vmatprep.subr.mxu0 0.0
    %12648 = vmatpush1.msra.mxu0 %v240
    %12649 = vmatprep.subr.mxu0 0.0
    %12650 = vmatpush1.msra.mxu0 %v241
    %12651 = vmatprep.subr.mxu0 0.0
    %12652 = vmatpush1.msra.mxu0 %v242
    %12653 = vmatprep.subr.mxu0 0.0
    %12654 = vmatpush1.msra.mxu0 %v243
    %12655 = vmatprep.subr.mxu0 0.0
    %12656 = vmatpush1.msra.mxu0 %v244
    %12657 = vmatprep.subr.mxu0 0.0
    %12658 = vmatpush1.msra.mxu0 %v245
    %12659 = vmatprep.subr.mxu0 0.0
    %12660 = vmatpush1.msra.mxu0 %v246
    %12661 = vmatprep.subr.mxu0 0.0
    %12662 = vmatpush1.msra.mxu0 %v247
    %12663 = vmatprep.subr.mxu0 0.0
    %12664 = vmatpush1.msra.mxu0 %v248
    %12665 = vmatprep.subr.mxu0 0.0
    %12666 = vmatpush1.msra.mxu0 %v249
    %12667 = vmatprep.subr.mxu0 0.0
    %12668 = vmatpush1.msra.mxu0 %v250
    %12669 = vmatprep.subr.mxu0 0.0
    %12670 = vmatpush1.msra.mxu0 %v251
    %12671 = vmatprep.subr.mxu0 0.0
    %12672 = vmatpush1.msra.mxu0 %v252
    %12673 = vmatprep.subr.mxu0 0.0
    %12674 = vmatpush1.msra.mxu0 %v253
    %12675 = vmatprep.subr.mxu0 0.0
    %12676 = vmatpush1.msra.mxu0 %v254
    %12677 = vmatprep.mubr.f32.mxu0 %v12402
    %12678 = vmatmul.mubr.f32.gmra.mrb[0].mxu0 %v12401
    %v12679 = vpop.f32.mrb[0].mxu0
    %v12680 = vadd.f32 %v12610, %v12679
    %v12681 = vpop.f32.mrb[0].mxu0
    %12682 = vdwg.mxu0
    %vm12683 = vcmask 73728
    %12684 = vst.msk [vmem:[#allocation14] sm:$0x1] %vm12683, %v12680
    %v12685 = vadd.f32 %v12338, %v12350
    %v12686 = vadd.f32 %v12339, %v12354
    %v12687 = vadd.f32 %v12340, %v12358
    %v12688 = vadd.f32 %v12341, %v12362
    %v12689 = vadd.f32 %v12342, %v12366
    %v12690 = vadd.f32 %v12343, %v12370
    %v12691 = vadd.f32 %v12344, %v12374
    %v12692 = vadd.f32 %v12345, %v12378
    %v12693 = vmax.f32 %v12685, 0.0
    %v12694 = vmax.f32 %v12686, 0.0
    %v12695 = vmax.f32 %v12687, 0.0
    %v12696 = vmax.f32 %v12688, 0.0
    %v12697 = vmax.f32 %v12689, 0.0
    %v12698 = vmax.f32 %v12690, 0.0
    %v12699 = vmax.f32 %v12691, 0.0
    %v12700 = vmax.f32 %v12692, 0.0
    %12701 = vmatprep.subr.mxu0 0.0
    %12702 = vmatpush1.msra.mxu0 %v127
    %12703 = vmatprep.subr.mxu0 0.0
    %12704 = vmatpush1.msra.mxu0 %v128
    %12705 = vmatprep.subr.mxu0 0.0
    %12706 = vmatpush1.msra.mxu0 %v129
    %12707 = vmatprep.subr.mxu0 0.0
    %12708 = vmatpush1.msra.mxu0 %v130
    %12709 = vmatprep.subr.mxu0 0.0
    %12710 = vmatpush1.msra.mxu0 %v131
    %12711 = vmatprep.subr.mxu0 0.0
    %12712 = vmatpush1.msra.mxu0 %v132
    %12713 = vmatprep.subr.mxu0 0.0
    %12714 = vmatpush1.msra.mxu0 %v133
    %12715 = vmatprep.subr.mxu0 0.0
    %12716 = vmatpush1.msra.mxu0 %v134
    %12717 = vmatprep.subr.mxu0 0.0
    %12718 = vmatpush1.msra.mxu0 %v135
    %12719 = vmatprep.subr.mxu0 0.0
    %12720 = vmatpush1.msra.mxu0 %v136
    %12721 = vmatprep.subr.mxu0 0.0
    %12722 = vmatpush1.msra.mxu0 %v137
    %12723 = vmatprep.subr.mxu0 0.0
    %12724 = vmatpush1.msra.mxu0 %v138
    %12725 = vmatprep.subr.mxu0 0.0
    %12726 = vmatpush1.msra.mxu0 %v139
    %12727 = vmatprep.subr.mxu0 0.0
    %12728 = vmatpush1.msra.mxu0 %v140
    %12729 = vmatprep.subr.mxu0 0.0
    %12730 = vmatpush1.msra.mxu0 %v141
    %12731 = vmatprep.subr.mxu0 0.0
    %12732 = vmatpush1.msra.mxu0 %v142
    %12733 = vmatprep.subr.mxu0 0.0
    %12734 = vmatpush1.msra.mxu0 %v143
    %12735 = vmatprep.subr.mxu0 0.0
    %12736 = vmatpush1.msra.mxu0 %v144
    %12737 = vmatprep.subr.mxu0 0.0
    %12738 = vmatpush1.msra.mxu0 %v145
    %12739 = vmatprep.subr.mxu0 0.0
    %12740 = vmatpush1.msra.mxu0 %v146
    %12741 = vmatprep.subr.mxu0 0.0
    %12742 = vmatpush1.msra.mxu0 %v147
    %12743 = vmatprep.subr.mxu0 0.0
    %12744 = vmatpush1.msra.mxu0 %v148
    %12745 = vmatprep.subr.mxu0 0.0
    %12746 = vmatpush1.msra.mxu0 %v149
    %12747 = vmatprep.subr.mxu0 0.0
    %12748 = vmatpush1.msra.mxu0 %v150
    %12749 = vmatprep.subr.mxu0 0.0
    %12750 = vmatpush1.msra.mxu0 %v151
    %12751 = vmatprep.subr.mxu0 0.0
    %12752 = vmatpush1.msra.mxu0 %v152
    %12753 = vmatprep.subr.mxu0 0.0
    %12754 = vmatpush1.msra.mxu0 %v153
    %12755 = vmatprep.subr.mxu0 0.0
    %12756 = vmatpush1.msra.mxu0 %v154
    %12757 = vmatprep.subr.mxu0 0.0
    %12758 = vmatpush1.msra.mxu0 %v155
    %12759 = vmatprep.subr.mxu0 0.0
    %12760 = vmatpush1.msra.mxu0 %v156
    %12761 = vmatprep.subr.mxu0 0.0
    %12762 = vmatpush1.msra.mxu0 %v157
    %12763 = vmatprep.subr.mxu0 0.0
    %12764 = vmatpush1.msra.mxu0 %v158
    %12765 = vmatprep.mubr.f32.mxu0 %v12694
    %12766 = vmatmul.mubr.f32.gmra.mrb[0].mxu0 %v12693
    %v12767 = vpop.f32.mrb[0].mxu0
    %v12768 = vadd.f32 %v255, %v12767
    %v12769 = vpop.f32.mrb[0].mxu0
    %12770 = vdwg.mxu0
    %12771 = vmatprep.subr.mxu0 0.0
    %12772 = vmatpush1.msra.mxu0 %v159
    %12773 = vmatprep.subr.mxu0 0.0
    %12774 = vmatpush1.msra.mxu0 %v160
    %12775 = vmatprep.subr.mxu0 0.0
    %12776 = vmatpush1.msra.mxu0 %v161
    %12777 = vmatprep.subr.mxu0 0.0
    %12778 = vmatpush1.msra.mxu0 %v162
    %12779 = vmatprep.subr.mxu0 0.0
    %12780 = vmatpush1.msra.mxu0 %v163
    %12781 = vmatprep.subr.mxu0 0.0
    %12782 = vmatpush1.msra.mxu0 %v164
    %12783 = vmatprep.subr.mxu0 0.0
    %12784 = vmatpush1.msra.mxu0 %v165
    %12785 = vmatprep.subr.mxu0 0.0
    %12786 = vmatpush1.msra.mxu0 %v166
    %12787 = vmatprep.subr.mxu0 0.0
    %12788 = vmatpush1.msra.mxu0 %v167
    %12789 = vmatprep.subr.mxu0 0.0
    %12790 = vmatpush1.msra.mxu0 %v168
    %12791 = vmatprep.subr.mxu0 0.0
    %12792 = vmatpush1.msra.mxu0 %v169
    %12793 = vmatprep.subr.mxu0 0.0
    %12794 = vmatpush1.msra.mxu0 %v170
    %12795 = vmatprep.subr.mxu0 0.0
    %12796 = vmatpush1.msra.mxu0 %v171
    %12797 = vmatprep.subr.mxu0 0.0
    %12798 = vmatpush1.msra.mxu0 %v172
    %12799 = vmatprep.subr.mxu0 0.0
    %12800 = vmatpush1.msra.mxu0 %v173
    %12801 = vmatprep.subr.mxu0 0.0
    %12802 = vmatpush1.msra.mxu0 %v174
    %12803 = vmatprep.subr.mxu0 0.0
    %12804 = vmatpush1.msra.mxu0 %v175
    %12805 = vmatprep.subr.mxu0 0.0
    %12806 = vmatpush1.msra.mxu0 %v176
    %12807 = vmatprep.subr.mxu0 0.0
    %12808 = vmatpush1.msra.mxu0 %v177
    %12809 = vmatprep.subr.mxu0 0.0
    %12810 = vmatpush1.msra.mxu0 %v178
    %12811 = vmatprep.subr.mxu0 0.0
    %12812 = vmatpush1.msra.mxu0 %v179
    %12813 = vmatprep.subr.mxu0 0.0
    %12814 = vmatpush1.msra.mxu0 %v180
    %12815 = vmatprep.subr.mxu0 0.0
    %12816 = vmatpush1.msra.mxu0 %v181
    %12817 = vmatprep.subr.mxu0 0.0
    %12818 = vmatpush1.msra.mxu0 %v182
    %12819 = vmatprep.subr.mxu0 0.0
    %12820 = vmatpush1.msra.mxu0 %v183
    %12821 = vmatprep.subr.mxu0 0.0
    %12822 = vmatpush1.msra.mxu0 %v184
    %12823 = vmatprep.subr.mxu0 0.0
    %12824 = vmatpush1.msra.mxu0 %v185
    %12825 = vmatprep.subr.mxu0 0.0
    %12826 = vmatpush1.msra.mxu0 %v186
    %12827 = vmatprep.subr.mxu0 0.0
    %12828 = vmatpush1.msra.mxu0 %v187
    %12829 = vmatprep.subr.mxu0 0.0
    %12830 = vmatpush1.msra.mxu0 %v188
    %12831 = vmatprep.subr.mxu0 0.0
    %12832 = vmatpush1.msra.mxu0 %v189
    %12833 = vmatprep.subr.mxu0 0.0
    %12834 = vmatpush1.msra.mxu0 %v190
    %12835 = vmatprep.mubr.f32.mxu0 %v12696
    %12836 = vmatmul.mubr.f32.gmra.mrb[0].mxu0 %v12695
    %v12837 = vpop.f32.mrb[0].mxu0
    %v12838 = vadd.f32 %v12768, %v12837
    %v12839 = vpop.f32.mrb[0].mxu0
    %12840 = vdwg.mxu0
    %12841 = vmatprep.subr.mxu0 0.0
    %12842 = vmatpush1.msra.mxu0 %v191
    %12843 = vmatprep.subr.mxu0 0.0
    %12844 = vmatpush1.msra.mxu0 %v192
    %12845 = vmatprep.subr.mxu0 0.0
    %12846 = vmatpush1.msra.mxu0 %v193
    %12847 = vmatprep.subr.mxu0 0.0
    %12848 = vmatpush1.msra.mxu0 %v194
    %12849 = vmatprep.subr.mxu0 0.0
    %12850 = vmatpush1.msra.mxu0 %v195
    %12851 = vmatprep.subr.mxu0 0.0
    %12852 = vmatpush1.msra.mxu0 %v196
    %12853 = vmatprep.subr.mxu0 0.0
    %12854 = vmatpush1.msra.mxu0 %v197
    %12855 = vmatprep.subr.mxu0 0.0
    %12856 = vmatpush1.msra.mxu0 %v198
    %12857 = vmatprep.subr.mxu0 0.0
    %12858 = vmatpush1.msra.mxu0 %v199
    %12859 = vmatprep.subr.mxu0 0.0
    %12860 = vmatpush1.msra.mxu0 %v200
    %12861 = vmatprep.subr.mxu0 0.0
    %12862 = vmatpush1.msra.mxu0 %v201
    %12863 = vmatprep.subr.mxu0 0.0
    %12864 = vmatpush1.msra.mxu0 %v202
    %12865 = vmatprep.subr.mxu0 0.0
    %12866 = vmatpush1.msra.mxu0 %v203
    %12867 = vmatprep.subr.mxu0 0.0
    %12868 = vmatpush1.msra.mxu0 %v204
    %12869 = vmatprep.subr.mxu0 0.0
    %12870 = vmatpush1.msra.mxu0 %v205
    %12871 = vmatprep.subr.mxu0 0.0
    %12872 = vmatpush1.msra.mxu0 %v206
    %12873 = vmatprep.subr.mxu0 0.0
    %12874 = vmatpush1.msra.mxu0 %v207
    %12875 = vmatprep.subr.mxu0 0.0
    %12876 = vmatpush1.msra.mxu0 %v208
    %12877 = vmatprep.subr.mxu0 0.0
    %12878 = vmatpush1.msra.mxu0 %v209
    %12879 = vmatprep.subr.mxu0 0.0
    %12880 = vmatpush1.msra.mxu0 %v210
    %12881 = vmatprep.subr.mxu0 0.0
    %12882 = vmatpush1.msra.mxu0 %v211
    %12883 = vmatprep.subr.mxu0 0.0
    %12884 = vmatpush1.msra.mxu0 %v212
    %12885 = vmatprep.subr.mxu0 0.0
    %12886 = vmatpush1.msra.mxu0 %v213
    %12887 = vmatprep.subr.mxu0 0.0
    %12888 = vmatpush1.msra.mxu0 %v214
    %12889 = vmatprep.subr.mxu0 0.0
    %12890 = vmatpush1.msra.mxu0 %v215
    %12891 = vmatprep.subr.mxu0 0.0
    %12892 = vmatpush1.msra.mxu0 %v216
    %12893 = vmatprep.subr.mxu0 0.0
    %12894 = vmatpush1.msra.mxu0 %v217
    %12895 = vmatprep.subr.mxu0 0.0
    %12896 = vmatpush1.msra.mxu0 %v218
    %12897 = vmatprep.subr.mxu0 0.0
    %12898 = vmatpush1.msra.mxu0 %v219
    %12899 = vmatprep.subr.mxu0 0.0
    %12900 = vmatpush1.msra.mxu0 %v220
    %12901 = vmatprep.subr.mxu0 0.0
    %12902 = vmatpush1.msra.mxu0 %v221
    %12903 = vmatprep.subr.mxu0 0.0
    %12904 = vmatpush1.msra.mxu0 %v222
    %12905 = vmatprep.mubr.f32.mxu0 %v12698
    %12906 = vmatmul.mubr.f32.gmra.mrb[0].mxu0 %v12697
    %v12907 = vpop.f32.mrb[0].mxu0
    %v12908 = vadd.f32 %v12838, %v12907
    %v12909 = vpop.f32.mrb[0].mxu0
    %12910 = vdwg.mxu0
    %12911 = vmatprep.subr.mxu0 0.0
    %12912 = vmatpush1.msra.mxu0 %v223
    %12913 = vmatprep.subr.mxu0 0.0
    %12914 = vmatpush1.msra.mxu0 %v224
    %12915 = vmatprep.subr.mxu0 0.0
    %12916 = vmatpush1.msra.mxu0 %v225
    %12917 = vmatprep.subr.mxu0 0.0
    %12918 = vmatpush1.msra.mxu0 %v226
    %12919 = vmatprep.subr.mxu0 0.0
    %12920 = vmatpush1.msra.mxu0 %v227
    %12921 = vmatprep.subr.mxu0 0.0
    %12922 = vmatpush1.msra.mxu0 %v228
    %12923 = vmatprep.subr.mxu0 0.0
    %12924 = vmatpush1.msra.mxu0 %v229
    %12925 = vmatprep.subr.mxu0 0.0
    %12926 = vmatpush1.msra.mxu0 %v230
    %12927 = vmatprep.subr.mxu0 0.0
    %12928 = vmatpush1.msra.mxu0 %v231
    %12929 = vmatprep.subr.mxu0 0.0
    %12930 = vmatpush1.msra.mxu0 %v232
    %12931 = vmatprep.subr.mxu0 0.0
    %12932 = vmatpush1.msra.mxu0 %v233
    %12933 = vmatprep.subr.mxu0 0.0
    %12934 = vmatpush1.msra.mxu0 %v234
    %12935 = vmatprep.subr.mxu0 0.0
    %12936 = vmatpush1.msra.mxu0 %v235
    %12937 = vmatprep.subr.mxu0 0.0
    %12938 = vmatpush1.msra.mxu0 %v236
    %12939 = vmatprep.subr.mxu0 0.0
    %12940 = vmatpush1.msra.mxu0 %v237
    %12941 = vmatprep.subr.mxu0 0.0
    %12942 = vmatpush1.msra.mxu0 %v238
    %12943 = vmatprep.subr.mxu0 0.0
    %12944 = vmatpush1.msra.mxu0 %v239
    %12945 = vmatprep.subr.mxu0 0.0
    %12946 = vmatpush1.msra.mxu0 %v240
    %12947 = vmatprep.subr.mxu0 0.0
    %12948 = vmatpush1.msra.mxu0 %v241
    %12949 = vmatprep.subr.mxu0 0.0
    %12950 = vmatpush1.msra.mxu0 %v242
    %12951 = vmatprep.subr.mxu0 0.0
    %12952 = vmatpush1.msra.mxu0 %v243
    %12953 = vmatprep.subr.mxu0 0.0
    %12954 = vmatpush1.msra.mxu0 %v244
    %12955 = vmatprep.subr.mxu0 0.0
    %12956 = vmatpush1.msra.mxu0 %v245
    %12957 = vmatprep.subr.mxu0 0.0
    %12958 = vmatpush1.msra.mxu0 %v246
    %12959 = vmatprep.subr.mxu0 0.0
    %12960 = vmatpush1.msra.mxu0 %v247
    %12961 = vmatprep.subr.mxu0 0.0
    %12962 = vmatpush1.msra.mxu0 %v248
    %12963 = vmatprep.subr.mxu0 0.0
    %12964 = vmatpush1.msra.mxu0 %v249
    %12965 = vmatprep.subr.mxu0 0.0
    %12966 = vmatpush1.msra.mxu0 %v250
    %12967 = vmatprep.subr.mxu0 0.0
    %12968 = vmatpush1.msra.mxu0 %v251
    %12969 = vmatprep.subr.mxu0 0.0
    %12970 = vmatpush1.msra.mxu0 %v252
    %12971 = vmatprep.subr.mxu0 0.0
    %12972 = vmatpush1.msra.mxu0 %v253
    %12973 = vmatprep.subr.mxu0 0.0
    %12974 = vmatpush1.msra.mxu0 %v254
    %12975 = vmatprep.mubr.f32.mxu0 %v12700
    %12976 = vmatmul.mubr.f32.gmra.mrb[0].mxu0 %v12699
    %v12977 = vpop.f32.mrb[0].mxu0
    %v12978 = vadd.f32 %v12908, %v12977
    %v12979 = vpop.f32.mrb[0].mxu0
    %12980 = vdwg.mxu0
    %12981 = vst.msk [vmem:[#allocation14 + $0x1] sm:$0x1] %vm12683, %v12978
    // Predicated region
    $region66: #{inception_aux_forward.1} parent=1 // pred_check
      _
    $region67: #{inception_aux_forward.1} parent=1 // pred_check_branch
      %12983 = sbr.rel (0) target = $region69
    $region68: #{inception_aux_forward.1} parent=1 // pred_region
      %s12985 = ssub.s32 32, 32
      %12986 = vsyncadd [#allocation4], %s12985
      %s12988 = sshll.u32 [#allocation14], 4
      %s12989 = int_to_ptr.vmem [resolvable:$true] %s12988
      %12991 = dma.vmem_to_hbm [thread:$0]  %s12989, 32, %s9, [#allocation4]
    $region69: #{inception_aux_forward.1} parent=1 // pred_fallthru
      _
    // Predicated region
    $region70: #{inception_aux_forward.1} parent=1 // pred_check
      _
    $region71: #{inception_aux_forward.1} parent=1 // pred_check_branch
      %12993 = sbr.rel (0) target = $region73
    $region72: #{inception_aux_forward.1} parent=1 // pred_region
      %12994 = dma.done [#allocation4], 32
    $region73: #{inception_aux_forward.1} parent=1 // pred_fallthru
      _
    %12995 = vsyncpa [#allocation3], 1
    %12996 = vsyncpa [#allocation6], 1
    %12997 = vsyncpa [#allocation9], 1
    %12998 = vsyncpa [#allocation12], 1
    %12999 = vsyncpa [#allocation4], 1

</llo_original>
